<compile_context>
chip_gen: v6e
topology: v6e:2x2x1
jax: 0.10.0
libtpu: 0.0.40
codegen_flags: <defaults>
</compile_context>

<pallas_src>
import functools

import jax
import jax.numpy as jnp
from jax.experimental import pallas as pl
from jax.experimental.pallas import tpu as pltpu

X_IN = 28
H = 300
OUT = 100

_LANE = 128


def _round_up(n, m):
    return -(-n // m) * m


X_PAD = _round_up(X_IN, _LANE)    # 128
H_PAD = _round_up(H, _LANE)       # 384
OUT_PAD = _round_up(OUT, _LANE)   # 128


def dn_kernel(x_ref,
              w1_ref, b1_ref,
              w2_ref, b2_ref,
              w3_ref, b3_ref,
              w4_ref, b4_ref,
              w5_ref, b5_ref,
              w6_ref, b6_ref,
              o_ref):
    """Fused MLP: bf16 operands into the MXU, f32 accumulation, f32 bias+ReLU."""

    def linear(h_f32, w_ref, b_ref, relu):
        y = jnp.dot(h_f32.astype(jnp.bfloat16), w_ref[...],
                    preferred_element_type=jnp.float32)
        y = y + b_ref[...]            # (1, out) bias broadcasts over the batch tile
        if relu:
            y = jnp.maximum(y, 0.0)
        return y

    h = x_ref[...]                    # (TM, X_PAD) f32
    h = linear(h, w1_ref, b1_ref, relu=True)
    h = linear(h, w2_ref, b2_ref, relu=True)
    h = linear(h, w3_ref, b3_ref, relu=True)
    h = linear(h, w4_ref, b4_ref, relu=True)
    h = linear(h, w5_ref, b5_ref, relu=True)
    h = linear(h, w6_ref, b6_ref, relu=False)
    o_ref[...] = h.astype(o_ref.dtype)


@functools.partial(jax.jit, static_argnames=("tm",))
def dn_forward(x, padded_params, tm=256):
    """x: (B, X_IN) f32.  padded_params: [(W bf16 (in_pad,out_pad), b f32 (1,out_pad))]."""
    B = x.shape[0]
    # Don't make the batch tile bigger than the (sublane-rounded) batch itself.
    tm = min(tm, max(8, _round_up(B, 8)))
    b_pad = _round_up(B, tm)

    # Zero-pad batch and input features to a lane-dense slab (numerically exact).
    x_p = jnp.zeros((b_pad, X_PAD), jnp.float32).at[:B, :X_IN].set(
        x.astype(jnp.float32))

    flat = []
    in_specs = [pl.BlockSpec((tm, X_PAD), lambda i: (i, 0))]
    for (w, b) in padded_params:
        flat.append(w)
        flat.append(b)
        # Constant index_map -> weights/biases stay resident in VMEM.
        in_specs.append(pl.BlockSpec(w.shape, lambda i: (0, 0)))
        in_specs.append(pl.BlockSpec(b.shape, lambda i: (0, 0)))

    flops = 2 * b_pad * (X_PAD * H_PAD + 4 * H_PAD * H_PAD + H_PAD * OUT_PAD)
    weight_bytes = sum(w.size * w.dtype.itemsize + b.size * b.dtype.itemsize
                       for (w, b) in padded_params)
    bytes_accessed = x_p.size * 4 + b_pad * OUT_PAD * 4 + weight_bytes

    out_padded = pl.pallas_call(
        dn_kernel,
        out_shape=jax.ShapeDtypeStruct((b_pad, OUT_PAD), jnp.float32),
        grid=(b_pad // tm,),
        in_specs=in_specs,
        out_specs=pl.BlockSpec((tm, OUT_PAD), lambda i: (i, 0)),
        compiler_params=pltpu.CompilerParams(
            dimension_semantics=("parallel",)),
        cost_estimate=pl.CostEstimate(
            flops=flops, transcendentals=0, bytes_accessed=bytes_accessed),
    )(x_p, *flat)

    return out_padded[:B, :OUT]


def init_params(key):
    """PyTorch-Linear-style uniform init; W stored as (in, out) so y = x @ W + b."""
    sizes = [(X_IN, H), (H, H), (H, H), (H, H), (H, H), (H, OUT)]
    params = []
    for (fan_in, fan_out) in sizes:
        key, kw, kb = jax.random.split(key, 3)
        bound = 1.0 / (fan_in ** 0.5)
        w = jax.random.uniform(kw, (fan_in, fan_out), jnp.float32, -bound, bound)
        b = jax.random.uniform(kb, (1, fan_out), jnp.float32, -bound, bound)
        params.append((w, b))
    return params


def prepare_params(params):
    """Zero-pad feature dims to lane (128) multiples and cast weights to bf16."""
    prepped = []
    for (w, b) in params:
        fi, fo = w.shape
        pi, po = _round_up(fi, _LANE), _round_up(fo, _LANE)
        wp = jnp.zeros((pi, po), jnp.bfloat16).at[:fi, :fo].set(
            w.astype(jnp.bfloat16))
        bp = jnp.zeros((1, po), jnp.float32).at[:, :fo].set(
            b.astype(jnp.float32))
        prepped.append((wp, bp))
    return prepped


def dn_reference(x, params):
    """Pure-JAX reference mirroring the kernel's bf16-operand / f32-accum math."""
    h = x.astype(jnp.float32)
    for i, (w, b) in enumerate(params):
        h = jnp.dot(h.astype(jnp.bfloat16), w.astype(jnp.bfloat16),
                    preferred_element_type=jnp.float32) + b
        if i < len(params) - 1:
            h = jnp.maximum(h, 0.0)
    return h


if __name__ == "__main__":
    key = jax.random.PRNGKey(0)
    key, kx = jax.random.split(key)

    B = 512                                   # 2 grid steps at TM=256
    x = jax.random.normal(kx, (B, X_IN), dtype=jnp.float32)
    params = init_params(key)
    padded_params = prepare_params(params)

    out = dn_forward(x, padded_params)
    out = jax.block_until_ready(out)

    ref = dn_reference(x, params)
    assert out.shape == (B, OUT), out.shape
    assert jnp.allclose(out, ref, atol=1e-2, rtol=1e-2), (
        float(jnp.max(jnp.abs(out - ref))))

    print("KERNEL_OK")
</pallas_src>

<mosaic_0001>
module attributes {stable_mosaic.version = 11 : i64} {
  func.func @dn_kernel(%arg0: i32, %arg1: memref<256x128xf32, #tpu.memory_space<vmem>>, %arg2: memref<128x384xbf16, #tpu.memory_space<vmem>>, %arg3: memref<1x384xf32, #tpu.memory_space<vmem>>, %arg4: memref<384x384xbf16, #tpu.memory_space<vmem>>, %arg5: memref<1x384xf32, #tpu.memory_space<vmem>>, %arg6: memref<384x384xbf16, #tpu.memory_space<vmem>>, %arg7: memref<1x384xf32, #tpu.memory_space<vmem>>, %arg8: memref<384x384xbf16, #tpu.memory_space<vmem>>, %arg9: memref<1x384xf32, #tpu.memory_space<vmem>>, %arg10: memref<384x384xbf16, #tpu.memory_space<vmem>>, %arg11: memref<1x384xf32, #tpu.memory_space<vmem>>, %arg12: memref<384x128xbf16, #tpu.memory_space<vmem>>, %arg13: memref<1x128xf32, #tpu.memory_space<vmem>>, %arg14: memref<256x128xf32, #tpu.memory_space<vmem>>) attributes {dimension_semantics = [#tpu.dimension_semantics<parallel>], iteration_bounds = array<i64: 2>, scalar_prefetch = 0 : i64, scratch_operands = 0 : i64, tpu.core_type = #tpu.core_type<tc>, window_params = [{transform_indices = @transform_0, window_bounds = array<i64: 256, 128>}, {pipeline_mode = #tpu.pipeline_mode<synchronous>, transform_indices = @transform_1, window_bounds = array<i64: 128, 384>}, {pipeline_mode = #tpu.pipeline_mode<synchronous>, transform_indices = @transform_2, window_bounds = array<i64: 1, 384>}, {pipeline_mode = #tpu.pipeline_mode<synchronous>, transform_indices = @transform_3, window_bounds = array<i64: 384, 384>}, {pipeline_mode = #tpu.pipeline_mode<synchronous>, transform_indices = @transform_4, window_bounds = array<i64: 1, 384>}, {pipeline_mode = #tpu.pipeline_mode<synchronous>, transform_indices = @transform_5, window_bounds = array<i64: 384, 384>}, {pipeline_mode = #tpu.pipeline_mode<synchronous>, transform_indices = @transform_6, window_bounds = array<i64: 1, 384>}, {pipeline_mode = #tpu.pipeline_mode<synchronous>, transform_indices = @transform_7, window_bounds = array<i64: 384, 384>}, {pipeline_mode = #tpu.pipeline_mode<synchronous>, transform_indices = @transform_8, window_bounds = array<i64: 1, 384>}, {pipeline_mode = #tpu.pipeline_mode<synchronous>, transform_indices = @transform_9, window_bounds = array<i64: 384, 384>}, {pipeline_mode = #tpu.pipeline_mode<synchronous>, transform_indices = @transform_10, window_bounds = array<i64: 1, 384>}, {pipeline_mode = #tpu.pipeline_mode<synchronous>, transform_indices = @transform_11, window_bounds = array<i64: 384, 128>}, {pipeline_mode = #tpu.pipeline_mode<synchronous>, transform_indices = @transform_12, window_bounds = array<i64: 1, 128>}, {transform_indices = @transform_13, window_bounds = array<i64: 256, 128>}]} {
    %c0 = arith.constant 0 : index
    %c0_0 = arith.constant 0 : index
    %0 = vector.load %arg1[%c0, %c0_0] : memref<256x128xf32, #tpu.memory_space<vmem>>, vector<256x128xf32>
    %1 = arith.truncf %0 : vector<256x128xf32> to vector<256x128xbf16>
    %c0_1 = arith.constant 0 : index
    %c0_2 = arith.constant 0 : index
    %2 = vector.load %arg2[%c0_1, %c0_2] : memref<128x384xbf16, #tpu.memory_space<vmem>>, vector<128x384xbf16>
    %cst = arith.constant dense<0.000000e+00> : vector<256x384xf32>
    %3 = tpu.matmul %1, %2, %cst {dimension_numbers = #tpu.dot_dimension_numbers<[1], [0], [0], [1], [0, 0, 1, 1], [], []>} : vector<256x128xbf16>, vector<128x384xbf16>, vector<256x384xf32> -> vector<256x384xf32>
    %c0_3 = arith.constant 0 : index
    %c0_4 = arith.constant 0 : index
    %4 = vector.load %arg3[%c0_3, %c0_4] : memref<1x384xf32, #tpu.memory_space<vmem>>, vector<1x384xf32>
    %5 = vector.broadcast %4 : vector<1x384xf32> to vector<256x384xf32>
    %6 = arith.addf %3, %5 : vector<256x384xf32>
    %cst_5 = arith.constant 0.000000e+00 : f32
    %7 = vector.broadcast %cst_5 : f32 to vector<256x384xf32>
    %8 = arith.maximumf %6, %7 : vector<256x384xf32>
    %9 = arith.truncf %8 : vector<256x384xf32> to vector<256x384xbf16>
    %c0_6 = arith.constant 0 : index
    %c0_7 = arith.constant 0 : index
    %10 = vector.load %arg4[%c0_6, %c0_7] : memref<384x384xbf16, #tpu.memory_space<vmem>>, vector<384x384xbf16>
    %cst_8 = arith.constant dense<0.000000e+00> : vector<256x384xf32>
    %11 = tpu.matmul %9, %10, %cst_8 {dimension_numbers = #tpu.dot_dimension_numbers<[1], [0], [0], [1], [0, 0, 1, 1], [], []>} : vector<256x384xbf16>, vector<384x384xbf16>, vector<256x384xf32> -> vector<256x384xf32>
    %c0_9 = arith.constant 0 : index
    %c0_10 = arith.constant 0 : index
    %12 = vector.load %arg5[%c0_9, %c0_10] : memref<1x384xf32, #tpu.memory_space<vmem>>, vector<1x384xf32>
    %13 = vector.broadcast %12 : vector<1x384xf32> to vector<256x384xf32>
    %14 = arith.addf %11, %13 : vector<256x384xf32>
    %cst_11 = arith.constant 0.000000e+00 : f32
    %15 = vector.broadcast %cst_11 : f32 to vector<256x384xf32>
    %16 = arith.maximumf %14, %15 : vector<256x384xf32>
    %17 = arith.truncf %16 : vector<256x384xf32> to vector<256x384xbf16>
    %c0_12 = arith.constant 0 : index
    %c0_13 = arith.constant 0 : index
    %18 = vector.load %arg6[%c0_12, %c0_13] : memref<384x384xbf16, #tpu.memory_space<vmem>>, vector<384x384xbf16>
    %cst_14 = arith.constant dense<0.000000e+00> : vector<256x384xf32>
    %19 = tpu.matmul %17, %18, %cst_14 {dimension_numbers = #tpu.dot_dimension_numbers<[1], [0], [0], [1], [0, 0, 1, 1], [], []>} : vector<256x384xbf16>, vector<384x384xbf16>, vector<256x384xf32> -> vector<256x384xf32>
    %c0_15 = arith.constant 0 : index
    %c0_16 = arith.constant 0 : index
    %20 = vector.load %arg7[%c0_15, %c0_16] : memref<1x384xf32, #tpu.memory_space<vmem>>, vector<1x384xf32>
    %21 = vector.broadcast %20 : vector<1x384xf32> to vector<256x384xf32>
    %22 = arith.addf %19, %21 : vector<256x384xf32>
    %cst_17 = arith.constant 0.000000e+00 : f32
    %23 = vector.broadcast %cst_17 : f32 to vector<256x384xf32>
    %24 = arith.maximumf %22, %23 : vector<256x384xf32>
    %25 = arith.truncf %24 : vector<256x384xf32> to vector<256x384xbf16>
    %c0_18 = arith.constant 0 : index
    %c0_19 = arith.constant 0 : index
    %26 = vector.load %arg8[%c0_18, %c0_19] : memref<384x384xbf16, #tpu.memory_space<vmem>>, vector<384x384xbf16>
    %cst_20 = arith.constant dense<0.000000e+00> : vector<256x384xf32>
    %27 = tpu.matmul %25, %26, %cst_20 {dimension_numbers = #tpu.dot_dimension_numbers<[1], [0], [0], [1], [0, 0, 1, 1], [], []>} : vector<256x384xbf16>, vector<384x384xbf16>, vector<256x384xf32> -> vector<256x384xf32>
    %c0_21 = arith.constant 0 : index
    %c0_22 = arith.constant 0 : index
    %28 = vector.load %arg9[%c0_21, %c0_22] : memref<1x384xf32, #tpu.memory_space<vmem>>, vector<1x384xf32>
    %29 = vector.broadcast %28 : vector<1x384xf32> to vector<256x384xf32>
    %30 = arith.addf %27, %29 : vector<256x384xf32>
    %cst_23 = arith.constant 0.000000e+00 : f32
    %31 = vector.broadcast %cst_23 : f32 to vector<256x384xf32>
    %32 = arith.maximumf %30, %31 : vector<256x384xf32>
    %33 = arith.truncf %32 : vector<256x384xf32> to vector<256x384xbf16>
    %c0_24 = arith.constant 0 : index
    %c0_25 = arith.constant 0 : index
    %34 = vector.load %arg10[%c0_24, %c0_25] : memref<384x384xbf16, #tpu.memory_space<vmem>>, vector<384x384xbf16>
    %cst_26 = arith.constant dense<0.000000e+00> : vector<256x384xf32>
    %35 = tpu.matmul %33, %34, %cst_26 {dimension_numbers = #tpu.dot_dimension_numbers<[1], [0], [0], [1], [0, 0, 1, 1], [], []>} : vector<256x384xbf16>, vector<384x384xbf16>, vector<256x384xf32> -> vector<256x384xf32>
    %c0_27 = arith.constant 0 : index
    %c0_28 = arith.constant 0 : index
    %36 = vector.load %arg11[%c0_27, %c0_28] : memref<1x384xf32, #tpu.memory_space<vmem>>, vector<1x384xf32>
    %37 = vector.broadcast %36 : vector<1x384xf32> to vector<256x384xf32>
    %38 = arith.addf %35, %37 : vector<256x384xf32>
    %cst_29 = arith.constant 0.000000e+00 : f32
    %39 = vector.broadcast %cst_29 : f32 to vector<256x384xf32>
    %40 = arith.maximumf %38, %39 : vector<256x384xf32>
    %41 = arith.truncf %40 : vector<256x384xf32> to vector<256x384xbf16>
    %c0_30 = arith.constant 0 : index
    %c0_31 = arith.constant 0 : index
    %42 = vector.load %arg12[%c0_30, %c0_31] : memref<384x128xbf16, #tpu.memory_space<vmem>>, vector<384x128xbf16>
    %cst_32 = arith.constant dense<0.000000e+00> : vector<256x128xf32>
    %43 = tpu.matmul %41, %42, %cst_32 {dimension_numbers = #tpu.dot_dimension_numbers<[1], [0], [0], [1], [0, 0, 1, 1], [], []>} : vector<256x384xbf16>, vector<384x128xbf16>, vector<256x128xf32> -> vector<256x128xf32>
    %c0_33 = arith.constant 0 : index
    %c0_34 = arith.constant 0 : index
    %44 = vector.load %arg13[%c0_33, %c0_34] : memref<1x128xf32, #tpu.memory_space<vmem>>, vector<1x128xf32>
    %45 = vector.broadcast %44 : vector<1x128xf32> to vector<256x128xf32>
    %46 = arith.addf %43, %45 : vector<256x128xf32>
    %c0_35 = arith.constant 0 : index
    %c0_36 = arith.constant 0 : index
    %47 = vector.load %arg14[%c0_35, %c0_36] : memref<256x128xf32, #tpu.memory_space<vmem>>, vector<256x128xf32>
    tpu.vector_store %arg14[%c0_35, %c0_36], %46 {strides = array<i32>} : memref<256x128xf32, #tpu.memory_space<vmem>>, vector<256x128xf32>,
    return
  }
  func.func @transform_0(%arg0: i32) -> (i32, i32) {
    %c0_i32 = arith.constant 0 : i32
    %c0_i32_0 = arith.constant 0 : i32
    return %arg0, %c0_i32 : i32, i32
  }
  func.func @transform_1(%arg0: i32) -> (i32, i32) {
    %c0_i32 = arith.constant 0 : i32
    %c0_i32_0 = arith.constant 0 : i32
    %c0_i32_1 = arith.constant 0 : i32
    return %c0_i32, %c0_i32_0 : i32, i32
  }
  func.func @transform_2(%arg0: i32) -> (i32, i32) {
    %c0_i32 = arith.constant 0 : i32
    %c0_i32_0 = arith.constant 0 : i32
    %c0_i32_1 = arith.constant 0 : i32
    return %c0_i32, %c0_i32_0 : i32, i32
  }
  func.func @transform_3(%arg0: i32) -> (i32, i32) {
    %c0_i32 = arith.constant 0 : i32
    %c0_i32_0 = arith.constant 0 : i32
    %c0_i32_1 = arith.constant 0 : i32
    return %c0_i32, %c0_i32_0 : i32, i32
  }
  func.func @transform_4(%arg0: i32) -> (i32, i32) {
    %c0_i32 = arith.constant 0 : i32
    %c0_i32_0 = arith.constant 0 : i32
    %c0_i32_1 = arith.constant 0 : i32
    return %c0_i32, %c0_i32_0 : i32, i32
  }
  func.func @transform_5(%arg0: i32) -> (i32, i32) {
    %c0_i32 = arith.constant 0 : i32
    %c0_i32_0 = arith.constant 0 : i32
    %c0_i32_1 = arith.constant 0 : i32
    return %c0_i32, %c0_i32_0 : i32, i32
  }
  func.func @transform_6(%arg0: i32) -> (i32, i32) {
    %c0_i32 = arith.constant 0 : i32
    %c0_i32_0 = arith.constant 0 : i32
    %c0_i32_1 = arith.constant 0 : i32
    return %c0_i32, %c0_i32_0 : i32, i32
  }
  func.func @transform_7(%arg0: i32) -> (i32, i32) {
    %c0_i32 = arith.constant 0 : i32
    %c0_i32_0 = arith.constant 0 : i32
    %c0_i32_1 = arith.constant 0 : i32
    return %c0_i32, %c0_i32_0 : i32, i32
  }
  func.func @transform_8(%arg0: i32) -> (i32, i32) {
    %c0_i32 = arith.constant 0 : i32
    %c0_i32_0 = arith.constant 0 : i32
    %c0_i32_1 = arith.constant 0 : i32
    return %c0_i32, %c0_i32_0 : i32, i32
  }
  func.func @transform_9(%arg0: i32) -> (i32, i32) {
    %c0_i32 = arith.constant 0 : i32
    %c0_i32_0 = arith.constant 0 : i32
    %c0_i32_1 = arith.constant 0 : i32
    return %c0_i32, %c0_i32_0 : i32, i32
  }
  func.func @transform_10(%arg0: i32) -> (i32, i32) {
    %c0_i32 = arith.constant 0 : i32
    %c0_i32_0 = arith.constant 0 : i32
    %c0_i32_1 = arith.constant 0 : i32
    return %c0_i32, %c0_i32_0 : i32, i32
  }
  func.func @transform_11(%arg0: i32) -> (i32, i32) {
    %c0_i32 = arith.constant 0 : i32
    %c0_i32_0 = arith.constant 0 : i32
    %c0_i32_1 = arith.constant 0 : i32
    return %c0_i32, %c0_i32_0 : i32, i32
  }
  func.func @transform_12(%arg0: i32) -> (i32, i32) {
    %c0_i32 = arith.constant 0 : i32
    %c0_i32_0 = arith.constant 0 : i32
    %c0_i32_1 = arith.constant 0 : i32
    return %c0_i32, %c0_i32_0 : i32, i32
  }
  func.func @transform_13(%arg0: i32) -> (i32, i32) {
    %c0_i32 = arith.constant 0 : i32
    %c0_i32_0 = arith.constant 0 : i32
    return %arg0, %c0_i32 : i32, i32
  }
}

</mosaic_0001>

<llo_original>
// kernel: dn_forward.1
$region0: #{dn_forward.1}
  #allocation0 [shape = 'u32[]', space=smem, size = 0x4, offset = 0x4, fixed_abs, tag = 'smem constant byte address 0x4 - core index']
  #allocation1 [shape = 'u32[144,128]{1,0:T(1,128)}', space=vmem, size = 0x12000, scoped, tag = 'internal scratch']
  %s0 = inlined_call_operand.vmem [shape: f32[512,128], index: 0, kind: input, shape index: {}]
  %s1 = inlined_call_operand.vmem [shape: bf16[128,384], index: 1, kind: input, shape index: {}]
  %s2 = inlined_call_operand.hbm [shape: f32[1,384], index: 2, kind: input, shape index: {}]
  %s3 = inlined_call_operand.vmem [shape: bf16[384,384], index: 3, kind: input, shape index: {}]
  %s4 = inlined_call_operand.hbm [shape: f32[1,384], index: 4, kind: input, shape index: {}]
  %s5 = inlined_call_operand.vmem [shape: bf16[384,384], index: 5, kind: input, shape index: {}]
  %s6 = inlined_call_operand.hbm [shape: f32[1,384], index: 6, kind: input, shape index: {}]
  %s7 = inlined_call_operand.vmem [shape: bf16[384,384], index: 7, kind: input, shape index: {}]
  %s8 = inlined_call_operand.hbm [shape: f32[1,384], index: 8, kind: input, shape index: {}]
  %s9 = inlined_call_operand.vmem [shape: bf16[384,384], index: 9, kind: input, shape index: {}]
  %s10 = inlined_call_operand.hbm [shape: f32[1,384], index: 10, kind: input, shape index: {}]
  %s11 = inlined_call_operand.vmem [shape: bf16[384,128], index: 11, kind: input, shape index: {}]
  %s12 = inlined_call_operand.vmem [shape: f32[1,128], index: 12, kind: input, shape index: {}]
  %s13 = inlined_call_operand.vmem [shape: f32[512,128], index: 13, kind: output, shape index: {}]
  %s14 = sld [smem:[#allocation0]]
  $region105: #{dn_forward.1} parent=0
    _
  %s16 = ssub.s32 1, %s14
  %s17 = scalar_select 0, %s16, %s14
  $region1: #{dn_forward.1} parent=0
    #allocation2 [shape = 'u8[1536]{0}', space=vmem, size = 0x800, scoped, tag = 'input window, operand 2, single buffered']
    #allocation3 [shape = 's32[2]{0}', space=sflag, size = 0x8, scoped, tag = 'scoped memory for dn_forward.1']
    #allocation4 [shape = 'u8[1536]{0}', space=vmem, size = 0x800, scoped, tag = 'input window, operand 4, single buffered']
    #allocation5 [shape = 's32[1]{0}', space=sflag, size = 0x4, scoped, tag = 'scoped memory for dn_forward.1']
    #allocation6 [shape = 'u8[1536]{0}', space=vmem, size = 0x800, scoped, tag = 'input window, operand 6, single buffered']
    #allocation7 [shape = 'u8[1536]{0}', space=vmem, size = 0x800, scoped, tag = 'input window, operand 8, single buffered']
    #allocation8 [shape = 's32[1]{0}', space=sflag, size = 0x4, scoped, tag = 'scoped memory for dn_forward.1']
    #allocation9 [shape = 'u8[1536]{0}', space=vmem, size = 0x800, scoped, tag = 'input window, operand 10, single buffered']
    %18 = vsyncpa [#allocation3], 0
    %19 = vsyncpa [#allocation5], 0
    %20 = vsyncpa [#allocation8], 0
    loop: start=0, step=1, limit=4
    $region2: #{dn_forward.1} parent=1 // loop_pre_header
      _
    $region3: #{dn_forward.1} parent=1 // loop_header
      %s22 = sphi 0, %s26
      %p23 = scmp.ge.s32.totalorder %s22, 4
      %s32 = sphi 0, %s34
      %s35 = sphi 0, %s32
      %s36 = sphi 0, %s35
      %s52 = sphi 0, %s36
      %s56 = sphi 0, %s56
      %s58 = sphi 0, %s56
      %s59 = sphi 0, %s58
      %s73 = sphi 0, %s59
      %s77 = sphi 0, %s77
      %s79 = sphi 0, %s77
      %s80 = sphi 0, %s79
      %s94 = sphi 0, %s80
      %s98 = sphi 0, %s98
      %s100 = sphi 0, %s98
      %s101 = sphi 0, %s100
      %s115 = sphi 0, %s101
      %s119 = sphi 0, %s119
      %s121 = sphi 0, %s119
      %s122 = sphi 0, %s121
      %s136 = sphi 0, %s122
      %s140 = sphi 0, %s140
      %s142 = sphi 0, %s140
      %s143 = sphi 0, %s142
      %s157 = sphi 0, %s143
      %s161 = sphi 0, %s161
      %s163 = sphi 0, %s161
      %s164 = sphi 0, %s163
      %s178 = sphi 0, %s164
      %s182 = sphi 0, %s182
      %s184 = sphi 0, %s182
      %s185 = sphi 0, %s184
      %s199 = sphi 0, %s185
      %s203 = sphi 0, %s203
      %s205 = sphi 0, %s203
      %s206 = sphi 0, %s205
      %s220 = sphi 0, %s206
      %s224 = sphi 0, %s224
      %s226 = sphi 0, %s224
      %s227 = sphi 0, %s226
      %s241 = sphi 0, %s227
      %s245 = sphi 0, %s245
      %s247 = sphi 0, %s245
      %s248 = sphi 0, %s247
      %s262 = sphi 0, %s248
      %s266 = sphi 0, %s266
      %s268 = sphi 0, %s266
      %s269 = sphi 0, %s268
      %s283 = sphi 0, %s269
      %s287 = sphi 0, %s287
      %s289 = sphi 0, %s287
      %s290 = sphi 0, %s289
      %s304 = sphi 0, %s290
      %s310 = sphi 0, %s312
      %s313 = sphi 0, %s310
      %s314 = sphi 0, %s313
      %s330 = sphi 0, %s314
    $region4: #{dn_forward.1} parent=1 // loop_header_branch
      %25 = sbr.rel (%p23) target = $region8
    $region5: #{dn_forward.1} parent=1 // loop_body
      %s27 = ssub.s32 %s22, 1
      %s28 = ssub.s32 %s22, 2
      %s29 = sadd.s32 %s22, 1
      %s30 = ssub.s32 %s22, %s29
      %p31 = scmp.eq.s32.totalorder %s30, 0
      %s33 = sadd.s32 %s32, 1
      %s34 = scalar_select %p31, %s32, %s33
      %p37 = pneg %p31
      %p38 = scmp.eq.s32.totalorder %s22, 1
      %p39 = por %p37, %p38
      %p40 = scmp.ne.s32.totalorder %s32, %s35
      %p41 = scmp.eq.s32.totalorder %s22, 0
      %p42 = por %p40, %p41
      %p43 = scmp.ne.s32.totalorder %s32, %s35
      %p44 = scmp.eq.s32.totalorder %s27, 1
      %p45 = por %p43, %p44
      %p46 = scmp.ne.s32.totalorder %s35, %s36
      %p47 = scmp.eq.s32.totalorder %s27, 0
      %p48 = por %p46, %p47
      %p49 = scmp.ne.s32.totalorder %s35, %s36
      %p50 = scmp.eq.s32.totalorder %s28, 1
      %p51 = por %p49, %p50
      %p53 = scmp.ne.s32.totalorder %s36, %s52
      %p54 = scmp.eq.s32.totalorder %s28, 0
      %p55 = por %p53, %p54
      %s57 = sadd.s32 %s56, 1
      %p60 = scmp.eq.s32.totalorder %s22, 1
      %p61 = scmp.ne.s32.totalorder %s56, %s58
      %p62 = scmp.eq.s32.totalorder %s22, 0
      %p63 = por %p61, %p62
      %p64 = scmp.ne.s32.totalorder %s56, %s58
      %p65 = scmp.eq.s32.totalorder %s27, 1
      %p66 = por %p64, %p65
      %p67 = scmp.ne.s32.totalorder %s58, %s59
      %p68 = scmp.eq.s32.totalorder %s27, 0
      %p69 = por %p67, %p68
      %p70 = scmp.ne.s32.totalorder %s58, %s59
      %p71 = scmp.eq.s32.totalorder %s28, 1
      %p72 = por %p70, %p71
      %p74 = scmp.ne.s32.totalorder %s59, %s73
      %p75 = scmp.eq.s32.totalorder %s28, 0
      %p76 = por %p74, %p75
      %s78 = sadd.s32 %s77, 1
      %p81 = scmp.eq.s32.totalorder %s22, 1
      %p82 = scmp.ne.s32.totalorder %s77, %s79
      %p83 = scmp.eq.s32.totalorder %s22, 0
      %p84 = por %p82, %p83
      %p85 = scmp.ne.s32.totalorder %s77, %s79
      %p86 = scmp.eq.s32.totalorder %s27, 1
      %p87 = por %p85, %p86
      %p88 = scmp.ne.s32.totalorder %s79, %s80
      %p89 = scmp.eq.s32.totalorder %s27, 0
      %p90 = por %p88, %p89
      %p91 = scmp.ne.s32.totalorder %s79, %s80
      %p92 = scmp.eq.s32.totalorder %s28, 1
      %p93 = por %p91, %p92
      %p95 = scmp.ne.s32.totalorder %s80, %s94
      %p96 = scmp.eq.s32.totalorder %s28, 0
      %p97 = por %p95, %p96
      %s99 = sadd.s32 %s98, 1
      %p102 = scmp.eq.s32.totalorder %s22, 1
      %p103 = scmp.ne.s32.totalorder %s98, %s100
      %p104 = scmp.eq.s32.totalorder %s22, 0
      %p105 = por %p103, %p104
      %p106 = scmp.ne.s32.totalorder %s98, %s100
      %p107 = scmp.eq.s32.totalorder %s27, 1
      %p108 = por %p106, %p107
      %p109 = scmp.ne.s32.totalorder %s100, %s101
      %p110 = scmp.eq.s32.totalorder %s27, 0
      %p111 = por %p109, %p110
      %p112 = scmp.ne.s32.totalorder %s100, %s101
      %p113 = scmp.eq.s32.totalorder %s28, 1
      %p114 = por %p112, %p113
      %p116 = scmp.ne.s32.totalorder %s101, %s115
      %p117 = scmp.eq.s32.totalorder %s28, 0
      %p118 = por %p116, %p117
      %s120 = sadd.s32 %s119, 1
      %p123 = scmp.eq.s32.totalorder %s22, 1
      %p124 = scmp.ne.s32.totalorder %s119, %s121
      %p125 = scmp.eq.s32.totalorder %s22, 0
      %p126 = por %p124, %p125
      %p127 = scmp.ne.s32.totalorder %s119, %s121
      %p128 = scmp.eq.s32.totalorder %s27, 1
      %p129 = por %p127, %p128
      %p130 = scmp.ne.s32.totalorder %s121, %s122
      %p131 = scmp.eq.s32.totalorder %s27, 0
      %p132 = por %p130, %p131
      %p133 = scmp.ne.s32.totalorder %s121, %s122
      %p134 = scmp.eq.s32.totalorder %s28, 1
      %p135 = por %p133, %p134
      %p137 = scmp.ne.s32.totalorder %s122, %s136
      %p138 = scmp.eq.s32.totalorder %s28, 0
      %p139 = por %p137, %p138
      %s141 = sadd.s32 %s140, 1
      %p144 = scmp.eq.s32.totalorder %s22, 1
      %p145 = scmp.ne.s32.totalorder %s140, %s142
      %p146 = scmp.eq.s32.totalorder %s22, 0
      %p147 = por %p145, %p146
      %p148 = scmp.ne.s32.totalorder %s140, %s142
      %p149 = scmp.eq.s32.totalorder %s27, 1
      %p150 = por %p148, %p149
      %p151 = scmp.ne.s32.totalorder %s142, %s143
      %p152 = scmp.eq.s32.totalorder %s27, 0
      %p153 = por %p151, %p152
      %p154 = scmp.ne.s32.totalorder %s142, %s143
      %p155 = scmp.eq.s32.totalorder %s28, 1
      %p156 = por %p154, %p155
      %p158 = scmp.ne.s32.totalorder %s143, %s157
      %p159 = scmp.eq.s32.totalorder %s28, 0
      %p160 = por %p158, %p159
      %s162 = sadd.s32 %s161, 1
      %p165 = scmp.eq.s32.totalorder %s22, 1
      %p166 = scmp.ne.s32.totalorder %s161, %s163
      %p167 = scmp.eq.s32.totalorder %s22, 0
      %p168 = por %p166, %p167
      %p169 = scmp.ne.s32.totalorder %s161, %s163
      %p170 = scmp.eq.s32.totalorder %s27, 1
      %p171 = por %p169, %p170
      %p172 = scmp.ne.s32.totalorder %s163, %s164
      %p173 = scmp.eq.s32.totalorder %s27, 0
      %p174 = por %p172, %p173
      %p175 = scmp.ne.s32.totalorder %s163, %s164
      %p176 = scmp.eq.s32.totalorder %s28, 1
      %p177 = por %p175, %p176
      %p179 = scmp.ne.s32.totalorder %s164, %s178
      %p180 = scmp.eq.s32.totalorder %s28, 0
      %p181 = por %p179, %p180
      %s183 = sadd.s32 %s182, 1
      %p186 = scmp.eq.s32.totalorder %s22, 1
      %p187 = scmp.ne.s32.totalorder %s182, %s184
      %p188 = scmp.eq.s32.totalorder %s22, 0
      %p189 = por %p187, %p188
      %p190 = scmp.ne.s32.totalorder %s182, %s184
      %p191 = scmp.eq.s32.totalorder %s27, 1
      %p192 = por %p190, %p191
      %p193 = scmp.ne.s32.totalorder %s184, %s185
      %p194 = scmp.eq.s32.totalorder %s27, 0
      %p195 = por %p193, %p194
      %p196 = scmp.ne.s32.totalorder %s184, %s185
      %p197 = scmp.eq.s32.totalorder %s28, 1
      %p198 = por %p196, %p197
      %p200 = scmp.ne.s32.totalorder %s185, %s199
      %p201 = scmp.eq.s32.totalorder %s28, 0
      %p202 = por %p200, %p201
      %s204 = sadd.s32 %s203, 1
      %p207 = scmp.eq.s32.totalorder %s22, 1
      %p208 = scmp.ne.s32.totalorder %s203, %s205
      %p209 = scmp.eq.s32.totalorder %s22, 0
      %p210 = por %p208, %p209
      %p211 = scmp.ne.s32.totalorder %s203, %s205
      %p212 = scmp.eq.s32.totalorder %s27, 1
      %p213 = por %p211, %p212
      %p214 = scmp.ne.s32.totalorder %s205, %s206
      %p215 = scmp.eq.s32.totalorder %s27, 0
      %p216 = por %p214, %p215
      %p217 = scmp.ne.s32.totalorder %s205, %s206
      %p218 = scmp.eq.s32.totalorder %s28, 1
      %p219 = por %p217, %p218
      %p221 = scmp.ne.s32.totalorder %s206, %s220
      %p222 = scmp.eq.s32.totalorder %s28, 0
      %p223 = por %p221, %p222
      %s225 = sadd.s32 %s224, 1
      %p228 = scmp.eq.s32.totalorder %s22, 1
      %p229 = scmp.ne.s32.totalorder %s224, %s226
      %p230 = scmp.eq.s32.totalorder %s22, 0
      %p231 = por %p229, %p230
      %p232 = scmp.ne.s32.totalorder %s224, %s226
      %p233 = scmp.eq.s32.totalorder %s27, 1
      %p234 = por %p232, %p233
      %p235 = scmp.ne.s32.totalorder %s226, %s227
      %p236 = scmp.eq.s32.totalorder %s27, 0
      %p237 = por %p235, %p236
      %p238 = scmp.ne.s32.totalorder %s226, %s227
      %p239 = scmp.eq.s32.totalorder %s28, 1
      %p240 = por %p238, %p239
      %p242 = scmp.ne.s32.totalorder %s227, %s241
      %p243 = scmp.eq.s32.totalorder %s28, 0
      %p244 = por %p242, %p243
      %s246 = sadd.s32 %s245, 1
      %p249 = scmp.eq.s32.totalorder %s22, 1
      %p250 = scmp.ne.s32.totalorder %s245, %s247
      %p251 = scmp.eq.s32.totalorder %s22, 0
      %p252 = por %p250, %p251
      %p253 = scmp.ne.s32.totalorder %s245, %s247
      %p254 = scmp.eq.s32.totalorder %s27, 1
      %p255 = por %p253, %p254
      %p256 = scmp.ne.s32.totalorder %s247, %s248
      %p257 = scmp.eq.s32.totalorder %s27, 0
      %p258 = por %p256, %p257
      %p259 = scmp.ne.s32.totalorder %s247, %s248
      %p260 = scmp.eq.s32.totalorder %s28, 1
      %p261 = por %p259, %p260
      %p263 = scmp.ne.s32.totalorder %s248, %s262
      %p264 = scmp.eq.s32.totalorder %s28, 0
      %p265 = por %p263, %p264
      %s267 = sadd.s32 %s266, 1
      %p270 = scmp.eq.s32.totalorder %s22, 1
      %p271 = scmp.ne.s32.totalorder %s266, %s268
      %p272 = scmp.eq.s32.totalorder %s22, 0
      %p273 = por %p271, %p272
      %p274 = scmp.ne.s32.totalorder %s266, %s268
      %p275 = scmp.eq.s32.totalorder %s27, 1
      %p276 = por %p274, %p275
      %p277 = scmp.ne.s32.totalorder %s268, %s269
      %p278 = scmp.eq.s32.totalorder %s27, 0
      %p279 = por %p277, %p278
      %p280 = scmp.ne.s32.totalorder %s268, %s269
      %p281 = scmp.eq.s32.totalorder %s28, 1
      %p282 = por %p280, %p281
      %p284 = scmp.ne.s32.totalorder %s269, %s283
      %p285 = scmp.eq.s32.totalorder %s28, 0
      %p286 = por %p284, %p285
      %s288 = sadd.s32 %s287, 1
      %p291 = scmp.eq.s32.totalorder %s22, 1
      %p292 = scmp.ne.s32.totalorder %s287, %s289
      %p293 = scmp.eq.s32.totalorder %s22, 0
      %p294 = por %p292, %p293
      %p295 = scmp.ne.s32.totalorder %s287, %s289
      %p296 = scmp.eq.s32.totalorder %s27, 1
      %p297 = por %p295, %p296
      %p298 = scmp.ne.s32.totalorder %s289, %s290
      %p299 = scmp.eq.s32.totalorder %s27, 0
      %p300 = por %p298, %p299
      %p301 = scmp.ne.s32.totalorder %s289, %s290
      %p302 = scmp.eq.s32.totalorder %s28, 1
      %p303 = por %p301, %p302
      %p305 = scmp.ne.s32.totalorder %s290, %s304
      %p306 = scmp.eq.s32.totalorder %s28, 0
      %p307 = por %p305, %p306
      %s308 = ssub.s32 %s22, %s29
      %p309 = scmp.eq.s32.totalorder %s308, 0
      %s311 = sadd.s32 %s310, 1
      %s312 = scalar_select %p309, %s310, %s311
      %p315 = pneg %p309
      %p316 = scmp.eq.s32.totalorder %s22, 1
      %p317 = por %p315, %p316
      %p318 = scmp.ne.s32.totalorder %s310, %s313
      %p319 = scmp.eq.s32.totalorder %s22, 0
      %p320 = por %p318, %p319
      %p321 = scmp.ne.s32.totalorder %s310, %s313
      %p322 = scmp.eq.s32.totalorder %s27, 1
      %p323 = por %p321, %p322
      %p324 = scmp.ne.s32.totalorder %s313, %s314
      %p325 = scmp.eq.s32.totalorder %s27, 0
      %p326 = por %p324, %p325
      %p327 = scmp.ne.s32.totalorder %s313, %s314
      %p328 = scmp.eq.s32.totalorder %s28, 1
      %p329 = por %p327, %p328
      %p331 = scmp.ne.s32.totalorder %s314, %s330
      %p332 = scmp.eq.s32.totalorder %s28, 0
      %p333 = por %p331, %p332
      %p334 = scmp.le.s32.totalorder 1, %s22
      %p335 = scmp.lt.s32.totalorder %s22, 3
      %p336 = pnand %p334, %p335
      %p337 = pneg %p336
      // Predicated region
      $region9: #{dn_forward.1} parent=5 // pred_check
        _
      $region10: #{dn_forward.1} parent=5 // pred_check_branch
        %339 = sbr.rel (%p336) target = $region12
      $region11: #{dn_forward.1} parent=5 // pred_region
        %s340 = ssub.s32 %s22, 1
        // Predicated region
        $region13: #{dn_forward.1} parent=11 // pred_check
          %p341 = pneg %p69
        $region14: #{dn_forward.1} parent=11 // pred_check_branch
          %343 = sbr.rel (%p341) target = $region16
        $region15: #{dn_forward.1} parent=11 // pred_region
          _
        $region16: #{dn_forward.1} parent=11 // pred_fallthru
          _
        // Predicated region
        $region17: #{dn_forward.1} parent=11 // pred_check
          %p344 = pneg %p90
        $region18: #{dn_forward.1} parent=11 // pred_check_branch
          %346 = sbr.rel (%p344) target = $region20
        $region19: #{dn_forward.1} parent=11 // pred_region
          %s348 = ssub.s32 48, 48
          %349 = vsyncadd [#allocation3], %s348
          %s351 = sshll.u32 [#allocation2], 4
          %s352 = int_to_ptr.vmem [resolvable:$true] %s351
          %354 = dma.hbm_to_vmem [thread:$0]  %s2, 48, %s352, [#allocation3]
        $region20: #{dn_forward.1} parent=11 // pred_fallthru
          _
        // Predicated region
        $region21: #{dn_forward.1} parent=11 // pred_check
          %p355 = pneg %p111
        $region22: #{dn_forward.1} parent=11 // pred_check_branch
          %357 = sbr.rel (%p355) target = $region24
        $region23: #{dn_forward.1} parent=11 // pred_region
          _
        $region24: #{dn_forward.1} parent=11 // pred_fallthru
          _
        // Predicated region
        $region25: #{dn_forward.1} parent=11 // pred_check
          %p358 = pneg %p132
        $region26: #{dn_forward.1} parent=11 // pred_check_branch
          %360 = sbr.rel (%p358) target = $region28
        $region27: #{dn_forward.1} parent=11 // pred_region
          %s362 = ssub.s32 48, 48
          %363 = vsyncadd [#allocation5], %s362
          %s365 = sshll.u32 [#allocation4], 4
          %s366 = int_to_ptr.vmem [resolvable:$true] %s365
          %368 = dma.hbm_to_vmem [thread:$0]  %s4, 48, %s366, [#allocation5]
        $region28: #{dn_forward.1} parent=11 // pred_fallthru
          _
        // Predicated region
        $region29: #{dn_forward.1} parent=11 // pred_check
          %p369 = pneg %p153
        $region30: #{dn_forward.1} parent=11 // pred_check_branch
          %371 = sbr.rel (%p369) target = $region32
        $region31: #{dn_forward.1} parent=11 // pred_region
          _
        $region32: #{dn_forward.1} parent=11 // pred_fallthru
          _
        // Predicated region
        $region33: #{dn_forward.1} parent=11 // pred_check
          %p372 = pneg %p174
        $region34: #{dn_forward.1} parent=11 // pred_check_branch
          %374 = sbr.rel (%p372) target = $region36
        $region35: #{dn_forward.1} parent=11 // pred_region
          %s376 = ssub.s32 48, 48
          %377 = vsyncadd [#allocation5], %s376
          %s379 = sshll.u32 [#allocation6], 4
          %s380 = int_to_ptr.vmem [resolvable:$true] %s379
          %382 = dma.hbm_to_vmem [thread:$0]  %s6, 48, %s380, [#allocation5]
        $region36: #{dn_forward.1} parent=11 // pred_fallthru
          _
        // Predicated region
        $region37: #{dn_forward.1} parent=11 // pred_check
          %p383 = pneg %p195
        $region38: #{dn_forward.1} parent=11 // pred_check_branch
          %385 = sbr.rel (%p383) target = $region40
        $region39: #{dn_forward.1} parent=11 // pred_region
          _
        $region40: #{dn_forward.1} parent=11 // pred_fallthru
          _
        // Predicated region
        $region41: #{dn_forward.1} parent=11 // pred_check
          %p386 = pneg %p216
        $region42: #{dn_forward.1} parent=11 // pred_check_branch
          %388 = sbr.rel (%p386) target = $region44
        $region43: #{dn_forward.1} parent=11 // pred_region
          %s390 = ssub.s32 48, 48
          %391 = vsyncadd [#allocation8], %s390
          %s393 = sshll.u32 [#allocation7], 4
          %s394 = int_to_ptr.vmem [resolvable:$true] %s393
          %396 = dma.hbm_to_vmem [thread:$0]  %s8, 48, %s394, [#allocation8]
        $region44: #{dn_forward.1} parent=11 // pred_fallthru
          _
        // Predicated region
        $region45: #{dn_forward.1} parent=11 // pred_check
          %p397 = pneg %p237
        $region46: #{dn_forward.1} parent=11 // pred_check_branch
          %399 = sbr.rel (%p397) target = $region48
        $region47: #{dn_forward.1} parent=11 // pred_region
          _
        $region48: #{dn_forward.1} parent=11 // pred_fallthru
          _
        // Predicated region
        $region49: #{dn_forward.1} parent=11 // pred_check
          %p400 = pneg %p258
        $region50: #{dn_forward.1} parent=11 // pred_check_branch
          %402 = sbr.rel (%p400) target = $region52
        $region51: #{dn_forward.1} parent=11 // pred_region
          %s404 = ssub.s32 48, 48
          %405 = vsyncadd [#allocation8], %s404
          %s407 = sshll.u32 [#allocation9], 4
          %s408 = int_to_ptr.vmem [resolvable:$true] %s407
          %410 = dma.hbm_to_vmem [thread:$0]  %s10, 48, %s408, [#allocation8]
        $region52: #{dn_forward.1} parent=11 // pred_fallthru
          _
        // Predicated region
        $region53: #{dn_forward.1} parent=11 // pred_check
          %p411 = pneg %p279
        $region54: #{dn_forward.1} parent=11 // pred_check_branch
          %413 = sbr.rel (%p411) target = $region56
        $region55: #{dn_forward.1} parent=11 // pred_region
          _
        $region56: #{dn_forward.1} parent=11 // pred_fallthru
          _
        // Predicated region
        $region57: #{dn_forward.1} parent=11 // pred_check
          %p414 = pneg %p300
        $region58: #{dn_forward.1} parent=11 // pred_check_branch
          %416 = sbr.rel (%p414) target = $region60
        $region59: #{dn_forward.1} parent=11 // pred_region
          _
        $region60: #{dn_forward.1} parent=11 // pred_fallthru
          _
      $region12: #{dn_forward.1} parent=5 // pred_fallthru
        _
      %p417 = scmp.lt.s32.totalorder %s22, 2
      // Predicated region
      $region61: #{dn_forward.1} parent=5 // pred_check
        %p418 = pneg %p417
      $region62: #{dn_forward.1} parent=5 // pred_check_branch
        %420 = sbr.rel (%p418) target = $region64
      $region63: #{dn_forward.1} parent=5 // pred_region
        // Predicated region
        $region65: #{dn_forward.1} parent=63 // pred_check
          %p421 = pneg %p42
        $region66: #{dn_forward.1} parent=63 // pred_check_branch
          %423 = sbr.rel (%p421) target = $region68
        $region67: #{dn_forward.1} parent=63 // pred_region
          %s424 = smul.u32 32, %s22
          %p425 = scmp.lt.s32.totalorder %s424, 63
          %s426 = scalar_select %p425, %s424, 63
          %s427 = smul.addr %s426, 8
          %s428 = scalar_lea.vmem %s0, %s427
          %s429 = smul.u32 32, %s22
        $region68: #{dn_forward.1} parent=63 // pred_fallthru
          _
      $region64: #{dn_forward.1} parent=5 // pred_fallthru
        _
      %p430 = scmp.le.s32.totalorder 1, %s22
      %p431 = scmp.lt.s32.totalorder %s22, 3
      %p432 = pnand %p430, %p431
      %p433 = pneg %p432
      // Predicated region
      $region69: #{dn_forward.1} parent=5 // pred_check
        _
      $region70: #{dn_forward.1} parent=5 // pred_check_branch
        %435 = sbr.rel (%p432) target = $region72
      $region71: #{dn_forward.1} parent=5 // pred_region
        %s436 = ssub.s32 %s22, 1
        // Predicated region
        $region73: #{dn_forward.1} parent=71 // pred_check
          %p437 = pneg %p90
        $region74: #{dn_forward.1} parent=71 // pred_check_branch
          %439 = sbr.rel (%p437) target = $region76
        $region75: #{dn_forward.1} parent=71 // pred_region
          %440 = dma.done [#allocation3], 48
        $region76: #{dn_forward.1} parent=71 // pred_fallthru
          _
        // Predicated region
        $region77: #{dn_forward.1} parent=71 // pred_check
          %p441 = pneg %p132
        $region78: #{dn_forward.1} parent=71 // pred_check_branch
          %443 = sbr.rel (%p441) target = $region80
        $region79: #{dn_forward.1} parent=71 // pred_region
          %444 = dma.done [#allocation5], 48
        $region80: #{dn_forward.1} parent=71 // pred_fallthru
          _
        // Predicated region
        $region81: #{dn_forward.1} parent=71 // pred_check
          %p445 = pneg %p174
        $region82: #{dn_forward.1} parent=71 // pred_check_branch
          %447 = sbr.rel (%p445) target = $region84
        $region83: #{dn_forward.1} parent=71 // pred_region
          %448 = dma.done [#allocation5], 48
        $region84: #{dn_forward.1} parent=71 // pred_fallthru
          _
        // Predicated region
        $region85: #{dn_forward.1} parent=71 // pred_check
          %p449 = pneg %p216
        $region86: #{dn_forward.1} parent=71 // pred_check_branch
          %451 = sbr.rel (%p449) target = $region88
        $region87: #{dn_forward.1} parent=71 // pred_region
          %452 = dma.done [#allocation8], 48
        $region88: #{dn_forward.1} parent=71 // pred_fallthru
          _
        // Predicated region
        $region89: #{dn_forward.1} parent=71 // pred_check
          %p453 = pneg %p258
        $region90: #{dn_forward.1} parent=71 // pred_check_branch
          %455 = sbr.rel (%p453) target = $region92
        $region91: #{dn_forward.1} parent=71 // pred_region
          %456 = dma.done [#allocation8], 48
        $region92: #{dn_forward.1} parent=71 // pred_fallthru
          _
        %s457 = smul.u32 32, %s27
        %p458 = scmp.lt.s32.totalorder %s457, 63
        %s459 = scalar_select %p458, %s457, 63
        %s460 = smul.addr %s459, 8
        %s461 = scalar_lea.vmem %s0, %s460
        %p462 = pneg %p48
        %p463 = pneg %p45
        %p464 = pneg %p69
        %p465 = pneg %p66
        %p466 = pneg %p90
        %p467 = pneg %p87
        %p468 = pneg %p111
        %p469 = pneg %p108
        %p470 = pneg %p132
        %p471 = pneg %p129
        %p472 = pneg %p153
        %p473 = pneg %p150
        %p474 = pneg %p174
        %p475 = pneg %p171
        %p476 = pneg %p195
        %p477 = pneg %p192
        %p478 = pneg %p216
        %p479 = pneg %p213
        %p480 = pneg %p237
        %p481 = pneg %p234
        %p482 = pneg %p258
        %p483 = pneg %p255
        %p484 = pneg %p279
        %p485 = pneg %p276
        %p486 = pneg %p300
        %p487 = pneg %p297
        %p488 = pneg %p326
        %p489 = pneg %p323
        %s490 = smul.u32 32, %s27
        %p491 = scmp.lt.s32.totalorder %s490, 63
        %s492 = scalar_select %p491, %s490, 63
        %s493 = smul.addr %s492, 8
        %s494 = scalar_lea.vmem %s13, %s493
        %s495 = smul.u32 32, %s27
        %p496 = scmp.lt.s32.totalorder %s495, 63
        %s497 = scalar_select %p496, %s495, 63
        %s498 = smul.addr %s497, 8
        %s499 = scalar_lea.vmem %s0, %s498
        %s500 = smul.u32 32, %s27
        %s501 = smul.u32 32, %s27
        %p502 = scmp.lt.s32.totalorder %s501, 63
        %s503 = scalar_select %p502, %s501, 63
        %s504 = smul.addr %s503, 8
        %s505 = scalar_lea.vmem %s13, %s504
        %s506 = smul.u32 32, %s27
        %v508 = vld [vmem:[%s499] sm:$0xff]
        %v509 = vld [vmem:[%s499 + $0x8] sm:$0xff]
        %v510 = vld [vmem:[%s499 + $0x10] sm:$0xff]
        %v511 = vld [vmem:[%s499 + $0x18] sm:$0xff]
        %v512 = vld [vmem:[%s499 + $0x20] sm:$0xff]
        %v513 = vld [vmem:[%s499 + $0x28] sm:$0xff]
        %v514 = vld [vmem:[%s499 + $0x30] sm:$0xff]
        %v515 = vld [vmem:[%s499 + $0x38] sm:$0xff]
        %v516 = vld [vmem:[%s499 + $0x40] sm:$0xff]
        %v517 = vld [vmem:[%s499 + $0x48] sm:$0xff]
        %v518 = vld [vmem:[%s499 + $0x50] sm:$0xff]
        %v519 = vld [vmem:[%s499 + $0x58] sm:$0xff]
        %v520 = vld [vmem:[%s499 + $0x60] sm:$0xff]
        %v521 = vld [vmem:[%s499 + $0x68] sm:$0xff]
        %v522 = vld [vmem:[%s499 + $0x70] sm:$0xff]
        %v523 = vld [vmem:[%s499 + $0x78] sm:$0xff]
        %v524 = vld [vmem:[%s499 + $0x80] sm:$0xff]
        %v525 = vld [vmem:[%s499 + $0x88] sm:$0xff]
        %v526 = vld [vmem:[%s499 + $0x90] sm:$0xff]
        %v527 = vld [vmem:[%s499 + $0x98] sm:$0xff]
        %v528 = vld [vmem:[%s499 + $0xa0] sm:$0xff]
        %v529 = vld [vmem:[%s499 + $0xa8] sm:$0xff]
        %v530 = vld [vmem:[%s499 + $0xb0] sm:$0xff]
        %v531 = vld [vmem:[%s499 + $0xb8] sm:$0xff]
        %v532 = vld [vmem:[%s499 + $0xc0] sm:$0xff]
        %v533 = vld [vmem:[%s499 + $0xc8] sm:$0xff]
        %v534 = vld [vmem:[%s499 + $0xd0] sm:$0xff]
        %v535 = vld [vmem:[%s499 + $0xd8] sm:$0xff]
        %v536 = vld [vmem:[%s499 + $0xe0] sm:$0xff]
        %v537 = vld [vmem:[%s499 + $0xe8] sm:$0xff]
        %v538 = vld [vmem:[%s499 + $0xf0] sm:$0xff]
        %v539 = vld [vmem:[%s499 + $0xf8] sm:$0xff]
        %v540 = vpack.c.bf16 %v509, %v508
        %v541 = vpack.c.bf16 %v511, %v510
        %v542 = vpack.c.bf16 %v513, %v512
        %v543 = vpack.c.bf16 %v515, %v514
        %v544 = vpack.c.bf16 %v517, %v516
        %v545 = vpack.c.bf16 %v519, %v518
        %v546 = vpack.c.bf16 %v521, %v520
        %v547 = vpack.c.bf16 %v523, %v522
        %v548 = vpack.c.bf16 %v525, %v524
        %v549 = vpack.c.bf16 %v527, %v526
        %v550 = vpack.c.bf16 %v529, %v528
        %v551 = vpack.c.bf16 %v531, %v530
        %v552 = vpack.c.bf16 %v533, %v532
        %v553 = vpack.c.bf16 %v535, %v534
        %v554 = vpack.c.bf16 %v537, %v536
        %v555 = vpack.c.bf16 %v539, %v538
        %v556 = vld [vmem:[%s1] sm:$0xff]
        %v557 = vld [vmem:[%s1 + $0x8] sm:$0xf]
        %v558 = vld [vmem:[%s1 + $0xc] sm:$0xff]
        %v559 = vld [vmem:[%s1 + $0x14] sm:$0xf]
        %v560 = vld [vmem:[%s1 + $0x18] sm:$0xff]
        %v561 = vld [vmem:[%s1 + $0x20] sm:$0xf]
        %v562 = vld [vmem:[%s1 + $0x24] sm:$0xff]
        %v563 = vld [vmem:[%s1 + $0x2c] sm:$0xf]
        %v564 = vld [vmem:[%s1 + $0x30] sm:$0xff]
        %v565 = vld [vmem:[%s1 + $0x38] sm:$0xf]
        %v566 = vld [vmem:[%s1 + $0x3c] sm:$0xff]
        %v567 = vld [vmem:[%s1 + $0x44] sm:$0xf]
        %v568 = vld [vmem:[%s1 + $0x48] sm:$0xff]
        %v569 = vld [vmem:[%s1 + $0x50] sm:$0xf]
        %v570 = vld [vmem:[%s1 + $0x54] sm:$0xff]
        %v571 = vld [vmem:[%s1 + $0x5c] sm:$0xf]
        %v572 = vld [vmem:[%s1 + $0x60] sm:$0xff]
        %v573 = vld [vmem:[%s1 + $0x68] sm:$0xf]
        %v574 = vld [vmem:[%s1 + $0x6c] sm:$0xff]
        %v575 = vld [vmem:[%s1 + $0x74] sm:$0xf]
        %v576 = vld [vmem:[%s1 + $0x78] sm:$0xff]
        %v577 = vld [vmem:[%s1 + $0x80] sm:$0xf]
        %v578 = vld [vmem:[%s1 + $0x84] sm:$0xff]
        %v579 = vld [vmem:[%s1 + $0x8c] sm:$0xf]
        %v580 = vld [vmem:[%s1 + $0x90] sm:$0xff]
        %v581 = vld [vmem:[%s1 + $0x98] sm:$0xf]
        %v582 = vld [vmem:[%s1 + $0x9c] sm:$0xff]
        %v583 = vld [vmem:[%s1 + $0xa4] sm:$0xf]
        %v584 = vld [vmem:[%s1 + $0xa8] sm:$0xff]
        %v585 = vld [vmem:[%s1 + $0xb0] sm:$0xf]
        %v586 = vld [vmem:[%s1 + $0xb4] sm:$0xff]
        %v587 = vld [vmem:[%s1 + $0xbc] sm:$0xf]
        %v588 = vld [vmem:[#allocation2] sm:$0x7]
        %v590 = vlaneseq
        %v591 = vshrl.u32 %v590, 7
        %v592 = vsub.s32 0, %v591
        %v593 = vrot.slane %v588, %v592
        %v594 = vlaneseq
        %v595 = vshrl.u32 %v594, 7
        %v596 = vsub.s32 1, %v595
        %v597 = vrot.slane %v588, %v596
        %v598 = vlaneseq
        %v599 = vshrl.u32 %v598, 7
        %v600 = vsub.s32 2, %v599
        %v601 = vrot.slane %v588, %v600
        %v637 = vunpack.c.l.b16 %v556
        %v638 = vunpack.c.h.b16 %v556
        %v639 = vunpack.c.l.b16 %v557
        %v640 = vunpack.c.l.b16 %v558
        %v641 = vunpack.c.h.b16 %v558
        %v642 = vunpack.c.l.b16 %v559
        %v643 = vunpack.c.l.b16 %v560
        %v644 = vunpack.c.h.b16 %v560
        %v645 = vunpack.c.l.b16 %v561
        %v646 = vunpack.c.l.b16 %v562
        %v647 = vunpack.c.h.b16 %v562
        %v648 = vunpack.c.l.b16 %v563
        %v649 = vunpack.c.l.b16 %v564
        %v650 = vunpack.c.h.b16 %v564
        %v651 = vunpack.c.l.b16 %v565
        %v652 = vunpack.c.l.b16 %v566
        %v653 = vunpack.c.h.b16 %v566
        %v654 = vunpack.c.l.b16 %v567
        %v655 = vunpack.c.l.b16 %v568
        %v656 = vunpack.c.h.b16 %v568
        %v657 = vunpack.c.l.b16 %v569
        %v658 = vunpack.c.l.b16 %v570
        %v659 = vunpack.c.h.b16 %v570
        %v660 = vunpack.c.l.b16 %v571
        %v661 = vunpack.c.l.b16 %v572
        %v662 = vunpack.c.h.b16 %v572
        %v663 = vunpack.c.l.b16 %v573
        %v664 = vunpack.c.l.b16 %v574
        %v665 = vunpack.c.h.b16 %v574
        %v666 = vunpack.c.l.b16 %v575
        %v667 = vunpack.c.l.b16 %v576
        %v668 = vunpack.c.h.b16 %v576
        %v669 = vunpack.c.l.b16 %v577
        %v670 = vunpack.c.l.b16 %v578
        %v671 = vunpack.c.h.b16 %v578
        %v672 = vunpack.c.l.b16 %v579
        %v673 = vunpack.c.l.b16 %v580
        %v674 = vunpack.c.h.b16 %v580
        %v675 = vunpack.c.l.b16 %v581
        %v676 = vunpack.c.l.b16 %v582
        %v677 = vunpack.c.h.b16 %v582
        %v678 = vunpack.c.l.b16 %v583
        %v679 = vunpack.c.l.b16 %v584
        %v680 = vunpack.c.h.b16 %v584
        %v681 = vunpack.c.l.b16 %v585
        %v682 = vunpack.c.l.b16 %v586
        %v683 = vunpack.c.h.b16 %v586
        %v684 = vunpack.c.l.b16 %v587
        %v685 = vpack.c.b16 %v640, %v637
        %v686 = vpack.c.b16 %v641, %v638
        %v687 = vpack.c.b16 %v642, %v639
        %v688 = vpack.c.b16 %v646, %v643
        %v689 = vpack.c.b16 %v647, %v644
        %v690 = vpack.c.b16 %v648, %v645
        %v691 = vpack.c.b16 %v652, %v649
        %v692 = vpack.c.b16 %v653, %v650
        %v693 = vpack.c.b16 %v654, %v651
        %v694 = vpack.c.b16 %v658, %v655
        %v695 = vpack.c.b16 %v659, %v656
        %v696 = vpack.c.b16 %v660, %v657
        %v697 = vpack.c.b16 %v664, %v661
        %v698 = vpack.c.b16 %v665, %v662
        %v699 = vpack.c.b16 %v666, %v663
        %v700 = vpack.c.b16 %v670, %v667
        %v701 = vpack.c.b16 %v671, %v668
        %v702 = vpack.c.b16 %v672, %v669
        %v703 = vpack.c.b16 %v676, %v673
        %v704 = vpack.c.b16 %v677, %v674
        %v705 = vpack.c.b16 %v678, %v675
        %v706 = vpack.c.b16 %v682, %v679
        %v707 = vpack.c.b16 %v683, %v680
        %v708 = vpack.c.b16 %v684, %v681
        %733 = vmatprep.subr.bf16.mxu0 %v707
        %734 = vmatpush1.bf16.msra.mxu0 %v706
        %735 = vmatprep.subr.bf16.mxu0 %v704
        %736 = vmatpush1.bf16.msra.mxu0 %v703
        %737 = vmatprep.subr.bf16.mxu0 %v701
        %738 = vmatpush1.bf16.msra.mxu0 %v700
        %739 = vmatprep.subr.bf16.mxu0 %v698
        %740 = vmatpush1.bf16.msra.mxu0 %v697
        %741 = vmatprep.subr.bf16.mxu0 %v695
        %742 = vmatpush1.bf16.msra.mxu0 %v694
        %743 = vmatprep.subr.bf16.mxu0 %v692
        %744 = vmatpush1.bf16.msra.mxu0 %v691
        %745 = vmatprep.subr.bf16.mxu0 %v689
        %746 = vmatpush1.bf16.msra.mxu0 %v688
        %747 = vmatprep.subr.bf16.mxu0 %v686
        %748 = vmatpush1.bf16.msra.mxu0 %v685
        %749 = vmatprep.subr.bf16.mxu0 0
        %750 = vmatpush2.bf16.msra.mxu0 0
        %751 = vmatprep.subr.bf16.mxu0 0
        %752 = vmatpush2.bf16.msra.mxu0 0
        %753 = vmatprep.subr.bf16.mxu0 0
        %754 = vmatpush2.bf16.msra.mxu0 0
        %755 = vmatprep.subr.bf16.mxu0 0
        %756 = vmatpush2.bf16.msra.mxu0 0
        %757 = vmatprep.subr.bf16.mxu0 0
        %758 = vmatpush2.bf16.msra.mxu0 0
        %759 = vmatprep.subr.bf16.mxu0 0
        %760 = vmatpush2.bf16.msra.mxu0 0
        %761 = vmatprep.subr.bf16.mxu0 0
        %762 = vmatpush2.bf16.msra.mxu0 0
        %763 = vmatprep.subr.bf16.mxu0 0
        %764 = vmatpush2.bf16.msra.mxu0 0
        %765 = vmatprep.mubr.bf16.mxu0 0
        %766 = vmatmul.mubr.bf16.gmra.mxu0 %v540
        %v767 = vpop.f32.mrf.mxu0
        %v768 = vadd.f32 %v593, %v767
        %v769 = vpop.f32.mrf.mxu0
        %v770 = vadd.f32 %v597, %v769
        %v771 = vpop.f32.mrf.mxu0
        %v772 = vadd.f32 %v593, %v771
        %v773 = vpop.f32.mrf.mxu0
        %v774 = vadd.f32 %v597, %v773
        %775 = vmatprep.mubr.bf16.mxu0 0
        %776 = vmatmul.mubr.bf16.gmra.mxu0 %v541
        %v777 = vpop.f32.mrf.mxu0
        %v778 = vadd.f32 %v593, %v777
        %v779 = vpop.f32.mrf.mxu0
        %v780 = vadd.f32 %v597, %v779
        %v781 = vpop.f32.mrf.mxu0
        %v782 = vadd.f32 %v593, %v781
        %v783 = vpop.f32.mrf.mxu0
        %v784 = vadd.f32 %v597, %v783
        %785 = vmatprep.mubr.bf16.mxu0 0
        %786 = vmatmul.mubr.bf16.gmra.mxu0 %v542
        %v787 = vpop.f32.mrf.mxu0
        %v788 = vadd.f32 %v593, %v787
        %v789 = vpop.f32.mrf.mxu0
        %v790 = vadd.f32 %v597, %v789
        %v791 = vpop.f32.mrf.mxu0
        %v792 = vadd.f32 %v593, %v791
        %v793 = vpop.f32.mrf.mxu0
        %v794 = vadd.f32 %v597, %v793
        %795 = vmatprep.mubr.bf16.mxu0 0
        %796 = vmatmul.mubr.bf16.gmra.mxu0 %v543
        %v797 = vpop.f32.mrf.mxu0
        %v798 = vadd.f32 %v593, %v797
        %v799 = vpop.f32.mrf.mxu0
        %v800 = vadd.f32 %v597, %v799
        %v801 = vpop.f32.mrf.mxu0
        %v802 = vadd.f32 %v593, %v801
        %v803 = vpop.f32.mrf.mxu0
        %v804 = vadd.f32 %v597, %v803
        %805 = vmatprep.mubr.bf16.mxu0 0
        %806 = vmatmul.mubr.bf16.gmra.mxu0 %v544
        %v807 = vpop.f32.mrf.mxu0
        %v808 = vadd.f32 %v593, %v807
        %v809 = vpop.f32.mrf.mxu0
        %v810 = vadd.f32 %v597, %v809
        %v811 = vpop.f32.mrf.mxu0
        %v812 = vadd.f32 %v593, %v811
        %v813 = vpop.f32.mrf.mxu0
        %v814 = vadd.f32 %v597, %v813
        %815 = vmatprep.mubr.bf16.mxu0 0
        %816 = vmatmul.mubr.bf16.gmra.mxu0 %v545
        %v817 = vpop.f32.mrf.mxu0
        %v818 = vadd.f32 %v593, %v817
        %v819 = vpop.f32.mrf.mxu0
        %v820 = vadd.f32 %v597, %v819
        %v821 = vpop.f32.mrf.mxu0
        %v822 = vadd.f32 %v593, %v821
        %v823 = vpop.f32.mrf.mxu0
        %v824 = vadd.f32 %v597, %v823
        %825 = vmatprep.mubr.bf16.mxu0 0
        %826 = vmatmul.mubr.bf16.gmra.mxu0 %v546
        %v827 = vpop.f32.mrf.mxu0
        %v828 = vadd.f32 %v593, %v827
        %v829 = vpop.f32.mrf.mxu0
        %v830 = vadd.f32 %v597, %v829
        %v831 = vpop.f32.mrf.mxu0
        %v832 = vadd.f32 %v593, %v831
        %v833 = vpop.f32.mrf.mxu0
        %v834 = vadd.f32 %v597, %v833
        %835 = vmatprep.mubr.bf16.mxu0 0
        %836 = vmatmul.mubr.bf16.gmra.mxu0 %v547
        %v837 = vpop.f32.mrf.mxu0
        %v838 = vadd.f32 %v593, %v837
        %v839 = vpop.f32.mrf.mxu0
        %v840 = vadd.f32 %v597, %v839
        %v841 = vpop.f32.mrf.mxu0
        %v842 = vadd.f32 %v593, %v841
        %v843 = vpop.f32.mrf.mxu0
        %v844 = vadd.f32 %v597, %v843
        %845 = vmatprep.mubr.bf16.mxu0 0
        %846 = vmatmul.mubr.bf16.gmra.mxu0 %v548
        %v847 = vpop.f32.mrf.mxu0
        %v848 = vadd.f32 %v593, %v847
        %v849 = vpop.f32.mrf.mxu0
        %v850 = vadd.f32 %v597, %v849
        %v851 = vpop.f32.mrf.mxu0
        %v852 = vadd.f32 %v593, %v851
        %v853 = vpop.f32.mrf.mxu0
        %v854 = vadd.f32 %v597, %v853
        %855 = vmatprep.mubr.bf16.mxu0 0
        %856 = vmatmul.mubr.bf16.gmra.mxu0 %v549
        %v857 = vpop.f32.mrf.mxu0
        %v858 = vadd.f32 %v593, %v857
        %v859 = vpop.f32.mrf.mxu0
        %v860 = vadd.f32 %v597, %v859
        %v861 = vpop.f32.mrf.mxu0
        %v862 = vadd.f32 %v593, %v861
        %v863 = vpop.f32.mrf.mxu0
        %v864 = vadd.f32 %v597, %v863
        %865 = vmatprep.mubr.bf16.mxu0 0
        %866 = vmatmul.mubr.bf16.gmra.mxu0 %v550
        %v867 = vpop.f32.mrf.mxu0
        %v868 = vadd.f32 %v593, %v867
        %v869 = vpop.f32.mrf.mxu0
        %v870 = vadd.f32 %v597, %v869
        %v871 = vpop.f32.mrf.mxu0
        %v872 = vadd.f32 %v593, %v871
        %v873 = vpop.f32.mrf.mxu0
        %v874 = vadd.f32 %v597, %v873
        %875 = vmatprep.mubr.bf16.mxu0 0
        %876 = vmatmul.mubr.bf16.gmra.mxu0 %v551
        %v877 = vpop.f32.mrf.mxu0
        %v878 = vadd.f32 %v593, %v877
        %v879 = vpop.f32.mrf.mxu0
        %v880 = vadd.f32 %v597, %v879
        %v881 = vpop.f32.mrf.mxu0
        %v882 = vadd.f32 %v593, %v881
        %v883 = vpop.f32.mrf.mxu0
        %v884 = vadd.f32 %v597, %v883
        %885 = vmatprep.mubr.bf16.mxu0 0
        %886 = vmatmul.mubr.bf16.gmra.mxu0 %v552
        %v887 = vpop.f32.mrf.mxu0
        %v888 = vadd.f32 %v593, %v887
        %v889 = vpop.f32.mrf.mxu0
        %v890 = vadd.f32 %v597, %v889
        %v891 = vpop.f32.mrf.mxu0
        %v892 = vadd.f32 %v593, %v891
        %v893 = vpop.f32.mrf.mxu0
        %v894 = vadd.f32 %v597, %v893
        %895 = vmatprep.mubr.bf16.mxu0 0
        %896 = vmatmul.mubr.bf16.gmra.mxu0 %v553
        %v897 = vpop.f32.mrf.mxu0
        %v898 = vadd.f32 %v593, %v897
        %v899 = vpop.f32.mrf.mxu0
        %v900 = vadd.f32 %v597, %v899
        %v901 = vpop.f32.mrf.mxu0
        %v902 = vadd.f32 %v593, %v901
        %v903 = vpop.f32.mrf.mxu0
        %v904 = vadd.f32 %v597, %v903
        %905 = vmatprep.mubr.bf16.mxu0 0
        %906 = vmatmul.mubr.bf16.gmra.mxu0 %v554
        %v907 = vpop.f32.mrf.mxu0
        %v908 = vadd.f32 %v593, %v907
        %v909 = vpop.f32.mrf.mxu0
        %v910 = vadd.f32 %v597, %v909
        %v911 = vpop.f32.mrf.mxu0
        %v912 = vadd.f32 %v593, %v911
        %v913 = vpop.f32.mrf.mxu0
        %v914 = vadd.f32 %v597, %v913
        %915 = vmatprep.mubr.bf16.mxu0 0
        %916 = vmatmul.mubr.bf16.gmra.mxu0 %v555
        %v917 = vpop.f32.mrf.mxu0
        %v918 = vadd.f32 %v593, %v917
        %v919 = vpop.f32.mrf.mxu0
        %v920 = vadd.f32 %v597, %v919
        %v921 = vpop.f32.mrf.mxu0
        %v922 = vadd.f32 %v593, %v921
        %v923 = vpop.f32.mrf.mxu0
        %v924 = vadd.f32 %v597, %v923
        %925 = vdwg.mxu0
        %926 = vmatprep.subr.bf16.mxu0 0
        %927 = vmatpush1.bf16.msra.mxu0 %v708
        %928 = vmatprep.subr.bf16.mxu0 0
        %929 = vmatpush1.bf16.msra.mxu0 %v705
        %930 = vmatprep.subr.bf16.mxu0 0
        %931 = vmatpush1.bf16.msra.mxu0 %v702
        %932 = vmatprep.subr.bf16.mxu0 0
        %933 = vmatpush1.bf16.msra.mxu0 %v699
        %934 = vmatprep.subr.bf16.mxu0 0
        %935 = vmatpush1.bf16.msra.mxu0 %v696
        %936 = vmatprep.subr.bf16.mxu0 0
        %937 = vmatpush1.bf16.msra.mxu0 %v693
        %938 = vmatprep.subr.bf16.mxu0 0
        %939 = vmatpush1.bf16.msra.mxu0 %v690
        %940 = vmatprep.subr.bf16.mxu0 0
        %941 = vmatpush1.bf16.msra.mxu0 %v687
        %942 = vmatprep.subr.bf16.mxu0 0
        %943 = vmatpush2.bf16.msra.mxu0 0
        %944 = vmatprep.subr.bf16.mxu0 0
        %945 = vmatpush2.bf16.msra.mxu0 0
        %946 = vmatprep.subr.bf16.mxu0 0
        %947 = vmatpush2.bf16.msra.mxu0 0
        %948 = vmatprep.subr.bf16.mxu0 0
        %949 = vmatpush2.bf16.msra.mxu0 0
        %950 = vmatprep.subr.bf16.mxu0 0
        %951 = vmatpush2.bf16.msra.mxu0 0
        %952 = vmatprep.subr.bf16.mxu0 0
        %953 = vmatpush2.bf16.msra.mxu0 0
        %954 = vmatprep.subr.bf16.mxu0 0
        %955 = vmatpush2.bf16.msra.mxu0 0
        %956 = vmatprep.subr.bf16.mxu0 0
        %957 = vmatpush2.bf16.msra.mxu0 0
        %958 = vmatprep.mubr.bf16.mxu0 0
        %959 = vmatmul.mubr.bf16.gmra.mxu0 %v540
        %v960 = vpop.f32.mrf.mxu0
        %v961 = vadd.f32 %v601, %v960
        %v962 = vpop.f32.mrf.mxu0
        %v963 = vpop.f32.mrf.mxu0
        %v964 = vadd.f32 %v601, %v963
        %v965 = vpop.f32.mrf.mxu0
        %966 = vmatprep.mubr.bf16.mxu0 0
        %967 = vmatmul.mubr.bf16.gmra.mxu0 %v541
        %v968 = vpop.f32.mrf.mxu0
        %v969 = vadd.f32 %v601, %v968
        %v970 = vpop.f32.mrf.mxu0
        %v971 = vpop.f32.mrf.mxu0
        %v972 = vadd.f32 %v601, %v971
        %v973 = vpop.f32.mrf.mxu0
        %974 = vmatprep.mubr.bf16.mxu0 0
        %975 = vmatmul.mubr.bf16.gmra.mxu0 %v542
        %v976 = vpop.f32.mrf.mxu0
        %v977 = vadd.f32 %v601, %v976
        %v978 = vpop.f32.mrf.mxu0
        %v979 = vpop.f32.mrf.mxu0
        %v980 = vadd.f32 %v601, %v979
        %v981 = vpop.f32.mrf.mxu0
        %982 = vmatprep.mubr.bf16.mxu0 0
        %983 = vmatmul.mubr.bf16.gmra.mxu0 %v543
        %v984 = vpop.f32.mrf.mxu0
        %v985 = vadd.f32 %v601, %v984
        %v986 = vpop.f32.mrf.mxu0
        %v987 = vpop.f32.mrf.mxu0
        %v988 = vadd.f32 %v601, %v987
        %v989 = vpop.f32.mrf.mxu0
        %990 = vmatprep.mubr.bf16.mxu0 0
        %991 = vmatmul.mubr.bf16.gmra.mxu0 %v544
        %v992 = vpop.f32.mrf.mxu0
        %v993 = vadd.f32 %v601, %v992
        %v994 = vpop.f32.mrf.mxu0
        %v995 = vpop.f32.mrf.mxu0
        %v996 = vadd.f32 %v601, %v995
        %v997 = vpop.f32.mrf.mxu0
        %998 = vmatprep.mubr.bf16.mxu0 0
        %999 = vmatmul.mubr.bf16.gmra.mxu0 %v545
        %v1000 = vpop.f32.mrf.mxu0
        %v1001 = vadd.f32 %v601, %v1000
        %v1002 = vpop.f32.mrf.mxu0
        %v1003 = vpop.f32.mrf.mxu0
        %v1004 = vadd.f32 %v601, %v1003
        %v1005 = vpop.f32.mrf.mxu0
        %1006 = vmatprep.mubr.bf16.mxu0 0
        %1007 = vmatmul.mubr.bf16.gmra.mxu0 %v546
        %v1008 = vpop.f32.mrf.mxu0
        %v1009 = vadd.f32 %v601, %v1008
        %v1010 = vpop.f32.mrf.mxu0
        %v1011 = vpop.f32.mrf.mxu0
        %v1012 = vadd.f32 %v601, %v1011
        %v1013 = vpop.f32.mrf.mxu0
        %1014 = vmatprep.mubr.bf16.mxu0 0
        %1015 = vmatmul.mubr.bf16.gmra.mxu0 %v547
        %v1016 = vpop.f32.mrf.mxu0
        %v1017 = vadd.f32 %v601, %v1016
        %v1018 = vpop.f32.mrf.mxu0
        %v1019 = vpop.f32.mrf.mxu0
        %v1020 = vadd.f32 %v601, %v1019
        %v1021 = vpop.f32.mrf.mxu0
        %1022 = vmatprep.mubr.bf16.mxu0 0
        %1023 = vmatmul.mubr.bf16.gmra.mxu0 %v548
        %v1024 = vpop.f32.mrf.mxu0
        %v1025 = vadd.f32 %v601, %v1024
        %v1026 = vpop.f32.mrf.mxu0
        %v1027 = vpop.f32.mrf.mxu0
        %v1028 = vadd.f32 %v601, %v1027
        %v1029 = vpop.f32.mrf.mxu0
        %1030 = vmatprep.mubr.bf16.mxu0 0
        %1031 = vmatmul.mubr.bf16.gmra.mxu0 %v549
        %v1032 = vpop.f32.mrf.mxu0
        %v1033 = vadd.f32 %v601, %v1032
        %v1034 = vpop.f32.mrf.mxu0
        %v1035 = vpop.f32.mrf.mxu0
        %v1036 = vadd.f32 %v601, %v1035
        %v1037 = vpop.f32.mrf.mxu0
        %1038 = vmatprep.mubr.bf16.mxu0 0
        %1039 = vmatmul.mubr.bf16.gmra.mxu0 %v550
        %v1040 = vpop.f32.mrf.mxu0
        %v1041 = vadd.f32 %v601, %v1040
        %v1042 = vpop.f32.mrf.mxu0
        %v1043 = vpop.f32.mrf.mxu0
        %v1044 = vadd.f32 %v601, %v1043
        %v1045 = vpop.f32.mrf.mxu0
        %1046 = vmatprep.mubr.bf16.mxu0 0
        %1047 = vmatmul.mubr.bf16.gmra.mxu0 %v551
        %v1048 = vpop.f32.mrf.mxu0
        %v1049 = vadd.f32 %v601, %v1048
        %v1050 = vpop.f32.mrf.mxu0
        %v1051 = vpop.f32.mrf.mxu0
        %v1052 = vadd.f32 %v601, %v1051
        %v1053 = vpop.f32.mrf.mxu0
        %1054 = vmatprep.mubr.bf16.mxu0 0
        %1055 = vmatmul.mubr.bf16.gmra.mxu0 %v552
        %v1056 = vpop.f32.mrf.mxu0
        %v1057 = vadd.f32 %v601, %v1056
        %v1058 = vpop.f32.mrf.mxu0
        %v1059 = vpop.f32.mrf.mxu0
        %v1060 = vadd.f32 %v601, %v1059
        %v1061 = vpop.f32.mrf.mxu0
        %1062 = vmatprep.mubr.bf16.mxu0 0
        %1063 = vmatmul.mubr.bf16.gmra.mxu0 %v553
        %v1064 = vpop.f32.mrf.mxu0
        %v1065 = vadd.f32 %v601, %v1064
        %v1066 = vpop.f32.mrf.mxu0
        %v1067 = vpop.f32.mrf.mxu0
        %v1068 = vadd.f32 %v601, %v1067
        %v1069 = vpop.f32.mrf.mxu0
        %1070 = vmatprep.mubr.bf16.mxu0 0
        %1071 = vmatmul.mubr.bf16.gmra.mxu0 %v554
        %v1072 = vpop.f32.mrf.mxu0
        %v1073 = vadd.f32 %v601, %v1072
        %v1074 = vpop.f32.mrf.mxu0
        %v1075 = vpop.f32.mrf.mxu0
        %v1076 = vadd.f32 %v601, %v1075
        %v1077 = vpop.f32.mrf.mxu0
        %1078 = vmatprep.mubr.bf16.mxu0 0
        %1079 = vmatmul.mubr.bf16.gmra.mxu0 %v555
        %v1080 = vpop.f32.mrf.mxu0
        %v1081 = vadd.f32 %v601, %v1080
        %v1082 = vpop.f32.mrf.mxu0
        %v1083 = vpop.f32.mrf.mxu0
        %v1084 = vadd.f32 %v601, %v1083
        %v1085 = vpop.f32.mrf.mxu0
        %1086 = vdwg.mxu0
        %v1087 = vmax.f32 %v768, 0.0
        %v1088 = vmax.f32 %v770, 0.0
        %v1089 = vmax.f32 %v961, 0.0
        %v1090 = vmax.f32 %v772, 0.0
        %v1091 = vmax.f32 %v774, 0.0
        %v1092 = vmax.f32 %v964, 0.0
        %v1093 = vmax.f32 %v778, 0.0
        %v1094 = vmax.f32 %v780, 0.0
        %v1095 = vmax.f32 %v969, 0.0
        %v1096 = vmax.f32 %v782, 0.0
        %v1097 = vmax.f32 %v784, 0.0
        %v1098 = vmax.f32 %v972, 0.0
        %v1099 = vmax.f32 %v788, 0.0
        %v1100 = vmax.f32 %v790, 0.0
        %v1101 = vmax.f32 %v977, 0.0
        %v1102 = vmax.f32 %v792, 0.0
        %v1103 = vmax.f32 %v794, 0.0
        %v1104 = vmax.f32 %v980, 0.0
        %v1105 = vmax.f32 %v798, 0.0
        %v1106 = vmax.f32 %v800, 0.0
        %v1107 = vmax.f32 %v985, 0.0
        %v1108 = vmax.f32 %v802, 0.0
        %v1109 = vmax.f32 %v804, 0.0
        %v1110 = vmax.f32 %v988, 0.0
        %v1111 = vmax.f32 %v808, 0.0
        %v1112 = vmax.f32 %v810, 0.0
        %v1113 = vmax.f32 %v993, 0.0
        %v1114 = vmax.f32 %v812, 0.0
        %v1115 = vmax.f32 %v814, 0.0
        %v1116 = vmax.f32 %v996, 0.0
        %v1117 = vmax.f32 %v818, 0.0
        %v1118 = vmax.f32 %v820, 0.0
        %v1119 = vmax.f32 %v1001, 0.0
        %v1120 = vmax.f32 %v822, 0.0
        %v1121 = vmax.f32 %v824, 0.0
        %v1122 = vmax.f32 %v1004, 0.0
        %v1123 = vmax.f32 %v828, 0.0
        %v1124 = vmax.f32 %v830, 0.0
        %v1125 = vmax.f32 %v1009, 0.0
        %v1126 = vmax.f32 %v832, 0.0
        %v1127 = vmax.f32 %v834, 0.0
        %v1128 = vmax.f32 %v1012, 0.0
        %v1129 = vmax.f32 %v838, 0.0
        %v1130 = vmax.f32 %v840, 0.0
        %v1131 = vmax.f32 %v1017, 0.0
        %v1132 = vmax.f32 %v842, 0.0
        %v1133 = vmax.f32 %v844, 0.0
        %v1134 = vmax.f32 %v1020, 0.0
        %v1135 = vmax.f32 %v848, 0.0
        %v1136 = vmax.f32 %v850, 0.0
        %v1137 = vmax.f32 %v1025, 0.0
        %v1138 = vmax.f32 %v852, 0.0
        %v1139 = vmax.f32 %v854, 0.0
        %v1140 = vmax.f32 %v1028, 0.0
        %v1141 = vmax.f32 %v858, 0.0
        %v1142 = vmax.f32 %v860, 0.0
        %v1143 = vmax.f32 %v1033, 0.0
        %v1144 = vmax.f32 %v862, 0.0
        %v1145 = vmax.f32 %v864, 0.0
        %v1146 = vmax.f32 %v1036, 0.0
        %v1147 = vmax.f32 %v868, 0.0
        %v1148 = vmax.f32 %v870, 0.0
        %v1149 = vmax.f32 %v1041, 0.0
        %v1150 = vmax.f32 %v872, 0.0
        %v1151 = vmax.f32 %v874, 0.0
        %v1152 = vmax.f32 %v1044, 0.0
        %v1153 = vmax.f32 %v878, 0.0
        %v1154 = vmax.f32 %v880, 0.0
        %v1155 = vmax.f32 %v1049, 0.0
        %v1156 = vmax.f32 %v882, 0.0
        %v1157 = vmax.f32 %v884, 0.0
        %v1158 = vmax.f32 %v1052, 0.0
        %v1159 = vmax.f32 %v888, 0.0
        %v1160 = vmax.f32 %v890, 0.0
        %v1161 = vmax.f32 %v1057, 0.0
        %v1162 = vmax.f32 %v892, 0.0
        %v1163 = vmax.f32 %v894, 0.0
        %v1164 = vmax.f32 %v1060, 0.0
        %v1165 = vmax.f32 %v898, 0.0
        %v1166 = vmax.f32 %v900, 0.0
        %v1167 = vmax.f32 %v1065, 0.0
        %v1168 = vmax.f32 %v902, 0.0
        %v1169 = vmax.f32 %v904, 0.0
        %v1170 = vmax.f32 %v1068, 0.0
        %v1171 = vmax.f32 %v908, 0.0
        %v1172 = vmax.f32 %v910, 0.0
        %v1173 = vmax.f32 %v1073, 0.0
        %v1174 = vmax.f32 %v912, 0.0
        %v1175 = vmax.f32 %v914, 0.0
        %v1176 = vmax.f32 %v1076, 0.0
        %v1177 = vmax.f32 %v918, 0.0
        %v1178 = vmax.f32 %v920, 0.0
        %v1179 = vmax.f32 %v1081, 0.0
        %v1180 = vmax.f32 %v922, 0.0
        %v1181 = vmax.f32 %v924, 0.0
        %v1182 = vmax.f32 %v1084, 0.0
        %v1183 = vpack.c.bf16 %v1090, %v1087
        %v1184 = vpack.c.bf16 %v1091, %v1088
        %v1185 = vpack.c.bf16 %v1092, %v1089
        %v1186 = vpack.c.bf16 %v1096, %v1093
        %v1187 = vpack.c.bf16 %v1097, %v1094
        %v1188 = vpack.c.bf16 %v1098, %v1095
        %v1189 = vpack.c.bf16 %v1102, %v1099
        %v1190 = vpack.c.bf16 %v1103, %v1100
        %v1191 = vpack.c.bf16 %v1104, %v1101
        %v1192 = vpack.c.bf16 %v1108, %v1105
        %v1193 = vpack.c.bf16 %v1109, %v1106
        %v1194 = vpack.c.bf16 %v1110, %v1107
        %v1195 = vpack.c.bf16 %v1114, %v1111
        %v1196 = vpack.c.bf16 %v1115, %v1112
        %v1197 = vpack.c.bf16 %v1116, %v1113
        %v1198 = vpack.c.bf16 %v1120, %v1117
        %v1199 = vpack.c.bf16 %v1121, %v1118
        %v1200 = vpack.c.bf16 %v1122, %v1119
        %v1201 = vpack.c.bf16 %v1126, %v1123
        %v1202 = vpack.c.bf16 %v1127, %v1124
        %v1203 = vpack.c.bf16 %v1128, %v1125
        %v1204 = vpack.c.bf16 %v1132, %v1129
        %v1205 = vpack.c.bf16 %v1133, %v1130
        %v1206 = vpack.c.bf16 %v1134, %v1131
        %v1207 = vpack.c.bf16 %v1138, %v1135
        %v1208 = vpack.c.bf16 %v1139, %v1136
        %v1209 = vpack.c.bf16 %v1140, %v1137
        %v1210 = vpack.c.bf16 %v1144, %v1141
        %v1211 = vpack.c.bf16 %v1145, %v1142
        %v1212 = vpack.c.bf16 %v1146, %v1143
        %v1213 = vpack.c.bf16 %v1150, %v1147
        %v1214 = vpack.c.bf16 %v1151, %v1148
        %v1215 = vpack.c.bf16 %v1152, %v1149
        %v1216 = vpack.c.bf16 %v1156, %v1153
        %v1217 = vpack.c.bf16 %v1157, %v1154
        %v1218 = vpack.c.bf16 %v1158, %v1155
        %v1219 = vpack.c.bf16 %v1162, %v1159
        %v1220 = vpack.c.bf16 %v1163, %v1160
        %v1221 = vpack.c.bf16 %v1164, %v1161
        %v1222 = vpack.c.bf16 %v1168, %v1165
        %v1223 = vpack.c.bf16 %v1169, %v1166
        %v1224 = vpack.c.bf16 %v1170, %v1167
        %v1225 = vpack.c.bf16 %v1174, %v1171
        %v1226 = vpack.c.bf16 %v1175, %v1172
        %v1227 = vpack.c.bf16 %v1176, %v1173
        %v1228 = vpack.c.bf16 %v1180, %v1177
        %v1229 = vpack.c.bf16 %v1181, %v1178
        %v1230 = vpack.c.bf16 %v1182, %v1179
        %v1231 = vld [vmem:[%s3] sm:$0xff]
        %v1232 = vld [vmem:[%s3 + $0x8] sm:$0xf]
        %v1233 = vld [vmem:[%s3 + $0xc] sm:$0xff]
        %v1234 = vld [vmem:[%s3 + $0x14] sm:$0xf]
        %v1235 = vld [vmem:[%s3 + $0x18] sm:$0xff]
        %v1236 = vld [vmem:[%s3 + $0x20] sm:$0xf]
        %v1237 = vld [vmem:[%s3 + $0x24] sm:$0xff]
        %v1238 = vld [vmem:[%s3 + $0x2c] sm:$0xf]
        %v1239 = vld [vmem:[%s3 + $0x30] sm:$0xff]
        %v1240 = vld [vmem:[%s3 + $0x38] sm:$0xf]
        %v1241 = vld [vmem:[%s3 + $0x3c] sm:$0xff]
        %v1242 = vld [vmem:[%s3 + $0x44] sm:$0xf]
        %v1243 = vld [vmem:[%s3 + $0x48] sm:$0xff]
        %v1244 = vld [vmem:[%s3 + $0x50] sm:$0xf]
        %v1245 = vld [vmem:[%s3 + $0x54] sm:$0xff]
        %v1246 = vld [vmem:[%s3 + $0x5c] sm:$0xf]
        %v1247 = vld [vmem:[%s3 + $0x60] sm:$0xff]
        %v1248 = vld [vmem:[%s3 + $0x68] sm:$0xf]
        %v1249 = vld [vmem:[%s3 + $0x6c] sm:$0xff]
        %v1250 = vld [vmem:[%s3 + $0x74] sm:$0xf]
        %v1251 = vld [vmem:[%s3 + $0x78] sm:$0xff]
        %v1252 = vld [vmem:[%s3 + $0x80] sm:$0xf]
        %v1253 = vld [vmem:[%s3 + $0x84] sm:$0xff]
        %v1254 = vld [vmem:[%s3 + $0x8c] sm:$0xf]
        %v1255 = vld [vmem:[%s3 + $0x90] sm:$0xff]
        %v1256 = vld [vmem:[%s3 + $0x98] sm:$0xf]
        %v1257 = vld [vmem:[%s3 + $0x9c] sm:$0xff]
        %v1258 = vld [vmem:[%s3 + $0xa4] sm:$0xf]
        %v1259 = vld [vmem:[%s3 + $0xa8] sm:$0xff]
        %v1260 = vld [vmem:[%s3 + $0xb0] sm:$0xf]
        %v1261 = vld [vmem:[%s3 + $0xb4] sm:$0xff]
        %v1262 = vld [vmem:[%s3 + $0xbc] sm:$0xf]
        %v1263 = vld [vmem:[%s3 + $0xc0] sm:$0xff]
        %v1264 = vld [vmem:[%s3 + $0xc8] sm:$0xf]
        %v1265 = vld [vmem:[%s3 + $0xcc] sm:$0xff]
        %v1266 = vld [vmem:[%s3 + $0xd4] sm:$0xf]
        %v1267 = vld [vmem:[%s3 + $0xd8] sm:$0xff]
        %v1268 = vld [vmem:[%s3 + $0xe0] sm:$0xf]
        %v1269 = vld [vmem:[%s3 + $0xe4] sm:$0xff]
        %v1270 = vld [vmem:[%s3 + $0xec] sm:$0xf]
        %v1271 = vld [vmem:[%s3 + $0xf0] sm:$0xff]
        %v1272 = vld [vmem:[%s3 + $0xf8] sm:$0xf]
        %v1273 = vld [vmem:[%s3 + $0xfc] sm:$0xff]
        %v1274 = vld [vmem:[%s3 + $0x104] sm:$0xf]
        %v1275 = vld [vmem:[%s3 + $0x108] sm:$0xff]
        %v1276 = vld [vmem:[%s3 + $0x110] sm:$0xf]
        %v1277 = vld [vmem:[%s3 + $0x114] sm:$0xff]
        %v1278 = vld [vmem:[%s3 + $0x11c] sm:$0xf]
        %v1279 = vld [vmem:[%s3 + $0x120] sm:$0xff]
        %v1280 = vld [vmem:[%s3 + $0x128] sm:$0xf]
        %v1281 = vld [vmem:[%s3 + $0x12c] sm:$0xff]
        %v1282 = vld [vmem:[%s3 + $0x134] sm:$0xf]
        %v1283 = vld [vmem:[%s3 + $0x138] sm:$0xff]
        %v1284 = vld [vmem:[%s3 + $0x140] sm:$0xf]
        %v1285 = vld [vmem:[%s3 + $0x144] sm:$0xff]
        %v1286 = vld [vmem:[%s3 + $0x14c] sm:$0xf]
        %v1287 = vld [vmem:[%s3 + $0x150] sm:$0xff]
        %v1288 = vld [vmem:[%s3 + $0x158] sm:$0xf]
        %v1289 = vld [vmem:[%s3 + $0x15c] sm:$0xff]
        %v1290 = vld [vmem:[%s3 + $0x164] sm:$0xf]
        %v1291 = vld [vmem:[%s3 + $0x168] sm:$0xff]
        %v1292 = vld [vmem:[%s3 + $0x170] sm:$0xf]
        %v1293 = vld [vmem:[%s3 + $0x174] sm:$0xff]
        %v1294 = vld [vmem:[%s3 + $0x17c] sm:$0xf]
        %v1295 = vld [vmem:[%s3 + $0x180] sm:$0xff]
        %v1296 = vld [vmem:[%s3 + $0x188] sm:$0xf]
        %v1297 = vld [vmem:[%s3 + $0x18c] sm:$0xff]
        %v1298 = vld [vmem:[%s3 + $0x194] sm:$0xf]
        %v1299 = vld [vmem:[%s3 + $0x198] sm:$0xff]
        %v1300 = vld [vmem:[%s3 + $0x1a0] sm:$0xf]
        %v1301 = vld [vmem:[%s3 + $0x1a4] sm:$0xff]
        %v1302 = vld [vmem:[%s3 + $0x1ac] sm:$0xf]
        %v1303 = vld [vmem:[%s3 + $0x1b0] sm:$0xff]
        %v1304 = vld [vmem:[%s3 + $0x1b8] sm:$0xf]
        %v1305 = vld [vmem:[%s3 + $0x1bc] sm:$0xff]
        %v1306 = vld [vmem:[%s3 + $0x1c4] sm:$0xf]
        %v1307 = vld [vmem:[%s3 + $0x1c8] sm:$0xff]
        %v1308 = vld [vmem:[%s3 + $0x1d0] sm:$0xf]
        %v1309 = vld [vmem:[%s3 + $0x1d4] sm:$0xff]
        %v1310 = vld [vmem:[%s3 + $0x1dc] sm:$0xf]
        %v1311 = vld [vmem:[%s3 + $0x1e0] sm:$0xff]
        %v1312 = vld [vmem:[%s3 + $0x1e8] sm:$0xf]
        %v1313 = vld [vmem:[%s3 + $0x1ec] sm:$0xff]
        %v1314 = vld [vmem:[%s3 + $0x1f4] sm:$0xf]
        %v1315 = vld [vmem:[%s3 + $0x1f8] sm:$0xff]
        %v1316 = vld [vmem:[%s3 + $0x200] sm:$0xf]
        %v1317 = vld [vmem:[%s3 + $0x204] sm:$0xff]
        %v1318 = vld [vmem:[%s3 + $0x20c] sm:$0xf]
        %v1319 = vld [vmem:[%s3 + $0x210] sm:$0xff]
        %v1320 = vld [vmem:[%s3 + $0x218] sm:$0xf]
        %v1321 = vld [vmem:[%s3 + $0x21c] sm:$0xff]
        %v1322 = vld [vmem:[%s3 + $0x224] sm:$0xf]
        %v1323 = vld [vmem:[%s3 + $0x228] sm:$0xff]
        %v1324 = vld [vmem:[%s3 + $0x230] sm:$0xf]
        %v1325 = vld [vmem:[%s3 + $0x234] sm:$0xff]
        %v1326 = vld [vmem:[%s3 + $0x23c] sm:$0xf]
        %v1327 = vld [vmem:[#allocation4] sm:$0x7]
        %v1329 = vlaneseq
        %v1330 = vshrl.u32 %v1329, 7
        %v1331 = vsub.s32 0, %v1330
        %v1332 = vrot.slane %v1327, %v1331
        %v1333 = vlaneseq
        %v1334 = vshrl.u32 %v1333, 7
        %v1335 = vsub.s32 1, %v1334
        %v1336 = vrot.slane %v1327, %v1335
        %v1337 = vlaneseq
        %v1338 = vshrl.u32 %v1337, 7
        %v1339 = vsub.s32 2, %v1338
        %v1340 = vrot.slane %v1327, %v1339
        %v1440 = vunpack.c.l.b16 %v1231
        %v1441 = vunpack.c.h.b16 %v1231
        %v1442 = vunpack.c.l.b16 %v1232
        %v1443 = vunpack.c.l.b16 %v1233
        %v1444 = vunpack.c.h.b16 %v1233
        %v1445 = vunpack.c.l.b16 %v1234
        %v1446 = vunpack.c.l.b16 %v1235
        %v1447 = vunpack.c.h.b16 %v1235
        %v1448 = vunpack.c.l.b16 %v1236
        %v1449 = vunpack.c.l.b16 %v1237
        %v1450 = vunpack.c.h.b16 %v1237
        %v1451 = vunpack.c.l.b16 %v1238
        %v1452 = vunpack.c.l.b16 %v1239
        %v1453 = vunpack.c.h.b16 %v1239
        %v1454 = vunpack.c.l.b16 %v1240
        %v1455 = vunpack.c.l.b16 %v1241
        %v1456 = vunpack.c.h.b16 %v1241
        %v1457 = vunpack.c.l.b16 %v1242
        %v1458 = vunpack.c.l.b16 %v1243
        %v1459 = vunpack.c.h.b16 %v1243
        %v1460 = vunpack.c.l.b16 %v1244
        %v1461 = vunpack.c.l.b16 %v1245
        %v1462 = vunpack.c.h.b16 %v1245
        %v1463 = vunpack.c.l.b16 %v1246
        %v1464 = vunpack.c.l.b16 %v1247
        %v1465 = vunpack.c.h.b16 %v1247
        %v1466 = vunpack.c.l.b16 %v1248
        %v1467 = vunpack.c.l.b16 %v1249
        %v1468 = vunpack.c.h.b16 %v1249
        %v1469 = vunpack.c.l.b16 %v1250
        %v1470 = vunpack.c.l.b16 %v1251
        %v1471 = vunpack.c.h.b16 %v1251
        %v1472 = vunpack.c.l.b16 %v1252
        %v1473 = vunpack.c.l.b16 %v1253
        %v1474 = vunpack.c.h.b16 %v1253
        %v1475 = vunpack.c.l.b16 %v1254
        %v1476 = vunpack.c.l.b16 %v1255
        %v1477 = vunpack.c.h.b16 %v1255
        %v1478 = vunpack.c.l.b16 %v1256
        %v1479 = vunpack.c.l.b16 %v1257
        %v1480 = vunpack.c.h.b16 %v1257
        %v1481 = vunpack.c.l.b16 %v1258
        %v1482 = vunpack.c.l.b16 %v1259
        %v1483 = vunpack.c.h.b16 %v1259
        %v1484 = vunpack.c.l.b16 %v1260
        %v1485 = vunpack.c.l.b16 %v1261
        %v1486 = vunpack.c.h.b16 %v1261
        %v1487 = vunpack.c.l.b16 %v1262
        %v1488 = vunpack.c.l.b16 %v1263
        %v1489 = vunpack.c.h.b16 %v1263
        %v1490 = vunpack.c.l.b16 %v1264
        %v1491 = vunpack.c.l.b16 %v1265
        %v1492 = vunpack.c.h.b16 %v1265
        %v1493 = vunpack.c.l.b16 %v1266
        %v1494 = vunpack.c.l.b16 %v1267
        %v1495 = vunpack.c.h.b16 %v1267
        %v1496 = vunpack.c.l.b16 %v1268
        %v1497 = vunpack.c.l.b16 %v1269
        %v1498 = vunpack.c.h.b16 %v1269
        %v1499 = vunpack.c.l.b16 %v1270
        %v1500 = vunpack.c.l.b16 %v1271
        %v1501 = vunpack.c.h.b16 %v1271
        %v1502 = vunpack.c.l.b16 %v1272
        %v1503 = vunpack.c.l.b16 %v1273
        %v1504 = vunpack.c.h.b16 %v1273
        %v1505 = vunpack.c.l.b16 %v1274
        %v1506 = vunpack.c.l.b16 %v1275
        %v1507 = vunpack.c.h.b16 %v1275
        %v1508 = vunpack.c.l.b16 %v1276
        %v1509 = vunpack.c.l.b16 %v1277
        %v1510 = vunpack.c.h.b16 %v1277
        %v1511 = vunpack.c.l.b16 %v1278
        %v1512 = vunpack.c.l.b16 %v1279
        %v1513 = vunpack.c.h.b16 %v1279
        %v1514 = vunpack.c.l.b16 %v1280
        %v1515 = vunpack.c.l.b16 %v1281
        %v1516 = vunpack.c.h.b16 %v1281
        %v1517 = vunpack.c.l.b16 %v1282
        %v1518 = vunpack.c.l.b16 %v1283
        %v1519 = vunpack.c.h.b16 %v1283
        %v1520 = vunpack.c.l.b16 %v1284
        %v1521 = vunpack.c.l.b16 %v1285
        %v1522 = vunpack.c.h.b16 %v1285
        %v1523 = vunpack.c.l.b16 %v1286
        %v1524 = vunpack.c.l.b16 %v1287
        %v1525 = vunpack.c.h.b16 %v1287
        %v1526 = vunpack.c.l.b16 %v1288
        %v1527 = vunpack.c.l.b16 %v1289
        %v1528 = vunpack.c.h.b16 %v1289
        %v1529 = vunpack.c.l.b16 %v1290
        %v1530 = vunpack.c.l.b16 %v1291
        %v1531 = vunpack.c.h.b16 %v1291
        %v1532 = vunpack.c.l.b16 %v1292
        %v1533 = vunpack.c.l.b16 %v1293
        %v1534 = vunpack.c.h.b16 %v1293
        %v1535 = vunpack.c.l.b16 %v1294
        %v1536 = vunpack.c.l.b16 %v1295
        %v1537 = vunpack.c.h.b16 %v1295
        %v1538 = vunpack.c.l.b16 %v1296
        %v1539 = vunpack.c.l.b16 %v1297
        %v1540 = vunpack.c.h.b16 %v1297
        %v1541 = vunpack.c.l.b16 %v1298
        %v1542 = vunpack.c.l.b16 %v1299
        %v1543 = vunpack.c.h.b16 %v1299
        %v1544 = vunpack.c.l.b16 %v1300
        %v1545 = vunpack.c.l.b16 %v1301
        %v1546 = vunpack.c.h.b16 %v1301
        %v1547 = vunpack.c.l.b16 %v1302
        %v1548 = vunpack.c.l.b16 %v1303
        %v1549 = vunpack.c.h.b16 %v1303
        %v1550 = vunpack.c.l.b16 %v1304
        %v1551 = vunpack.c.l.b16 %v1305
        %v1552 = vunpack.c.h.b16 %v1305
        %v1553 = vunpack.c.l.b16 %v1306
        %v1554 = vunpack.c.l.b16 %v1307
        %v1555 = vunpack.c.h.b16 %v1307
        %v1556 = vunpack.c.l.b16 %v1308
        %v1557 = vunpack.c.l.b16 %v1309
        %v1558 = vunpack.c.h.b16 %v1309
        %v1559 = vunpack.c.l.b16 %v1310
        %v1560 = vunpack.c.l.b16 %v1311
        %v1561 = vunpack.c.h.b16 %v1311
        %v1562 = vunpack.c.l.b16 %v1312
        %v1563 = vunpack.c.l.b16 %v1313
        %v1564 = vunpack.c.h.b16 %v1313
        %v1565 = vunpack.c.l.b16 %v1314
        %v1566 = vunpack.c.l.b16 %v1315
        %v1567 = vunpack.c.h.b16 %v1315
        %v1568 = vunpack.c.l.b16 %v1316
        %v1569 = vunpack.c.l.b16 %v1317
        %v1570 = vunpack.c.h.b16 %v1317
        %v1571 = vunpack.c.l.b16 %v1318
        %v1572 = vunpack.c.l.b16 %v1319
        %v1573 = vunpack.c.h.b16 %v1319
        %v1574 = vunpack.c.l.b16 %v1320
        %v1575 = vunpack.c.l.b16 %v1321
        %v1576 = vunpack.c.h.b16 %v1321
        %v1577 = vunpack.c.l.b16 %v1322
        %v1578 = vunpack.c.l.b16 %v1323
        %v1579 = vunpack.c.h.b16 %v1323
        %v1580 = vunpack.c.l.b16 %v1324
        %v1581 = vunpack.c.l.b16 %v1325
        %v1582 = vunpack.c.h.b16 %v1325
        %v1583 = vunpack.c.l.b16 %v1326
        %v1584 = vpack.c.b16 %v1443, %v1440
        %v1585 = vpack.c.b16 %v1444, %v1441
        %v1586 = vpack.c.b16 %v1445, %v1442
        %v1587 = vpack.c.b16 %v1449, %v1446
        %v1588 = vpack.c.b16 %v1450, %v1447
        %v1589 = vpack.c.b16 %v1451, %v1448
        %v1590 = vpack.c.b16 %v1455, %v1452
        %v1591 = vpack.c.b16 %v1456, %v1453
        %v1592 = vpack.c.b16 %v1457, %v1454
        %v1593 = vpack.c.b16 %v1461, %v1458
        %v1594 = vpack.c.b16 %v1462, %v1459
        %v1595 = vpack.c.b16 %v1463, %v1460
        %v1596 = vpack.c.b16 %v1467, %v1464
        %v1597 = vpack.c.b16 %v1468, %v1465
        %v1598 = vpack.c.b16 %v1469, %v1466
        %v1599 = vpack.c.b16 %v1473, %v1470
        %v1600 = vpack.c.b16 %v1474, %v1471
        %v1601 = vpack.c.b16 %v1475, %v1472
        %v1602 = vpack.c.b16 %v1479, %v1476
        %v1603 = vpack.c.b16 %v1480, %v1477
        %v1604 = vpack.c.b16 %v1481, %v1478
        %v1605 = vpack.c.b16 %v1485, %v1482
        %v1606 = vpack.c.b16 %v1486, %v1483
        %v1607 = vpack.c.b16 %v1487, %v1484
        %v1608 = vpack.c.b16 %v1491, %v1488
        %v1609 = vpack.c.b16 %v1492, %v1489
        %v1610 = vpack.c.b16 %v1493, %v1490
        %v1611 = vpack.c.b16 %v1497, %v1494
        %v1612 = vpack.c.b16 %v1498, %v1495
        %v1613 = vpack.c.b16 %v1499, %v1496
        %v1614 = vpack.c.b16 %v1503, %v1500
        %v1615 = vpack.c.b16 %v1504, %v1501
        %v1616 = vpack.c.b16 %v1505, %v1502
        %v1617 = vpack.c.b16 %v1509, %v1506
        %v1618 = vpack.c.b16 %v1510, %v1507
        %v1619 = vpack.c.b16 %v1511, %v1508
        %v1620 = vpack.c.b16 %v1515, %v1512
        %v1621 = vpack.c.b16 %v1516, %v1513
        %v1622 = vpack.c.b16 %v1517, %v1514
        %v1623 = vpack.c.b16 %v1521, %v1518
        %v1624 = vpack.c.b16 %v1522, %v1519
        %v1625 = vpack.c.b16 %v1523, %v1520
        %v1626 = vpack.c.b16 %v1527, %v1524
        %v1627 = vpack.c.b16 %v1528, %v1525
        %v1628 = vpack.c.b16 %v1529, %v1526
        %v1629 = vpack.c.b16 %v1533, %v1530
        %v1630 = vpack.c.b16 %v1534, %v1531
        %v1631 = vpack.c.b16 %v1535, %v1532
        %v1632 = vpack.c.b16 %v1539, %v1536
        %v1633 = vpack.c.b16 %v1540, %v1537
        %v1634 = vpack.c.b16 %v1541, %v1538
        %v1635 = vpack.c.b16 %v1545, %v1542
        %v1636 = vpack.c.b16 %v1546, %v1543
        %v1637 = vpack.c.b16 %v1547, %v1544
        %v1638 = vpack.c.b16 %v1551, %v1548
        %v1639 = vpack.c.b16 %v1552, %v1549
        %v1640 = vpack.c.b16 %v1553, %v1550
        %v1641 = vpack.c.b16 %v1557, %v1554
        %v1642 = vpack.c.b16 %v1558, %v1555
        %v1643 = vpack.c.b16 %v1559, %v1556
        %v1644 = vpack.c.b16 %v1563, %v1560
        %v1645 = vpack.c.b16 %v1564, %v1561
        %v1646 = vpack.c.b16 %v1565, %v1562
        %v1647 = vpack.c.b16 %v1569, %v1566
        %v1648 = vpack.c.b16 %v1570, %v1567
        %v1649 = vpack.c.b16 %v1571, %v1568
        %v1650 = vpack.c.b16 %v1575, %v1572
        %v1651 = vpack.c.b16 %v1576, %v1573
        %v1652 = vpack.c.b16 %v1577, %v1574
        %v1653 = vpack.c.b16 %v1581, %v1578
        %v1654 = vpack.c.b16 %v1582, %v1579
        %v1655 = vpack.c.b16 %v1583, %v1580
        %1728 = vmatprep.subr.bf16.mxu0 %v1606
        %1729 = vmatpush1.bf16.msra.mxu0 %v1605
        %1730 = vmatprep.subr.bf16.mxu0 %v1603
        %1731 = vmatpush1.bf16.msra.mxu0 %v1602
        %1732 = vmatprep.subr.bf16.mxu0 %v1600
        %1733 = vmatpush1.bf16.msra.mxu0 %v1599
        %1734 = vmatprep.subr.bf16.mxu0 %v1597
        %1735 = vmatpush1.bf16.msra.mxu0 %v1596
        %1736 = vmatprep.subr.bf16.mxu0 %v1594
        %1737 = vmatpush1.bf16.msra.mxu0 %v1593
        %1738 = vmatprep.subr.bf16.mxu0 %v1591
        %1739 = vmatpush1.bf16.msra.mxu0 %v1590
        %1740 = vmatprep.subr.bf16.mxu0 %v1588
        %1741 = vmatpush1.bf16.msra.mxu0 %v1587
        %1742 = vmatprep.subr.bf16.mxu0 %v1585
        %1743 = vmatpush1.bf16.msra.mxu0 %v1584
        %1744 = vmatprep.subr.bf16.mxu0 %v1630
        %1745 = vmatpush2.bf16.msra.mxu0 %v1629
        %1746 = vmatprep.subr.bf16.mxu0 %v1627
        %1747 = vmatpush2.bf16.msra.mxu0 %v1626
        %1748 = vmatprep.subr.bf16.mxu0 %v1624
        %1749 = vmatpush2.bf16.msra.mxu0 %v1623
        %1750 = vmatprep.subr.bf16.mxu0 %v1621
        %1751 = vmatpush2.bf16.msra.mxu0 %v1620
        %1752 = vmatprep.subr.bf16.mxu0 %v1618
        %1753 = vmatpush2.bf16.msra.mxu0 %v1617
        %1754 = vmatprep.subr.bf16.mxu0 %v1615
        %1755 = vmatpush2.bf16.msra.mxu0 %v1614
        %1756 = vmatprep.subr.bf16.mxu0 %v1612
        %1757 = vmatpush2.bf16.msra.mxu0 %v1611
        %1758 = vmatprep.subr.bf16.mxu0 %v1609
        %1759 = vmatpush2.bf16.msra.mxu0 %v1608
        %1760 = vmatprep.mubr.bf16.mxu0 %v1184
        %1761 = vmatmul.mubr.bf16.gmra.mxu0 %v1183
        %v1762 = vpop.f32.mrf.mxu0
        %v1763 = vadd.f32 %v1332, %v1762
        %v1764 = vpop.f32.mrf.mxu0
        %v1765 = vadd.f32 %v1336, %v1764
        %v1766 = vpop.f32.mrf.mxu0
        %v1767 = vadd.f32 %v1332, %v1766
        %v1768 = vpop.f32.mrf.mxu0
        %v1769 = vadd.f32 %v1336, %v1768
        %1770 = vmatprep.mubr.bf16.mxu0 %v1187
        %1771 = vmatmul.mubr.bf16.gmra.mxu0 %v1186
        %v1772 = vpop.f32.mrf.mxu0
        %v1773 = vadd.f32 %v1332, %v1772
        %v1774 = vpop.f32.mrf.mxu0
        %v1775 = vadd.f32 %v1336, %v1774
        %v1776 = vpop.f32.mrf.mxu0
        %v1777 = vadd.f32 %v1332, %v1776
        %v1778 = vpop.f32.mrf.mxu0
        %v1779 = vadd.f32 %v1336, %v1778
        %1780 = vmatprep.mubr.bf16.mxu0 %v1190
        %1781 = vmatmul.mubr.bf16.gmra.mxu0 %v1189
        %v1782 = vpop.f32.mrf.mxu0
        %v1783 = vadd.f32 %v1332, %v1782
        %v1784 = vpop.f32.mrf.mxu0
        %v1785 = vadd.f32 %v1336, %v1784
        %v1786 = vpop.f32.mrf.mxu0
        %v1787 = vadd.f32 %v1332, %v1786
        %v1788 = vpop.f32.mrf.mxu0
        %v1789 = vadd.f32 %v1336, %v1788
        %1790 = vmatprep.mubr.bf16.mxu0 %v1193
        %1791 = vmatmul.mubr.bf16.gmra.mxu0 %v1192
        %v1792 = vpop.f32.mrf.mxu0
        %v1793 = vadd.f32 %v1332, %v1792
        %v1794 = vpop.f32.mrf.mxu0
        %v1795 = vadd.f32 %v1336, %v1794
        %v1796 = vpop.f32.mrf.mxu0
        %v1797 = vadd.f32 %v1332, %v1796
        %v1798 = vpop.f32.mrf.mxu0
        %v1799 = vadd.f32 %v1336, %v1798
        %1800 = vmatprep.mubr.bf16.mxu0 %v1196
        %1801 = vmatmul.mubr.bf16.gmra.mxu0 %v1195
        %v1802 = vpop.f32.mrf.mxu0
        %v1803 = vadd.f32 %v1332, %v1802
        %v1804 = vpop.f32.mrf.mxu0
        %v1805 = vadd.f32 %v1336, %v1804
        %v1806 = vpop.f32.mrf.mxu0
        %v1807 = vadd.f32 %v1332, %v1806
        %v1808 = vpop.f32.mrf.mxu0
        %v1809 = vadd.f32 %v1336, %v1808
        %1810 = vmatprep.mubr.bf16.mxu0 %v1199
        %1811 = vmatmul.mubr.bf16.gmra.mxu0 %v1198
        %v1812 = vpop.f32.mrf.mxu0
        %v1813 = vadd.f32 %v1332, %v1812
        %v1814 = vpop.f32.mrf.mxu0
        %v1815 = vadd.f32 %v1336, %v1814
        %v1816 = vpop.f32.mrf.mxu0
        %v1817 = vadd.f32 %v1332, %v1816
        %v1818 = vpop.f32.mrf.mxu0
        %v1819 = vadd.f32 %v1336, %v1818
        %1820 = vmatprep.mubr.bf16.mxu0 %v1202
        %1821 = vmatmul.mubr.bf16.gmra.mxu0 %v1201
        %v1822 = vpop.f32.mrf.mxu0
        %v1823 = vadd.f32 %v1332, %v1822
        %v1824 = vpop.f32.mrf.mxu0
        %v1825 = vadd.f32 %v1336, %v1824
        %v1826 = vpop.f32.mrf.mxu0
        %v1827 = vadd.f32 %v1332, %v1826
        %v1828 = vpop.f32.mrf.mxu0
        %v1829 = vadd.f32 %v1336, %v1828
        %1830 = vmatprep.mubr.bf16.mxu0 %v1205
        %1831 = vmatmul.mubr.bf16.gmra.mxu0 %v1204
        %v1832 = vpop.f32.mrf.mxu0
        %v1833 = vadd.f32 %v1332, %v1832
        %v1834 = vpop.f32.mrf.mxu0
        %v1835 = vadd.f32 %v1336, %v1834
        %v1836 = vpop.f32.mrf.mxu0
        %v1837 = vadd.f32 %v1332, %v1836
        %v1838 = vpop.f32.mrf.mxu0
        %v1839 = vadd.f32 %v1336, %v1838
        %1840 = vmatprep.mubr.bf16.mxu0 %v1208
        %1841 = vmatmul.mubr.bf16.gmra.mxu0 %v1207
        %v1842 = vpop.f32.mrf.mxu0
        %v1843 = vadd.f32 %v1332, %v1842
        %v1844 = vpop.f32.mrf.mxu0
        %v1845 = vadd.f32 %v1336, %v1844
        %v1846 = vpop.f32.mrf.mxu0
        %v1847 = vadd.f32 %v1332, %v1846
        %v1848 = vpop.f32.mrf.mxu0
        %v1849 = vadd.f32 %v1336, %v1848
        %1850 = vmatprep.mubr.bf16.mxu0 %v1211
        %1851 = vmatmul.mubr.bf16.gmra.mxu0 %v1210
        %v1852 = vpop.f32.mrf.mxu0
        %v1853 = vadd.f32 %v1332, %v1852
        %v1854 = vpop.f32.mrf.mxu0
        %v1855 = vadd.f32 %v1336, %v1854
        %v1856 = vpop.f32.mrf.mxu0
        %v1857 = vadd.f32 %v1332, %v1856
        %v1858 = vpop.f32.mrf.mxu0
        %v1859 = vadd.f32 %v1336, %v1858
        %1860 = vmatprep.mubr.bf16.mxu0 %v1214
        %1861 = vmatmul.mubr.bf16.gmra.mxu0 %v1213
        %v1862 = vpop.f32.mrf.mxu0
        %v1863 = vadd.f32 %v1332, %v1862
        %v1864 = vpop.f32.mrf.mxu0
        %v1865 = vadd.f32 %v1336, %v1864
        %v1866 = vpop.f32.mrf.mxu0
        %v1867 = vadd.f32 %v1332, %v1866
        %v1868 = vpop.f32.mrf.mxu0
        %v1869 = vadd.f32 %v1336, %v1868
        %1870 = vmatprep.mubr.bf16.mxu0 %v1217
        %1871 = vmatmul.mubr.bf16.gmra.mxu0 %v1216
        %v1872 = vpop.f32.mrf.mxu0
        %v1873 = vadd.f32 %v1332, %v1872
        %v1874 = vpop.f32.mrf.mxu0
        %v1875 = vadd.f32 %v1336, %v1874
        %v1876 = vpop.f32.mrf.mxu0
        %v1877 = vadd.f32 %v1332, %v1876
        %v1878 = vpop.f32.mrf.mxu0
        %v1879 = vadd.f32 %v1336, %v1878
        %1880 = vmatprep.mubr.bf16.mxu0 %v1220
        %1881 = vmatmul.mubr.bf16.gmra.mxu0 %v1219
        %v1882 = vpop.f32.mrf.mxu0
        %v1883 = vadd.f32 %v1332, %v1882
        %v1884 = vpop.f32.mrf.mxu0
        %v1885 = vadd.f32 %v1336, %v1884
        %v1886 = vpop.f32.mrf.mxu0
        %v1887 = vadd.f32 %v1332, %v1886
        %v1888 = vpop.f32.mrf.mxu0
        %v1889 = vadd.f32 %v1336, %v1888
        %1890 = vmatprep.mubr.bf16.mxu0 %v1223
        %1891 = vmatmul.mubr.bf16.gmra.mxu0 %v1222
        %v1892 = vpop.f32.mrf.mxu0
        %v1893 = vadd.f32 %v1332, %v1892
        %v1894 = vpop.f32.mrf.mxu0
        %v1895 = vadd.f32 %v1336, %v1894
        %v1896 = vpop.f32.mrf.mxu0
        %v1897 = vadd.f32 %v1332, %v1896
        %v1898 = vpop.f32.mrf.mxu0
        %v1899 = vadd.f32 %v1336, %v1898
        %1900 = vmatprep.mubr.bf16.mxu0 %v1226
        %1901 = vmatmul.mubr.bf16.gmra.mxu0 %v1225
        %v1902 = vpop.f32.mrf.mxu0
        %v1903 = vadd.f32 %v1332, %v1902
        %v1904 = vpop.f32.mrf.mxu0
        %v1905 = vadd.f32 %v1336, %v1904
        %v1906 = vpop.f32.mrf.mxu0
        %v1907 = vadd.f32 %v1332, %v1906
        %v1908 = vpop.f32.mrf.mxu0
        %v1909 = vadd.f32 %v1336, %v1908
        %1910 = vmatprep.mubr.bf16.mxu0 %v1229
        %1911 = vmatmul.mubr.bf16.gmra.mxu0 %v1228
        %v1912 = vpop.f32.mrf.mxu0
        %v1913 = vadd.f32 %v1332, %v1912
        %v1914 = vpop.f32.mrf.mxu0
        %v1915 = vadd.f32 %v1336, %v1914
        %v1916 = vpop.f32.mrf.mxu0
        %v1917 = vadd.f32 %v1332, %v1916
        %v1918 = vpop.f32.mrf.mxu0
        %v1919 = vadd.f32 %v1336, %v1918
        %1920 = vdwg.mxu0
        %1921 = vmatprep.subr.bf16.mxu0 %v1654
        %1922 = vmatpush1.bf16.msra.mxu0 %v1653
        %1923 = vmatprep.subr.bf16.mxu0 %v1651
        %1924 = vmatpush1.bf16.msra.mxu0 %v1650
        %1925 = vmatprep.subr.bf16.mxu0 %v1648
        %1926 = vmatpush1.bf16.msra.mxu0 %v1647
        %1927 = vmatprep.subr.bf16.mxu0 %v1645
        %1928 = vmatpush1.bf16.msra.mxu0 %v1644
        %1929 = vmatprep.subr.bf16.mxu0 %v1642
        %1930 = vmatpush1.bf16.msra.mxu0 %v1641
        %1931 = vmatprep.subr.bf16.mxu0 %v1639
        %1932 = vmatpush1.bf16.msra.mxu0 %v1638
        %1933 = vmatprep.subr.bf16.mxu0 %v1636
        %1934 = vmatpush1.bf16.msra.mxu0 %v1635
        %1935 = vmatprep.subr.bf16.mxu0 %v1633
        %1936 = vmatpush1.bf16.msra.mxu0 %v1632
        %1937 = vmatprep.subr.bf16.mxu0 0
        %1938 = vmatpush2.bf16.msra.mxu0 0
        %1939 = vmatprep.subr.bf16.mxu0 0
        %1940 = vmatpush2.bf16.msra.mxu0 0
        %1941 = vmatprep.subr.bf16.mxu0 0
        %1942 = vmatpush2.bf16.msra.mxu0 0
        %1943 = vmatprep.subr.bf16.mxu0 0
        %1944 = vmatpush2.bf16.msra.mxu0 0
        %1945 = vmatprep.subr.bf16.mxu0 0
        %1946 = vmatpush2.bf16.msra.mxu0 0
        %1947 = vmatprep.subr.bf16.mxu0 0
        %1948 = vmatpush2.bf16.msra.mxu0 0
        %1949 = vmatprep.subr.bf16.mxu0 0
        %1950 = vmatpush2.bf16.msra.mxu0 0
        %1951 = vmatprep.subr.bf16.mxu0 0
        %1952 = vmatpush2.bf16.msra.mxu0 0
        %1953 = vmatprep.mubr.bf16.mxu0 0
        %1954 = vmatmul.mubr.bf16.gmra.mxu0 %v1185
        %v1955 = vpop.f32.mrf.mxu0
        %v1956 = vadd.f32 %v1763, %v1955
        %v1957 = vpop.f32.mrf.mxu0
        %v1958 = vadd.f32 %v1765, %v1957
        %v1959 = vpop.f32.mrf.mxu0
        %v1960 = vadd.f32 %v1767, %v1959
        %v1961 = vpop.f32.mrf.mxu0
        %v1962 = vadd.f32 %v1769, %v1961
        %1963 = vmatprep.mubr.bf16.mxu0 0
        %1964 = vmatmul.mubr.bf16.gmra.mxu0 %v1188
        %v1965 = vpop.f32.mrf.mxu0
        %v1966 = vadd.f32 %v1773, %v1965
        %v1967 = vpop.f32.mrf.mxu0
        %v1968 = vadd.f32 %v1775, %v1967
        %v1969 = vpop.f32.mrf.mxu0
        %v1970 = vadd.f32 %v1777, %v1969
        %v1971 = vpop.f32.mrf.mxu0
        %v1972 = vadd.f32 %v1779, %v1971
        %1973 = vmatprep.mubr.bf16.mxu0 0
        %1974 = vmatmul.mubr.bf16.gmra.mxu0 %v1191
        %v1975 = vpop.f32.mrf.mxu0
        %v1976 = vadd.f32 %v1783, %v1975
        %v1977 = vpop.f32.mrf.mxu0
        %v1978 = vadd.f32 %v1785, %v1977
        %v1979 = vpop.f32.mrf.mxu0
        %v1980 = vadd.f32 %v1787, %v1979
        %v1981 = vpop.f32.mrf.mxu0
        %v1982 = vadd.f32 %v1789, %v1981
        %1983 = vmatprep.mubr.bf16.mxu0 0
        %1984 = vmatmul.mubr.bf16.gmra.mxu0 %v1194
        %v1985 = vpop.f32.mrf.mxu0
        %v1986 = vadd.f32 %v1793, %v1985
        %v1987 = vpop.f32.mrf.mxu0
        %v1988 = vadd.f32 %v1795, %v1987
        %v1989 = vpop.f32.mrf.mxu0
        %v1990 = vadd.f32 %v1797, %v1989
        %v1991 = vpop.f32.mrf.mxu0
        %v1992 = vadd.f32 %v1799, %v1991
        %1993 = vmatprep.mubr.bf16.mxu0 0
        %1994 = vmatmul.mubr.bf16.gmra.mxu0 %v1197
        %v1995 = vpop.f32.mrf.mxu0
        %v1996 = vadd.f32 %v1803, %v1995
        %v1997 = vpop.f32.mrf.mxu0
        %v1998 = vadd.f32 %v1805, %v1997
        %v1999 = vpop.f32.mrf.mxu0
        %v2000 = vadd.f32 %v1807, %v1999
        %v2001 = vpop.f32.mrf.mxu0
        %v2002 = vadd.f32 %v1809, %v2001
        %2003 = vmatprep.mubr.bf16.mxu0 0
        %2004 = vmatmul.mubr.bf16.gmra.mxu0 %v1200
        %v2005 = vpop.f32.mrf.mxu0
        %v2006 = vadd.f32 %v1813, %v2005
        %v2007 = vpop.f32.mrf.mxu0
        %v2008 = vadd.f32 %v1815, %v2007
        %v2009 = vpop.f32.mrf.mxu0
        %v2010 = vadd.f32 %v1817, %v2009
        %v2011 = vpop.f32.mrf.mxu0
        %v2012 = vadd.f32 %v1819, %v2011
        %2013 = vmatprep.mubr.bf16.mxu0 0
        %2014 = vmatmul.mubr.bf16.gmra.mxu0 %v1203
        %v2015 = vpop.f32.mrf.mxu0
        %v2016 = vadd.f32 %v1823, %v2015
        %v2017 = vpop.f32.mrf.mxu0
        %v2018 = vadd.f32 %v1825, %v2017
        %v2019 = vpop.f32.mrf.mxu0
        %v2020 = vadd.f32 %v1827, %v2019
        %v2021 = vpop.f32.mrf.mxu0
        %v2022 = vadd.f32 %v1829, %v2021
        %2023 = vmatprep.mubr.bf16.mxu0 0
        %2024 = vmatmul.mubr.bf16.gmra.mxu0 %v1206
        %v2025 = vpop.f32.mrf.mxu0
        %v2026 = vadd.f32 %v1833, %v2025
        %v2027 = vpop.f32.mrf.mxu0
        %v2028 = vadd.f32 %v1835, %v2027
        %v2029 = vpop.f32.mrf.mxu0
        %v2030 = vadd.f32 %v1837, %v2029
        %v2031 = vpop.f32.mrf.mxu0
        %v2032 = vadd.f32 %v1839, %v2031
        %2033 = vmatprep.mubr.bf16.mxu0 0
        %2034 = vmatmul.mubr.bf16.gmra.mxu0 %v1209
        %v2035 = vpop.f32.mrf.mxu0
        %v2036 = vadd.f32 %v1843, %v2035
        %v2037 = vpop.f32.mrf.mxu0
        %v2038 = vadd.f32 %v1845, %v2037
        %v2039 = vpop.f32.mrf.mxu0
        %v2040 = vadd.f32 %v1847, %v2039
        %v2041 = vpop.f32.mrf.mxu0
        %v2042 = vadd.f32 %v1849, %v2041
        %2043 = vmatprep.mubr.bf16.mxu0 0
        %2044 = vmatmul.mubr.bf16.gmra.mxu0 %v1212
        %v2045 = vpop.f32.mrf.mxu0
        %v2046 = vadd.f32 %v1853, %v2045
        %v2047 = vpop.f32.mrf.mxu0
        %v2048 = vadd.f32 %v1855, %v2047
        %v2049 = vpop.f32.mrf.mxu0
        %v2050 = vadd.f32 %v1857, %v2049
        %v2051 = vpop.f32.mrf.mxu0
        %v2052 = vadd.f32 %v1859, %v2051
        %2053 = vmatprep.mubr.bf16.mxu0 0
        %2054 = vmatmul.mubr.bf16.gmra.mxu0 %v1215
        %v2055 = vpop.f32.mrf.mxu0
        %v2056 = vadd.f32 %v1863, %v2055
        %v2057 = vpop.f32.mrf.mxu0
        %v2058 = vadd.f32 %v1865, %v2057
        %v2059 = vpop.f32.mrf.mxu0
        %v2060 = vadd.f32 %v1867, %v2059
        %v2061 = vpop.f32.mrf.mxu0
        %v2062 = vadd.f32 %v1869, %v2061
        %2063 = vmatprep.mubr.bf16.mxu0 0
        %2064 = vmatmul.mubr.bf16.gmra.mxu0 %v1218
        %v2065 = vpop.f32.mrf.mxu0
        %v2066 = vadd.f32 %v1873, %v2065
        %v2067 = vpop.f32.mrf.mxu0
        %v2068 = vadd.f32 %v1875, %v2067
        %v2069 = vpop.f32.mrf.mxu0
        %v2070 = vadd.f32 %v1877, %v2069
        %v2071 = vpop.f32.mrf.mxu0
        %v2072 = vadd.f32 %v1879, %v2071
        %2073 = vmatprep.mubr.bf16.mxu0 0
        %2074 = vmatmul.mubr.bf16.gmra.mxu0 %v1221
        %v2075 = vpop.f32.mrf.mxu0
        %v2076 = vadd.f32 %v1883, %v2075
        %v2077 = vpop.f32.mrf.mxu0
        %v2078 = vadd.f32 %v1885, %v2077
        %v2079 = vpop.f32.mrf.mxu0
        %v2080 = vadd.f32 %v1887, %v2079
        %v2081 = vpop.f32.mrf.mxu0
        %v2082 = vadd.f32 %v1889, %v2081
        %2083 = vmatprep.mubr.bf16.mxu0 0
        %2084 = vmatmul.mubr.bf16.gmra.mxu0 %v1224
        %v2085 = vpop.f32.mrf.mxu0
        %v2086 = vadd.f32 %v1893, %v2085
        %v2087 = vpop.f32.mrf.mxu0
        %v2088 = vadd.f32 %v1895, %v2087
        %v2089 = vpop.f32.mrf.mxu0
        %v2090 = vadd.f32 %v1897, %v2089
        %v2091 = vpop.f32.mrf.mxu0
        %v2092 = vadd.f32 %v1899, %v2091
        %2093 = vmatprep.mubr.bf16.mxu0 0
        %2094 = vmatmul.mubr.bf16.gmra.mxu0 %v1227
        %v2095 = vpop.f32.mrf.mxu0
        %v2096 = vadd.f32 %v1903, %v2095
        %v2097 = vpop.f32.mrf.mxu0
        %v2098 = vadd.f32 %v1905, %v2097
        %v2099 = vpop.f32.mrf.mxu0
        %v2100 = vadd.f32 %v1907, %v2099
        %v2101 = vpop.f32.mrf.mxu0
        %v2102 = vadd.f32 %v1909, %v2101
        %2103 = vmatprep.mubr.bf16.mxu0 0
        %2104 = vmatmul.mubr.bf16.gmra.mxu0 %v1230
        %v2105 = vpop.f32.mrf.mxu0
        %v2106 = vadd.f32 %v1913, %v2105
        %v2107 = vpop.f32.mrf.mxu0
        %v2108 = vadd.f32 %v1915, %v2107
        %v2109 = vpop.f32.mrf.mxu0
        %v2110 = vadd.f32 %v1917, %v2109
        %v2111 = vpop.f32.mrf.mxu0
        %v2112 = vadd.f32 %v1919, %v2111
        %2113 = vdwg.mxu0
        %2114 = vmatprep.subr.bf16.mxu0 0
        %2115 = vmatpush1.bf16.msra.mxu0 %v1607
        %2116 = vmatprep.subr.bf16.mxu0 0
        %2117 = vmatpush1.bf16.msra.mxu0 %v1604
        %2118 = vmatprep.subr.bf16.mxu0 0
        %2119 = vmatpush1.bf16.msra.mxu0 %v1601
        %2120 = vmatprep.subr.bf16.mxu0 0
        %2121 = vmatpush1.bf16.msra.mxu0 %v1598
        %2122 = vmatprep.subr.bf16.mxu0 0
        %2123 = vmatpush1.bf16.msra.mxu0 %v1595
        %2124 = vmatprep.subr.bf16.mxu0 0
        %2125 = vmatpush1.bf16.msra.mxu0 %v1592
        %2126 = vmatprep.subr.bf16.mxu0 0
        %2127 = vmatpush1.bf16.msra.mxu0 %v1589
        %2128 = vmatprep.subr.bf16.mxu0 0
        %2129 = vmatpush1.bf16.msra.mxu0 %v1586
        %2130 = vmatprep.subr.bf16.mxu0 0
        %2131 = vmatpush2.bf16.msra.mxu0 %v1631
        %2132 = vmatprep.subr.bf16.mxu0 0
        %2133 = vmatpush2.bf16.msra.mxu0 %v1628
        %2134 = vmatprep.subr.bf16.mxu0 0
        %2135 = vmatpush2.bf16.msra.mxu0 %v1625
        %2136 = vmatprep.subr.bf16.mxu0 0
        %2137 = vmatpush2.bf16.msra.mxu0 %v1622
        %2138 = vmatprep.subr.bf16.mxu0 0
        %2139 = vmatpush2.bf16.msra.mxu0 %v1619
        %2140 = vmatprep.subr.bf16.mxu0 0
        %2141 = vmatpush2.bf16.msra.mxu0 %v1616
        %2142 = vmatprep.subr.bf16.mxu0 0
        %2143 = vmatpush2.bf16.msra.mxu0 %v1613
        %2144 = vmatprep.subr.bf16.mxu0 0
        %2145 = vmatpush2.bf16.msra.mxu0 %v1610
        %2146 = vmatprep.mubr.bf16.mxu0 %v1184
        %2147 = vmatmul.mubr.bf16.gmra.mxu0 %v1183
        %v2148 = vpop.f32.mrf.mxu0
        %v2149 = vadd.f32 %v1340, %v2148
        %v2150 = vpop.f32.mrf.mxu0
        %v2151 = vpop.f32.mrf.mxu0
        %v2152 = vadd.f32 %v1340, %v2151
        %v2153 = vpop.f32.mrf.mxu0
        %2154 = vmatprep.mubr.bf16.mxu0 %v1187
        %2155 = vmatmul.mubr.bf16.gmra.mxu0 %v1186
        %v2156 = vpop.f32.mrf.mxu0
        %v2157 = vadd.f32 %v1340, %v2156
        %v2158 = vpop.f32.mrf.mxu0
        %v2159 = vpop.f32.mrf.mxu0
        %v2160 = vadd.f32 %v1340, %v2159
        %v2161 = vpop.f32.mrf.mxu0
        %2162 = vmatprep.mubr.bf16.mxu0 %v1190
        %2163 = vmatmul.mubr.bf16.gmra.mxu0 %v1189
        %v2164 = vpop.f32.mrf.mxu0
        %v2165 = vadd.f32 %v1340, %v2164
        %v2166 = vpop.f32.mrf.mxu0
        %v2167 = vpop.f32.mrf.mxu0
        %v2168 = vadd.f32 %v1340, %v2167
        %v2169 = vpop.f32.mrf.mxu0
        %2170 = vmatprep.mubr.bf16.mxu0 %v1193
        %2171 = vmatmul.mubr.bf16.gmra.mxu0 %v1192
        %v2172 = vpop.f32.mrf.mxu0
        %v2173 = vadd.f32 %v1340, %v2172
        %v2174 = vpop.f32.mrf.mxu0
        %v2175 = vpop.f32.mrf.mxu0
        %v2176 = vadd.f32 %v1340, %v2175
        %v2177 = vpop.f32.mrf.mxu0
        %2178 = vmatprep.mubr.bf16.mxu0 %v1196
        %2179 = vmatmul.mubr.bf16.gmra.mxu0 %v1195
        %v2180 = vpop.f32.mrf.mxu0
        %v2181 = vadd.f32 %v1340, %v2180
        %v2182 = vpop.f32.mrf.mxu0
        %v2183 = vpop.f32.mrf.mxu0
        %v2184 = vadd.f32 %v1340, %v2183
        %v2185 = vpop.f32.mrf.mxu0
        %2186 = vmatprep.mubr.bf16.mxu0 %v1199
        %2187 = vmatmul.mubr.bf16.gmra.mxu0 %v1198
        %v2188 = vpop.f32.mrf.mxu0
        %v2189 = vadd.f32 %v1340, %v2188
        %v2190 = vpop.f32.mrf.mxu0
        %v2191 = vpop.f32.mrf.mxu0
        %v2192 = vadd.f32 %v1340, %v2191
        %v2193 = vpop.f32.mrf.mxu0
        %2194 = vmatprep.mubr.bf16.mxu0 %v1202
        %2195 = vmatmul.mubr.bf16.gmra.mxu0 %v1201
        %v2196 = vpop.f32.mrf.mxu0
        %v2197 = vadd.f32 %v1340, %v2196
        %v2198 = vpop.f32.mrf.mxu0
        %v2199 = vpop.f32.mrf.mxu0
        %v2200 = vadd.f32 %v1340, %v2199
        %v2201 = vpop.f32.mrf.mxu0
        %2202 = vmatprep.mubr.bf16.mxu0 %v1205
        %2203 = vmatmul.mubr.bf16.gmra.mxu0 %v1204
        %v2204 = vpop.f32.mrf.mxu0
        %v2205 = vadd.f32 %v1340, %v2204
        %v2206 = vpop.f32.mrf.mxu0
        %v2207 = vpop.f32.mrf.mxu0
        %v2208 = vadd.f32 %v1340, %v2207
        %v2209 = vpop.f32.mrf.mxu0
        %2210 = vmatprep.mubr.bf16.mxu0 %v1208
        %2211 = vmatmul.mubr.bf16.gmra.mxu0 %v1207
        %v2212 = vpop.f32.mrf.mxu0
        %v2213 = vadd.f32 %v1340, %v2212
        %v2214 = vpop.f32.mrf.mxu0
        %v2215 = vpop.f32.mrf.mxu0
        %v2216 = vadd.f32 %v1340, %v2215
        %v2217 = vpop.f32.mrf.mxu0
        %2218 = vmatprep.mubr.bf16.mxu0 %v1211
        %2219 = vmatmul.mubr.bf16.gmra.mxu0 %v1210
        %v2220 = vpop.f32.mrf.mxu0
        %v2221 = vadd.f32 %v1340, %v2220
        %v2222 = vpop.f32.mrf.mxu0
        %v2223 = vpop.f32.mrf.mxu0
        %v2224 = vadd.f32 %v1340, %v2223
        %v2225 = vpop.f32.mrf.mxu0
        %2226 = vmatprep.mubr.bf16.mxu0 %v1214
        %2227 = vmatmul.mubr.bf16.gmra.mxu0 %v1213
        %v2228 = vpop.f32.mrf.mxu0
        %v2229 = vadd.f32 %v1340, %v2228
        %v2230 = vpop.f32.mrf.mxu0
        %v2231 = vpop.f32.mrf.mxu0
        %v2232 = vadd.f32 %v1340, %v2231
        %v2233 = vpop.f32.mrf.mxu0
        %2234 = vmatprep.mubr.bf16.mxu0 %v1217
        %2235 = vmatmul.mubr.bf16.gmra.mxu0 %v1216
        %v2236 = vpop.f32.mrf.mxu0
        %v2237 = vadd.f32 %v1340, %v2236
        %v2238 = vpop.f32.mrf.mxu0
        %v2239 = vpop.f32.mrf.mxu0
        %v2240 = vadd.f32 %v1340, %v2239
        %v2241 = vpop.f32.mrf.mxu0
        %2242 = vmatprep.mubr.bf16.mxu0 %v1220
        %2243 = vmatmul.mubr.bf16.gmra.mxu0 %v1219
        %v2244 = vpop.f32.mrf.mxu0
        %v2245 = vadd.f32 %v1340, %v2244
        %v2246 = vpop.f32.mrf.mxu0
        %v2247 = vpop.f32.mrf.mxu0
        %v2248 = vadd.f32 %v1340, %v2247
        %v2249 = vpop.f32.mrf.mxu0
        %2250 = vmatprep.mubr.bf16.mxu0 %v1223
        %2251 = vmatmul.mubr.bf16.gmra.mxu0 %v1222
        %v2252 = vpop.f32.mrf.mxu0
        %v2253 = vadd.f32 %v1340, %v2252
        %v2254 = vpop.f32.mrf.mxu0
        %v2255 = vpop.f32.mrf.mxu0
        %v2256 = vadd.f32 %v1340, %v2255
        %v2257 = vpop.f32.mrf.mxu0
        %2258 = vmatprep.mubr.bf16.mxu0 %v1226
        %2259 = vmatmul.mubr.bf16.gmra.mxu0 %v1225
        %v2260 = vpop.f32.mrf.mxu0
        %v2261 = vadd.f32 %v1340, %v2260
        %v2262 = vpop.f32.mrf.mxu0
        %v2263 = vpop.f32.mrf.mxu0
        %v2264 = vadd.f32 %v1340, %v2263
        %v2265 = vpop.f32.mrf.mxu0
        %2266 = vmatprep.mubr.bf16.mxu0 %v1229
        %2267 = vmatmul.mubr.bf16.gmra.mxu0 %v1228
        %v2268 = vpop.f32.mrf.mxu0
        %v2269 = vadd.f32 %v1340, %v2268
        %v2270 = vpop.f32.mrf.mxu0
        %v2271 = vpop.f32.mrf.mxu0
        %v2272 = vadd.f32 %v1340, %v2271
        %v2273 = vpop.f32.mrf.mxu0
        %2274 = vdwg.mxu0
        %2275 = vmatprep.subr.bf16.mxu0 0
        %2276 = vmatpush1.bf16.msra.mxu0 %v1655
        %2277 = vmatprep.subr.bf16.mxu0 0
        %2278 = vmatpush1.bf16.msra.mxu0 %v1652
        %2279 = vmatprep.subr.bf16.mxu0 0
        %2280 = vmatpush1.bf16.msra.mxu0 %v1649
        %2281 = vmatprep.subr.bf16.mxu0 0
        %2282 = vmatpush1.bf16.msra.mxu0 %v1646
        %2283 = vmatprep.subr.bf16.mxu0 0
        %2284 = vmatpush1.bf16.msra.mxu0 %v1643
        %2285 = vmatprep.subr.bf16.mxu0 0
        %2286 = vmatpush1.bf16.msra.mxu0 %v1640
        %2287 = vmatprep.subr.bf16.mxu0 0
        %2288 = vmatpush1.bf16.msra.mxu0 %v1637
        %2289 = vmatprep.subr.bf16.mxu0 0
        %2290 = vmatpush1.bf16.msra.mxu0 %v1634
        %2291 = vmatprep.subr.bf16.mxu0 0
        %2292 = vmatpush2.bf16.msra.mxu0 0
        %2293 = vmatprep.subr.bf16.mxu0 0
        %2294 = vmatpush2.bf16.msra.mxu0 0
        %2295 = vmatprep.subr.bf16.mxu0 0
        %2296 = vmatpush2.bf16.msra.mxu0 0
        %2297 = vmatprep.subr.bf16.mxu0 0
        %2298 = vmatpush2.bf16.msra.mxu0 0
        %2299 = vmatprep.subr.bf16.mxu0 0
        %2300 = vmatpush2.bf16.msra.mxu0 0
        %2301 = vmatprep.subr.bf16.mxu0 0
        %2302 = vmatpush2.bf16.msra.mxu0 0
        %2303 = vmatprep.subr.bf16.mxu0 0
        %2304 = vmatpush2.bf16.msra.mxu0 0
        %2305 = vmatprep.subr.bf16.mxu0 0
        %2306 = vmatpush2.bf16.msra.mxu0 0
        %2307 = vmatprep.mubr.bf16.mxu0 0
        %2308 = vmatmul.mubr.bf16.gmra.mxu0 %v1185
        %v2309 = vpop.f32.mrf.mxu0
        %v2310 = vadd.f32 %v2149, %v2309
        %v2311 = vpop.f32.mrf.mxu0
        %v2312 = vpop.f32.mrf.mxu0
        %v2313 = vadd.f32 %v2152, %v2312
        %v2314 = vpop.f32.mrf.mxu0
        %2315 = vmatprep.mubr.bf16.mxu0 0
        %2316 = vmatmul.mubr.bf16.gmra.mxu0 %v1188
        %v2317 = vpop.f32.mrf.mxu0
        %v2318 = vadd.f32 %v2157, %v2317
        %v2319 = vpop.f32.mrf.mxu0
        %v2320 = vpop.f32.mrf.mxu0
        %v2321 = vadd.f32 %v2160, %v2320
        %v2322 = vpop.f32.mrf.mxu0
        %2323 = vmatprep.mubr.bf16.mxu0 0
        %2324 = vmatmul.mubr.bf16.gmra.mxu0 %v1191
        %v2325 = vpop.f32.mrf.mxu0
        %v2326 = vadd.f32 %v2165, %v2325
        %v2327 = vpop.f32.mrf.mxu0
        %v2328 = vpop.f32.mrf.mxu0
        %v2329 = vadd.f32 %v2168, %v2328
        %v2330 = vpop.f32.mrf.mxu0
        %2331 = vmatprep.mubr.bf16.mxu0 0
        %2332 = vmatmul.mubr.bf16.gmra.mxu0 %v1194
        %v2333 = vpop.f32.mrf.mxu0
        %v2334 = vadd.f32 %v2173, %v2333
        %v2335 = vpop.f32.mrf.mxu0
        %v2336 = vpop.f32.mrf.mxu0
        %v2337 = vadd.f32 %v2176, %v2336
        %v2338 = vpop.f32.mrf.mxu0
        %2339 = vmatprep.mubr.bf16.mxu0 0
        %2340 = vmatmul.mubr.bf16.gmra.mxu0 %v1197
        %v2341 = vpop.f32.mrf.mxu0
        %v2342 = vadd.f32 %v2181, %v2341
        %v2343 = vpop.f32.mrf.mxu0
        %v2344 = vpop.f32.mrf.mxu0
        %v2345 = vadd.f32 %v2184, %v2344
        %v2346 = vpop.f32.mrf.mxu0
        %2347 = vmatprep.mubr.bf16.mxu0 0
        %2348 = vmatmul.mubr.bf16.gmra.mxu0 %v1200
        %v2349 = vpop.f32.mrf.mxu0
        %v2350 = vadd.f32 %v2189, %v2349
        %v2351 = vpop.f32.mrf.mxu0
        %v2352 = vpop.f32.mrf.mxu0
        %v2353 = vadd.f32 %v2192, %v2352
        %v2354 = vpop.f32.mrf.mxu0
        %2355 = vmatprep.mubr.bf16.mxu0 0
        %2356 = vmatmul.mubr.bf16.gmra.mxu0 %v1203
        %v2357 = vpop.f32.mrf.mxu0
        %v2358 = vadd.f32 %v2197, %v2357
        %v2359 = vpop.f32.mrf.mxu0
        %v2360 = vpop.f32.mrf.mxu0
        %v2361 = vadd.f32 %v2200, %v2360
        %v2362 = vpop.f32.mrf.mxu0
        %2363 = vmatprep.mubr.bf16.mxu0 0
        %2364 = vmatmul.mubr.bf16.gmra.mxu0 %v1206
        %v2365 = vpop.f32.mrf.mxu0
        %v2366 = vadd.f32 %v2205, %v2365
        %v2367 = vpop.f32.mrf.mxu0
        %v2368 = vpop.f32.mrf.mxu0
        %v2369 = vadd.f32 %v2208, %v2368
        %v2370 = vpop.f32.mrf.mxu0
        %2371 = vmatprep.mubr.bf16.mxu0 0
        %2372 = vmatmul.mubr.bf16.gmra.mxu0 %v1209
        %v2373 = vpop.f32.mrf.mxu0
        %v2374 = vadd.f32 %v2213, %v2373
        %v2375 = vpop.f32.mrf.mxu0
        %v2376 = vpop.f32.mrf.mxu0
        %v2377 = vadd.f32 %v2216, %v2376
        %v2378 = vpop.f32.mrf.mxu0
        %2379 = vmatprep.mubr.bf16.mxu0 0
        %2380 = vmatmul.mubr.bf16.gmra.mxu0 %v1212
        %v2381 = vpop.f32.mrf.mxu0
        %v2382 = vadd.f32 %v2221, %v2381
        %v2383 = vpop.f32.mrf.mxu0
        %v2384 = vpop.f32.mrf.mxu0
        %v2385 = vadd.f32 %v2224, %v2384
        %v2386 = vpop.f32.mrf.mxu0
        %2387 = vmatprep.mubr.bf16.mxu0 0
        %2388 = vmatmul.mubr.bf16.gmra.mxu0 %v1215
        %v2389 = vpop.f32.mrf.mxu0
        %v2390 = vadd.f32 %v2229, %v2389
        %v2391 = vpop.f32.mrf.mxu0
        %v2392 = vpop.f32.mrf.mxu0
        %v2393 = vadd.f32 %v2232, %v2392
        %v2394 = vpop.f32.mrf.mxu0
        %2395 = vmatprep.mubr.bf16.mxu0 0
        %2396 = vmatmul.mubr.bf16.gmra.mxu0 %v1218
        %v2397 = vpop.f32.mrf.mxu0
        %v2398 = vadd.f32 %v2237, %v2397
        %v2399 = vpop.f32.mrf.mxu0
        %v2400 = vpop.f32.mrf.mxu0
        %v2401 = vadd.f32 %v2240, %v2400
        %v2402 = vpop.f32.mrf.mxu0
        %2403 = vmatprep.mubr.bf16.mxu0 0
        %2404 = vmatmul.mubr.bf16.gmra.mxu0 %v1221
        %v2405 = vpop.f32.mrf.mxu0
        %v2406 = vadd.f32 %v2245, %v2405
        %v2407 = vpop.f32.mrf.mxu0
        %v2408 = vpop.f32.mrf.mxu0
        %v2409 = vadd.f32 %v2248, %v2408
        %v2410 = vpop.f32.mrf.mxu0
        %2411 = vmatprep.mubr.bf16.mxu0 0
        %2412 = vmatmul.mubr.bf16.gmra.mxu0 %v1224
        %v2413 = vpop.f32.mrf.mxu0
        %v2414 = vadd.f32 %v2253, %v2413
        %v2415 = vpop.f32.mrf.mxu0
        %v2416 = vpop.f32.mrf.mxu0
        %v2417 = vadd.f32 %v2256, %v2416
        %v2418 = vpop.f32.mrf.mxu0
        %2419 = vmatprep.mubr.bf16.mxu0 0
        %2420 = vmatmul.mubr.bf16.gmra.mxu0 %v1227
        %v2421 = vpop.f32.mrf.mxu0
        %v2422 = vadd.f32 %v2261, %v2421
        %v2423 = vpop.f32.mrf.mxu0
        %v2424 = vpop.f32.mrf.mxu0
        %v2425 = vadd.f32 %v2264, %v2424
        %v2426 = vpop.f32.mrf.mxu0
        %2427 = vmatprep.mubr.bf16.mxu0 0
        %2428 = vmatmul.mubr.bf16.gmra.mxu0 %v1230
        %v2429 = vpop.f32.mrf.mxu0
        %v2430 = vadd.f32 %v2269, %v2429
        %v2431 = vpop.f32.mrf.mxu0
        %v2432 = vpop.f32.mrf.mxu0
        %v2433 = vadd.f32 %v2272, %v2432
        %v2434 = vpop.f32.mrf.mxu0
        %2435 = vdwg.mxu0
        %v2436 = vmax.f32 %v1956, 0.0
        %v2437 = vmax.f32 %v1958, 0.0
        %v2438 = vmax.f32 %v2310, 0.0
        %v2439 = vmax.f32 %v1960, 0.0
        %v2440 = vmax.f32 %v1962, 0.0
        %v2441 = vmax.f32 %v2313, 0.0
        %v2442 = vmax.f32 %v1966, 0.0
        %v2443 = vmax.f32 %v1968, 0.0
        %v2444 = vmax.f32 %v2318, 0.0
        %v2445 = vmax.f32 %v1970, 0.0
        %v2446 = vmax.f32 %v1972, 0.0
        %v2447 = vmax.f32 %v2321, 0.0
        %v2448 = vmax.f32 %v1976, 0.0
        %v2449 = vmax.f32 %v1978, 0.0
        %v2450 = vmax.f32 %v2326, 0.0
        %v2451 = vmax.f32 %v1980, 0.0
        %v2452 = vmax.f32 %v1982, 0.0
        %v2453 = vmax.f32 %v2329, 0.0
        %v2454 = vmax.f32 %v1986, 0.0
        %v2455 = vmax.f32 %v1988, 0.0
        %v2456 = vmax.f32 %v2334, 0.0
        %v2457 = vmax.f32 %v1990, 0.0
        %v2458 = vmax.f32 %v1992, 0.0
        %v2459 = vmax.f32 %v2337, 0.0
        %v2460 = vmax.f32 %v1996, 0.0
        %v2461 = vmax.f32 %v1998, 0.0
        %v2462 = vmax.f32 %v2342, 0.0
        %v2463 = vmax.f32 %v2000, 0.0
        %v2464 = vmax.f32 %v2002, 0.0
        %v2465 = vmax.f32 %v2345, 0.0
        %v2466 = vmax.f32 %v2006, 0.0
        %v2467 = vmax.f32 %v2008, 0.0
        %v2468 = vmax.f32 %v2350, 0.0
        %v2469 = vmax.f32 %v2010, 0.0
        %v2470 = vmax.f32 %v2012, 0.0
        %v2471 = vmax.f32 %v2353, 0.0
        %v2472 = vmax.f32 %v2016, 0.0
        %v2473 = vmax.f32 %v2018, 0.0
        %v2474 = vmax.f32 %v2358, 0.0
        %v2475 = vmax.f32 %v2020, 0.0
        %v2476 = vmax.f32 %v2022, 0.0
        %v2477 = vmax.f32 %v2361, 0.0
        %v2478 = vmax.f32 %v2026, 0.0
        %v2479 = vmax.f32 %v2028, 0.0
        %v2480 = vmax.f32 %v2366, 0.0
        %v2481 = vmax.f32 %v2030, 0.0
        %v2482 = vmax.f32 %v2032, 0.0
        %v2483 = vmax.f32 %v2369, 0.0
        %v2484 = vmax.f32 %v2036, 0.0
        %v2485 = vmax.f32 %v2038, 0.0
        %v2486 = vmax.f32 %v2374, 0.0
        %v2487 = vmax.f32 %v2040, 0.0
        %v2488 = vmax.f32 %v2042, 0.0
        %v2489 = vmax.f32 %v2377, 0.0
        %v2490 = vmax.f32 %v2046, 0.0
        %v2491 = vmax.f32 %v2048, 0.0
        %v2492 = vmax.f32 %v2382, 0.0
        %v2493 = vmax.f32 %v2050, 0.0
        %v2494 = vmax.f32 %v2052, 0.0
        %v2495 = vmax.f32 %v2385, 0.0
        %v2496 = vmax.f32 %v2056, 0.0
        %v2497 = vmax.f32 %v2058, 0.0
        %v2498 = vmax.f32 %v2390, 0.0
        %v2499 = vmax.f32 %v2060, 0.0
        %v2500 = vmax.f32 %v2062, 0.0
        %v2501 = vmax.f32 %v2393, 0.0
        %v2502 = vmax.f32 %v2066, 0.0
        %v2503 = vmax.f32 %v2068, 0.0
        %v2504 = vmax.f32 %v2398, 0.0
        %v2505 = vmax.f32 %v2070, 0.0
        %v2506 = vmax.f32 %v2072, 0.0
        %v2507 = vmax.f32 %v2401, 0.0
        %v2508 = vmax.f32 %v2076, 0.0
        %v2509 = vmax.f32 %v2078, 0.0
        %v2510 = vmax.f32 %v2406, 0.0
        %v2511 = vmax.f32 %v2080, 0.0
        %v2512 = vmax.f32 %v2082, 0.0
        %v2513 = vmax.f32 %v2409, 0.0
        %v2514 = vmax.f32 %v2086, 0.0
        %v2515 = vmax.f32 %v2088, 0.0
        %v2516 = vmax.f32 %v2414, 0.0
        %v2517 = vmax.f32 %v2090, 0.0
        %v2518 = vmax.f32 %v2092, 0.0
        %v2519 = vmax.f32 %v2417, 0.0
        %v2520 = vmax.f32 %v2096, 0.0
        %v2521 = vmax.f32 %v2098, 0.0
        %v2522 = vmax.f32 %v2422, 0.0
        %v2523 = vmax.f32 %v2100, 0.0
        %v2524 = vmax.f32 %v2102, 0.0
        %v2525 = vmax.f32 %v2425, 0.0
        %v2526 = vmax.f32 %v2106, 0.0
        %v2527 = vmax.f32 %v2108, 0.0
        %v2528 = vmax.f32 %v2430, 0.0
        %v2529 = vmax.f32 %v2110, 0.0
        %v2530 = vmax.f32 %v2112, 0.0
        %v2531 = vmax.f32 %v2433, 0.0
        %v2532 = vpack.c.bf16 %v2439, %v2436
        %v2533 = vpack.c.bf16 %v2440, %v2437
        %v2534 = vpack.c.bf16 %v2441, %v2438
        %v2535 = vpack.c.bf16 %v2445, %v2442
        %v2536 = vpack.c.bf16 %v2446, %v2443
        %v2537 = vpack.c.bf16 %v2447, %v2444
        %v2538 = vpack.c.bf16 %v2451, %v2448
        %v2539 = vpack.c.bf16 %v2452, %v2449
        %v2540 = vpack.c.bf16 %v2453, %v2450
        %v2541 = vpack.c.bf16 %v2457, %v2454
        %v2542 = vpack.c.bf16 %v2458, %v2455
        %v2543 = vpack.c.bf16 %v2459, %v2456
        %v2544 = vpack.c.bf16 %v2463, %v2460
        %v2545 = vpack.c.bf16 %v2464, %v2461
        %v2546 = vpack.c.bf16 %v2465, %v2462
        %v2547 = vpack.c.bf16 %v2469, %v2466
        %v2548 = vpack.c.bf16 %v2470, %v2467
        %v2549 = vpack.c.bf16 %v2471, %v2468
        %v2550 = vpack.c.bf16 %v2475, %v2472
        %v2551 = vpack.c.bf16 %v2476, %v2473
        %v2552 = vpack.c.bf16 %v2477, %v2474
        %v2553 = vpack.c.bf16 %v2481, %v2478
        %v2554 = vpack.c.bf16 %v2482, %v2479
        %v2555 = vpack.c.bf16 %v2483, %v2480
        %v2556 = vpack.c.bf16 %v2487, %v2484
        %v2557 = vpack.c.bf16 %v2488, %v2485
        %v2558 = vpack.c.bf16 %v2489, %v2486
        %v2559 = vpack.c.bf16 %v2493, %v2490
        %v2560 = vpack.c.bf16 %v2494, %v2491
        %v2561 = vpack.c.bf16 %v2495, %v2492
        %v2562 = vpack.c.bf16 %v2499, %v2496
        %v2563 = vpack.c.bf16 %v2500, %v2497
        %v2564 = vpack.c.bf16 %v2501, %v2498
        %v2565 = vpack.c.bf16 %v2505, %v2502
        %v2566 = vpack.c.bf16 %v2506, %v2503
        %v2567 = vpack.c.bf16 %v2507, %v2504
        %v2568 = vpack.c.bf16 %v2511, %v2508
        %v2569 = vpack.c.bf16 %v2512, %v2509
        %v2570 = vpack.c.bf16 %v2513, %v2510
        %v2571 = vpack.c.bf16 %v2517, %v2514
        %v2572 = vpack.c.bf16 %v2518, %v2515
        %v2573 = vpack.c.bf16 %v2519, %v2516
        %v2574 = vpack.c.bf16 %v2523, %v2520
        %v2575 = vpack.c.bf16 %v2524, %v2521
        %v2576 = vpack.c.bf16 %v2525, %v2522
        %v2577 = vpack.c.bf16 %v2529, %v2526
        %v2578 = vpack.c.bf16 %v2530, %v2527
        %v2579 = vpack.c.bf16 %v2531, %v2528
        %v2580 = vld [vmem:[%s5] sm:$0xff]
        %v2581 = vld [vmem:[%s5 + $0x8] sm:$0xf]
        %v2582 = vld [vmem:[%s5 + $0xc] sm:$0xff]
        %v2583 = vld [vmem:[%s5 + $0x14] sm:$0xf]
        %v2584 = vld [vmem:[%s5 + $0x18] sm:$0xff]
        %v2585 = vld [vmem:[%s5 + $0x20] sm:$0xf]
        %v2586 = vld [vmem:[%s5 + $0x24] sm:$0xff]
        %v2587 = vld [vmem:[%s5 + $0x2c] sm:$0xf]
        %v2588 = vld [vmem:[%s5 + $0x30] sm:$0xff]
        %v2589 = vld [vmem:[%s5 + $0x38] sm:$0xf]
        %v2590 = vld [vmem:[%s5 + $0x3c] sm:$0xff]
        %v2591 = vld [vmem:[%s5 + $0x44] sm:$0xf]
        %v2592 = vld [vmem:[%s5 + $0x48] sm:$0xff]
        %v2593 = vld [vmem:[%s5 + $0x50] sm:$0xf]
        %v2594 = vld [vmem:[%s5 + $0x54] sm:$0xff]
        %v2595 = vld [vmem:[%s5 + $0x5c] sm:$0xf]
        %v2596 = vld [vmem:[%s5 + $0x60] sm:$0xff]
        %v2597 = vld [vmem:[%s5 + $0x68] sm:$0xf]
        %v2598 = vld [vmem:[%s5 + $0x6c] sm:$0xff]
        %v2599 = vld [vmem:[%s5 + $0x74] sm:$0xf]
        %v2600 = vld [vmem:[%s5 + $0x78] sm:$0xff]
        %v2601 = vld [vmem:[%s5 + $0x80] sm:$0xf]
        %v2602 = vld [vmem:[%s5 + $0x84] sm:$0xff]
        %v2603 = vld [vmem:[%s5 + $0x8c] sm:$0xf]
        %v2604 = vld [vmem:[%s5 + $0x90] sm:$0xff]
        %v2605 = vld [vmem:[%s5 + $0x98] sm:$0xf]
        %v2606 = vld [vmem:[%s5 + $0x9c] sm:$0xff]
        %v2607 = vld [vmem:[%s5 + $0xa4] sm:$0xf]
        %v2608 = vld [vmem:[%s5 + $0xa8] sm:$0xff]
        %v2609 = vld [vmem:[%s5 + $0xb0] sm:$0xf]
        %v2610 = vld [vmem:[%s5 + $0xb4] sm:$0xff]
        %v2611 = vld [vmem:[%s5 + $0xbc] sm:$0xf]
        %v2612 = vld [vmem:[%s5 + $0xc0] sm:$0xff]
        %v2613 = vld [vmem:[%s5 + $0xc8] sm:$0xf]
        %v2614 = vld [vmem:[%s5 + $0xcc] sm:$0xff]
        %v2615 = vld [vmem:[%s5 + $0xd4] sm:$0xf]
        %v2616 = vld [vmem:[%s5 + $0xd8] sm:$0xff]
        %v2617 = vld [vmem:[%s5 + $0xe0] sm:$0xf]
        %v2618 = vld [vmem:[%s5 + $0xe4] sm:$0xff]
        %v2619 = vld [vmem:[%s5 + $0xec] sm:$0xf]
        %v2620 = vld [vmem:[%s5 + $0xf0] sm:$0xff]
        %v2621 = vld [vmem:[%s5 + $0xf8] sm:$0xf]
        %v2622 = vld [vmem:[%s5 + $0xfc] sm:$0xff]
        %v2623 = vld [vmem:[%s5 + $0x104] sm:$0xf]
        %v2624 = vld [vmem:[%s5 + $0x108] sm:$0xff]
        %v2625 = vld [vmem:[%s5 + $0x110] sm:$0xf]
        %v2626 = vld [vmem:[%s5 + $0x114] sm:$0xff]
        %v2627 = vld [vmem:[%s5 + $0x11c] sm:$0xf]
        %v2628 = vld [vmem:[%s5 + $0x120] sm:$0xff]
        %v2629 = vld [vmem:[%s5 + $0x128] sm:$0xf]
        %v2630 = vld [vmem:[%s5 + $0x12c] sm:$0xff]
        %v2631 = vld [vmem:[%s5 + $0x134] sm:$0xf]
        %v2632 = vld [vmem:[%s5 + $0x138] sm:$0xff]
        %v2633 = vld [vmem:[%s5 + $0x140] sm:$0xf]
        %v2634 = vld [vmem:[%s5 + $0x144] sm:$0xff]
        %v2635 = vld [vmem:[%s5 + $0x14c] sm:$0xf]
        %v2636 = vld [vmem:[%s5 + $0x150] sm:$0xff]
        %v2637 = vld [vmem:[%s5 + $0x158] sm:$0xf]
        %v2638 = vld [vmem:[%s5 + $0x15c] sm:$0xff]
        %v2639 = vld [vmem:[%s5 + $0x164] sm:$0xf]
        %v2640 = vld [vmem:[%s5 + $0x168] sm:$0xff]
        %v2641 = vld [vmem:[%s5 + $0x170] sm:$0xf]
        %v2642 = vld [vmem:[%s5 + $0x174] sm:$0xff]
        %v2643 = vld [vmem:[%s5 + $0x17c] sm:$0xf]
        %v2644 = vld [vmem:[%s5 + $0x180] sm:$0xff]
        %v2645 = vld [vmem:[%s5 + $0x188] sm:$0xf]
        %v2646 = vld [vmem:[%s5 + $0x18c] sm:$0xff]
        %v2647 = vld [vmem:[%s5 + $0x194] sm:$0xf]
        %v2648 = vld [vmem:[%s5 + $0x198] sm:$0xff]
        %v2649 = vld [vmem:[%s5 + $0x1a0] sm:$0xf]
        %v2650 = vld [vmem:[%s5 + $0x1a4] sm:$0xff]
        %v2651 = vld [vmem:[%s5 + $0x1ac] sm:$0xf]
        %v2652 = vld [vmem:[%s5 + $0x1b0] sm:$0xff]
        %v2653 = vld [vmem:[%s5 + $0x1b8] sm:$0xf]
        %v2654 = vld [vmem:[%s5 + $0x1bc] sm:$0xff]
        %v2655 = vld [vmem:[%s5 + $0x1c4] sm:$0xf]
        %v2656 = vld [vmem:[%s5 + $0x1c8] sm:$0xff]
        %v2657 = vld [vmem:[%s5 + $0x1d0] sm:$0xf]
        %v2658 = vld [vmem:[%s5 + $0x1d4] sm:$0xff]
        %v2659 = vld [vmem:[%s5 + $0x1dc] sm:$0xf]
        %v2660 = vld [vmem:[%s5 + $0x1e0] sm:$0xff]
        %v2661 = vld [vmem:[%s5 + $0x1e8] sm:$0xf]
        %v2662 = vld [vmem:[%s5 + $0x1ec] sm:$0xff]
        %v2663 = vld [vmem:[%s5 + $0x1f4] sm:$0xf]
        %v2664 = vld [vmem:[%s5 + $0x1f8] sm:$0xff]
        %v2665 = vld [vmem:[%s5 + $0x200] sm:$0xf]
        %v2666 = vld [vmem:[%s5 + $0x204] sm:$0xff]
        %v2667 = vld [vmem:[%s5 + $0x20c] sm:$0xf]
        %v2668 = vld [vmem:[%s5 + $0x210] sm:$0xff]
        %v2669 = vld [vmem:[%s5 + $0x218] sm:$0xf]
        %v2670 = vld [vmem:[%s5 + $0x21c] sm:$0xff]
        %v2671 = vld [vmem:[%s5 + $0x224] sm:$0xf]
        %v2672 = vld [vmem:[%s5 + $0x228] sm:$0xff]
        %v2673 = vld [vmem:[%s5 + $0x230] sm:$0xf]
        %v2674 = vld [vmem:[%s5 + $0x234] sm:$0xff]
        %v2675 = vld [vmem:[%s5 + $0x23c] sm:$0xf]
        %v2676 = vld [vmem:[#allocation6] sm:$0x7]
        %v2678 = vlaneseq
        %v2679 = vshrl.u32 %v2678, 7
        %v2680 = vsub.s32 0, %v2679
        %v2681 = vrot.slane %v2676, %v2680
        %v2682 = vlaneseq
        %v2683 = vshrl.u32 %v2682, 7
        %v2684 = vsub.s32 1, %v2683
        %v2685 = vrot.slane %v2676, %v2684
        %v2686 = vlaneseq
        %v2687 = vshrl.u32 %v2686, 7
        %v2688 = vsub.s32 2, %v2687
        %v2689 = vrot.slane %v2676, %v2688
        %v2789 = vunpack.c.l.b16 %v2580
        %v2790 = vunpack.c.h.b16 %v2580
        %v2791 = vunpack.c.l.b16 %v2581
        %v2792 = vunpack.c.l.b16 %v2582
        %v2793 = vunpack.c.h.b16 %v2582
        %v2794 = vunpack.c.l.b16 %v2583
        %v2795 = vunpack.c.l.b16 %v2584
        %v2796 = vunpack.c.h.b16 %v2584
        %v2797 = vunpack.c.l.b16 %v2585
        %v2798 = vunpack.c.l.b16 %v2586
        %v2799 = vunpack.c.h.b16 %v2586
        %v2800 = vunpack.c.l.b16 %v2587
        %v2801 = vunpack.c.l.b16 %v2588
        %v2802 = vunpack.c.h.b16 %v2588
        %v2803 = vunpack.c.l.b16 %v2589
        %v2804 = vunpack.c.l.b16 %v2590
        %v2805 = vunpack.c.h.b16 %v2590
        %v2806 = vunpack.c.l.b16 %v2591
        %v2807 = vunpack.c.l.b16 %v2592
        %v2808 = vunpack.c.h.b16 %v2592
        %v2809 = vunpack.c.l.b16 %v2593
        %v2810 = vunpack.c.l.b16 %v2594
        %v2811 = vunpack.c.h.b16 %v2594
        %v2812 = vunpack.c.l.b16 %v2595
        %v2813 = vunpack.c.l.b16 %v2596
        %v2814 = vunpack.c.h.b16 %v2596
        %v2815 = vunpack.c.l.b16 %v2597
        %v2816 = vunpack.c.l.b16 %v2598
        %v2817 = vunpack.c.h.b16 %v2598
        %v2818 = vunpack.c.l.b16 %v2599
        %v2819 = vunpack.c.l.b16 %v2600
        %v2820 = vunpack.c.h.b16 %v2600
        %v2821 = vunpack.c.l.b16 %v2601
        %v2822 = vunpack.c.l.b16 %v2602
        %v2823 = vunpack.c.h.b16 %v2602
        %v2824 = vunpack.c.l.b16 %v2603
        %v2825 = vunpack.c.l.b16 %v2604
        %v2826 = vunpack.c.h.b16 %v2604
        %v2827 = vunpack.c.l.b16 %v2605
        %v2828 = vunpack.c.l.b16 %v2606
        %v2829 = vunpack.c.h.b16 %v2606
        %v2830 = vunpack.c.l.b16 %v2607
        %v2831 = vunpack.c.l.b16 %v2608
        %v2832 = vunpack.c.h.b16 %v2608
        %v2833 = vunpack.c.l.b16 %v2609
        %v2834 = vunpack.c.l.b16 %v2610
        %v2835 = vunpack.c.h.b16 %v2610
        %v2836 = vunpack.c.l.b16 %v2611
        %v2837 = vunpack.c.l.b16 %v2612
        %v2838 = vunpack.c.h.b16 %v2612
        %v2839 = vunpack.c.l.b16 %v2613
        %v2840 = vunpack.c.l.b16 %v2614
        %v2841 = vunpack.c.h.b16 %v2614
        %v2842 = vunpack.c.l.b16 %v2615
        %v2843 = vunpack.c.l.b16 %v2616
        %v2844 = vunpack.c.h.b16 %v2616
        %v2845 = vunpack.c.l.b16 %v2617
        %v2846 = vunpack.c.l.b16 %v2618
        %v2847 = vunpack.c.h.b16 %v2618
        %v2848 = vunpack.c.l.b16 %v2619
        %v2849 = vunpack.c.l.b16 %v2620
        %v2850 = vunpack.c.h.b16 %v2620
        %v2851 = vunpack.c.l.b16 %v2621
        %v2852 = vunpack.c.l.b16 %v2622
        %v2853 = vunpack.c.h.b16 %v2622
        %v2854 = vunpack.c.l.b16 %v2623
        %v2855 = vunpack.c.l.b16 %v2624
        %v2856 = vunpack.c.h.b16 %v2624
        %v2857 = vunpack.c.l.b16 %v2625
        %v2858 = vunpack.c.l.b16 %v2626
        %v2859 = vunpack.c.h.b16 %v2626
        %v2860 = vunpack.c.l.b16 %v2627
        %v2861 = vunpack.c.l.b16 %v2628
        %v2862 = vunpack.c.h.b16 %v2628
        %v2863 = vunpack.c.l.b16 %v2629
        %v2864 = vunpack.c.l.b16 %v2630
        %v2865 = vunpack.c.h.b16 %v2630
        %v2866 = vunpack.c.l.b16 %v2631
        %v2867 = vunpack.c.l.b16 %v2632
        %v2868 = vunpack.c.h.b16 %v2632
        %v2869 = vunpack.c.l.b16 %v2633
        %v2870 = vunpack.c.l.b16 %v2634
        %v2871 = vunpack.c.h.b16 %v2634
        %v2872 = vunpack.c.l.b16 %v2635
        %v2873 = vunpack.c.l.b16 %v2636
        %v2874 = vunpack.c.h.b16 %v2636
        %v2875 = vunpack.c.l.b16 %v2637
        %v2876 = vunpack.c.l.b16 %v2638
        %v2877 = vunpack.c.h.b16 %v2638
        %v2878 = vunpack.c.l.b16 %v2639
        %v2879 = vunpack.c.l.b16 %v2640
        %v2880 = vunpack.c.h.b16 %v2640
        %v2881 = vunpack.c.l.b16 %v2641
        %v2882 = vunpack.c.l.b16 %v2642
        %v2883 = vunpack.c.h.b16 %v2642
        %v2884 = vunpack.c.l.b16 %v2643
        %v2885 = vunpack.c.l.b16 %v2644
        %v2886 = vunpack.c.h.b16 %v2644
        %v2887 = vunpack.c.l.b16 %v2645
        %v2888 = vunpack.c.l.b16 %v2646
        %v2889 = vunpack.c.h.b16 %v2646
        %v2890 = vunpack.c.l.b16 %v2647
        %v2891 = vunpack.c.l.b16 %v2648
        %v2892 = vunpack.c.h.b16 %v2648
        %v2893 = vunpack.c.l.b16 %v2649
        %v2894 = vunpack.c.l.b16 %v2650
        %v2895 = vunpack.c.h.b16 %v2650
        %v2896 = vunpack.c.l.b16 %v2651
        %v2897 = vunpack.c.l.b16 %v2652
        %v2898 = vunpack.c.h.b16 %v2652
        %v2899 = vunpack.c.l.b16 %v2653
        %v2900 = vunpack.c.l.b16 %v2654
        %v2901 = vunpack.c.h.b16 %v2654
        %v2902 = vunpack.c.l.b16 %v2655
        %v2903 = vunpack.c.l.b16 %v2656
        %v2904 = vunpack.c.h.b16 %v2656
        %v2905 = vunpack.c.l.b16 %v2657
        %v2906 = vunpack.c.l.b16 %v2658
        %v2907 = vunpack.c.h.b16 %v2658
        %v2908 = vunpack.c.l.b16 %v2659
        %v2909 = vunpack.c.l.b16 %v2660
        %v2910 = vunpack.c.h.b16 %v2660
        %v2911 = vunpack.c.l.b16 %v2661
        %v2912 = vunpack.c.l.b16 %v2662
        %v2913 = vunpack.c.h.b16 %v2662
        %v2914 = vunpack.c.l.b16 %v2663
        %v2915 = vunpack.c.l.b16 %v2664
        %v2916 = vunpack.c.h.b16 %v2664
        %v2917 = vunpack.c.l.b16 %v2665
        %v2918 = vunpack.c.l.b16 %v2666
        %v2919 = vunpack.c.h.b16 %v2666
        %v2920 = vunpack.c.l.b16 %v2667
        %v2921 = vunpack.c.l.b16 %v2668
        %v2922 = vunpack.c.h.b16 %v2668
        %v2923 = vunpack.c.l.b16 %v2669
        %v2924 = vunpack.c.l.b16 %v2670
        %v2925 = vunpack.c.h.b16 %v2670
        %v2926 = vunpack.c.l.b16 %v2671
        %v2927 = vunpack.c.l.b16 %v2672
        %v2928 = vunpack.c.h.b16 %v2672
        %v2929 = vunpack.c.l.b16 %v2673
        %v2930 = vunpack.c.l.b16 %v2674
        %v2931 = vunpack.c.h.b16 %v2674
        %v2932 = vunpack.c.l.b16 %v2675
        %v2933 = vpack.c.b16 %v2792, %v2789
        %v2934 = vpack.c.b16 %v2793, %v2790
        %v2935 = vpack.c.b16 %v2794, %v2791
        %v2936 = vpack.c.b16 %v2798, %v2795
        %v2937 = vpack.c.b16 %v2799, %v2796
        %v2938 = vpack.c.b16 %v2800, %v2797
        %v2939 = vpack.c.b16 %v2804, %v2801
        %v2940 = vpack.c.b16 %v2805, %v2802
        %v2941 = vpack.c.b16 %v2806, %v2803
        %v2942 = vpack.c.b16 %v2810, %v2807
        %v2943 = vpack.c.b16 %v2811, %v2808
        %v2944 = vpack.c.b16 %v2812, %v2809
        %v2945 = vpack.c.b16 %v2816, %v2813
        %v2946 = vpack.c.b16 %v2817, %v2814
        %v2947 = vpack.c.b16 %v2818, %v2815
        %v2948 = vpack.c.b16 %v2822, %v2819
        %v2949 = vpack.c.b16 %v2823, %v2820
        %v2950 = vpack.c.b16 %v2824, %v2821
        %v2951 = vpack.c.b16 %v2828, %v2825
        %v2952 = vpack.c.b16 %v2829, %v2826
        %v2953 = vpack.c.b16 %v2830, %v2827
        %v2954 = vpack.c.b16 %v2834, %v2831
        %v2955 = vpack.c.b16 %v2835, %v2832
        %v2956 = vpack.c.b16 %v2836, %v2833
        %v2957 = vpack.c.b16 %v2840, %v2837
        %v2958 = vpack.c.b16 %v2841, %v2838
        %v2959 = vpack.c.b16 %v2842, %v2839
        %v2960 = vpack.c.b16 %v2846, %v2843
        %v2961 = vpack.c.b16 %v2847, %v2844
        %v2962 = vpack.c.b16 %v2848, %v2845
        %v2963 = vpack.c.b16 %v2852, %v2849
        %v2964 = vpack.c.b16 %v2853, %v2850
        %v2965 = vpack.c.b16 %v2854, %v2851
        %v2966 = vpack.c.b16 %v2858, %v2855
        %v2967 = vpack.c.b16 %v2859, %v2856
        %v2968 = vpack.c.b16 %v2860, %v2857
        %v2969 = vpack.c.b16 %v2864, %v2861
        %v2970 = vpack.c.b16 %v2865, %v2862
        %v2971 = vpack.c.b16 %v2866, %v2863
        %v2972 = vpack.c.b16 %v2870, %v2867
        %v2973 = vpack.c.b16 %v2871, %v2868
        %v2974 = vpack.c.b16 %v2872, %v2869
        %v2975 = vpack.c.b16 %v2876, %v2873
        %v2976 = vpack.c.b16 %v2877, %v2874
        %v2977 = vpack.c.b16 %v2878, %v2875
        %v2978 = vpack.c.b16 %v2882, %v2879
        %v2979 = vpack.c.b16 %v2883, %v2880
        %v2980 = vpack.c.b16 %v2884, %v2881
        %v2981 = vpack.c.b16 %v2888, %v2885
        %v2982 = vpack.c.b16 %v2889, %v2886
        %v2983 = vpack.c.b16 %v2890, %v2887
        %v2984 = vpack.c.b16 %v2894, %v2891
        %v2985 = vpack.c.b16 %v2895, %v2892
        %v2986 = vpack.c.b16 %v2896, %v2893
        %v2987 = vpack.c.b16 %v2900, %v2897
        %v2988 = vpack.c.b16 %v2901, %v2898
        %v2989 = vpack.c.b16 %v2902, %v2899
        %v2990 = vpack.c.b16 %v2906, %v2903
        %v2991 = vpack.c.b16 %v2907, %v2904
        %v2992 = vpack.c.b16 %v2908, %v2905
        %v2993 = vpack.c.b16 %v2912, %v2909
        %v2994 = vpack.c.b16 %v2913, %v2910
        %v2995 = vpack.c.b16 %v2914, %v2911
        %v2996 = vpack.c.b16 %v2918, %v2915
        %v2997 = vpack.c.b16 %v2919, %v2916
        %v2998 = vpack.c.b16 %v2920, %v2917
        %v2999 = vpack.c.b16 %v2924, %v2921
        %v3000 = vpack.c.b16 %v2925, %v2922
        %v3001 = vpack.c.b16 %v2926, %v2923
        %v3002 = vpack.c.b16 %v2930, %v2927
        %v3003 = vpack.c.b16 %v2931, %v2928
        %v3004 = vpack.c.b16 %v2932, %v2929
        %3077 = vmatprep.subr.bf16.mxu0 %v2955
        %3078 = vmatpush1.bf16.msra.mxu0 %v2954
        %3079 = vmatprep.subr.bf16.mxu0 %v2952
        %3080 = vmatpush1.bf16.msra.mxu0 %v2951
        %3081 = vmatprep.subr.bf16.mxu0 %v2949
        %3082 = vmatpush1.bf16.msra.mxu0 %v2948
        %3083 = vmatprep.subr.bf16.mxu0 %v2946
        %3084 = vmatpush1.bf16.msra.mxu0 %v2945
        %3085 = vmatprep.subr.bf16.mxu0 %v2943
        %3086 = vmatpush1.bf16.msra.mxu0 %v2942
        %3087 = vmatprep.subr.bf16.mxu0 %v2940
        %3088 = vmatpush1.bf16.msra.mxu0 %v2939
        %3089 = vmatprep.subr.bf16.mxu0 %v2937
        %3090 = vmatpush1.bf16.msra.mxu0 %v2936
        %3091 = vmatprep.subr.bf16.mxu0 %v2934
        %3092 = vmatpush1.bf16.msra.mxu0 %v2933
        %3093 = vmatprep.subr.bf16.mxu0 %v2979
        %3094 = vmatpush2.bf16.msra.mxu0 %v2978
        %3095 = vmatprep.subr.bf16.mxu0 %v2976
        %3096 = vmatpush2.bf16.msra.mxu0 %v2975
        %3097 = vmatprep.subr.bf16.mxu0 %v2973
        %3098 = vmatpush2.bf16.msra.mxu0 %v2972
        %3099 = vmatprep.subr.bf16.mxu0 %v2970
        %3100 = vmatpush2.bf16.msra.mxu0 %v2969
        %3101 = vmatprep.subr.bf16.mxu0 %v2967
        %3102 = vmatpush2.bf16.msra.mxu0 %v2966
        %3103 = vmatprep.subr.bf16.mxu0 %v2964
        %3104 = vmatpush2.bf16.msra.mxu0 %v2963
        %3105 = vmatprep.subr.bf16.mxu0 %v2961
        %3106 = vmatpush2.bf16.msra.mxu0 %v2960
        %3107 = vmatprep.subr.bf16.mxu0 %v2958
        %3108 = vmatpush2.bf16.msra.mxu0 %v2957
        %3109 = vmatprep.mubr.bf16.mxu0 %v2533
        %3110 = vmatmul.mubr.bf16.gmra.mxu0 %v2532
        %v3111 = vpop.f32.mrf.mxu0
        %v3112 = vadd.f32 %v2681, %v3111
        %v3113 = vpop.f32.mrf.mxu0
        %v3114 = vadd.f32 %v2685, %v3113
        %v3115 = vpop.f32.mrf.mxu0
        %v3116 = vadd.f32 %v2681, %v3115
        %v3117 = vpop.f32.mrf.mxu0
        %v3118 = vadd.f32 %v2685, %v3117
        %3119 = vmatprep.mubr.bf16.mxu0 %v2536
        %3120 = vmatmul.mubr.bf16.gmra.mxu0 %v2535
        %v3121 = vpop.f32.mrf.mxu0
        %v3122 = vadd.f32 %v2681, %v3121
        %v3123 = vpop.f32.mrf.mxu0
        %v3124 = vadd.f32 %v2685, %v3123
        %v3125 = vpop.f32.mrf.mxu0
        %v3126 = vadd.f32 %v2681, %v3125
        %v3127 = vpop.f32.mrf.mxu0
        %v3128 = vadd.f32 %v2685, %v3127
        %3129 = vmatprep.mubr.bf16.mxu0 %v2539
        %3130 = vmatmul.mubr.bf16.gmra.mxu0 %v2538
        %v3131 = vpop.f32.mrf.mxu0
        %v3132 = vadd.f32 %v2681, %v3131
        %v3133 = vpop.f32.mrf.mxu0
        %v3134 = vadd.f32 %v2685, %v3133
        %v3135 = vpop.f32.mrf.mxu0
        %v3136 = vadd.f32 %v2681, %v3135
        %v3137 = vpop.f32.mrf.mxu0
        %v3138 = vadd.f32 %v2685, %v3137
        %3139 = vmatprep.mubr.bf16.mxu0 %v2542
        %3140 = vmatmul.mubr.bf16.gmra.mxu0 %v2541
        %v3141 = vpop.f32.mrf.mxu0
        %v3142 = vadd.f32 %v2681, %v3141
        %v3143 = vpop.f32.mrf.mxu0
        %v3144 = vadd.f32 %v2685, %v3143
        %v3145 = vpop.f32.mrf.mxu0
        %v3146 = vadd.f32 %v2681, %v3145
        %v3147 = vpop.f32.mrf.mxu0
        %v3148 = vadd.f32 %v2685, %v3147
        %3149 = vmatprep.mubr.bf16.mxu0 %v2545
        %3150 = vmatmul.mubr.bf16.gmra.mxu0 %v2544
        %v3151 = vpop.f32.mrf.mxu0
        %v3152 = vadd.f32 %v2681, %v3151
        %v3153 = vpop.f32.mrf.mxu0
        %v3154 = vadd.f32 %v2685, %v3153
        %v3155 = vpop.f32.mrf.mxu0
        %v3156 = vadd.f32 %v2681, %v3155
        %v3157 = vpop.f32.mrf.mxu0
        %v3158 = vadd.f32 %v2685, %v3157
        %3159 = vmatprep.mubr.bf16.mxu0 %v2548
        %3160 = vmatmul.mubr.bf16.gmra.mxu0 %v2547
        %v3161 = vpop.f32.mrf.mxu0
        %v3162 = vadd.f32 %v2681, %v3161
        %v3163 = vpop.f32.mrf.mxu0
        %v3164 = vadd.f32 %v2685, %v3163
        %v3165 = vpop.f32.mrf.mxu0
        %v3166 = vadd.f32 %v2681, %v3165
        %v3167 = vpop.f32.mrf.mxu0
        %v3168 = vadd.f32 %v2685, %v3167
        %3169 = vmatprep.mubr.bf16.mxu0 %v2551
        %3170 = vmatmul.mubr.bf16.gmra.mxu0 %v2550
        %v3171 = vpop.f32.mrf.mxu0
        %v3172 = vadd.f32 %v2681, %v3171
        %v3173 = vpop.f32.mrf.mxu0
        %v3174 = vadd.f32 %v2685, %v3173
        %v3175 = vpop.f32.mrf.mxu0
        %v3176 = vadd.f32 %v2681, %v3175
        %v3177 = vpop.f32.mrf.mxu0
        %v3178 = vadd.f32 %v2685, %v3177
        %3179 = vmatprep.mubr.bf16.mxu0 %v2554
        %3180 = vmatmul.mubr.bf16.gmra.mxu0 %v2553
        %v3181 = vpop.f32.mrf.mxu0
        %v3182 = vadd.f32 %v2681, %v3181
        %v3183 = vpop.f32.mrf.mxu0
        %v3184 = vadd.f32 %v2685, %v3183
        %v3185 = vpop.f32.mrf.mxu0
        %v3186 = vadd.f32 %v2681, %v3185
        %v3187 = vpop.f32.mrf.mxu0
        %v3188 = vadd.f32 %v2685, %v3187
        %3189 = vmatprep.mubr.bf16.mxu0 %v2557
        %3190 = vmatmul.mubr.bf16.gmra.mxu0 %v2556
        %v3191 = vpop.f32.mrf.mxu0
        %v3192 = vadd.f32 %v2681, %v3191
        %v3193 = vpop.f32.mrf.mxu0
        %v3194 = vadd.f32 %v2685, %v3193
        %v3195 = vpop.f32.mrf.mxu0
        %v3196 = vadd.f32 %v2681, %v3195
        %v3197 = vpop.f32.mrf.mxu0
        %v3198 = vadd.f32 %v2685, %v3197
        %3199 = vmatprep.mubr.bf16.mxu0 %v2560
        %3200 = vmatmul.mubr.bf16.gmra.mxu0 %v2559
        %v3201 = vpop.f32.mrf.mxu0
        %v3202 = vadd.f32 %v2681, %v3201
        %v3203 = vpop.f32.mrf.mxu0
        %v3204 = vadd.f32 %v2685, %v3203
        %v3205 = vpop.f32.mrf.mxu0
        %v3206 = vadd.f32 %v2681, %v3205
        %v3207 = vpop.f32.mrf.mxu0
        %v3208 = vadd.f32 %v2685, %v3207
        %3209 = vmatprep.mubr.bf16.mxu0 %v2563
        %3210 = vmatmul.mubr.bf16.gmra.mxu0 %v2562
        %v3211 = vpop.f32.mrf.mxu0
        %v3212 = vadd.f32 %v2681, %v3211
        %v3213 = vpop.f32.mrf.mxu0
        %v3214 = vadd.f32 %v2685, %v3213
        %v3215 = vpop.f32.mrf.mxu0
        %v3216 = vadd.f32 %v2681, %v3215
        %v3217 = vpop.f32.mrf.mxu0
        %v3218 = vadd.f32 %v2685, %v3217
        %3219 = vmatprep.mubr.bf16.mxu0 %v2566
        %3220 = vmatmul.mubr.bf16.gmra.mxu0 %v2565
        %v3221 = vpop.f32.mrf.mxu0
        %v3222 = vadd.f32 %v2681, %v3221
        %v3223 = vpop.f32.mrf.mxu0
        %v3224 = vadd.f32 %v2685, %v3223
        %v3225 = vpop.f32.mrf.mxu0
        %v3226 = vadd.f32 %v2681, %v3225
        %v3227 = vpop.f32.mrf.mxu0
        %v3228 = vadd.f32 %v2685, %v3227
        %3229 = vmatprep.mubr.bf16.mxu0 %v2569
        %3230 = vmatmul.mubr.bf16.gmra.mxu0 %v2568
        %v3231 = vpop.f32.mrf.mxu0
        %v3232 = vadd.f32 %v2681, %v3231
        %v3233 = vpop.f32.mrf.mxu0
        %v3234 = vadd.f32 %v2685, %v3233
        %v3235 = vpop.f32.mrf.mxu0
        %v3236 = vadd.f32 %v2681, %v3235
        %v3237 = vpop.f32.mrf.mxu0
        %v3238 = vadd.f32 %v2685, %v3237
        %3239 = vmatprep.mubr.bf16.mxu0 %v2572
        %3240 = vmatmul.mubr.bf16.gmra.mxu0 %v2571
        %v3241 = vpop.f32.mrf.mxu0
        %v3242 = vadd.f32 %v2681, %v3241
        %v3243 = vpop.f32.mrf.mxu0
        %v3244 = vadd.f32 %v2685, %v3243
        %v3245 = vpop.f32.mrf.mxu0
        %v3246 = vadd.f32 %v2681, %v3245
        %v3247 = vpop.f32.mrf.mxu0
        %v3248 = vadd.f32 %v2685, %v3247
        %3249 = vmatprep.mubr.bf16.mxu0 %v2575
        %3250 = vmatmul.mubr.bf16.gmra.mxu0 %v2574
        %v3251 = vpop.f32.mrf.mxu0
        %v3252 = vadd.f32 %v2681, %v3251
        %v3253 = vpop.f32.mrf.mxu0
        %v3254 = vadd.f32 %v2685, %v3253
        %v3255 = vpop.f32.mrf.mxu0
        %v3256 = vadd.f32 %v2681, %v3255
        %v3257 = vpop.f32.mrf.mxu0
        %v3258 = vadd.f32 %v2685, %v3257
        %3259 = vmatprep.mubr.bf16.mxu0 %v2578
        %3260 = vmatmul.mubr.bf16.gmra.mxu0 %v2577
        %v3261 = vpop.f32.mrf.mxu0
        %v3262 = vadd.f32 %v2681, %v3261
        %v3263 = vpop.f32.mrf.mxu0
        %v3264 = vadd.f32 %v2685, %v3263
        %v3265 = vpop.f32.mrf.mxu0
        %v3266 = vadd.f32 %v2681, %v3265
        %v3267 = vpop.f32.mrf.mxu0
        %v3268 = vadd.f32 %v2685, %v3267
        %3269 = vdwg.mxu0
        %3270 = vmatprep.subr.bf16.mxu0 %v3003
        %3271 = vmatpush1.bf16.msra.mxu0 %v3002
        %3272 = vmatprep.subr.bf16.mxu0 %v3000
        %3273 = vmatpush1.bf16.msra.mxu0 %v2999
        %3274 = vmatprep.subr.bf16.mxu0 %v2997
        %3275 = vmatpush1.bf16.msra.mxu0 %v2996
        %3276 = vmatprep.subr.bf16.mxu0 %v2994
        %3277 = vmatpush1.bf16.msra.mxu0 %v2993
        %3278 = vmatprep.subr.bf16.mxu0 %v2991
        %3279 = vmatpush1.bf16.msra.mxu0 %v2990
        %3280 = vmatprep.subr.bf16.mxu0 %v2988
        %3281 = vmatpush1.bf16.msra.mxu0 %v2987
        %3282 = vmatprep.subr.bf16.mxu0 %v2985
        %3283 = vmatpush1.bf16.msra.mxu0 %v2984
        %3284 = vmatprep.subr.bf16.mxu0 %v2982
        %3285 = vmatpush1.bf16.msra.mxu0 %v2981
        %3286 = vmatprep.subr.bf16.mxu0 0
        %3287 = vmatpush2.bf16.msra.mxu0 0
        %3288 = vmatprep.subr.bf16.mxu0 0
        %3289 = vmatpush2.bf16.msra.mxu0 0
        %3290 = vmatprep.subr.bf16.mxu0 0
        %3291 = vmatpush2.bf16.msra.mxu0 0
        %3292 = vmatprep.subr.bf16.mxu0 0
        %3293 = vmatpush2.bf16.msra.mxu0 0
        %3294 = vmatprep.subr.bf16.mxu0 0
        %3295 = vmatpush2.bf16.msra.mxu0 0
        %3296 = vmatprep.subr.bf16.mxu0 0
        %3297 = vmatpush2.bf16.msra.mxu0 0
        %3298 = vmatprep.subr.bf16.mxu0 0
        %3299 = vmatpush2.bf16.msra.mxu0 0
        %3300 = vmatprep.subr.bf16.mxu0 0
        %3301 = vmatpush2.bf16.msra.mxu0 0
        %3302 = vmatprep.mubr.bf16.mxu0 0
        %3303 = vmatmul.mubr.bf16.gmra.mxu0 %v2534
        %v3304 = vpop.f32.mrf.mxu0
        %v3305 = vadd.f32 %v3112, %v3304
        %v3306 = vpop.f32.mrf.mxu0
        %v3307 = vadd.f32 %v3114, %v3306
        %v3308 = vpop.f32.mrf.mxu0
        %v3309 = vadd.f32 %v3116, %v3308
        %v3310 = vpop.f32.mrf.mxu0
        %v3311 = vadd.f32 %v3118, %v3310
        %3312 = vmatprep.mubr.bf16.mxu0 0
        %3313 = vmatmul.mubr.bf16.gmra.mxu0 %v2537
        %v3314 = vpop.f32.mrf.mxu0
        %v3315 = vadd.f32 %v3122, %v3314
        %v3316 = vpop.f32.mrf.mxu0
        %v3317 = vadd.f32 %v3124, %v3316
        %v3318 = vpop.f32.mrf.mxu0
        %v3319 = vadd.f32 %v3126, %v3318
        %v3320 = vpop.f32.mrf.mxu0
        %v3321 = vadd.f32 %v3128, %v3320
        %3322 = vmatprep.mubr.bf16.mxu0 0
        %3323 = vmatmul.mubr.bf16.gmra.mxu0 %v2540
        %v3324 = vpop.f32.mrf.mxu0
        %v3325 = vadd.f32 %v3132, %v3324
        %v3326 = vpop.f32.mrf.mxu0
        %v3327 = vadd.f32 %v3134, %v3326
        %v3328 = vpop.f32.mrf.mxu0
        %v3329 = vadd.f32 %v3136, %v3328
        %v3330 = vpop.f32.mrf.mxu0
        %v3331 = vadd.f32 %v3138, %v3330
        %3332 = vmatprep.mubr.bf16.mxu0 0
        %3333 = vmatmul.mubr.bf16.gmra.mxu0 %v2543
        %v3334 = vpop.f32.mrf.mxu0
        %v3335 = vadd.f32 %v3142, %v3334
        %v3336 = vpop.f32.mrf.mxu0
        %v3337 = vadd.f32 %v3144, %v3336
        %v3338 = vpop.f32.mrf.mxu0
        %v3339 = vadd.f32 %v3146, %v3338
        %v3340 = vpop.f32.mrf.mxu0
        %v3341 = vadd.f32 %v3148, %v3340
        %3342 = vmatprep.mubr.bf16.mxu0 0
        %3343 = vmatmul.mubr.bf16.gmra.mxu0 %v2546
        %v3344 = vpop.f32.mrf.mxu0
        %v3345 = vadd.f32 %v3152, %v3344
        %v3346 = vpop.f32.mrf.mxu0
        %v3347 = vadd.f32 %v3154, %v3346
        %v3348 = vpop.f32.mrf.mxu0
        %v3349 = vadd.f32 %v3156, %v3348
        %v3350 = vpop.f32.mrf.mxu0
        %v3351 = vadd.f32 %v3158, %v3350
        %3352 = vmatprep.mubr.bf16.mxu0 0
        %3353 = vmatmul.mubr.bf16.gmra.mxu0 %v2549
        %v3354 = vpop.f32.mrf.mxu0
        %v3355 = vadd.f32 %v3162, %v3354
        %v3356 = vpop.f32.mrf.mxu0
        %v3357 = vadd.f32 %v3164, %v3356
        %v3358 = vpop.f32.mrf.mxu0
        %v3359 = vadd.f32 %v3166, %v3358
        %v3360 = vpop.f32.mrf.mxu0
        %v3361 = vadd.f32 %v3168, %v3360
        %3362 = vmatprep.mubr.bf16.mxu0 0
        %3363 = vmatmul.mubr.bf16.gmra.mxu0 %v2552
        %v3364 = vpop.f32.mrf.mxu0
        %v3365 = vadd.f32 %v3172, %v3364
        %v3366 = vpop.f32.mrf.mxu0
        %v3367 = vadd.f32 %v3174, %v3366
        %v3368 = vpop.f32.mrf.mxu0
        %v3369 = vadd.f32 %v3176, %v3368
        %v3370 = vpop.f32.mrf.mxu0
        %v3371 = vadd.f32 %v3178, %v3370
        %3372 = vmatprep.mubr.bf16.mxu0 0
        %3373 = vmatmul.mubr.bf16.gmra.mxu0 %v2555
        %v3374 = vpop.f32.mrf.mxu0
        %v3375 = vadd.f32 %v3182, %v3374
        %v3376 = vpop.f32.mrf.mxu0
        %v3377 = vadd.f32 %v3184, %v3376
        %v3378 = vpop.f32.mrf.mxu0
        %v3379 = vadd.f32 %v3186, %v3378
        %v3380 = vpop.f32.mrf.mxu0
        %v3381 = vadd.f32 %v3188, %v3380
        %3382 = vmatprep.mubr.bf16.mxu0 0
        %3383 = vmatmul.mubr.bf16.gmra.mxu0 %v2558
        %v3384 = vpop.f32.mrf.mxu0
        %v3385 = vadd.f32 %v3192, %v3384
        %v3386 = vpop.f32.mrf.mxu0
        %v3387 = vadd.f32 %v3194, %v3386
        %v3388 = vpop.f32.mrf.mxu0
        %v3389 = vadd.f32 %v3196, %v3388
        %v3390 = vpop.f32.mrf.mxu0
        %v3391 = vadd.f32 %v3198, %v3390
        %3392 = vmatprep.mubr.bf16.mxu0 0
        %3393 = vmatmul.mubr.bf16.gmra.mxu0 %v2561
        %v3394 = vpop.f32.mrf.mxu0
        %v3395 = vadd.f32 %v3202, %v3394
        %v3396 = vpop.f32.mrf.mxu0
        %v3397 = vadd.f32 %v3204, %v3396
        %v3398 = vpop.f32.mrf.mxu0
        %v3399 = vadd.f32 %v3206, %v3398
        %v3400 = vpop.f32.mrf.mxu0
        %v3401 = vadd.f32 %v3208, %v3400
        %3402 = vmatprep.mubr.bf16.mxu0 0
        %3403 = vmatmul.mubr.bf16.gmra.mxu0 %v2564
        %v3404 = vpop.f32.mrf.mxu0
        %v3405 = vadd.f32 %v3212, %v3404
        %v3406 = vpop.f32.mrf.mxu0
        %v3407 = vadd.f32 %v3214, %v3406
        %v3408 = vpop.f32.mrf.mxu0
        %v3409 = vadd.f32 %v3216, %v3408
        %v3410 = vpop.f32.mrf.mxu0
        %v3411 = vadd.f32 %v3218, %v3410
        %3412 = vmatprep.mubr.bf16.mxu0 0
        %3413 = vmatmul.mubr.bf16.gmra.mxu0 %v2567
        %v3414 = vpop.f32.mrf.mxu0
        %v3415 = vadd.f32 %v3222, %v3414
        %v3416 = vpop.f32.mrf.mxu0
        %v3417 = vadd.f32 %v3224, %v3416
        %v3418 = vpop.f32.mrf.mxu0
        %v3419 = vadd.f32 %v3226, %v3418
        %v3420 = vpop.f32.mrf.mxu0
        %v3421 = vadd.f32 %v3228, %v3420
        %3422 = vmatprep.mubr.bf16.mxu0 0
        %3423 = vmatmul.mubr.bf16.gmra.mxu0 %v2570
        %v3424 = vpop.f32.mrf.mxu0
        %v3425 = vadd.f32 %v3232, %v3424
        %v3426 = vpop.f32.mrf.mxu0
        %v3427 = vadd.f32 %v3234, %v3426
        %v3428 = vpop.f32.mrf.mxu0
        %v3429 = vadd.f32 %v3236, %v3428
        %v3430 = vpop.f32.mrf.mxu0
        %v3431 = vadd.f32 %v3238, %v3430
        %3432 = vmatprep.mubr.bf16.mxu0 0
        %3433 = vmatmul.mubr.bf16.gmra.mxu0 %v2573
        %v3434 = vpop.f32.mrf.mxu0
        %v3435 = vadd.f32 %v3242, %v3434
        %v3436 = vpop.f32.mrf.mxu0
        %v3437 = vadd.f32 %v3244, %v3436
        %v3438 = vpop.f32.mrf.mxu0
        %v3439 = vadd.f32 %v3246, %v3438
        %v3440 = vpop.f32.mrf.mxu0
        %v3441 = vadd.f32 %v3248, %v3440
        %3442 = vmatprep.mubr.bf16.mxu0 0
        %3443 = vmatmul.mubr.bf16.gmra.mxu0 %v2576
        %v3444 = vpop.f32.mrf.mxu0
        %v3445 = vadd.f32 %v3252, %v3444
        %v3446 = vpop.f32.mrf.mxu0
        %v3447 = vadd.f32 %v3254, %v3446
        %v3448 = vpop.f32.mrf.mxu0
        %v3449 = vadd.f32 %v3256, %v3448
        %v3450 = vpop.f32.mrf.mxu0
        %v3451 = vadd.f32 %v3258, %v3450
        %3452 = vmatprep.mubr.bf16.mxu0 0
        %3453 = vmatmul.mubr.bf16.gmra.mxu0 %v2579
        %v3454 = vpop.f32.mrf.mxu0
        %v3455 = vadd.f32 %v3262, %v3454
        %v3456 = vpop.f32.mrf.mxu0
        %v3457 = vadd.f32 %v3264, %v3456
        %v3458 = vpop.f32.mrf.mxu0
        %v3459 = vadd.f32 %v3266, %v3458
        %v3460 = vpop.f32.mrf.mxu0
        %v3461 = vadd.f32 %v3268, %v3460
        %3462 = vdwg.mxu0
        %3463 = vmatprep.subr.bf16.mxu0 0
        %3464 = vmatpush1.bf16.msra.mxu0 %v2956
        %3465 = vmatprep.subr.bf16.mxu0 0
        %3466 = vmatpush1.bf16.msra.mxu0 %v2953
        %3467 = vmatprep.subr.bf16.mxu0 0
        %3468 = vmatpush1.bf16.msra.mxu0 %v2950
        %3469 = vmatprep.subr.bf16.mxu0 0
        %3470 = vmatpush1.bf16.msra.mxu0 %v2947
        %3471 = vmatprep.subr.bf16.mxu0 0
        %3472 = vmatpush1.bf16.msra.mxu0 %v2944
        %3473 = vmatprep.subr.bf16.mxu0 0
        %3474 = vmatpush1.bf16.msra.mxu0 %v2941
        %3475 = vmatprep.subr.bf16.mxu0 0
        %3476 = vmatpush1.bf16.msra.mxu0 %v2938
        %3477 = vmatprep.subr.bf16.mxu0 0
        %3478 = vmatpush1.bf16.msra.mxu0 %v2935
        %3479 = vmatprep.subr.bf16.mxu0 0
        %3480 = vmatpush2.bf16.msra.mxu0 %v2980
        %3481 = vmatprep.subr.bf16.mxu0 0
        %3482 = vmatpush2.bf16.msra.mxu0 %v2977
        %3483 = vmatprep.subr.bf16.mxu0 0
        %3484 = vmatpush2.bf16.msra.mxu0 %v2974
        %3485 = vmatprep.subr.bf16.mxu0 0
        %3486 = vmatpush2.bf16.msra.mxu0 %v2971
        %3487 = vmatprep.subr.bf16.mxu0 0
        %3488 = vmatpush2.bf16.msra.mxu0 %v2968
        %3489 = vmatprep.subr.bf16.mxu0 0
        %3490 = vmatpush2.bf16.msra.mxu0 %v2965
        %3491 = vmatprep.subr.bf16.mxu0 0
        %3492 = vmatpush2.bf16.msra.mxu0 %v2962
        %3493 = vmatprep.subr.bf16.mxu0 0
        %3494 = vmatpush2.bf16.msra.mxu0 %v2959
        %3495 = vmatprep.mubr.bf16.mxu0 %v2533
        %3496 = vmatmul.mubr.bf16.gmra.mxu0 %v2532
        %v3497 = vpop.f32.mrf.mxu0
        %v3498 = vadd.f32 %v2689, %v3497
        %v3499 = vpop.f32.mrf.mxu0
        %v3500 = vpop.f32.mrf.mxu0
        %v3501 = vadd.f32 %v2689, %v3500
        %v3502 = vpop.f32.mrf.mxu0
        %3503 = vmatprep.mubr.bf16.mxu0 %v2536
        %3504 = vmatmul.mubr.bf16.gmra.mxu0 %v2535
        %v3505 = vpop.f32.mrf.mxu0
        %v3506 = vadd.f32 %v2689, %v3505
        %v3507 = vpop.f32.mrf.mxu0
        %v3508 = vpop.f32.mrf.mxu0
        %v3509 = vadd.f32 %v2689, %v3508
        %v3510 = vpop.f32.mrf.mxu0
        %3511 = vmatprep.mubr.bf16.mxu0 %v2539
        %3512 = vmatmul.mubr.bf16.gmra.mxu0 %v2538
        %v3513 = vpop.f32.mrf.mxu0
        %v3514 = vadd.f32 %v2689, %v3513
        %v3515 = vpop.f32.mrf.mxu0
        %v3516 = vpop.f32.mrf.mxu0
        %v3517 = vadd.f32 %v2689, %v3516
        %v3518 = vpop.f32.mrf.mxu0
        %3519 = vmatprep.mubr.bf16.mxu0 %v2542
        %3520 = vmatmul.mubr.bf16.gmra.mxu0 %v2541
        %v3521 = vpop.f32.mrf.mxu0
        %v3522 = vadd.f32 %v2689, %v3521
        %v3523 = vpop.f32.mrf.mxu0
        %v3524 = vpop.f32.mrf.mxu0
        %v3525 = vadd.f32 %v2689, %v3524
        %v3526 = vpop.f32.mrf.mxu0
        %3527 = vmatprep.mubr.bf16.mxu0 %v2545
        %3528 = vmatmul.mubr.bf16.gmra.mxu0 %v2544
        %v3529 = vpop.f32.mrf.mxu0
        %v3530 = vadd.f32 %v2689, %v3529
        %v3531 = vpop.f32.mrf.mxu0
        %v3532 = vpop.f32.mrf.mxu0
        %v3533 = vadd.f32 %v2689, %v3532
        %v3534 = vpop.f32.mrf.mxu0
        %3535 = vmatprep.mubr.bf16.mxu0 %v2548
        %3536 = vmatmul.mubr.bf16.gmra.mxu0 %v2547
        %v3537 = vpop.f32.mrf.mxu0
        %v3538 = vadd.f32 %v2689, %v3537
        %v3539 = vpop.f32.mrf.mxu0
        %v3540 = vpop.f32.mrf.mxu0
        %v3541 = vadd.f32 %v2689, %v3540
        %v3542 = vpop.f32.mrf.mxu0
        %3543 = vmatprep.mubr.bf16.mxu0 %v2551
        %3544 = vmatmul.mubr.bf16.gmra.mxu0 %v2550
        %v3545 = vpop.f32.mrf.mxu0
        %v3546 = vadd.f32 %v2689, %v3545
        %v3547 = vpop.f32.mrf.mxu0
        %v3548 = vpop.f32.mrf.mxu0
        %v3549 = vadd.f32 %v2689, %v3548
        %v3550 = vpop.f32.mrf.mxu0
        %3551 = vmatprep.mubr.bf16.mxu0 %v2554
        %3552 = vmatmul.mubr.bf16.gmra.mxu0 %v2553
        %v3553 = vpop.f32.mrf.mxu0
        %v3554 = vadd.f32 %v2689, %v3553
        %v3555 = vpop.f32.mrf.mxu0
        %v3556 = vpop.f32.mrf.mxu0
        %v3557 = vadd.f32 %v2689, %v3556
        %v3558 = vpop.f32.mrf.mxu0
        %3559 = vmatprep.mubr.bf16.mxu0 %v2557
        %3560 = vmatmul.mubr.bf16.gmra.mxu0 %v2556
        %v3561 = vpop.f32.mrf.mxu0
        %v3562 = vadd.f32 %v2689, %v3561
        %v3563 = vpop.f32.mrf.mxu0
        %v3564 = vpop.f32.mrf.mxu0
        %v3565 = vadd.f32 %v2689, %v3564
        %v3566 = vpop.f32.mrf.mxu0
        %3567 = vmatprep.mubr.bf16.mxu0 %v2560
        %3568 = vmatmul.mubr.bf16.gmra.mxu0 %v2559
        %v3569 = vpop.f32.mrf.mxu0
        %v3570 = vadd.f32 %v2689, %v3569
        %v3571 = vpop.f32.mrf.mxu0
        %v3572 = vpop.f32.mrf.mxu0
        %v3573 = vadd.f32 %v2689, %v3572
        %v3574 = vpop.f32.mrf.mxu0
        %3575 = vmatprep.mubr.bf16.mxu0 %v2563
        %3576 = vmatmul.mubr.bf16.gmra.mxu0 %v2562
        %v3577 = vpop.f32.mrf.mxu0
        %v3578 = vadd.f32 %v2689, %v3577
        %v3579 = vpop.f32.mrf.mxu0
        %v3580 = vpop.f32.mrf.mxu0
        %v3581 = vadd.f32 %v2689, %v3580
        %v3582 = vpop.f32.mrf.mxu0
        %3583 = vmatprep.mubr.bf16.mxu0 %v2566
        %3584 = vmatmul.mubr.bf16.gmra.mxu0 %v2565
        %v3585 = vpop.f32.mrf.mxu0
        %v3586 = vadd.f32 %v2689, %v3585
        %v3587 = vpop.f32.mrf.mxu0
        %v3588 = vpop.f32.mrf.mxu0
        %v3589 = vadd.f32 %v2689, %v3588
        %v3590 = vpop.f32.mrf.mxu0
        %3591 = vmatprep.mubr.bf16.mxu0 %v2569
        %3592 = vmatmul.mubr.bf16.gmra.mxu0 %v2568
        %v3593 = vpop.f32.mrf.mxu0
        %v3594 = vadd.f32 %v2689, %v3593
        %v3595 = vpop.f32.mrf.mxu0
        %v3596 = vpop.f32.mrf.mxu0
        %v3597 = vadd.f32 %v2689, %v3596
        %v3598 = vpop.f32.mrf.mxu0
        %3599 = vmatprep.mubr.bf16.mxu0 %v2572
        %3600 = vmatmul.mubr.bf16.gmra.mxu0 %v2571
        %v3601 = vpop.f32.mrf.mxu0
        %v3602 = vadd.f32 %v2689, %v3601
        %v3603 = vpop.f32.mrf.mxu0
        %v3604 = vpop.f32.mrf.mxu0
        %v3605 = vadd.f32 %v2689, %v3604
        %v3606 = vpop.f32.mrf.mxu0
        %3607 = vmatprep.mubr.bf16.mxu0 %v2575
        %3608 = vmatmul.mubr.bf16.gmra.mxu0 %v2574
        %v3609 = vpop.f32.mrf.mxu0
        %v3610 = vadd.f32 %v2689, %v3609
        %v3611 = vpop.f32.mrf.mxu0
        %v3612 = vpop.f32.mrf.mxu0
        %v3613 = vadd.f32 %v2689, %v3612
        %v3614 = vpop.f32.mrf.mxu0
        %3615 = vmatprep.mubr.bf16.mxu0 %v2578
        %3616 = vmatmul.mubr.bf16.gmra.mxu0 %v2577
        %v3617 = vpop.f32.mrf.mxu0
        %v3618 = vadd.f32 %v2689, %v3617
        %v3619 = vpop.f32.mrf.mxu0
        %v3620 = vpop.f32.mrf.mxu0
        %v3621 = vadd.f32 %v2689, %v3620
        %v3622 = vpop.f32.mrf.mxu0
        %3623 = vdwg.mxu0
        %3624 = vmatprep.subr.bf16.mxu0 0
        %3625 = vmatpush1.bf16.msra.mxu0 %v3004
        %3626 = vmatprep.subr.bf16.mxu0 0
        %3627 = vmatpush1.bf16.msra.mxu0 %v3001
        %3628 = vmatprep.subr.bf16.mxu0 0
        %3629 = vmatpush1.bf16.msra.mxu0 %v2998
        %3630 = vmatprep.subr.bf16.mxu0 0
        %3631 = vmatpush1.bf16.msra.mxu0 %v2995
        %3632 = vmatprep.subr.bf16.mxu0 0
        %3633 = vmatpush1.bf16.msra.mxu0 %v2992
        %3634 = vmatprep.subr.bf16.mxu0 0
        %3635 = vmatpush1.bf16.msra.mxu0 %v2989
        %3636 = vmatprep.subr.bf16.mxu0 0
        %3637 = vmatpush1.bf16.msra.mxu0 %v2986
        %3638 = vmatprep.subr.bf16.mxu0 0
        %3639 = vmatpush1.bf16.msra.mxu0 %v2983
        %3640 = vmatprep.subr.bf16.mxu0 0
        %3641 = vmatpush2.bf16.msra.mxu0 0
        %3642 = vmatprep.subr.bf16.mxu0 0
        %3643 = vmatpush2.bf16.msra.mxu0 0
        %3644 = vmatprep.subr.bf16.mxu0 0
        %3645 = vmatpush2.bf16.msra.mxu0 0
        %3646 = vmatprep.subr.bf16.mxu0 0
        %3647 = vmatpush2.bf16.msra.mxu0 0
        %3648 = vmatprep.subr.bf16.mxu0 0
        %3649 = vmatpush2.bf16.msra.mxu0 0
        %3650 = vmatprep.subr.bf16.mxu0 0
        %3651 = vmatpush2.bf16.msra.mxu0 0
        %3652 = vmatprep.subr.bf16.mxu0 0
        %3653 = vmatpush2.bf16.msra.mxu0 0
        %3654 = vmatprep.subr.bf16.mxu0 0
        %3655 = vmatpush2.bf16.msra.mxu0 0
        %3656 = vmatprep.mubr.bf16.mxu0 0
        %3657 = vmatmul.mubr.bf16.gmra.mxu0 %v2534
        %v3658 = vpop.f32.mrf.mxu0
        %v3659 = vadd.f32 %v3498, %v3658
        %v3660 = vpop.f32.mrf.mxu0
        %v3661 = vpop.f32.mrf.mxu0
        %v3662 = vadd.f32 %v3501, %v3661
        %v3663 = vpop.f32.mrf.mxu0
        %3664 = vmatprep.mubr.bf16.mxu0 0
        %3665 = vmatmul.mubr.bf16.gmra.mxu0 %v2537
        %v3666 = vpop.f32.mrf.mxu0
        %v3667 = vadd.f32 %v3506, %v3666
        %v3668 = vpop.f32.mrf.mxu0
        %v3669 = vpop.f32.mrf.mxu0
        %v3670 = vadd.f32 %v3509, %v3669
        %v3671 = vpop.f32.mrf.mxu0
        %3672 = vmatprep.mubr.bf16.mxu0 0
        %3673 = vmatmul.mubr.bf16.gmra.mxu0 %v2540
        %v3674 = vpop.f32.mrf.mxu0
        %v3675 = vadd.f32 %v3514, %v3674
        %v3676 = vpop.f32.mrf.mxu0
        %v3677 = vpop.f32.mrf.mxu0
        %v3678 = vadd.f32 %v3517, %v3677
        %v3679 = vpop.f32.mrf.mxu0
        %3680 = vmatprep.mubr.bf16.mxu0 0
        %3681 = vmatmul.mubr.bf16.gmra.mxu0 %v2543
        %v3682 = vpop.f32.mrf.mxu0
        %v3683 = vadd.f32 %v3522, %v3682
        %v3684 = vpop.f32.mrf.mxu0
        %v3685 = vpop.f32.mrf.mxu0
        %v3686 = vadd.f32 %v3525, %v3685
        %v3687 = vpop.f32.mrf.mxu0
        %3688 = vmatprep.mubr.bf16.mxu0 0
        %3689 = vmatmul.mubr.bf16.gmra.mxu0 %v2546
        %v3690 = vpop.f32.mrf.mxu0
        %v3691 = vadd.f32 %v3530, %v3690
        %v3692 = vpop.f32.mrf.mxu0
        %v3693 = vpop.f32.mrf.mxu0
        %v3694 = vadd.f32 %v3533, %v3693
        %v3695 = vpop.f32.mrf.mxu0
        %3696 = vmatprep.mubr.bf16.mxu0 0
        %3697 = vmatmul.mubr.bf16.gmra.mxu0 %v2549
        %v3698 = vpop.f32.mrf.mxu0
        %v3699 = vadd.f32 %v3538, %v3698
        %v3700 = vpop.f32.mrf.mxu0
        %v3701 = vpop.f32.mrf.mxu0
        %v3702 = vadd.f32 %v3541, %v3701
        %v3703 = vpop.f32.mrf.mxu0
        %3704 = vmatprep.mubr.bf16.mxu0 0
        %3705 = vmatmul.mubr.bf16.gmra.mxu0 %v2552
        %v3706 = vpop.f32.mrf.mxu0
        %v3707 = vadd.f32 %v3546, %v3706
        %v3708 = vpop.f32.mrf.mxu0
        %v3709 = vpop.f32.mrf.mxu0
        %v3710 = vadd.f32 %v3549, %v3709
        %v3711 = vpop.f32.mrf.mxu0
        %3712 = vmatprep.mubr.bf16.mxu0 0
        %3713 = vmatmul.mubr.bf16.gmra.mxu0 %v2555
        %v3714 = vpop.f32.mrf.mxu0
        %v3715 = vadd.f32 %v3554, %v3714
        %v3716 = vpop.f32.mrf.mxu0
        %v3717 = vpop.f32.mrf.mxu0
        %v3718 = vadd.f32 %v3557, %v3717
        %v3719 = vpop.f32.mrf.mxu0
        %3720 = vmatprep.mubr.bf16.mxu0 0
        %3721 = vmatmul.mubr.bf16.gmra.mxu0 %v2558
        %v3722 = vpop.f32.mrf.mxu0
        %v3723 = vadd.f32 %v3562, %v3722
        %v3724 = vpop.f32.mrf.mxu0
        %v3725 = vpop.f32.mrf.mxu0
        %v3726 = vadd.f32 %v3565, %v3725
        %v3727 = vpop.f32.mrf.mxu0
        %3728 = vmatprep.mubr.bf16.mxu0 0
        %3729 = vmatmul.mubr.bf16.gmra.mxu0 %v2561
        %v3730 = vpop.f32.mrf.mxu0
        %v3731 = vadd.f32 %v3570, %v3730
        %v3732 = vpop.f32.mrf.mxu0
        %v3733 = vpop.f32.mrf.mxu0
        %v3734 = vadd.f32 %v3573, %v3733
        %v3735 = vpop.f32.mrf.mxu0
        %3736 = vmatprep.mubr.bf16.mxu0 0
        %3737 = vmatmul.mubr.bf16.gmra.mxu0 %v2564
        %v3738 = vpop.f32.mrf.mxu0
        %v3739 = vadd.f32 %v3578, %v3738
        %v3740 = vpop.f32.mrf.mxu0
        %v3741 = vpop.f32.mrf.mxu0
        %v3742 = vadd.f32 %v3581, %v3741
        %v3743 = vpop.f32.mrf.mxu0
        %3744 = vmatprep.mubr.bf16.mxu0 0
        %3745 = vmatmul.mubr.bf16.gmra.mxu0 %v2567
        %v3746 = vpop.f32.mrf.mxu0
        %v3747 = vadd.f32 %v3586, %v3746
        %v3748 = vpop.f32.mrf.mxu0
        %v3749 = vpop.f32.mrf.mxu0
        %v3750 = vadd.f32 %v3589, %v3749
        %v3751 = vpop.f32.mrf.mxu0
        %3752 = vmatprep.mubr.bf16.mxu0 0
        %3753 = vmatmul.mubr.bf16.gmra.mxu0 %v2570
        %v3754 = vpop.f32.mrf.mxu0
        %v3755 = vadd.f32 %v3594, %v3754
        %v3756 = vpop.f32.mrf.mxu0
        %v3757 = vpop.f32.mrf.mxu0
        %v3758 = vadd.f32 %v3597, %v3757
        %v3759 = vpop.f32.mrf.mxu0
        %3760 = vmatprep.mubr.bf16.mxu0 0
        %3761 = vmatmul.mubr.bf16.gmra.mxu0 %v2573
        %v3762 = vpop.f32.mrf.mxu0
        %v3763 = vadd.f32 %v3602, %v3762
        %v3764 = vpop.f32.mrf.mxu0
        %v3765 = vpop.f32.mrf.mxu0
        %v3766 = vadd.f32 %v3605, %v3765
        %v3767 = vpop.f32.mrf.mxu0
        %3768 = vmatprep.mubr.bf16.mxu0 0
        %3769 = vmatmul.mubr.bf16.gmra.mxu0 %v2576
        %v3770 = vpop.f32.mrf.mxu0
        %v3771 = vadd.f32 %v3610, %v3770
        %v3772 = vpop.f32.mrf.mxu0
        %v3773 = vpop.f32.mrf.mxu0
        %v3774 = vadd.f32 %v3613, %v3773
        %v3775 = vpop.f32.mrf.mxu0
        %3776 = vmatprep.mubr.bf16.mxu0 0
        %3777 = vmatmul.mubr.bf16.gmra.mxu0 %v2579
        %v3778 = vpop.f32.mrf.mxu0
        %v3779 = vadd.f32 %v3618, %v3778
        %v3780 = vpop.f32.mrf.mxu0
        %v3781 = vpop.f32.mrf.mxu0
        %v3782 = vadd.f32 %v3621, %v3781
        %v3783 = vpop.f32.mrf.mxu0
        %3784 = vdwg.mxu0
        %v3785 = vmax.f32 %v3305, 0.0
        %v3786 = vmax.f32 %v3307, 0.0
        %v3787 = vmax.f32 %v3659, 0.0
        %v3788 = vmax.f32 %v3309, 0.0
        %v3789 = vmax.f32 %v3311, 0.0
        %v3790 = vmax.f32 %v3662, 0.0
        %v3791 = vmax.f32 %v3315, 0.0
        %v3792 = vmax.f32 %v3317, 0.0
        %v3793 = vmax.f32 %v3667, 0.0
        %v3794 = vmax.f32 %v3319, 0.0
        %v3795 = vmax.f32 %v3321, 0.0
        %v3796 = vmax.f32 %v3670, 0.0
        %v3797 = vmax.f32 %v3325, 0.0
        %v3798 = vmax.f32 %v3327, 0.0
        %v3799 = vmax.f32 %v3675, 0.0
        %v3800 = vmax.f32 %v3329, 0.0
        %v3801 = vmax.f32 %v3331, 0.0
        %v3802 = vmax.f32 %v3678, 0.0
        %v3803 = vmax.f32 %v3335, 0.0
        %v3804 = vmax.f32 %v3337, 0.0
        %v3805 = vmax.f32 %v3683, 0.0
        %v3806 = vmax.f32 %v3339, 0.0
        %v3807 = vmax.f32 %v3341, 0.0
        %v3808 = vmax.f32 %v3686, 0.0
        %v3809 = vmax.f32 %v3345, 0.0
        %v3810 = vmax.f32 %v3347, 0.0
        %v3811 = vmax.f32 %v3691, 0.0
        %v3812 = vmax.f32 %v3349, 0.0
        %v3813 = vmax.f32 %v3351, 0.0
        %v3814 = vmax.f32 %v3694, 0.0
        %v3815 = vmax.f32 %v3355, 0.0
        %v3816 = vmax.f32 %v3357, 0.0
        %v3817 = vmax.f32 %v3699, 0.0
        %v3818 = vmax.f32 %v3359, 0.0
        %v3819 = vmax.f32 %v3361, 0.0
        %v3820 = vmax.f32 %v3702, 0.0
        %v3821 = vmax.f32 %v3365, 0.0
        %v3822 = vmax.f32 %v3367, 0.0
        %v3823 = vmax.f32 %v3707, 0.0
        %v3824 = vmax.f32 %v3369, 0.0
        %v3825 = vmax.f32 %v3371, 0.0
        %v3826 = vmax.f32 %v3710, 0.0
        %v3827 = vmax.f32 %v3375, 0.0
        %v3828 = vmax.f32 %v3377, 0.0
        %v3829 = vmax.f32 %v3715, 0.0
        %v3830 = vmax.f32 %v3379, 0.0
        %v3831 = vmax.f32 %v3381, 0.0
        %v3832 = vmax.f32 %v3718, 0.0
        %v3833 = vmax.f32 %v3385, 0.0
        %v3834 = vmax.f32 %v3387, 0.0
        %v3835 = vmax.f32 %v3723, 0.0
        %v3836 = vmax.f32 %v3389, 0.0
        %v3837 = vmax.f32 %v3391, 0.0
        %v3838 = vmax.f32 %v3726, 0.0
        %v3839 = vmax.f32 %v3395, 0.0
        %v3840 = vmax.f32 %v3397, 0.0
        %v3841 = vmax.f32 %v3731, 0.0
        %v3842 = vmax.f32 %v3399, 0.0
        %v3843 = vmax.f32 %v3401, 0.0
        %v3844 = vmax.f32 %v3734, 0.0
        %v3845 = vmax.f32 %v3405, 0.0
        %v3846 = vmax.f32 %v3407, 0.0
        %v3847 = vmax.f32 %v3739, 0.0
        %v3848 = vmax.f32 %v3409, 0.0
        %v3849 = vmax.f32 %v3411, 0.0
        %v3850 = vmax.f32 %v3742, 0.0
        %v3851 = vmax.f32 %v3415, 0.0
        %v3852 = vmax.f32 %v3417, 0.0
        %v3853 = vmax.f32 %v3747, 0.0
        %v3854 = vmax.f32 %v3419, 0.0
        %v3855 = vmax.f32 %v3421, 0.0
        %v3856 = vmax.f32 %v3750, 0.0
        %v3857 = vmax.f32 %v3425, 0.0
        %v3858 = vmax.f32 %v3427, 0.0
        %v3859 = vmax.f32 %v3755, 0.0
        %v3860 = vmax.f32 %v3429, 0.0
        %v3861 = vmax.f32 %v3431, 0.0
        %v3862 = vmax.f32 %v3758, 0.0
        %v3863 = vmax.f32 %v3435, 0.0
        %v3864 = vmax.f32 %v3437, 0.0
        %v3865 = vmax.f32 %v3763, 0.0
        %v3866 = vmax.f32 %v3439, 0.0
        %v3867 = vmax.f32 %v3441, 0.0
        %v3868 = vmax.f32 %v3766, 0.0
        %v3869 = vmax.f32 %v3445, 0.0
        %v3870 = vmax.f32 %v3447, 0.0
        %v3871 = vmax.f32 %v3771, 0.0
        %v3872 = vmax.f32 %v3449, 0.0
        %v3873 = vmax.f32 %v3451, 0.0
        %v3874 = vmax.f32 %v3774, 0.0
        %v3875 = vmax.f32 %v3455, 0.0
        %v3876 = vmax.f32 %v3457, 0.0
        %v3877 = vmax.f32 %v3779, 0.0
        %v3878 = vmax.f32 %v3459, 0.0
        %v3879 = vmax.f32 %v3461, 0.0
        %v3880 = vmax.f32 %v3782, 0.0
        %v3881 = vpack.c.bf16 %v3788, %v3785
        %v3882 = vpack.c.bf16 %v3789, %v3786
        %v3883 = vpack.c.bf16 %v3790, %v3787
        %v3884 = vpack.c.bf16 %v3794, %v3791
        %v3885 = vpack.c.bf16 %v3795, %v3792
        %v3886 = vpack.c.bf16 %v3796, %v3793
        %v3887 = vpack.c.bf16 %v3800, %v3797
        %v3888 = vpack.c.bf16 %v3801, %v3798
        %v3889 = vpack.c.bf16 %v3802, %v3799
        %v3890 = vpack.c.bf16 %v3806, %v3803
        %v3891 = vpack.c.bf16 %v3807, %v3804
        %v3892 = vpack.c.bf16 %v3808, %v3805
        %v3893 = vpack.c.bf16 %v3812, %v3809
        %v3894 = vpack.c.bf16 %v3813, %v3810
        %v3895 = vpack.c.bf16 %v3814, %v3811
        %v3896 = vpack.c.bf16 %v3818, %v3815
        %v3897 = vpack.c.bf16 %v3819, %v3816
        %v3898 = vpack.c.bf16 %v3820, %v3817
        %v3899 = vpack.c.bf16 %v3824, %v3821
        %v3900 = vpack.c.bf16 %v3825, %v3822
        %v3901 = vpack.c.bf16 %v3826, %v3823
        %v3902 = vpack.c.bf16 %v3830, %v3827
        %v3903 = vpack.c.bf16 %v3831, %v3828
        %v3904 = vpack.c.bf16 %v3832, %v3829
        %v3905 = vpack.c.bf16 %v3836, %v3833
        %v3906 = vpack.c.bf16 %v3837, %v3834
        %v3907 = vpack.c.bf16 %v3838, %v3835
        %v3908 = vpack.c.bf16 %v3842, %v3839
        %v3909 = vpack.c.bf16 %v3843, %v3840
        %v3910 = vpack.c.bf16 %v3844, %v3841
        %v3911 = vpack.c.bf16 %v3848, %v3845
        %v3912 = vpack.c.bf16 %v3849, %v3846
        %v3913 = vpack.c.bf16 %v3850, %v3847
        %v3914 = vpack.c.bf16 %v3854, %v3851
        %v3915 = vpack.c.bf16 %v3855, %v3852
        %v3916 = vpack.c.bf16 %v3856, %v3853
        %v3917 = vpack.c.bf16 %v3860, %v3857
        %v3918 = vpack.c.bf16 %v3861, %v3858
        %v3919 = vpack.c.bf16 %v3862, %v3859
        %v3920 = vpack.c.bf16 %v3866, %v3863
        %v3921 = vpack.c.bf16 %v3867, %v3864
        %v3922 = vpack.c.bf16 %v3868, %v3865
        %v3923 = vpack.c.bf16 %v3872, %v3869
        %v3924 = vpack.c.bf16 %v3873, %v3870
        %v3925 = vpack.c.bf16 %v3874, %v3871
        %v3926 = vpack.c.bf16 %v3878, %v3875
        %v3927 = vpack.c.bf16 %v3879, %v3876
        %v3928 = vpack.c.bf16 %v3880, %v3877
        %v3929 = vld [vmem:[%s7] sm:$0xff]
        %v3930 = vld [vmem:[%s7 + $0x8] sm:$0xf]
        %v3931 = vld [vmem:[%s7 + $0xc] sm:$0xff]
        %v3932 = vld [vmem:[%s7 + $0x14] sm:$0xf]
        %v3933 = vld [vmem:[%s7 + $0x18] sm:$0xff]
        %v3934 = vld [vmem:[%s7 + $0x20] sm:$0xf]
        %v3935 = vld [vmem:[%s7 + $0x24] sm:$0xff]
        %v3936 = vld [vmem:[%s7 + $0x2c] sm:$0xf]
        %v3937 = vld [vmem:[%s7 + $0x30] sm:$0xff]
        %v3938 = vld [vmem:[%s7 + $0x38] sm:$0xf]
        %v3939 = vld [vmem:[%s7 + $0x3c] sm:$0xff]
        %v3940 = vld [vmem:[%s7 + $0x44] sm:$0xf]
        %v3941 = vld [vmem:[%s7 + $0x48] sm:$0xff]
        %v3942 = vld [vmem:[%s7 + $0x50] sm:$0xf]
        %v3943 = vld [vmem:[%s7 + $0x54] sm:$0xff]
        %v3944 = vld [vmem:[%s7 + $0x5c] sm:$0xf]
        %v3945 = vld [vmem:[%s7 + $0x60] sm:$0xff]
        %v3946 = vld [vmem:[%s7 + $0x68] sm:$0xf]
        %v3947 = vld [vmem:[%s7 + $0x6c] sm:$0xff]
        %v3948 = vld [vmem:[%s7 + $0x74] sm:$0xf]
        %v3949 = vld [vmem:[%s7 + $0x78] sm:$0xff]
        %v3950 = vld [vmem:[%s7 + $0x80] sm:$0xf]
        %v3951 = vld [vmem:[%s7 + $0x84] sm:$0xff]
        %v3952 = vld [vmem:[%s7 + $0x8c] sm:$0xf]
        %v3953 = vld [vmem:[%s7 + $0x90] sm:$0xff]
        %v3954 = vld [vmem:[%s7 + $0x98] sm:$0xf]
        %v3955 = vld [vmem:[%s7 + $0x9c] sm:$0xff]
        %v3956 = vld [vmem:[%s7 + $0xa4] sm:$0xf]
        %v3957 = vld [vmem:[%s7 + $0xa8] sm:$0xff]
        %v3958 = vld [vmem:[%s7 + $0xb0] sm:$0xf]
        %v3959 = vld [vmem:[%s7 + $0xb4] sm:$0xff]
        %v3960 = vld [vmem:[%s7 + $0xbc] sm:$0xf]
        %v3961 = vld [vmem:[%s7 + $0xc0] sm:$0xff]
        %v3962 = vld [vmem:[%s7 + $0xc8] sm:$0xf]
        %v3963 = vld [vmem:[%s7 + $0xcc] sm:$0xff]
        %v3964 = vld [vmem:[%s7 + $0xd4] sm:$0xf]
        %v3965 = vld [vmem:[%s7 + $0xd8] sm:$0xff]
        %v3966 = vld [vmem:[%s7 + $0xe0] sm:$0xf]
        %v3967 = vld [vmem:[%s7 + $0xe4] sm:$0xff]
        %v3968 = vld [vmem:[%s7 + $0xec] sm:$0xf]
        %v3969 = vld [vmem:[%s7 + $0xf0] sm:$0xff]
        %v3970 = vld [vmem:[%s7 + $0xf8] sm:$0xf]
        %v3971 = vld [vmem:[%s7 + $0xfc] sm:$0xff]
        %v3972 = vld [vmem:[%s7 + $0x104] sm:$0xf]
        %v3973 = vld [vmem:[%s7 + $0x108] sm:$0xff]
        %v3974 = vld [vmem:[%s7 + $0x110] sm:$0xf]
        %v3975 = vld [vmem:[%s7 + $0x114] sm:$0xff]
        %v3976 = vld [vmem:[%s7 + $0x11c] sm:$0xf]
        %v3977 = vld [vmem:[%s7 + $0x120] sm:$0xff]
        %v3978 = vld [vmem:[%s7 + $0x128] sm:$0xf]
        %v3979 = vld [vmem:[%s7 + $0x12c] sm:$0xff]
        %v3980 = vld [vmem:[%s7 + $0x134] sm:$0xf]
        %v3981 = vld [vmem:[%s7 + $0x138] sm:$0xff]
        %v3982 = vld [vmem:[%s7 + $0x140] sm:$0xf]
        %v3983 = vld [vmem:[%s7 + $0x144] sm:$0xff]
        %v3984 = vld [vmem:[%s7 + $0x14c] sm:$0xf]
        %v3985 = vld [vmem:[%s7 + $0x150] sm:$0xff]
        %v3986 = vld [vmem:[%s7 + $0x158] sm:$0xf]
        %v3987 = vld [vmem:[%s7 + $0x15c] sm:$0xff]
        %v3988 = vld [vmem:[%s7 + $0x164] sm:$0xf]
        %v3989 = vld [vmem:[%s7 + $0x168] sm:$0xff]
        %v3990 = vld [vmem:[%s7 + $0x170] sm:$0xf]
        %v3991 = vld [vmem:[%s7 + $0x174] sm:$0xff]
        %v3992 = vld [vmem:[%s7 + $0x17c] sm:$0xf]
        %v3993 = vld [vmem:[%s7 + $0x180] sm:$0xff]
        %v3994 = vld [vmem:[%s7 + $0x188] sm:$0xf]
        %v3995 = vld [vmem:[%s7 + $0x18c] sm:$0xff]
        %v3996 = vld [vmem:[%s7 + $0x194] sm:$0xf]
        %v3997 = vld [vmem:[%s7 + $0x198] sm:$0xff]
        %v3998 = vld [vmem:[%s7 + $0x1a0] sm:$0xf]
        %v3999 = vld [vmem:[%s7 + $0x1a4] sm:$0xff]
        %v4000 = vld [vmem:[%s7 + $0x1ac] sm:$0xf]
        %v4001 = vld [vmem:[%s7 + $0x1b0] sm:$0xff]
        %v4002 = vld [vmem:[%s7 + $0x1b8] sm:$0xf]
        %v4003 = vld [vmem:[%s7 + $0x1bc] sm:$0xff]
        %v4004 = vld [vmem:[%s7 + $0x1c4] sm:$0xf]
        %v4005 = vld [vmem:[%s7 + $0x1c8] sm:$0xff]
        %v4006 = vld [vmem:[%s7 + $0x1d0] sm:$0xf]
        %v4007 = vld [vmem:[%s7 + $0x1d4] sm:$0xff]
        %v4008 = vld [vmem:[%s7 + $0x1dc] sm:$0xf]
        %v4009 = vld [vmem:[%s7 + $0x1e0] sm:$0xff]
        %v4010 = vld [vmem:[%s7 + $0x1e8] sm:$0xf]
        %v4011 = vld [vmem:[%s7 + $0x1ec] sm:$0xff]
        %v4012 = vld [vmem:[%s7 + $0x1f4] sm:$0xf]
        %v4013 = vld [vmem:[%s7 + $0x1f8] sm:$0xff]
        %v4014 = vld [vmem:[%s7 + $0x200] sm:$0xf]
        %v4015 = vld [vmem:[%s7 + $0x204] sm:$0xff]
        %v4016 = vld [vmem:[%s7 + $0x20c] sm:$0xf]
        %v4017 = vld [vmem:[%s7 + $0x210] sm:$0xff]
        %v4018 = vld [vmem:[%s7 + $0x218] sm:$0xf]
        %v4019 = vld [vmem:[%s7 + $0x21c] sm:$0xff]
        %v4020 = vld [vmem:[%s7 + $0x224] sm:$0xf]
        %v4021 = vld [vmem:[%s7 + $0x228] sm:$0xff]
        %v4022 = vld [vmem:[%s7 + $0x230] sm:$0xf]
        %v4023 = vld [vmem:[%s7 + $0x234] sm:$0xff]
        %v4024 = vld [vmem:[%s7 + $0x23c] sm:$0xf]
        %v4025 = vld [vmem:[#allocation7] sm:$0x7]
        %v4027 = vlaneseq
        %v4028 = vshrl.u32 %v4027, 7
        %v4029 = vsub.s32 0, %v4028
        %v4030 = vrot.slane %v4025, %v4029
        %v4031 = vlaneseq
        %v4032 = vshrl.u32 %v4031, 7
        %v4033 = vsub.s32 1, %v4032
        %v4034 = vrot.slane %v4025, %v4033
        %v4035 = vlaneseq
        %v4036 = vshrl.u32 %v4035, 7
        %v4037 = vsub.s32 2, %v4036
        %v4038 = vrot.slane %v4025, %v4037
        %v4138 = vunpack.c.l.b16 %v3929
        %v4139 = vunpack.c.h.b16 %v3929
        %v4140 = vunpack.c.l.b16 %v3930
        %v4141 = vunpack.c.l.b16 %v3931
        %v4142 = vunpack.c.h.b16 %v3931
        %v4143 = vunpack.c.l.b16 %v3932
        %v4144 = vunpack.c.l.b16 %v3933
        %v4145 = vunpack.c.h.b16 %v3933
        %v4146 = vunpack.c.l.b16 %v3934
        %v4147 = vunpack.c.l.b16 %v3935
        %v4148 = vunpack.c.h.b16 %v3935
        %v4149 = vunpack.c.l.b16 %v3936
        %v4150 = vunpack.c.l.b16 %v3937
        %v4151 = vunpack.c.h.b16 %v3937
        %v4152 = vunpack.c.l.b16 %v3938
        %v4153 = vunpack.c.l.b16 %v3939
        %v4154 = vunpack.c.h.b16 %v3939
        %v4155 = vunpack.c.l.b16 %v3940
        %v4156 = vunpack.c.l.b16 %v3941
        %v4157 = vunpack.c.h.b16 %v3941
        %v4158 = vunpack.c.l.b16 %v3942
        %v4159 = vunpack.c.l.b16 %v3943
        %v4160 = vunpack.c.h.b16 %v3943
        %v4161 = vunpack.c.l.b16 %v3944
        %v4162 = vunpack.c.l.b16 %v3945
        %v4163 = vunpack.c.h.b16 %v3945
        %v4164 = vunpack.c.l.b16 %v3946
        %v4165 = vunpack.c.l.b16 %v3947
        %v4166 = vunpack.c.h.b16 %v3947
        %v4167 = vunpack.c.l.b16 %v3948
        %v4168 = vunpack.c.l.b16 %v3949
        %v4169 = vunpack.c.h.b16 %v3949
        %v4170 = vunpack.c.l.b16 %v3950
        %v4171 = vunpack.c.l.b16 %v3951
        %v4172 = vunpack.c.h.b16 %v3951
        %v4173 = vunpack.c.l.b16 %v3952
        %v4174 = vunpack.c.l.b16 %v3953
        %v4175 = vunpack.c.h.b16 %v3953
        %v4176 = vunpack.c.l.b16 %v3954
        %v4177 = vunpack.c.l.b16 %v3955
        %v4178 = vunpack.c.h.b16 %v3955
        %v4179 = vunpack.c.l.b16 %v3956
        %v4180 = vunpack.c.l.b16 %v3957
        %v4181 = vunpack.c.h.b16 %v3957
        %v4182 = vunpack.c.l.b16 %v3958
        %v4183 = vunpack.c.l.b16 %v3959
        %v4184 = vunpack.c.h.b16 %v3959
        %v4185 = vunpack.c.l.b16 %v3960
        %v4186 = vunpack.c.l.b16 %v3961
        %v4187 = vunpack.c.h.b16 %v3961
        %v4188 = vunpack.c.l.b16 %v3962
        %v4189 = vunpack.c.l.b16 %v3963
        %v4190 = vunpack.c.h.b16 %v3963
        %v4191 = vunpack.c.l.b16 %v3964
        %v4192 = vunpack.c.l.b16 %v3965
        %v4193 = vunpack.c.h.b16 %v3965
        %v4194 = vunpack.c.l.b16 %v3966
        %v4195 = vunpack.c.l.b16 %v3967
        %v4196 = vunpack.c.h.b16 %v3967
        %v4197 = vunpack.c.l.b16 %v3968
        %v4198 = vunpack.c.l.b16 %v3969
        %v4199 = vunpack.c.h.b16 %v3969
        %v4200 = vunpack.c.l.b16 %v3970
        %v4201 = vunpack.c.l.b16 %v3971
        %v4202 = vunpack.c.h.b16 %v3971
        %v4203 = vunpack.c.l.b16 %v3972
        %v4204 = vunpack.c.l.b16 %v3973
        %v4205 = vunpack.c.h.b16 %v3973
        %v4206 = vunpack.c.l.b16 %v3974
        %v4207 = vunpack.c.l.b16 %v3975
        %v4208 = vunpack.c.h.b16 %v3975
        %v4209 = vunpack.c.l.b16 %v3976
        %v4210 = vunpack.c.l.b16 %v3977
        %v4211 = vunpack.c.h.b16 %v3977
        %v4212 = vunpack.c.l.b16 %v3978
        %v4213 = vunpack.c.l.b16 %v3979
        %v4214 = vunpack.c.h.b16 %v3979
        %v4215 = vunpack.c.l.b16 %v3980
        %v4216 = vunpack.c.l.b16 %v3981
        %v4217 = vunpack.c.h.b16 %v3981
        %v4218 = vunpack.c.l.b16 %v3982
        %v4219 = vunpack.c.l.b16 %v3983
        %v4220 = vunpack.c.h.b16 %v3983
        %v4221 = vunpack.c.l.b16 %v3984
        %v4222 = vunpack.c.l.b16 %v3985
        %v4223 = vunpack.c.h.b16 %v3985
        %v4224 = vunpack.c.l.b16 %v3986
        %v4225 = vunpack.c.l.b16 %v3987
        %v4226 = vunpack.c.h.b16 %v3987
        %v4227 = vunpack.c.l.b16 %v3988
        %v4228 = vunpack.c.l.b16 %v3989
        %v4229 = vunpack.c.h.b16 %v3989
        %v4230 = vunpack.c.l.b16 %v3990
        %v4231 = vunpack.c.l.b16 %v3991
        %v4232 = vunpack.c.h.b16 %v3991
        %v4233 = vunpack.c.l.b16 %v3992
        %v4234 = vunpack.c.l.b16 %v3993
        %v4235 = vunpack.c.h.b16 %v3993
        %v4236 = vunpack.c.l.b16 %v3994
        %v4237 = vunpack.c.l.b16 %v3995
        %v4238 = vunpack.c.h.b16 %v3995
        %v4239 = vunpack.c.l.b16 %v3996
        %v4240 = vunpack.c.l.b16 %v3997
        %v4241 = vunpack.c.h.b16 %v3997
        %v4242 = vunpack.c.l.b16 %v3998
        %v4243 = vunpack.c.l.b16 %v3999
        %v4244 = vunpack.c.h.b16 %v3999
        %v4245 = vunpack.c.l.b16 %v4000
        %v4246 = vunpack.c.l.b16 %v4001
        %v4247 = vunpack.c.h.b16 %v4001
        %v4248 = vunpack.c.l.b16 %v4002
        %v4249 = vunpack.c.l.b16 %v4003
        %v4250 = vunpack.c.h.b16 %v4003
        %v4251 = vunpack.c.l.b16 %v4004
        %v4252 = vunpack.c.l.b16 %v4005
        %v4253 = vunpack.c.h.b16 %v4005
        %v4254 = vunpack.c.l.b16 %v4006
        %v4255 = vunpack.c.l.b16 %v4007
        %v4256 = vunpack.c.h.b16 %v4007
        %v4257 = vunpack.c.l.b16 %v4008
        %v4258 = vunpack.c.l.b16 %v4009
        %v4259 = vunpack.c.h.b16 %v4009
        %v4260 = vunpack.c.l.b16 %v4010
        %v4261 = vunpack.c.l.b16 %v4011
        %v4262 = vunpack.c.h.b16 %v4011
        %v4263 = vunpack.c.l.b16 %v4012
        %v4264 = vunpack.c.l.b16 %v4013
        %v4265 = vunpack.c.h.b16 %v4013
        %v4266 = vunpack.c.l.b16 %v4014
        %v4267 = vunpack.c.l.b16 %v4015
        %v4268 = vunpack.c.h.b16 %v4015
        %v4269 = vunpack.c.l.b16 %v4016
        %v4270 = vunpack.c.l.b16 %v4017
        %v4271 = vunpack.c.h.b16 %v4017
        %v4272 = vunpack.c.l.b16 %v4018
        %v4273 = vunpack.c.l.b16 %v4019
        %v4274 = vunpack.c.h.b16 %v4019
        %v4275 = vunpack.c.l.b16 %v4020
        %v4276 = vunpack.c.l.b16 %v4021
        %v4277 = vunpack.c.h.b16 %v4021
        %v4278 = vunpack.c.l.b16 %v4022
        %v4279 = vunpack.c.l.b16 %v4023
        %v4280 = vunpack.c.h.b16 %v4023
        %v4281 = vunpack.c.l.b16 %v4024
        %v4282 = vpack.c.b16 %v4141, %v4138
        %v4283 = vpack.c.b16 %v4142, %v4139
        %v4284 = vpack.c.b16 %v4143, %v4140
        %v4285 = vpack.c.b16 %v4147, %v4144
        %v4286 = vpack.c.b16 %v4148, %v4145
        %v4287 = vpack.c.b16 %v4149, %v4146
        %v4288 = vpack.c.b16 %v4153, %v4150
        %v4289 = vpack.c.b16 %v4154, %v4151
        %v4290 = vpack.c.b16 %v4155, %v4152
        %v4291 = vpack.c.b16 %v4159, %v4156
        %v4292 = vpack.c.b16 %v4160, %v4157
        %v4293 = vpack.c.b16 %v4161, %v4158
        %v4294 = vpack.c.b16 %v4165, %v4162
        %v4295 = vpack.c.b16 %v4166, %v4163
        %v4296 = vpack.c.b16 %v4167, %v4164
        %v4297 = vpack.c.b16 %v4171, %v4168
        %v4298 = vpack.c.b16 %v4172, %v4169
        %v4299 = vpack.c.b16 %v4173, %v4170
        %v4300 = vpack.c.b16 %v4177, %v4174
        %v4301 = vpack.c.b16 %v4178, %v4175
        %v4302 = vpack.c.b16 %v4179, %v4176
        %v4303 = vpack.c.b16 %v4183, %v4180
        %v4304 = vpack.c.b16 %v4184, %v4181
        %v4305 = vpack.c.b16 %v4185, %v4182
        %v4306 = vpack.c.b16 %v4189, %v4186
        %v4307 = vpack.c.b16 %v4190, %v4187
        %v4308 = vpack.c.b16 %v4191, %v4188
        %v4309 = vpack.c.b16 %v4195, %v4192
        %v4310 = vpack.c.b16 %v4196, %v4193
        %v4311 = vpack.c.b16 %v4197, %v4194
        %v4312 = vpack.c.b16 %v4201, %v4198
        %v4313 = vpack.c.b16 %v4202, %v4199
        %v4314 = vpack.c.b16 %v4203, %v4200
        %v4315 = vpack.c.b16 %v4207, %v4204
        %v4316 = vpack.c.b16 %v4208, %v4205
        %v4317 = vpack.c.b16 %v4209, %v4206
        %v4318 = vpack.c.b16 %v4213, %v4210
        %v4319 = vpack.c.b16 %v4214, %v4211
        %v4320 = vpack.c.b16 %v4215, %v4212
        %v4321 = vpack.c.b16 %v4219, %v4216
        %v4322 = vpack.c.b16 %v4220, %v4217
        %v4323 = vpack.c.b16 %v4221, %v4218
        %v4324 = vpack.c.b16 %v4225, %v4222
        %v4325 = vpack.c.b16 %v4226, %v4223
        %v4326 = vpack.c.b16 %v4227, %v4224
        %v4327 = vpack.c.b16 %v4231, %v4228
        %v4328 = vpack.c.b16 %v4232, %v4229
        %v4329 = vpack.c.b16 %v4233, %v4230
        %v4330 = vpack.c.b16 %v4237, %v4234
        %v4331 = vpack.c.b16 %v4238, %v4235
        %v4332 = vpack.c.b16 %v4239, %v4236
        %v4333 = vpack.c.b16 %v4243, %v4240
        %v4334 = vpack.c.b16 %v4244, %v4241
        %v4335 = vpack.c.b16 %v4245, %v4242
        %v4336 = vpack.c.b16 %v4249, %v4246
        %v4337 = vpack.c.b16 %v4250, %v4247
        %v4338 = vpack.c.b16 %v4251, %v4248
        %v4339 = vpack.c.b16 %v4255, %v4252
        %v4340 = vpack.c.b16 %v4256, %v4253
        %v4341 = vpack.c.b16 %v4257, %v4254
        %v4342 = vpack.c.b16 %v4261, %v4258
        %v4343 = vpack.c.b16 %v4262, %v4259
        %v4344 = vpack.c.b16 %v4263, %v4260
        %v4345 = vpack.c.b16 %v4267, %v4264
        %v4346 = vpack.c.b16 %v4268, %v4265
        %v4347 = vpack.c.b16 %v4269, %v4266
        %v4348 = vpack.c.b16 %v4273, %v4270
        %v4349 = vpack.c.b16 %v4274, %v4271
        %v4350 = vpack.c.b16 %v4275, %v4272
        %v4351 = vpack.c.b16 %v4279, %v4276
        %v4352 = vpack.c.b16 %v4280, %v4277
        %v4353 = vpack.c.b16 %v4281, %v4278
        %4426 = vmatprep.subr.bf16.mxu0 %v4304
        %4427 = vmatpush1.bf16.msra.mxu0 %v4303
        %4428 = vmatprep.subr.bf16.mxu0 %v4301
        %4429 = vmatpush1.bf16.msra.mxu0 %v4300
        %4430 = vmatprep.subr.bf16.mxu0 %v4298
        %4431 = vmatpush1.bf16.msra.mxu0 %v4297
        %4432 = vmatprep.subr.bf16.mxu0 %v4295
        %4433 = vmatpush1.bf16.msra.mxu0 %v4294
        %4434 = vmatprep.subr.bf16.mxu0 %v4292
        %4435 = vmatpush1.bf16.msra.mxu0 %v4291
        %4436 = vmatprep.subr.bf16.mxu0 %v4289
        %4437 = vmatpush1.bf16.msra.mxu0 %v4288
        %4438 = vmatprep.subr.bf16.mxu0 %v4286
        %4439 = vmatpush1.bf16.msra.mxu0 %v4285
        %4440 = vmatprep.subr.bf16.mxu0 %v4283
        %4441 = vmatpush1.bf16.msra.mxu0 %v4282
        %4442 = vmatprep.subr.bf16.mxu0 %v4328
        %4443 = vmatpush2.bf16.msra.mxu0 %v4327
        %4444 = vmatprep.subr.bf16.mxu0 %v4325
        %4445 = vmatpush2.bf16.msra.mxu0 %v4324
        %4446 = vmatprep.subr.bf16.mxu0 %v4322
        %4447 = vmatpush2.bf16.msra.mxu0 %v4321
        %4448 = vmatprep.subr.bf16.mxu0 %v4319
        %4449 = vmatpush2.bf16.msra.mxu0 %v4318
        %4450 = vmatprep.subr.bf16.mxu0 %v4316
        %4451 = vmatpush2.bf16.msra.mxu0 %v4315
        %4452 = vmatprep.subr.bf16.mxu0 %v4313
        %4453 = vmatpush2.bf16.msra.mxu0 %v4312
        %4454 = vmatprep.subr.bf16.mxu0 %v4310
        %4455 = vmatpush2.bf16.msra.mxu0 %v4309
        %4456 = vmatprep.subr.bf16.mxu0 %v4307
        %4457 = vmatpush2.bf16.msra.mxu0 %v4306
        %4458 = vmatprep.mubr.bf16.mxu0 %v3882
        %4459 = vmatmul.mubr.bf16.gmra.mxu0 %v3881
        %v4460 = vpop.f32.mrf.mxu0
        %v4461 = vadd.f32 %v4030, %v4460
        %v4462 = vpop.f32.mrf.mxu0
        %v4463 = vadd.f32 %v4034, %v4462
        %v4464 = vpop.f32.mrf.mxu0
        %v4465 = vadd.f32 %v4030, %v4464
        %v4466 = vpop.f32.mrf.mxu0
        %v4467 = vadd.f32 %v4034, %v4466
        %4468 = vmatprep.mubr.bf16.mxu0 %v3885
        %4469 = vmatmul.mubr.bf16.gmra.mxu0 %v3884
        %v4470 = vpop.f32.mrf.mxu0
        %v4471 = vadd.f32 %v4030, %v4470
        %v4472 = vpop.f32.mrf.mxu0
        %v4473 = vadd.f32 %v4034, %v4472
        %v4474 = vpop.f32.mrf.mxu0
        %v4475 = vadd.f32 %v4030, %v4474
        %v4476 = vpop.f32.mrf.mxu0
        %v4477 = vadd.f32 %v4034, %v4476
        %4478 = vmatprep.mubr.bf16.mxu0 %v3888
        %4479 = vmatmul.mubr.bf16.gmra.mxu0 %v3887
        %v4480 = vpop.f32.mrf.mxu0
        %v4481 = vadd.f32 %v4030, %v4480
        %v4482 = vpop.f32.mrf.mxu0
        %v4483 = vadd.f32 %v4034, %v4482
        %v4484 = vpop.f32.mrf.mxu0
        %v4485 = vadd.f32 %v4030, %v4484
        %v4486 = vpop.f32.mrf.mxu0
        %v4487 = vadd.f32 %v4034, %v4486
        %4488 = vmatprep.mubr.bf16.mxu0 %v3891
        %4489 = vmatmul.mubr.bf16.gmra.mxu0 %v3890
        %v4490 = vpop.f32.mrf.mxu0
        %v4491 = vadd.f32 %v4030, %v4490
        %v4492 = vpop.f32.mrf.mxu0
        %v4493 = vadd.f32 %v4034, %v4492
        %v4494 = vpop.f32.mrf.mxu0
        %v4495 = vadd.f32 %v4030, %v4494
        %v4496 = vpop.f32.mrf.mxu0
        %v4497 = vadd.f32 %v4034, %v4496
        %4498 = vmatprep.mubr.bf16.mxu0 %v3894
        %4499 = vmatmul.mubr.bf16.gmra.mxu0 %v3893
        %v4500 = vpop.f32.mrf.mxu0
        %v4501 = vadd.f32 %v4030, %v4500
        %v4502 = vpop.f32.mrf.mxu0
        %v4503 = vadd.f32 %v4034, %v4502
        %v4504 = vpop.f32.mrf.mxu0
        %v4505 = vadd.f32 %v4030, %v4504
        %v4506 = vpop.f32.mrf.mxu0
        %v4507 = vadd.f32 %v4034, %v4506
        %4508 = vmatprep.mubr.bf16.mxu0 %v3897
        %4509 = vmatmul.mubr.bf16.gmra.mxu0 %v3896
        %v4510 = vpop.f32.mrf.mxu0
        %v4511 = vadd.f32 %v4030, %v4510
        %v4512 = vpop.f32.mrf.mxu0
        %v4513 = vadd.f32 %v4034, %v4512
        %v4514 = vpop.f32.mrf.mxu0
        %v4515 = vadd.f32 %v4030, %v4514
        %v4516 = vpop.f32.mrf.mxu0
        %v4517 = vadd.f32 %v4034, %v4516
        %4518 = vmatprep.mubr.bf16.mxu0 %v3900
        %4519 = vmatmul.mubr.bf16.gmra.mxu0 %v3899
        %v4520 = vpop.f32.mrf.mxu0
        %v4521 = vadd.f32 %v4030, %v4520
        %v4522 = vpop.f32.mrf.mxu0
        %v4523 = vadd.f32 %v4034, %v4522
        %v4524 = vpop.f32.mrf.mxu0
        %v4525 = vadd.f32 %v4030, %v4524
        %v4526 = vpop.f32.mrf.mxu0
        %v4527 = vadd.f32 %v4034, %v4526
        %4528 = vmatprep.mubr.bf16.mxu0 %v3903
        %4529 = vmatmul.mubr.bf16.gmra.mxu0 %v3902
        %v4530 = vpop.f32.mrf.mxu0
        %v4531 = vadd.f32 %v4030, %v4530
        %v4532 = vpop.f32.mrf.mxu0
        %v4533 = vadd.f32 %v4034, %v4532
        %v4534 = vpop.f32.mrf.mxu0
        %v4535 = vadd.f32 %v4030, %v4534
        %v4536 = vpop.f32.mrf.mxu0
        %v4537 = vadd.f32 %v4034, %v4536
        %4538 = vmatprep.mubr.bf16.mxu0 %v3906
        %4539 = vmatmul.mubr.bf16.gmra.mxu0 %v3905
        %v4540 = vpop.f32.mrf.mxu0
        %v4541 = vadd.f32 %v4030, %v4540
        %v4542 = vpop.f32.mrf.mxu0
        %v4543 = vadd.f32 %v4034, %v4542
        %v4544 = vpop.f32.mrf.mxu0
        %v4545 = vadd.f32 %v4030, %v4544
        %v4546 = vpop.f32.mrf.mxu0
        %v4547 = vadd.f32 %v4034, %v4546
        %4548 = vmatprep.mubr.bf16.mxu0 %v3909
        %4549 = vmatmul.mubr.bf16.gmra.mxu0 %v3908
        %v4550 = vpop.f32.mrf.mxu0
        %v4551 = vadd.f32 %v4030, %v4550
        %v4552 = vpop.f32.mrf.mxu0
        %v4553 = vadd.f32 %v4034, %v4552
        %v4554 = vpop.f32.mrf.mxu0
        %v4555 = vadd.f32 %v4030, %v4554
        %v4556 = vpop.f32.mrf.mxu0
        %v4557 = vadd.f32 %v4034, %v4556
        %4558 = vmatprep.mubr.bf16.mxu0 %v3912
        %4559 = vmatmul.mubr.bf16.gmra.mxu0 %v3911
        %v4560 = vpop.f32.mrf.mxu0
        %v4561 = vadd.f32 %v4030, %v4560
        %v4562 = vpop.f32.mrf.mxu0
        %v4563 = vadd.f32 %v4034, %v4562
        %v4564 = vpop.f32.mrf.mxu0
        %v4565 = vadd.f32 %v4030, %v4564
        %v4566 = vpop.f32.mrf.mxu0
        %v4567 = vadd.f32 %v4034, %v4566
        %4568 = vmatprep.mubr.bf16.mxu0 %v3915
        %4569 = vmatmul.mubr.bf16.gmra.mxu0 %v3914
        %v4570 = vpop.f32.mrf.mxu0
        %v4571 = vadd.f32 %v4030, %v4570
        %v4572 = vpop.f32.mrf.mxu0
        %v4573 = vadd.f32 %v4034, %v4572
        %v4574 = vpop.f32.mrf.mxu0
        %v4575 = vadd.f32 %v4030, %v4574
        %v4576 = vpop.f32.mrf.mxu0
        %v4577 = vadd.f32 %v4034, %v4576
        %4578 = vmatprep.mubr.bf16.mxu0 %v3918
        %4579 = vmatmul.mubr.bf16.gmra.mxu0 %v3917
        %v4580 = vpop.f32.mrf.mxu0
        %v4581 = vadd.f32 %v4030, %v4580
        %v4582 = vpop.f32.mrf.mxu0
        %v4583 = vadd.f32 %v4034, %v4582
        %v4584 = vpop.f32.mrf.mxu0
        %v4585 = vadd.f32 %v4030, %v4584
        %v4586 = vpop.f32.mrf.mxu0
        %v4587 = vadd.f32 %v4034, %v4586
        %4588 = vmatprep.mubr.bf16.mxu0 %v3921
        %4589 = vmatmul.mubr.bf16.gmra.mxu0 %v3920
        %v4590 = vpop.f32.mrf.mxu0
        %v4591 = vadd.f32 %v4030, %v4590
        %v4592 = vpop.f32.mrf.mxu0
        %v4593 = vadd.f32 %v4034, %v4592
        %v4594 = vpop.f32.mrf.mxu0
        %v4595 = vadd.f32 %v4030, %v4594
        %v4596 = vpop.f32.mrf.mxu0
        %v4597 = vadd.f32 %v4034, %v4596
        %4598 = vmatprep.mubr.bf16.mxu0 %v3924
        %4599 = vmatmul.mubr.bf16.gmra.mxu0 %v3923
        %v4600 = vpop.f32.mrf.mxu0
        %v4601 = vadd.f32 %v4030, %v4600
        %v4602 = vpop.f32.mrf.mxu0
        %v4603 = vadd.f32 %v4034, %v4602
        %v4604 = vpop.f32.mrf.mxu0
        %v4605 = vadd.f32 %v4030, %v4604
        %v4606 = vpop.f32.mrf.mxu0
        %v4607 = vadd.f32 %v4034, %v4606
        %4608 = vmatprep.mubr.bf16.mxu0 %v3927
        %4609 = vmatmul.mubr.bf16.gmra.mxu0 %v3926
        %v4610 = vpop.f32.mrf.mxu0
        %v4611 = vadd.f32 %v4030, %v4610
        %v4612 = vpop.f32.mrf.mxu0
        %v4613 = vadd.f32 %v4034, %v4612
        %v4614 = vpop.f32.mrf.mxu0
        %v4615 = vadd.f32 %v4030, %v4614
        %v4616 = vpop.f32.mrf.mxu0
        %v4617 = vadd.f32 %v4034, %v4616
        %4618 = vdwg.mxu0
        %4619 = vmatprep.subr.bf16.mxu0 %v4352
        %4620 = vmatpush1.bf16.msra.mxu0 %v4351
        %4621 = vmatprep.subr.bf16.mxu0 %v4349
        %4622 = vmatpush1.bf16.msra.mxu0 %v4348
        %4623 = vmatprep.subr.bf16.mxu0 %v4346
        %4624 = vmatpush1.bf16.msra.mxu0 %v4345
        %4625 = vmatprep.subr.bf16.mxu0 %v4343
        %4626 = vmatpush1.bf16.msra.mxu0 %v4342
        %4627 = vmatprep.subr.bf16.mxu0 %v4340
        %4628 = vmatpush1.bf16.msra.mxu0 %v4339
        %4629 = vmatprep.subr.bf16.mxu0 %v4337
        %4630 = vmatpush1.bf16.msra.mxu0 %v4336
        %4631 = vmatprep.subr.bf16.mxu0 %v4334
        %4632 = vmatpush1.bf16.msra.mxu0 %v4333
        %4633 = vmatprep.subr.bf16.mxu0 %v4331
        %4634 = vmatpush1.bf16.msra.mxu0 %v4330
        %4635 = vmatprep.subr.bf16.mxu0 0
        %4636 = vmatpush2.bf16.msra.mxu0 0
        %4637 = vmatprep.subr.bf16.mxu0 0
        %4638 = vmatpush2.bf16.msra.mxu0 0
        %4639 = vmatprep.subr.bf16.mxu0 0
        %4640 = vmatpush2.bf16.msra.mxu0 0
        %4641 = vmatprep.subr.bf16.mxu0 0
        %4642 = vmatpush2.bf16.msra.mxu0 0
        %4643 = vmatprep.subr.bf16.mxu0 0
        %4644 = vmatpush2.bf16.msra.mxu0 0
        %4645 = vmatprep.subr.bf16.mxu0 0
        %4646 = vmatpush2.bf16.msra.mxu0 0
        %4647 = vmatprep.subr.bf16.mxu0 0
        %4648 = vmatpush2.bf16.msra.mxu0 0
        %4649 = vmatprep.subr.bf16.mxu0 0
        %4650 = vmatpush2.bf16.msra.mxu0 0
        %4651 = vmatprep.mubr.bf16.mxu0 0
        %4652 = vmatmul.mubr.bf16.gmra.mxu0 %v3883
        %v4653 = vpop.f32.mrf.mxu0
        %v4654 = vadd.f32 %v4461, %v4653
        %v4655 = vpop.f32.mrf.mxu0
        %v4656 = vadd.f32 %v4463, %v4655
        %v4657 = vpop.f32.mrf.mxu0
        %v4658 = vadd.f32 %v4465, %v4657
        %v4659 = vpop.f32.mrf.mxu0
        %v4660 = vadd.f32 %v4467, %v4659
        %4661 = vmatprep.mubr.bf16.mxu0 0
        %4662 = vmatmul.mubr.bf16.gmra.mxu0 %v3886
        %v4663 = vpop.f32.mrf.mxu0
        %v4664 = vadd.f32 %v4471, %v4663
        %v4665 = vpop.f32.mrf.mxu0
        %v4666 = vadd.f32 %v4473, %v4665
        %v4667 = vpop.f32.mrf.mxu0
        %v4668 = vadd.f32 %v4475, %v4667
        %v4669 = vpop.f32.mrf.mxu0
        %v4670 = vadd.f32 %v4477, %v4669
        %4671 = vmatprep.mubr.bf16.mxu0 0
        %4672 = vmatmul.mubr.bf16.gmra.mxu0 %v3889
        %v4673 = vpop.f32.mrf.mxu0
        %v4674 = vadd.f32 %v4481, %v4673
        %v4675 = vpop.f32.mrf.mxu0
        %v4676 = vadd.f32 %v4483, %v4675
        %v4677 = vpop.f32.mrf.mxu0
        %v4678 = vadd.f32 %v4485, %v4677
        %v4679 = vpop.f32.mrf.mxu0
        %v4680 = vadd.f32 %v4487, %v4679
        %4681 = vmatprep.mubr.bf16.mxu0 0
        %4682 = vmatmul.mubr.bf16.gmra.mxu0 %v3892
        %v4683 = vpop.f32.mrf.mxu0
        %v4684 = vadd.f32 %v4491, %v4683
        %v4685 = vpop.f32.mrf.mxu0
        %v4686 = vadd.f32 %v4493, %v4685
        %v4687 = vpop.f32.mrf.mxu0
        %v4688 = vadd.f32 %v4495, %v4687
        %v4689 = vpop.f32.mrf.mxu0
        %v4690 = vadd.f32 %v4497, %v4689
        %4691 = vmatprep.mubr.bf16.mxu0 0
        %4692 = vmatmul.mubr.bf16.gmra.mxu0 %v3895
        %v4693 = vpop.f32.mrf.mxu0
        %v4694 = vadd.f32 %v4501, %v4693
        %v4695 = vpop.f32.mrf.mxu0
        %v4696 = vadd.f32 %v4503, %v4695
        %v4697 = vpop.f32.mrf.mxu0
        %v4698 = vadd.f32 %v4505, %v4697
        %v4699 = vpop.f32.mrf.mxu0
        %v4700 = vadd.f32 %v4507, %v4699
        %4701 = vmatprep.mubr.bf16.mxu0 0
        %4702 = vmatmul.mubr.bf16.gmra.mxu0 %v3898
        %v4703 = vpop.f32.mrf.mxu0
        %v4704 = vadd.f32 %v4511, %v4703
        %v4705 = vpop.f32.mrf.mxu0
        %v4706 = vadd.f32 %v4513, %v4705
        %v4707 = vpop.f32.mrf.mxu0
        %v4708 = vadd.f32 %v4515, %v4707
        %v4709 = vpop.f32.mrf.mxu0
        %v4710 = vadd.f32 %v4517, %v4709
        %4711 = vmatprep.mubr.bf16.mxu0 0
        %4712 = vmatmul.mubr.bf16.gmra.mxu0 %v3901
        %v4713 = vpop.f32.mrf.mxu0
        %v4714 = vadd.f32 %v4521, %v4713
        %v4715 = vpop.f32.mrf.mxu0
        %v4716 = vadd.f32 %v4523, %v4715
        %v4717 = vpop.f32.mrf.mxu0
        %v4718 = vadd.f32 %v4525, %v4717
        %v4719 = vpop.f32.mrf.mxu0
        %v4720 = vadd.f32 %v4527, %v4719
        %4721 = vmatprep.mubr.bf16.mxu0 0
        %4722 = vmatmul.mubr.bf16.gmra.mxu0 %v3904
        %v4723 = vpop.f32.mrf.mxu0
        %v4724 = vadd.f32 %v4531, %v4723
        %v4725 = vpop.f32.mrf.mxu0
        %v4726 = vadd.f32 %v4533, %v4725
        %v4727 = vpop.f32.mrf.mxu0
        %v4728 = vadd.f32 %v4535, %v4727
        %v4729 = vpop.f32.mrf.mxu0
        %v4730 = vadd.f32 %v4537, %v4729
        %4731 = vmatprep.mubr.bf16.mxu0 0
        %4732 = vmatmul.mubr.bf16.gmra.mxu0 %v3907
        %v4733 = vpop.f32.mrf.mxu0
        %v4734 = vadd.f32 %v4541, %v4733
        %v4735 = vpop.f32.mrf.mxu0
        %v4736 = vadd.f32 %v4543, %v4735
        %v4737 = vpop.f32.mrf.mxu0
        %v4738 = vadd.f32 %v4545, %v4737
        %v4739 = vpop.f32.mrf.mxu0
        %v4740 = vadd.f32 %v4547, %v4739
        %4741 = vmatprep.mubr.bf16.mxu0 0
        %4742 = vmatmul.mubr.bf16.gmra.mxu0 %v3910
        %v4743 = vpop.f32.mrf.mxu0
        %v4744 = vadd.f32 %v4551, %v4743
        %v4745 = vpop.f32.mrf.mxu0
        %v4746 = vadd.f32 %v4553, %v4745
        %v4747 = vpop.f32.mrf.mxu0
        %v4748 = vadd.f32 %v4555, %v4747
        %v4749 = vpop.f32.mrf.mxu0
        %v4750 = vadd.f32 %v4557, %v4749
        %4751 = vmatprep.mubr.bf16.mxu0 0
        %4752 = vmatmul.mubr.bf16.gmra.mxu0 %v3913
        %v4753 = vpop.f32.mrf.mxu0
        %v4754 = vadd.f32 %v4561, %v4753
        %v4755 = vpop.f32.mrf.mxu0
        %v4756 = vadd.f32 %v4563, %v4755
        %v4757 = vpop.f32.mrf.mxu0
        %v4758 = vadd.f32 %v4565, %v4757
        %v4759 = vpop.f32.mrf.mxu0
        %v4760 = vadd.f32 %v4567, %v4759
        %4761 = vmatprep.mubr.bf16.mxu0 0
        %4762 = vmatmul.mubr.bf16.gmra.mxu0 %v3916
        %v4763 = vpop.f32.mrf.mxu0
        %v4764 = vadd.f32 %v4571, %v4763
        %v4765 = vpop.f32.mrf.mxu0
        %v4766 = vadd.f32 %v4573, %v4765
        %v4767 = vpop.f32.mrf.mxu0
        %v4768 = vadd.f32 %v4575, %v4767
        %v4769 = vpop.f32.mrf.mxu0
        %v4770 = vadd.f32 %v4577, %v4769
        %4771 = vmatprep.mubr.bf16.mxu0 0
        %4772 = vmatmul.mubr.bf16.gmra.mxu0 %v3919
        %v4773 = vpop.f32.mrf.mxu0
        %v4774 = vadd.f32 %v4581, %v4773
        %v4775 = vpop.f32.mrf.mxu0
        %v4776 = vadd.f32 %v4583, %v4775
        %v4777 = vpop.f32.mrf.mxu0
        %v4778 = vadd.f32 %v4585, %v4777
        %v4779 = vpop.f32.mrf.mxu0
        %v4780 = vadd.f32 %v4587, %v4779
        %4781 = vmatprep.mubr.bf16.mxu0 0
        %4782 = vmatmul.mubr.bf16.gmra.mxu0 %v3922
        %v4783 = vpop.f32.mrf.mxu0
        %v4784 = vadd.f32 %v4591, %v4783
        %v4785 = vpop.f32.mrf.mxu0
        %v4786 = vadd.f32 %v4593, %v4785
        %v4787 = vpop.f32.mrf.mxu0
        %v4788 = vadd.f32 %v4595, %v4787
        %v4789 = vpop.f32.mrf.mxu0
        %v4790 = vadd.f32 %v4597, %v4789
        %4791 = vmatprep.mubr.bf16.mxu0 0
        %4792 = vmatmul.mubr.bf16.gmra.mxu0 %v3925
        %v4793 = vpop.f32.mrf.mxu0
        %v4794 = vadd.f32 %v4601, %v4793
        %v4795 = vpop.f32.mrf.mxu0
        %v4796 = vadd.f32 %v4603, %v4795
        %v4797 = vpop.f32.mrf.mxu0
        %v4798 = vadd.f32 %v4605, %v4797
        %v4799 = vpop.f32.mrf.mxu0
        %v4800 = vadd.f32 %v4607, %v4799
        %4801 = vmatprep.mubr.bf16.mxu0 0
        %4802 = vmatmul.mubr.bf16.gmra.mxu0 %v3928
        %v4803 = vpop.f32.mrf.mxu0
        %v4804 = vadd.f32 %v4611, %v4803
        %v4805 = vpop.f32.mrf.mxu0
        %v4806 = vadd.f32 %v4613, %v4805
        %v4807 = vpop.f32.mrf.mxu0
        %v4808 = vadd.f32 %v4615, %v4807
        %v4809 = vpop.f32.mrf.mxu0
        %v4810 = vadd.f32 %v4617, %v4809
        %4811 = vdwg.mxu0
        %4812 = vmatprep.subr.bf16.mxu0 0
        %4813 = vmatpush1.bf16.msra.mxu0 %v4305
        %4814 = vmatprep.subr.bf16.mxu0 0
        %4815 = vmatpush1.bf16.msra.mxu0 %v4302
        %4816 = vmatprep.subr.bf16.mxu0 0
        %4817 = vmatpush1.bf16.msra.mxu0 %v4299
        %4818 = vmatprep.subr.bf16.mxu0 0
        %4819 = vmatpush1.bf16.msra.mxu0 %v4296
        %4820 = vmatprep.subr.bf16.mxu0 0
        %4821 = vmatpush1.bf16.msra.mxu0 %v4293
        %4822 = vmatprep.subr.bf16.mxu0 0
        %4823 = vmatpush1.bf16.msra.mxu0 %v4290
        %4824 = vmatprep.subr.bf16.mxu0 0
        %4825 = vmatpush1.bf16.msra.mxu0 %v4287
        %4826 = vmatprep.subr.bf16.mxu0 0
        %4827 = vmatpush1.bf16.msra.mxu0 %v4284
        %4828 = vmatprep.subr.bf16.mxu0 0
        %4829 = vmatpush2.bf16.msra.mxu0 %v4329
        %4830 = vmatprep.subr.bf16.mxu0 0
        %4831 = vmatpush2.bf16.msra.mxu0 %v4326
        %4832 = vmatprep.subr.bf16.mxu0 0
        %4833 = vmatpush2.bf16.msra.mxu0 %v4323
        %4834 = vmatprep.subr.bf16.mxu0 0
        %4835 = vmatpush2.bf16.msra.mxu0 %v4320
        %4836 = vmatprep.subr.bf16.mxu0 0
        %4837 = vmatpush2.bf16.msra.mxu0 %v4317
        %4838 = vmatprep.subr.bf16.mxu0 0
        %4839 = vmatpush2.bf16.msra.mxu0 %v4314
        %4840 = vmatprep.subr.bf16.mxu0 0
        %4841 = vmatpush2.bf16.msra.mxu0 %v4311
        %4842 = vmatprep.subr.bf16.mxu0 0
        %4843 = vmatpush2.bf16.msra.mxu0 %v4308
        %4844 = vmatprep.mubr.bf16.mxu0 %v3882
        %4845 = vmatmul.mubr.bf16.gmra.mxu0 %v3881
        %v4846 = vpop.f32.mrf.mxu0
        %v4847 = vadd.f32 %v4038, %v4846
        %v4848 = vpop.f32.mrf.mxu0
        %v4849 = vpop.f32.mrf.mxu0
        %v4850 = vadd.f32 %v4038, %v4849
        %v4851 = vpop.f32.mrf.mxu0
        %4852 = vmatprep.mubr.bf16.mxu0 %v3885
        %4853 = vmatmul.mubr.bf16.gmra.mxu0 %v3884
        %v4854 = vpop.f32.mrf.mxu0
        %v4855 = vadd.f32 %v4038, %v4854
        %v4856 = vpop.f32.mrf.mxu0
        %v4857 = vpop.f32.mrf.mxu0
        %v4858 = vadd.f32 %v4038, %v4857
        %v4859 = vpop.f32.mrf.mxu0
        %4860 = vmatprep.mubr.bf16.mxu0 %v3888
        %4861 = vmatmul.mubr.bf16.gmra.mxu0 %v3887
        %v4862 = vpop.f32.mrf.mxu0
        %v4863 = vadd.f32 %v4038, %v4862
        %v4864 = vpop.f32.mrf.mxu0
        %v4865 = vpop.f32.mrf.mxu0
        %v4866 = vadd.f32 %v4038, %v4865
        %v4867 = vpop.f32.mrf.mxu0
        %4868 = vmatprep.mubr.bf16.mxu0 %v3891
        %4869 = vmatmul.mubr.bf16.gmra.mxu0 %v3890
        %v4870 = vpop.f32.mrf.mxu0
        %v4871 = vadd.f32 %v4038, %v4870
        %v4872 = vpop.f32.mrf.mxu0
        %v4873 = vpop.f32.mrf.mxu0
        %v4874 = vadd.f32 %v4038, %v4873
        %v4875 = vpop.f32.mrf.mxu0
        %4876 = vmatprep.mubr.bf16.mxu0 %v3894
        %4877 = vmatmul.mubr.bf16.gmra.mxu0 %v3893
        %v4878 = vpop.f32.mrf.mxu0
        %v4879 = vadd.f32 %v4038, %v4878
        %v4880 = vpop.f32.mrf.mxu0
        %v4881 = vpop.f32.mrf.mxu0
        %v4882 = vadd.f32 %v4038, %v4881
        %v4883 = vpop.f32.mrf.mxu0
        %4884 = vmatprep.mubr.bf16.mxu0 %v3897
        %4885 = vmatmul.mubr.bf16.gmra.mxu0 %v3896
        %v4886 = vpop.f32.mrf.mxu0
        %v4887 = vadd.f32 %v4038, %v4886
        %v4888 = vpop.f32.mrf.mxu0
        %v4889 = vpop.f32.mrf.mxu0
        %v4890 = vadd.f32 %v4038, %v4889
        %v4891 = vpop.f32.mrf.mxu0
        %4892 = vmatprep.mubr.bf16.mxu0 %v3900
        %4893 = vmatmul.mubr.bf16.gmra.mxu0 %v3899
        %v4894 = vpop.f32.mrf.mxu0
        %v4895 = vadd.f32 %v4038, %v4894
        %v4896 = vpop.f32.mrf.mxu0
        %v4897 = vpop.f32.mrf.mxu0
        %v4898 = vadd.f32 %v4038, %v4897
        %v4899 = vpop.f32.mrf.mxu0
        %4900 = vmatprep.mubr.bf16.mxu0 %v3903
        %4901 = vmatmul.mubr.bf16.gmra.mxu0 %v3902
        %v4902 = vpop.f32.mrf.mxu0
        %v4903 = vadd.f32 %v4038, %v4902
        %v4904 = vpop.f32.mrf.mxu0
        %v4905 = vpop.f32.mrf.mxu0
        %v4906 = vadd.f32 %v4038, %v4905
        %v4907 = vpop.f32.mrf.mxu0
        %4908 = vmatprep.mubr.bf16.mxu0 %v3906
        %4909 = vmatmul.mubr.bf16.gmra.mxu0 %v3905
        %v4910 = vpop.f32.mrf.mxu0
        %v4911 = vadd.f32 %v4038, %v4910
        %v4912 = vpop.f32.mrf.mxu0
        %v4913 = vpop.f32.mrf.mxu0
        %v4914 = vadd.f32 %v4038, %v4913
        %v4915 = vpop.f32.mrf.mxu0
        %4916 = vmatprep.mubr.bf16.mxu0 %v3909
        %4917 = vmatmul.mubr.bf16.gmra.mxu0 %v3908
        %v4918 = vpop.f32.mrf.mxu0
        %v4919 = vadd.f32 %v4038, %v4918
        %v4920 = vpop.f32.mrf.mxu0
        %v4921 = vpop.f32.mrf.mxu0
        %v4922 = vadd.f32 %v4038, %v4921
        %v4923 = vpop.f32.mrf.mxu0
        %4924 = vmatprep.mubr.bf16.mxu0 %v3912
        %4925 = vmatmul.mubr.bf16.gmra.mxu0 %v3911
        %v4926 = vpop.f32.mrf.mxu0
        %v4927 = vadd.f32 %v4038, %v4926
        %v4928 = vpop.f32.mrf.mxu0
        %v4929 = vpop.f32.mrf.mxu0
        %v4930 = vadd.f32 %v4038, %v4929
        %v4931 = vpop.f32.mrf.mxu0
        %4932 = vmatprep.mubr.bf16.mxu0 %v3915
        %4933 = vmatmul.mubr.bf16.gmra.mxu0 %v3914
        %v4934 = vpop.f32.mrf.mxu0
        %v4935 = vadd.f32 %v4038, %v4934
        %v4936 = vpop.f32.mrf.mxu0
        %v4937 = vpop.f32.mrf.mxu0
        %v4938 = vadd.f32 %v4038, %v4937
        %v4939 = vpop.f32.mrf.mxu0
        %4940 = vmatprep.mubr.bf16.mxu0 %v3918
        %4941 = vmatmul.mubr.bf16.gmra.mxu0 %v3917
        %v4942 = vpop.f32.mrf.mxu0
        %v4943 = vadd.f32 %v4038, %v4942
        %v4944 = vpop.f32.mrf.mxu0
        %v4945 = vpop.f32.mrf.mxu0
        %v4946 = vadd.f32 %v4038, %v4945
        %v4947 = vpop.f32.mrf.mxu0
        %4948 = vmatprep.mubr.bf16.mxu0 %v3921
        %4949 = vmatmul.mubr.bf16.gmra.mxu0 %v3920
        %v4950 = vpop.f32.mrf.mxu0
        %v4951 = vadd.f32 %v4038, %v4950
        %v4952 = vpop.f32.mrf.mxu0
        %v4953 = vpop.f32.mrf.mxu0
        %v4954 = vadd.f32 %v4038, %v4953
        %v4955 = vpop.f32.mrf.mxu0
        %4956 = vmatprep.mubr.bf16.mxu0 %v3924
        %4957 = vmatmul.mubr.bf16.gmra.mxu0 %v3923
        %v4958 = vpop.f32.mrf.mxu0
        %v4959 = vadd.f32 %v4038, %v4958
        %v4960 = vpop.f32.mrf.mxu0
        %v4961 = vpop.f32.mrf.mxu0
        %v4962 = vadd.f32 %v4038, %v4961
        %v4963 = vpop.f32.mrf.mxu0
        %4964 = vmatprep.mubr.bf16.mxu0 %v3927
        %4965 = vmatmul.mubr.bf16.gmra.mxu0 %v3926
        %v4966 = vpop.f32.mrf.mxu0
        %v4967 = vadd.f32 %v4038, %v4966
        %v4968 = vpop.f32.mrf.mxu0
        %v4969 = vpop.f32.mrf.mxu0
        %v4970 = vadd.f32 %v4038, %v4969
        %v4971 = vpop.f32.mrf.mxu0
        %4972 = vdwg.mxu0
        %4973 = vmatprep.subr.bf16.mxu0 0
        %4974 = vmatpush1.bf16.msra.mxu0 %v4353
        %4975 = vmatprep.subr.bf16.mxu0 0
        %4976 = vmatpush1.bf16.msra.mxu0 %v4350
        %4977 = vmatprep.subr.bf16.mxu0 0
        %4978 = vmatpush1.bf16.msra.mxu0 %v4347
        %4979 = vmatprep.subr.bf16.mxu0 0
        %4980 = vmatpush1.bf16.msra.mxu0 %v4344
        %4981 = vmatprep.subr.bf16.mxu0 0
        %4982 = vmatpush1.bf16.msra.mxu0 %v4341
        %4983 = vmatprep.subr.bf16.mxu0 0
        %4984 = vmatpush1.bf16.msra.mxu0 %v4338
        %4985 = vmatprep.subr.bf16.mxu0 0
        %4986 = vmatpush1.bf16.msra.mxu0 %v4335
        %4987 = vmatprep.subr.bf16.mxu0 0
        %4988 = vmatpush1.bf16.msra.mxu0 %v4332
        %4989 = vmatprep.subr.bf16.mxu0 0
        %4990 = vmatpush2.bf16.msra.mxu0 0
        %4991 = vmatprep.subr.bf16.mxu0 0
        %4992 = vmatpush2.bf16.msra.mxu0 0
        %4993 = vmatprep.subr.bf16.mxu0 0
        %4994 = vmatpush2.bf16.msra.mxu0 0
        %4995 = vmatprep.subr.bf16.mxu0 0
        %4996 = vmatpush2.bf16.msra.mxu0 0
        %4997 = vmatprep.subr.bf16.mxu0 0
        %4998 = vmatpush2.bf16.msra.mxu0 0
        %4999 = vmatprep.subr.bf16.mxu0 0
        %5000 = vmatpush2.bf16.msra.mxu0 0
        %5001 = vmatprep.subr.bf16.mxu0 0
        %5002 = vmatpush2.bf16.msra.mxu0 0
        %5003 = vmatprep.subr.bf16.mxu0 0
        %5004 = vmatpush2.bf16.msra.mxu0 0
        %5005 = vmatprep.mubr.bf16.mxu0 0
        %5006 = vmatmul.mubr.bf16.gmra.mxu0 %v3883
        %v5007 = vpop.f32.mrf.mxu0
        %v5008 = vadd.f32 %v4847, %v5007
        %v5009 = vpop.f32.mrf.mxu0
        %v5010 = vpop.f32.mrf.mxu0
        %v5011 = vadd.f32 %v4850, %v5010
        %v5012 = vpop.f32.mrf.mxu0
        %5013 = vmatprep.mubr.bf16.mxu0 0
        %5014 = vmatmul.mubr.bf16.gmra.mxu0 %v3886
        %v5015 = vpop.f32.mrf.mxu0
        %v5016 = vadd.f32 %v4855, %v5015
        %v5017 = vpop.f32.mrf.mxu0
        %v5018 = vpop.f32.mrf.mxu0
        %v5019 = vadd.f32 %v4858, %v5018
        %v5020 = vpop.f32.mrf.mxu0
        %5021 = vmatprep.mubr.bf16.mxu0 0
        %5022 = vmatmul.mubr.bf16.gmra.mxu0 %v3889
        %v5023 = vpop.f32.mrf.mxu0
        %v5024 = vadd.f32 %v4863, %v5023
        %v5025 = vpop.f32.mrf.mxu0
        %v5026 = vpop.f32.mrf.mxu0
        %v5027 = vadd.f32 %v4866, %v5026
        %v5028 = vpop.f32.mrf.mxu0
        %5029 = vmatprep.mubr.bf16.mxu0 0
        %5030 = vmatmul.mubr.bf16.gmra.mxu0 %v3892
        %v5031 = vpop.f32.mrf.mxu0
        %v5032 = vadd.f32 %v4871, %v5031
        %v5033 = vpop.f32.mrf.mxu0
        %v5034 = vpop.f32.mrf.mxu0
        %v5035 = vadd.f32 %v4874, %v5034
        %v5036 = vpop.f32.mrf.mxu0
        %5037 = vmatprep.mubr.bf16.mxu0 0
        %5038 = vmatmul.mubr.bf16.gmra.mxu0 %v3895
        %v5039 = vpop.f32.mrf.mxu0
        %v5040 = vadd.f32 %v4879, %v5039
        %v5041 = vpop.f32.mrf.mxu0
        %v5042 = vpop.f32.mrf.mxu0
        %v5043 = vadd.f32 %v4882, %v5042
        %v5044 = vpop.f32.mrf.mxu0
        %5045 = vmatprep.mubr.bf16.mxu0 0
        %5046 = vmatmul.mubr.bf16.gmra.mxu0 %v3898
        %v5047 = vpop.f32.mrf.mxu0
        %v5048 = vadd.f32 %v4887, %v5047
        %v5049 = vpop.f32.mrf.mxu0
        %v5050 = vpop.f32.mrf.mxu0
        %v5051 = vadd.f32 %v4890, %v5050
        %v5052 = vpop.f32.mrf.mxu0
        %5053 = vmatprep.mubr.bf16.mxu0 0
        %5054 = vmatmul.mubr.bf16.gmra.mxu0 %v3901
        %v5055 = vpop.f32.mrf.mxu0
        %v5056 = vadd.f32 %v4895, %v5055
        %v5057 = vpop.f32.mrf.mxu0
        %v5058 = vpop.f32.mrf.mxu0
        %v5059 = vadd.f32 %v4898, %v5058
        %v5060 = vpop.f32.mrf.mxu0
        %5061 = vmatprep.mubr.bf16.mxu0 0
        %5062 = vmatmul.mubr.bf16.gmra.mxu0 %v3904
        %v5063 = vpop.f32.mrf.mxu0
        %v5064 = vadd.f32 %v4903, %v5063
        %v5065 = vpop.f32.mrf.mxu0
        %v5066 = vpop.f32.mrf.mxu0
        %v5067 = vadd.f32 %v4906, %v5066
        %v5068 = vpop.f32.mrf.mxu0
        %5069 = vmatprep.mubr.bf16.mxu0 0
        %5070 = vmatmul.mubr.bf16.gmra.mxu0 %v3907
        %v5071 = vpop.f32.mrf.mxu0
        %v5072 = vadd.f32 %v4911, %v5071
        %v5073 = vpop.f32.mrf.mxu0
        %v5074 = vpop.f32.mrf.mxu0
        %v5075 = vadd.f32 %v4914, %v5074
        %v5076 = vpop.f32.mrf.mxu0
        %5077 = vmatprep.mubr.bf16.mxu0 0
        %5078 = vmatmul.mubr.bf16.gmra.mxu0 %v3910
        %v5079 = vpop.f32.mrf.mxu0
        %v5080 = vadd.f32 %v4919, %v5079
        %v5081 = vpop.f32.mrf.mxu0
        %v5082 = vpop.f32.mrf.mxu0
        %v5083 = vadd.f32 %v4922, %v5082
        %v5084 = vpop.f32.mrf.mxu0
        %5085 = vmatprep.mubr.bf16.mxu0 0
        %5086 = vmatmul.mubr.bf16.gmra.mxu0 %v3913
        %v5087 = vpop.f32.mrf.mxu0
        %v5088 = vadd.f32 %v4927, %v5087
        %v5089 = vpop.f32.mrf.mxu0
        %v5090 = vpop.f32.mrf.mxu0
        %v5091 = vadd.f32 %v4930, %v5090
        %v5092 = vpop.f32.mrf.mxu0
        %5093 = vmatprep.mubr.bf16.mxu0 0
        %5094 = vmatmul.mubr.bf16.gmra.mxu0 %v3916
        %v5095 = vpop.f32.mrf.mxu0
        %v5096 = vadd.f32 %v4935, %v5095
        %v5097 = vpop.f32.mrf.mxu0
        %v5098 = vpop.f32.mrf.mxu0
        %v5099 = vadd.f32 %v4938, %v5098
        %v5100 = vpop.f32.mrf.mxu0
        %5101 = vmatprep.mubr.bf16.mxu0 0
        %5102 = vmatmul.mubr.bf16.gmra.mxu0 %v3919
        %v5103 = vpop.f32.mrf.mxu0
        %v5104 = vadd.f32 %v4943, %v5103
        %v5105 = vpop.f32.mrf.mxu0
        %v5106 = vpop.f32.mrf.mxu0
        %v5107 = vadd.f32 %v4946, %v5106
        %v5108 = vpop.f32.mrf.mxu0
        %5109 = vmatprep.mubr.bf16.mxu0 0
        %5110 = vmatmul.mubr.bf16.gmra.mxu0 %v3922
        %v5111 = vpop.f32.mrf.mxu0
        %v5112 = vadd.f32 %v4951, %v5111
        %v5113 = vpop.f32.mrf.mxu0
        %v5114 = vpop.f32.mrf.mxu0
        %v5115 = vadd.f32 %v4954, %v5114
        %v5116 = vpop.f32.mrf.mxu0
        %5117 = vmatprep.mubr.bf16.mxu0 0
        %5118 = vmatmul.mubr.bf16.gmra.mxu0 %v3925
        %v5119 = vpop.f32.mrf.mxu0
        %v5120 = vadd.f32 %v4959, %v5119
        %v5121 = vpop.f32.mrf.mxu0
        %v5122 = vpop.f32.mrf.mxu0
        %v5123 = vadd.f32 %v4962, %v5122
        %v5124 = vpop.f32.mrf.mxu0
        %5125 = vmatprep.mubr.bf16.mxu0 0
        %5126 = vmatmul.mubr.bf16.gmra.mxu0 %v3928
        %v5127 = vpop.f32.mrf.mxu0
        %v5128 = vadd.f32 %v4967, %v5127
        %v5129 = vpop.f32.mrf.mxu0
        %v5130 = vpop.f32.mrf.mxu0
        %v5131 = vadd.f32 %v4970, %v5130
        %v5132 = vpop.f32.mrf.mxu0
        %5133 = vdwg.mxu0
        %v5134 = vmax.f32 %v4654, 0.0
        %v5135 = vmax.f32 %v4656, 0.0
        %v5136 = vmax.f32 %v5008, 0.0
        %v5137 = vmax.f32 %v4658, 0.0
        %v5138 = vmax.f32 %v4660, 0.0
        %v5139 = vmax.f32 %v5011, 0.0
        %v5140 = vmax.f32 %v4664, 0.0
        %v5141 = vmax.f32 %v4666, 0.0
        %v5142 = vmax.f32 %v5016, 0.0
        %v5143 = vmax.f32 %v4668, 0.0
        %v5144 = vmax.f32 %v4670, 0.0
        %v5145 = vmax.f32 %v5019, 0.0
        %v5146 = vmax.f32 %v4674, 0.0
        %v5147 = vmax.f32 %v4676, 0.0
        %v5148 = vmax.f32 %v5024, 0.0
        %v5149 = vmax.f32 %v4678, 0.0
        %v5150 = vmax.f32 %v4680, 0.0
        %v5151 = vmax.f32 %v5027, 0.0
        %v5152 = vmax.f32 %v4684, 0.0
        %v5153 = vmax.f32 %v4686, 0.0
        %v5154 = vmax.f32 %v5032, 0.0
        %v5155 = vmax.f32 %v4688, 0.0
        %v5156 = vmax.f32 %v4690, 0.0
        %v5157 = vmax.f32 %v5035, 0.0
        %v5158 = vmax.f32 %v4694, 0.0
        %v5159 = vmax.f32 %v4696, 0.0
        %v5160 = vmax.f32 %v5040, 0.0
        %v5161 = vmax.f32 %v4698, 0.0
        %v5162 = vmax.f32 %v4700, 0.0
        %v5163 = vmax.f32 %v5043, 0.0
        %v5164 = vmax.f32 %v4704, 0.0
        %v5165 = vmax.f32 %v4706, 0.0
        %v5166 = vmax.f32 %v5048, 0.0
        %v5167 = vmax.f32 %v4708, 0.0
        %v5168 = vmax.f32 %v4710, 0.0
        %v5169 = vmax.f32 %v5051, 0.0
        %v5170 = vmax.f32 %v4714, 0.0
        %v5171 = vmax.f32 %v4716, 0.0
        %v5172 = vmax.f32 %v5056, 0.0
        %v5173 = vmax.f32 %v4718, 0.0
        %v5174 = vmax.f32 %v4720, 0.0
        %v5175 = vmax.f32 %v5059, 0.0
        %v5176 = vmax.f32 %v4724, 0.0
        %v5177 = vmax.f32 %v4726, 0.0
        %v5178 = vmax.f32 %v5064, 0.0
        %v5179 = vmax.f32 %v4728, 0.0
        %v5180 = vmax.f32 %v4730, 0.0
        %v5181 = vmax.f32 %v5067, 0.0
        %v5182 = vmax.f32 %v4734, 0.0
        %v5183 = vmax.f32 %v4736, 0.0
        %v5184 = vmax.f32 %v5072, 0.0
        %v5185 = vmax.f32 %v4738, 0.0
        %v5186 = vmax.f32 %v4740, 0.0
        %v5187 = vmax.f32 %v5075, 0.0
        %v5188 = vmax.f32 %v4744, 0.0
        %v5189 = vmax.f32 %v4746, 0.0
        %v5190 = vmax.f32 %v5080, 0.0
        %v5191 = vmax.f32 %v4748, 0.0
        %v5192 = vmax.f32 %v4750, 0.0
        %v5193 = vmax.f32 %v5083, 0.0
        %v5194 = vmax.f32 %v4754, 0.0
        %v5195 = vmax.f32 %v4756, 0.0
        %v5196 = vmax.f32 %v5088, 0.0
        %v5197 = vmax.f32 %v4758, 0.0
        %v5198 = vmax.f32 %v4760, 0.0
        %v5199 = vmax.f32 %v5091, 0.0
        %v5200 = vmax.f32 %v4764, 0.0
        %v5201 = vmax.f32 %v4766, 0.0
        %v5202 = vmax.f32 %v5096, 0.0
        %v5203 = vmax.f32 %v4768, 0.0
        %v5204 = vmax.f32 %v4770, 0.0
        %v5205 = vmax.f32 %v5099, 0.0
        %v5206 = vmax.f32 %v4774, 0.0
        %v5207 = vmax.f32 %v4776, 0.0
        %v5208 = vmax.f32 %v5104, 0.0
        %v5209 = vmax.f32 %v4778, 0.0
        %v5210 = vmax.f32 %v4780, 0.0
        %v5211 = vmax.f32 %v5107, 0.0
        %v5212 = vmax.f32 %v4784, 0.0
        %v5213 = vmax.f32 %v4786, 0.0
        %v5214 = vmax.f32 %v5112, 0.0
        %v5215 = vmax.f32 %v4788, 0.0
        %v5216 = vmax.f32 %v4790, 0.0
        %v5217 = vmax.f32 %v5115, 0.0
        %v5218 = vmax.f32 %v4794, 0.0
        %v5219 = vmax.f32 %v4796, 0.0
        %v5220 = vmax.f32 %v5120, 0.0
        %v5221 = vmax.f32 %v4798, 0.0
        %v5222 = vmax.f32 %v4800, 0.0
        %v5223 = vmax.f32 %v5123, 0.0
        %v5224 = vmax.f32 %v4804, 0.0
        %v5225 = vmax.f32 %v4806, 0.0
        %v5226 = vmax.f32 %v5128, 0.0
        %v5227 = vmax.f32 %v4808, 0.0
        %v5228 = vmax.f32 %v4810, 0.0
        %v5229 = vmax.f32 %v5131, 0.0
        %v5230 = vpack.c.bf16 %v5137, %v5134
        %v5231 = vpack.c.bf16 %v5138, %v5135
        %v5232 = vpack.c.bf16 %v5139, %v5136
        %v5233 = vpack.c.bf16 %v5143, %v5140
        %v5234 = vpack.c.bf16 %v5144, %v5141
        %v5235 = vpack.c.bf16 %v5145, %v5142
        %v5236 = vpack.c.bf16 %v5149, %v5146
        %v5237 = vpack.c.bf16 %v5150, %v5147
        %v5238 = vpack.c.bf16 %v5151, %v5148
        %v5239 = vpack.c.bf16 %v5155, %v5152
        %v5240 = vpack.c.bf16 %v5156, %v5153
        %v5241 = vpack.c.bf16 %v5157, %v5154
        %v5242 = vpack.c.bf16 %v5161, %v5158
        %v5243 = vpack.c.bf16 %v5162, %v5159
        %v5244 = vpack.c.bf16 %v5163, %v5160
        %v5245 = vpack.c.bf16 %v5167, %v5164
        %v5246 = vpack.c.bf16 %v5168, %v5165
        %v5247 = vpack.c.bf16 %v5169, %v5166
        %v5248 = vpack.c.bf16 %v5173, %v5170
        %v5249 = vpack.c.bf16 %v5174, %v5171
        %v5250 = vpack.c.bf16 %v5175, %v5172
        %v5251 = vpack.c.bf16 %v5179, %v5176
        %v5252 = vpack.c.bf16 %v5180, %v5177
        %v5253 = vpack.c.bf16 %v5181, %v5178
        %v5254 = vpack.c.bf16 %v5185, %v5182
        %v5255 = vpack.c.bf16 %v5186, %v5183
        %v5256 = vpack.c.bf16 %v5187, %v5184
        %v5257 = vpack.c.bf16 %v5191, %v5188
        %v5258 = vpack.c.bf16 %v5192, %v5189
        %v5259 = vpack.c.bf16 %v5193, %v5190
        %v5260 = vpack.c.bf16 %v5197, %v5194
        %v5261 = vpack.c.bf16 %v5198, %v5195
        %v5262 = vpack.c.bf16 %v5199, %v5196
        %v5263 = vpack.c.bf16 %v5203, %v5200
        %v5264 = vpack.c.bf16 %v5204, %v5201
        %v5265 = vpack.c.bf16 %v5205, %v5202
        %v5266 = vpack.c.bf16 %v5209, %v5206
        %v5267 = vpack.c.bf16 %v5210, %v5207
        %v5268 = vpack.c.bf16 %v5211, %v5208
        %v5269 = vpack.c.bf16 %v5215, %v5212
        %v5270 = vpack.c.bf16 %v5216, %v5213
        %v5271 = vpack.c.bf16 %v5217, %v5214
        %v5272 = vpack.c.bf16 %v5221, %v5218
        %v5273 = vpack.c.bf16 %v5222, %v5219
        %v5274 = vpack.c.bf16 %v5223, %v5220
        %v5275 = vpack.c.bf16 %v5227, %v5224
        %v5276 = vpack.c.bf16 %v5228, %v5225
        %v5277 = vpack.c.bf16 %v5229, %v5226
        %v5278 = vld [vmem:[%s9] sm:$0xff]
        %v5279 = vld [vmem:[%s9 + $0x8] sm:$0xf]
        %v5280 = vld [vmem:[%s9 + $0xc] sm:$0xff]
        %v5281 = vld [vmem:[%s9 + $0x14] sm:$0xf]
        %v5282 = vld [vmem:[%s9 + $0x18] sm:$0xff]
        %v5283 = vld [vmem:[%s9 + $0x20] sm:$0xf]
        %v5284 = vld [vmem:[%s9 + $0x24] sm:$0xff]
        %v5285 = vld [vmem:[%s9 + $0x2c] sm:$0xf]
        %v5286 = vld [vmem:[%s9 + $0x30] sm:$0xff]
        %v5287 = vld [vmem:[%s9 + $0x38] sm:$0xf]
        %v5288 = vld [vmem:[%s9 + $0x3c] sm:$0xff]
        %v5289 = vld [vmem:[%s9 + $0x44] sm:$0xf]
        %v5290 = vld [vmem:[%s9 + $0x48] sm:$0xff]
        %v5291 = vld [vmem:[%s9 + $0x50] sm:$0xf]
        %v5292 = vld [vmem:[%s9 + $0x54] sm:$0xff]
        %v5293 = vld [vmem:[%s9 + $0x5c] sm:$0xf]
        %v5294 = vld [vmem:[%s9 + $0x60] sm:$0xff]
        %v5295 = vld [vmem:[%s9 + $0x68] sm:$0xf]
        %v5296 = vld [vmem:[%s9 + $0x6c] sm:$0xff]
        %v5297 = vld [vmem:[%s9 + $0x74] sm:$0xf]
        %v5298 = vld [vmem:[%s9 + $0x78] sm:$0xff]
        %v5299 = vld [vmem:[%s9 + $0x80] sm:$0xf]
        %v5300 = vld [vmem:[%s9 + $0x84] sm:$0xff]
        %v5301 = vld [vmem:[%s9 + $0x8c] sm:$0xf]
        %v5302 = vld [vmem:[%s9 + $0x90] sm:$0xff]
        %v5303 = vld [vmem:[%s9 + $0x98] sm:$0xf]
        %v5304 = vld [vmem:[%s9 + $0x9c] sm:$0xff]
        %v5305 = vld [vmem:[%s9 + $0xa4] sm:$0xf]
        %v5306 = vld [vmem:[%s9 + $0xa8] sm:$0xff]
        %v5307 = vld [vmem:[%s9 + $0xb0] sm:$0xf]
        %v5308 = vld [vmem:[%s9 + $0xb4] sm:$0xff]
        %v5309 = vld [vmem:[%s9 + $0xbc] sm:$0xf]
        %v5310 = vld [vmem:[%s9 + $0xc0] sm:$0xff]
        %v5311 = vld [vmem:[%s9 + $0xc8] sm:$0xf]
        %v5312 = vld [vmem:[%s9 + $0xcc] sm:$0xff]
        %v5313 = vld [vmem:[%s9 + $0xd4] sm:$0xf]
        %v5314 = vld [vmem:[%s9 + $0xd8] sm:$0xff]
        %v5315 = vld [vmem:[%s9 + $0xe0] sm:$0xf]
        %v5316 = vld [vmem:[%s9 + $0xe4] sm:$0xff]
        %v5317 = vld [vmem:[%s9 + $0xec] sm:$0xf]
        %v5318 = vld [vmem:[%s9 + $0xf0] sm:$0xff]
        %v5319 = vld [vmem:[%s9 + $0xf8] sm:$0xf]
        %v5320 = vld [vmem:[%s9 + $0xfc] sm:$0xff]
        %v5321 = vld [vmem:[%s9 + $0x104] sm:$0xf]
        %v5322 = vld [vmem:[%s9 + $0x108] sm:$0xff]
        %v5323 = vld [vmem:[%s9 + $0x110] sm:$0xf]
        %v5324 = vld [vmem:[%s9 + $0x114] sm:$0xff]
        %v5325 = vld [vmem:[%s9 + $0x11c] sm:$0xf]
        %v5326 = vld [vmem:[%s9 + $0x120] sm:$0xff]
        %v5327 = vld [vmem:[%s9 + $0x128] sm:$0xf]
        %v5328 = vld [vmem:[%s9 + $0x12c] sm:$0xff]
        %v5329 = vld [vmem:[%s9 + $0x134] sm:$0xf]
        %v5330 = vld [vmem:[%s9 + $0x138] sm:$0xff]
        %v5331 = vld [vmem:[%s9 + $0x140] sm:$0xf]
        %v5332 = vld [vmem:[%s9 + $0x144] sm:$0xff]
        %v5333 = vld [vmem:[%s9 + $0x14c] sm:$0xf]
        %v5334 = vld [vmem:[%s9 + $0x150] sm:$0xff]
        %v5335 = vld [vmem:[%s9 + $0x158] sm:$0xf]
        %v5336 = vld [vmem:[%s9 + $0x15c] sm:$0xff]
        %v5337 = vld [vmem:[%s9 + $0x164] sm:$0xf]
        %v5338 = vld [vmem:[%s9 + $0x168] sm:$0xff]
        %v5339 = vld [vmem:[%s9 + $0x170] sm:$0xf]
        %v5340 = vld [vmem:[%s9 + $0x174] sm:$0xff]
        %v5341 = vld [vmem:[%s9 + $0x17c] sm:$0xf]
        %v5342 = vld [vmem:[%s9 + $0x180] sm:$0xff]
        %v5343 = vld [vmem:[%s9 + $0x188] sm:$0xf]
        %v5344 = vld [vmem:[%s9 + $0x18c] sm:$0xff]
        %v5345 = vld [vmem:[%s9 + $0x194] sm:$0xf]
        %v5346 = vld [vmem:[%s9 + $0x198] sm:$0xff]
        %v5347 = vld [vmem:[%s9 + $0x1a0] sm:$0xf]
        %v5348 = vld [vmem:[%s9 + $0x1a4] sm:$0xff]
        %v5349 = vld [vmem:[%s9 + $0x1ac] sm:$0xf]
        %v5350 = vld [vmem:[%s9 + $0x1b0] sm:$0xff]
        %v5351 = vld [vmem:[%s9 + $0x1b8] sm:$0xf]
        %v5352 = vld [vmem:[%s9 + $0x1bc] sm:$0xff]
        %v5353 = vld [vmem:[%s9 + $0x1c4] sm:$0xf]
        %v5354 = vld [vmem:[%s9 + $0x1c8] sm:$0xff]
        %v5355 = vld [vmem:[%s9 + $0x1d0] sm:$0xf]
        %v5356 = vld [vmem:[%s9 + $0x1d4] sm:$0xff]
        %v5357 = vld [vmem:[%s9 + $0x1dc] sm:$0xf]
        %v5358 = vld [vmem:[%s9 + $0x1e0] sm:$0xff]
        %v5359 = vld [vmem:[%s9 + $0x1e8] sm:$0xf]
        %v5360 = vld [vmem:[%s9 + $0x1ec] sm:$0xff]
        %v5361 = vld [vmem:[%s9 + $0x1f4] sm:$0xf]
        %v5362 = vld [vmem:[%s9 + $0x1f8] sm:$0xff]
        %v5363 = vld [vmem:[%s9 + $0x200] sm:$0xf]
        %v5364 = vld [vmem:[%s9 + $0x204] sm:$0xff]
        %v5365 = vld [vmem:[%s9 + $0x20c] sm:$0xf]
        %v5366 = vld [vmem:[%s9 + $0x210] sm:$0xff]
        %v5367 = vld [vmem:[%s9 + $0x218] sm:$0xf]
        %v5368 = vld [vmem:[%s9 + $0x21c] sm:$0xff]
        %v5369 = vld [vmem:[%s9 + $0x224] sm:$0xf]
        %v5370 = vld [vmem:[%s9 + $0x228] sm:$0xff]
        %v5371 = vld [vmem:[%s9 + $0x230] sm:$0xf]
        %v5372 = vld [vmem:[%s9 + $0x234] sm:$0xff]
        %v5373 = vld [vmem:[%s9 + $0x23c] sm:$0xf]
        %v5374 = vld [vmem:[#allocation9] sm:$0x7]
        %v5376 = vlaneseq
        %v5377 = vshrl.u32 %v5376, 7
        %v5378 = vsub.s32 0, %v5377
        %v5379 = vrot.slane %v5374, %v5378
        %v5380 = vlaneseq
        %v5381 = vshrl.u32 %v5380, 7
        %v5382 = vsub.s32 1, %v5381
        %v5383 = vrot.slane %v5374, %v5382
        %v5384 = vlaneseq
        %v5385 = vshrl.u32 %v5384, 7
        %v5386 = vsub.s32 2, %v5385
        %v5387 = vrot.slane %v5374, %v5386
        %v5487 = vunpack.c.l.b16 %v5278
        %v5488 = vunpack.c.h.b16 %v5278
        %v5489 = vunpack.c.l.b16 %v5279
        %v5490 = vunpack.c.l.b16 %v5280
        %v5491 = vunpack.c.h.b16 %v5280
        %v5492 = vunpack.c.l.b16 %v5281
        %v5493 = vunpack.c.l.b16 %v5282
        %v5494 = vunpack.c.h.b16 %v5282
        %v5495 = vunpack.c.l.b16 %v5283
        %v5496 = vunpack.c.l.b16 %v5284
        %v5497 = vunpack.c.h.b16 %v5284
        %v5498 = vunpack.c.l.b16 %v5285
        %v5499 = vunpack.c.l.b16 %v5286
        %v5500 = vunpack.c.h.b16 %v5286
        %v5501 = vunpack.c.l.b16 %v5287
        %v5502 = vunpack.c.l.b16 %v5288
        %v5503 = vunpack.c.h.b16 %v5288
        %v5504 = vunpack.c.l.b16 %v5289
        %v5505 = vunpack.c.l.b16 %v5290
        %v5506 = vunpack.c.h.b16 %v5290
        %v5507 = vunpack.c.l.b16 %v5291
        %v5508 = vunpack.c.l.b16 %v5292
        %v5509 = vunpack.c.h.b16 %v5292
        %v5510 = vunpack.c.l.b16 %v5293
        %v5511 = vunpack.c.l.b16 %v5294
        %v5512 = vunpack.c.h.b16 %v5294
        %v5513 = vunpack.c.l.b16 %v5295
        %v5514 = vunpack.c.l.b16 %v5296
        %v5515 = vunpack.c.h.b16 %v5296
        %v5516 = vunpack.c.l.b16 %v5297
        %v5517 = vunpack.c.l.b16 %v5298
        %v5518 = vunpack.c.h.b16 %v5298
        %v5519 = vunpack.c.l.b16 %v5299
        %v5520 = vunpack.c.l.b16 %v5300
        %v5521 = vunpack.c.h.b16 %v5300
        %v5522 = vunpack.c.l.b16 %v5301
        %v5523 = vunpack.c.l.b16 %v5302
        %v5524 = vunpack.c.h.b16 %v5302
        %v5525 = vunpack.c.l.b16 %v5303
        %v5526 = vunpack.c.l.b16 %v5304
        %v5527 = vunpack.c.h.b16 %v5304
        %v5528 = vunpack.c.l.b16 %v5305
        %v5529 = vunpack.c.l.b16 %v5306
        %v5530 = vunpack.c.h.b16 %v5306
        %v5531 = vunpack.c.l.b16 %v5307
        %v5532 = vunpack.c.l.b16 %v5308
        %v5533 = vunpack.c.h.b16 %v5308
        %v5534 = vunpack.c.l.b16 %v5309
        %v5535 = vunpack.c.l.b16 %v5310
        %v5536 = vunpack.c.h.b16 %v5310
        %v5537 = vunpack.c.l.b16 %v5311
        %v5538 = vunpack.c.l.b16 %v5312
        %v5539 = vunpack.c.h.b16 %v5312
        %v5540 = vunpack.c.l.b16 %v5313
        %v5541 = vunpack.c.l.b16 %v5314
        %v5542 = vunpack.c.h.b16 %v5314
        %v5543 = vunpack.c.l.b16 %v5315
        %v5544 = vunpack.c.l.b16 %v5316
        %v5545 = vunpack.c.h.b16 %v5316
        %v5546 = vunpack.c.l.b16 %v5317
        %v5547 = vunpack.c.l.b16 %v5318
        %v5548 = vunpack.c.h.b16 %v5318
        %v5549 = vunpack.c.l.b16 %v5319
        %v5550 = vunpack.c.l.b16 %v5320
        %v5551 = vunpack.c.h.b16 %v5320
        %v5552 = vunpack.c.l.b16 %v5321
        %v5553 = vunpack.c.l.b16 %v5322
        %v5554 = vunpack.c.h.b16 %v5322
        %v5555 = vunpack.c.l.b16 %v5323
        %v5556 = vunpack.c.l.b16 %v5324
        %v5557 = vunpack.c.h.b16 %v5324
        %v5558 = vunpack.c.l.b16 %v5325
        %v5559 = vunpack.c.l.b16 %v5326
        %v5560 = vunpack.c.h.b16 %v5326
        %v5561 = vunpack.c.l.b16 %v5327
        %v5562 = vunpack.c.l.b16 %v5328
        %v5563 = vunpack.c.h.b16 %v5328
        %v5564 = vunpack.c.l.b16 %v5329
        %v5565 = vunpack.c.l.b16 %v5330
        %v5566 = vunpack.c.h.b16 %v5330
        %v5567 = vunpack.c.l.b16 %v5331
        %v5568 = vunpack.c.l.b16 %v5332
        %v5569 = vunpack.c.h.b16 %v5332
        %v5570 = vunpack.c.l.b16 %v5333
        %v5571 = vunpack.c.l.b16 %v5334
        %v5572 = vunpack.c.h.b16 %v5334
        %v5573 = vunpack.c.l.b16 %v5335
        %v5574 = vunpack.c.l.b16 %v5336
        %v5575 = vunpack.c.h.b16 %v5336
        %v5576 = vunpack.c.l.b16 %v5337
        %v5577 = vunpack.c.l.b16 %v5338
        %v5578 = vunpack.c.h.b16 %v5338
        %v5579 = vunpack.c.l.b16 %v5339
        %v5580 = vunpack.c.l.b16 %v5340
        %v5581 = vunpack.c.h.b16 %v5340
        %v5582 = vunpack.c.l.b16 %v5341
        %v5583 = vunpack.c.l.b16 %v5342
        %v5584 = vunpack.c.h.b16 %v5342
        %v5585 = vunpack.c.l.b16 %v5343
        %v5586 = vunpack.c.l.b16 %v5344
        %v5587 = vunpack.c.h.b16 %v5344
        %v5588 = vunpack.c.l.b16 %v5345
        %v5589 = vunpack.c.l.b16 %v5346
        %v5590 = vunpack.c.h.b16 %v5346
        %v5591 = vunpack.c.l.b16 %v5347
        %v5592 = vunpack.c.l.b16 %v5348
        %v5593 = vunpack.c.h.b16 %v5348
        %v5594 = vunpack.c.l.b16 %v5349
        %v5595 = vunpack.c.l.b16 %v5350
        %v5596 = vunpack.c.h.b16 %v5350
        %v5597 = vunpack.c.l.b16 %v5351
        %v5598 = vunpack.c.l.b16 %v5352
        %v5599 = vunpack.c.h.b16 %v5352
        %v5600 = vunpack.c.l.b16 %v5353
        %v5601 = vunpack.c.l.b16 %v5354
        %v5602 = vunpack.c.h.b16 %v5354
        %v5603 = vunpack.c.l.b16 %v5355
        %v5604 = vunpack.c.l.b16 %v5356
        %v5605 = vunpack.c.h.b16 %v5356
        %v5606 = vunpack.c.l.b16 %v5357
        %v5607 = vunpack.c.l.b16 %v5358
        %v5608 = vunpack.c.h.b16 %v5358
        %v5609 = vunpack.c.l.b16 %v5359
        %v5610 = vunpack.c.l.b16 %v5360
        %v5611 = vunpack.c.h.b16 %v5360
        %v5612 = vunpack.c.l.b16 %v5361
        %v5613 = vunpack.c.l.b16 %v5362
        %v5614 = vunpack.c.h.b16 %v5362
        %v5615 = vunpack.c.l.b16 %v5363
        %v5616 = vunpack.c.l.b16 %v5364
        %v5617 = vunpack.c.h.b16 %v5364
        %v5618 = vunpack.c.l.b16 %v5365
        %v5619 = vunpack.c.l.b16 %v5366
        %v5620 = vunpack.c.h.b16 %v5366
        %v5621 = vunpack.c.l.b16 %v5367
        %v5622 = vunpack.c.l.b16 %v5368
        %v5623 = vunpack.c.h.b16 %v5368
        %v5624 = vunpack.c.l.b16 %v5369
        %v5625 = vunpack.c.l.b16 %v5370
        %v5626 = vunpack.c.h.b16 %v5370
        %v5627 = vunpack.c.l.b16 %v5371
        %v5628 = vunpack.c.l.b16 %v5372
        %v5629 = vunpack.c.h.b16 %v5372
        %v5630 = vunpack.c.l.b16 %v5373
        %v5631 = vpack.c.b16 %v5490, %v5487
        %v5632 = vpack.c.b16 %v5491, %v5488
        %v5633 = vpack.c.b16 %v5492, %v5489
        %v5634 = vpack.c.b16 %v5496, %v5493
        %v5635 = vpack.c.b16 %v5497, %v5494
        %v5636 = vpack.c.b16 %v5498, %v5495
        %v5637 = vpack.c.b16 %v5502, %v5499
        %v5638 = vpack.c.b16 %v5503, %v5500
        %v5639 = vpack.c.b16 %v5504, %v5501
        %v5640 = vpack.c.b16 %v5508, %v5505
        %v5641 = vpack.c.b16 %v5509, %v5506
        %v5642 = vpack.c.b16 %v5510, %v5507
        %v5643 = vpack.c.b16 %v5514, %v5511
        %v5644 = vpack.c.b16 %v5515, %v5512
        %v5645 = vpack.c.b16 %v5516, %v5513
        %v5646 = vpack.c.b16 %v5520, %v5517
        %v5647 = vpack.c.b16 %v5521, %v5518
        %v5648 = vpack.c.b16 %v5522, %v5519
        %v5649 = vpack.c.b16 %v5526, %v5523
        %v5650 = vpack.c.b16 %v5527, %v5524
        %v5651 = vpack.c.b16 %v5528, %v5525
        %v5652 = vpack.c.b16 %v5532, %v5529
        %v5653 = vpack.c.b16 %v5533, %v5530
        %v5654 = vpack.c.b16 %v5534, %v5531
        %v5655 = vpack.c.b16 %v5538, %v5535
        %v5656 = vpack.c.b16 %v5539, %v5536
        %v5657 = vpack.c.b16 %v5540, %v5537
        %v5658 = vpack.c.b16 %v5544, %v5541
        %v5659 = vpack.c.b16 %v5545, %v5542
        %v5660 = vpack.c.b16 %v5546, %v5543
        %v5661 = vpack.c.b16 %v5550, %v5547
        %v5662 = vpack.c.b16 %v5551, %v5548
        %v5663 = vpack.c.b16 %v5552, %v5549
        %v5664 = vpack.c.b16 %v5556, %v5553
        %v5665 = vpack.c.b16 %v5557, %v5554
        %v5666 = vpack.c.b16 %v5558, %v5555
        %v5667 = vpack.c.b16 %v5562, %v5559
        %v5668 = vpack.c.b16 %v5563, %v5560
        %v5669 = vpack.c.b16 %v5564, %v5561
        %v5670 = vpack.c.b16 %v5568, %v5565
        %v5671 = vpack.c.b16 %v5569, %v5566
        %v5672 = vpack.c.b16 %v5570, %v5567
        %v5673 = vpack.c.b16 %v5574, %v5571
        %v5674 = vpack.c.b16 %v5575, %v5572
        %v5675 = vpack.c.b16 %v5576, %v5573
        %v5676 = vpack.c.b16 %v5580, %v5577
        %v5677 = vpack.c.b16 %v5581, %v5578
        %v5678 = vpack.c.b16 %v5582, %v5579
        %v5679 = vpack.c.b16 %v5586, %v5583
        %v5680 = vpack.c.b16 %v5587, %v5584
        %v5681 = vpack.c.b16 %v5588, %v5585
        %v5682 = vpack.c.b16 %v5592, %v5589
        %v5683 = vpack.c.b16 %v5593, %v5590
        %v5684 = vpack.c.b16 %v5594, %v5591
        %v5685 = vpack.c.b16 %v5598, %v5595
        %v5686 = vpack.c.b16 %v5599, %v5596
        %v5687 = vpack.c.b16 %v5600, %v5597
        %v5688 = vpack.c.b16 %v5604, %v5601
        %v5689 = vpack.c.b16 %v5605, %v5602
        %v5690 = vpack.c.b16 %v5606, %v5603
        %v5691 = vpack.c.b16 %v5610, %v5607
        %v5692 = vpack.c.b16 %v5611, %v5608
        %v5693 = vpack.c.b16 %v5612, %v5609
        %v5694 = vpack.c.b16 %v5616, %v5613
        %v5695 = vpack.c.b16 %v5617, %v5614
        %v5696 = vpack.c.b16 %v5618, %v5615
        %v5697 = vpack.c.b16 %v5622, %v5619
        %v5698 = vpack.c.b16 %v5623, %v5620
        %v5699 = vpack.c.b16 %v5624, %v5621
        %v5700 = vpack.c.b16 %v5628, %v5625
        %v5701 = vpack.c.b16 %v5629, %v5626
        %v5702 = vpack.c.b16 %v5630, %v5627
        %5775 = vmatprep.subr.bf16.mxu0 %v5653
        %5776 = vmatpush1.bf16.msra.mxu0 %v5652
        %5777 = vmatprep.subr.bf16.mxu0 %v5650
        %5778 = vmatpush1.bf16.msra.mxu0 %v5649
        %5779 = vmatprep.subr.bf16.mxu0 %v5647
        %5780 = vmatpush1.bf16.msra.mxu0 %v5646
        %5781 = vmatprep.subr.bf16.mxu0 %v5644
        %5782 = vmatpush1.bf16.msra.mxu0 %v5643
        %5783 = vmatprep.subr.bf16.mxu0 %v5641
        %5784 = vmatpush1.bf16.msra.mxu0 %v5640
        %5785 = vmatprep.subr.bf16.mxu0 %v5638
        %5786 = vmatpush1.bf16.msra.mxu0 %v5637
        %5787 = vmatprep.subr.bf16.mxu0 %v5635
        %5788 = vmatpush1.bf16.msra.mxu0 %v5634
        %5789 = vmatprep.subr.bf16.mxu0 %v5632
        %5790 = vmatpush1.bf16.msra.mxu0 %v5631
        %5791 = vmatprep.subr.bf16.mxu0 %v5677
        %5792 = vmatpush2.bf16.msra.mxu0 %v5676
        %5793 = vmatprep.subr.bf16.mxu0 %v5674
        %5794 = vmatpush2.bf16.msra.mxu0 %v5673
        %5795 = vmatprep.subr.bf16.mxu0 %v5671
        %5796 = vmatpush2.bf16.msra.mxu0 %v5670
        %5797 = vmatprep.subr.bf16.mxu0 %v5668
        %5798 = vmatpush2.bf16.msra.mxu0 %v5667
        %5799 = vmatprep.subr.bf16.mxu0 %v5665
        %5800 = vmatpush2.bf16.msra.mxu0 %v5664
        %5801 = vmatprep.subr.bf16.mxu0 %v5662
        %5802 = vmatpush2.bf16.msra.mxu0 %v5661
        %5803 = vmatprep.subr.bf16.mxu0 %v5659
        %5804 = vmatpush2.bf16.msra.mxu0 %v5658
        %5805 = vmatprep.subr.bf16.mxu0 %v5656
        %5806 = vmatpush2.bf16.msra.mxu0 %v5655
        %5807 = vmatprep.mubr.bf16.mxu0 %v5231
        %5808 = vmatmul.mubr.bf16.gmra.mxu0 %v5230
        %v5809 = vpop.f32.mrf.mxu0
        %v5810 = vadd.f32 %v5379, %v5809
        %v5811 = vpop.f32.mrf.mxu0
        %v5812 = vadd.f32 %v5383, %v5811
        %v5813 = vpop.f32.mrf.mxu0
        %v5814 = vadd.f32 %v5379, %v5813
        %v5815 = vpop.f32.mrf.mxu0
        %v5816 = vadd.f32 %v5383, %v5815
        %5817 = vmatprep.mubr.bf16.mxu0 %v5234
        %5818 = vmatmul.mubr.bf16.gmra.mxu0 %v5233
        %v5819 = vpop.f32.mrf.mxu0
        %v5820 = vadd.f32 %v5379, %v5819
        %v5821 = vpop.f32.mrf.mxu0
        %v5822 = vadd.f32 %v5383, %v5821
        %v5823 = vpop.f32.mrf.mxu0
        %v5824 = vadd.f32 %v5379, %v5823
        %v5825 = vpop.f32.mrf.mxu0
        %v5826 = vadd.f32 %v5383, %v5825
        %5827 = vmatprep.mubr.bf16.mxu0 %v5237
        %5828 = vmatmul.mubr.bf16.gmra.mxu0 %v5236
        %v5829 = vpop.f32.mrf.mxu0
        %v5830 = vadd.f32 %v5379, %v5829
        %v5831 = vpop.f32.mrf.mxu0
        %v5832 = vadd.f32 %v5383, %v5831
        %v5833 = vpop.f32.mrf.mxu0
        %v5834 = vadd.f32 %v5379, %v5833
        %v5835 = vpop.f32.mrf.mxu0
        %v5836 = vadd.f32 %v5383, %v5835
        %5837 = vmatprep.mubr.bf16.mxu0 %v5240
        %5838 = vmatmul.mubr.bf16.gmra.mxu0 %v5239
        %v5839 = vpop.f32.mrf.mxu0
        %v5840 = vadd.f32 %v5379, %v5839
        %v5841 = vpop.f32.mrf.mxu0
        %v5842 = vadd.f32 %v5383, %v5841
        %v5843 = vpop.f32.mrf.mxu0
        %v5844 = vadd.f32 %v5379, %v5843
        %v5845 = vpop.f32.mrf.mxu0
        %v5846 = vadd.f32 %v5383, %v5845
        %5847 = vmatprep.mubr.bf16.mxu0 %v5243
        %5848 = vmatmul.mubr.bf16.gmra.mxu0 %v5242
        %v5849 = vpop.f32.mrf.mxu0
        %v5850 = vadd.f32 %v5379, %v5849
        %v5851 = vpop.f32.mrf.mxu0
        %v5852 = vadd.f32 %v5383, %v5851
        %v5853 = vpop.f32.mrf.mxu0
        %v5854 = vadd.f32 %v5379, %v5853
        %v5855 = vpop.f32.mrf.mxu0
        %v5856 = vadd.f32 %v5383, %v5855
        %5857 = vmatprep.mubr.bf16.mxu0 %v5246
        %5858 = vmatmul.mubr.bf16.gmra.mxu0 %v5245
        %v5859 = vpop.f32.mrf.mxu0
        %v5860 = vadd.f32 %v5379, %v5859
        %v5861 = vpop.f32.mrf.mxu0
        %v5862 = vadd.f32 %v5383, %v5861
        %v5863 = vpop.f32.mrf.mxu0
        %v5864 = vadd.f32 %v5379, %v5863
        %v5865 = vpop.f32.mrf.mxu0
        %v5866 = vadd.f32 %v5383, %v5865
        %5867 = vmatprep.mubr.bf16.mxu0 %v5249
        %5868 = vmatmul.mubr.bf16.gmra.mxu0 %v5248
        %v5869 = vpop.f32.mrf.mxu0
        %v5870 = vadd.f32 %v5379, %v5869
        %v5871 = vpop.f32.mrf.mxu0
        %v5872 = vadd.f32 %v5383, %v5871
        %v5873 = vpop.f32.mrf.mxu0
        %v5874 = vadd.f32 %v5379, %v5873
        %v5875 = vpop.f32.mrf.mxu0
        %v5876 = vadd.f32 %v5383, %v5875
        %5877 = vmatprep.mubr.bf16.mxu0 %v5252
        %5878 = vmatmul.mubr.bf16.gmra.mxu0 %v5251
        %v5879 = vpop.f32.mrf.mxu0
        %v5880 = vadd.f32 %v5379, %v5879
        %v5881 = vpop.f32.mrf.mxu0
        %v5882 = vadd.f32 %v5383, %v5881
        %v5883 = vpop.f32.mrf.mxu0
        %v5884 = vadd.f32 %v5379, %v5883
        %v5885 = vpop.f32.mrf.mxu0
        %v5886 = vadd.f32 %v5383, %v5885
        %5887 = vmatprep.mubr.bf16.mxu0 %v5255
        %5888 = vmatmul.mubr.bf16.gmra.mxu0 %v5254
        %v5889 = vpop.f32.mrf.mxu0
        %v5890 = vadd.f32 %v5379, %v5889
        %v5891 = vpop.f32.mrf.mxu0
        %v5892 = vadd.f32 %v5383, %v5891
        %v5893 = vpop.f32.mrf.mxu0
        %v5894 = vadd.f32 %v5379, %v5893
        %v5895 = vpop.f32.mrf.mxu0
        %v5896 = vadd.f32 %v5383, %v5895
        %5897 = vmatprep.mubr.bf16.mxu0 %v5258
        %5898 = vmatmul.mubr.bf16.gmra.mxu0 %v5257
        %v5899 = vpop.f32.mrf.mxu0
        %v5900 = vadd.f32 %v5379, %v5899
        %v5901 = vpop.f32.mrf.mxu0
        %v5902 = vadd.f32 %v5383, %v5901
        %v5903 = vpop.f32.mrf.mxu0
        %v5904 = vadd.f32 %v5379, %v5903
        %v5905 = vpop.f32.mrf.mxu0
        %v5906 = vadd.f32 %v5383, %v5905
        %5907 = vmatprep.mubr.bf16.mxu0 %v5261
        %5908 = vmatmul.mubr.bf16.gmra.mxu0 %v5260
        %v5909 = vpop.f32.mrf.mxu0
        %v5910 = vadd.f32 %v5379, %v5909
        %v5911 = vpop.f32.mrf.mxu0
        %v5912 = vadd.f32 %v5383, %v5911
        %v5913 = vpop.f32.mrf.mxu0
        %v5914 = vadd.f32 %v5379, %v5913
        %v5915 = vpop.f32.mrf.mxu0
        %v5916 = vadd.f32 %v5383, %v5915
        %5917 = vmatprep.mubr.bf16.mxu0 %v5264
        %5918 = vmatmul.mubr.bf16.gmra.mxu0 %v5263
        %v5919 = vpop.f32.mrf.mxu0
        %v5920 = vadd.f32 %v5379, %v5919
        %v5921 = vpop.f32.mrf.mxu0
        %v5922 = vadd.f32 %v5383, %v5921
        %v5923 = vpop.f32.mrf.mxu0
        %v5924 = vadd.f32 %v5379, %v5923
        %v5925 = vpop.f32.mrf.mxu0
        %v5926 = vadd.f32 %v5383, %v5925
        %5927 = vmatprep.mubr.bf16.mxu0 %v5267
        %5928 = vmatmul.mubr.bf16.gmra.mxu0 %v5266
        %v5929 = vpop.f32.mrf.mxu0
        %v5930 = vadd.f32 %v5379, %v5929
        %v5931 = vpop.f32.mrf.mxu0
        %v5932 = vadd.f32 %v5383, %v5931
        %v5933 = vpop.f32.mrf.mxu0
        %v5934 = vadd.f32 %v5379, %v5933
        %v5935 = vpop.f32.mrf.mxu0
        %v5936 = vadd.f32 %v5383, %v5935
        %5937 = vmatprep.mubr.bf16.mxu0 %v5270
        %5938 = vmatmul.mubr.bf16.gmra.mxu0 %v5269
        %v5939 = vpop.f32.mrf.mxu0
        %v5940 = vadd.f32 %v5379, %v5939
        %v5941 = vpop.f32.mrf.mxu0
        %v5942 = vadd.f32 %v5383, %v5941
        %v5943 = vpop.f32.mrf.mxu0
        %v5944 = vadd.f32 %v5379, %v5943
        %v5945 = vpop.f32.mrf.mxu0
        %v5946 = vadd.f32 %v5383, %v5945
        %5947 = vmatprep.mubr.bf16.mxu0 %v5273
        %5948 = vmatmul.mubr.bf16.gmra.mxu0 %v5272
        %v5949 = vpop.f32.mrf.mxu0
        %v5950 = vadd.f32 %v5379, %v5949
        %v5951 = vpop.f32.mrf.mxu0
        %v5952 = vadd.f32 %v5383, %v5951
        %v5953 = vpop.f32.mrf.mxu0
        %v5954 = vadd.f32 %v5379, %v5953
        %v5955 = vpop.f32.mrf.mxu0
        %v5956 = vadd.f32 %v5383, %v5955
        %5957 = vmatprep.mubr.bf16.mxu0 %v5276
        %5958 = vmatmul.mubr.bf16.gmra.mxu0 %v5275
        %v5959 = vpop.f32.mrf.mxu0
        %v5960 = vadd.f32 %v5379, %v5959
        %v5961 = vpop.f32.mrf.mxu0
        %v5962 = vadd.f32 %v5383, %v5961
        %v5963 = vpop.f32.mrf.mxu0
        %v5964 = vadd.f32 %v5379, %v5963
        %v5965 = vpop.f32.mrf.mxu0
        %v5966 = vadd.f32 %v5383, %v5965
        %5967 = vdwg.mxu0
        %5968 = vmatprep.subr.bf16.mxu0 %v5701
        %5969 = vmatpush1.bf16.msra.mxu0 %v5700
        %5970 = vmatprep.subr.bf16.mxu0 %v5698
        %5971 = vmatpush1.bf16.msra.mxu0 %v5697
        %5972 = vmatprep.subr.bf16.mxu0 %v5695
        %5973 = vmatpush1.bf16.msra.mxu0 %v5694
        %5974 = vmatprep.subr.bf16.mxu0 %v5692
        %5975 = vmatpush1.bf16.msra.mxu0 %v5691
        %5976 = vmatprep.subr.bf16.mxu0 %v5689
        %5977 = vmatpush1.bf16.msra.mxu0 %v5688
        %5978 = vmatprep.subr.bf16.mxu0 %v5686
        %5979 = vmatpush1.bf16.msra.mxu0 %v5685
        %5980 = vmatprep.subr.bf16.mxu0 %v5683
        %5981 = vmatpush1.bf16.msra.mxu0 %v5682
        %5982 = vmatprep.subr.bf16.mxu0 %v5680
        %5983 = vmatpush1.bf16.msra.mxu0 %v5679
        %5984 = vmatprep.subr.bf16.mxu0 0
        %5985 = vmatpush2.bf16.msra.mxu0 0
        %5986 = vmatprep.subr.bf16.mxu0 0
        %5987 = vmatpush2.bf16.msra.mxu0 0
        %5988 = vmatprep.subr.bf16.mxu0 0
        %5989 = vmatpush2.bf16.msra.mxu0 0
        %5990 = vmatprep.subr.bf16.mxu0 0
        %5991 = vmatpush2.bf16.msra.mxu0 0
        %5992 = vmatprep.subr.bf16.mxu0 0
        %5993 = vmatpush2.bf16.msra.mxu0 0
        %5994 = vmatprep.subr.bf16.mxu0 0
        %5995 = vmatpush2.bf16.msra.mxu0 0
        %5996 = vmatprep.subr.bf16.mxu0 0
        %5997 = vmatpush2.bf16.msra.mxu0 0
        %5998 = vmatprep.subr.bf16.mxu0 0
        %5999 = vmatpush2.bf16.msra.mxu0 0
        %6000 = vmatprep.mubr.bf16.mxu0 0
        %6001 = vmatmul.mubr.bf16.gmra.mxu0 %v5232
        %v6002 = vpop.f32.mrf.mxu0
        %v6003 = vadd.f32 %v5810, %v6002
        %v6004 = vpop.f32.mrf.mxu0
        %v6005 = vadd.f32 %v5812, %v6004
        %v6006 = vpop.f32.mrf.mxu0
        %v6007 = vadd.f32 %v5814, %v6006
        %v6008 = vpop.f32.mrf.mxu0
        %v6009 = vadd.f32 %v5816, %v6008
        %6010 = vmatprep.mubr.bf16.mxu0 0
        %6011 = vmatmul.mubr.bf16.gmra.mxu0 %v5235
        %v6012 = vpop.f32.mrf.mxu0
        %v6013 = vadd.f32 %v5820, %v6012
        %v6014 = vpop.f32.mrf.mxu0
        %v6015 = vadd.f32 %v5822, %v6014
        %v6016 = vpop.f32.mrf.mxu0
        %v6017 = vadd.f32 %v5824, %v6016
        %v6018 = vpop.f32.mrf.mxu0
        %v6019 = vadd.f32 %v5826, %v6018
        %6020 = vmatprep.mubr.bf16.mxu0 0
        %6021 = vmatmul.mubr.bf16.gmra.mxu0 %v5238
        %v6022 = vpop.f32.mrf.mxu0
        %v6023 = vadd.f32 %v5830, %v6022
        %v6024 = vpop.f32.mrf.mxu0
        %v6025 = vadd.f32 %v5832, %v6024
        %v6026 = vpop.f32.mrf.mxu0
        %v6027 = vadd.f32 %v5834, %v6026
        %v6028 = vpop.f32.mrf.mxu0
        %v6029 = vadd.f32 %v5836, %v6028
        %6030 = vmatprep.mubr.bf16.mxu0 0
        %6031 = vmatmul.mubr.bf16.gmra.mxu0 %v5241
        %v6032 = vpop.f32.mrf.mxu0
        %v6033 = vadd.f32 %v5840, %v6032
        %v6034 = vpop.f32.mrf.mxu0
        %v6035 = vadd.f32 %v5842, %v6034
        %v6036 = vpop.f32.mrf.mxu0
        %v6037 = vadd.f32 %v5844, %v6036
        %v6038 = vpop.f32.mrf.mxu0
        %v6039 = vadd.f32 %v5846, %v6038
        %6040 = vmatprep.mubr.bf16.mxu0 0
        %6041 = vmatmul.mubr.bf16.gmra.mxu0 %v5244
        %v6042 = vpop.f32.mrf.mxu0
        %v6043 = vadd.f32 %v5850, %v6042
        %v6044 = vpop.f32.mrf.mxu0
        %v6045 = vadd.f32 %v5852, %v6044
        %v6046 = vpop.f32.mrf.mxu0
        %v6047 = vadd.f32 %v5854, %v6046
        %v6048 = vpop.f32.mrf.mxu0
        %v6049 = vadd.f32 %v5856, %v6048
        %6050 = vmatprep.mubr.bf16.mxu0 0
        %6051 = vmatmul.mubr.bf16.gmra.mxu0 %v5247
        %v6052 = vpop.f32.mrf.mxu0
        %v6053 = vadd.f32 %v5860, %v6052
        %v6054 = vpop.f32.mrf.mxu0
        %v6055 = vadd.f32 %v5862, %v6054
        %v6056 = vpop.f32.mrf.mxu0
        %v6057 = vadd.f32 %v5864, %v6056
        %v6058 = vpop.f32.mrf.mxu0
        %v6059 = vadd.f32 %v5866, %v6058
        %6060 = vmatprep.mubr.bf16.mxu0 0
        %6061 = vmatmul.mubr.bf16.gmra.mxu0 %v5250
        %v6062 = vpop.f32.mrf.mxu0
        %v6063 = vadd.f32 %v5870, %v6062
        %v6064 = vpop.f32.mrf.mxu0
        %v6065 = vadd.f32 %v5872, %v6064
        %v6066 = vpop.f32.mrf.mxu0
        %v6067 = vadd.f32 %v5874, %v6066
        %v6068 = vpop.f32.mrf.mxu0
        %v6069 = vadd.f32 %v5876, %v6068
        %6070 = vmatprep.mubr.bf16.mxu0 0
        %6071 = vmatmul.mubr.bf16.gmra.mxu0 %v5253
        %v6072 = vpop.f32.mrf.mxu0
        %v6073 = vadd.f32 %v5880, %v6072
        %v6074 = vpop.f32.mrf.mxu0
        %v6075 = vadd.f32 %v5882, %v6074
        %v6076 = vpop.f32.mrf.mxu0
        %v6077 = vadd.f32 %v5884, %v6076
        %v6078 = vpop.f32.mrf.mxu0
        %v6079 = vadd.f32 %v5886, %v6078
        %6080 = vmatprep.mubr.bf16.mxu0 0
        %6081 = vmatmul.mubr.bf16.gmra.mxu0 %v5256
        %v6082 = vpop.f32.mrf.mxu0
        %v6083 = vadd.f32 %v5890, %v6082
        %v6084 = vpop.f32.mrf.mxu0
        %v6085 = vadd.f32 %v5892, %v6084
        %v6086 = vpop.f32.mrf.mxu0
        %v6087 = vadd.f32 %v5894, %v6086
        %v6088 = vpop.f32.mrf.mxu0
        %v6089 = vadd.f32 %v5896, %v6088
        %6090 = vmatprep.mubr.bf16.mxu0 0
        %6091 = vmatmul.mubr.bf16.gmra.mxu0 %v5259
        %v6092 = vpop.f32.mrf.mxu0
        %v6093 = vadd.f32 %v5900, %v6092
        %v6094 = vpop.f32.mrf.mxu0
        %v6095 = vadd.f32 %v5902, %v6094
        %v6096 = vpop.f32.mrf.mxu0
        %v6097 = vadd.f32 %v5904, %v6096
        %v6098 = vpop.f32.mrf.mxu0
        %v6099 = vadd.f32 %v5906, %v6098
        %6100 = vmatprep.mubr.bf16.mxu0 0
        %6101 = vmatmul.mubr.bf16.gmra.mxu0 %v5262
        %v6102 = vpop.f32.mrf.mxu0
        %v6103 = vadd.f32 %v5910, %v6102
        %v6104 = vpop.f32.mrf.mxu0
        %v6105 = vadd.f32 %v5912, %v6104
        %v6106 = vpop.f32.mrf.mxu0
        %v6107 = vadd.f32 %v5914, %v6106
        %v6108 = vpop.f32.mrf.mxu0
        %v6109 = vadd.f32 %v5916, %v6108
        %6110 = vmatprep.mubr.bf16.mxu0 0
        %6111 = vmatmul.mubr.bf16.gmra.mxu0 %v5265
        %v6112 = vpop.f32.mrf.mxu0
        %v6113 = vadd.f32 %v5920, %v6112
        %v6114 = vpop.f32.mrf.mxu0
        %v6115 = vadd.f32 %v5922, %v6114
        %v6116 = vpop.f32.mrf.mxu0
        %v6117 = vadd.f32 %v5924, %v6116
        %v6118 = vpop.f32.mrf.mxu0
        %v6119 = vadd.f32 %v5926, %v6118
        %6120 = vmatprep.mubr.bf16.mxu0 0
        %6121 = vmatmul.mubr.bf16.gmra.mxu0 %v5268
        %v6122 = vpop.f32.mrf.mxu0
        %v6123 = vadd.f32 %v5930, %v6122
        %v6124 = vpop.f32.mrf.mxu0
        %v6125 = vadd.f32 %v5932, %v6124
        %v6126 = vpop.f32.mrf.mxu0
        %v6127 = vadd.f32 %v5934, %v6126
        %v6128 = vpop.f32.mrf.mxu0
        %v6129 = vadd.f32 %v5936, %v6128
        %6130 = vmatprep.mubr.bf16.mxu0 0
        %6131 = vmatmul.mubr.bf16.gmra.mxu0 %v5271
        %v6132 = vpop.f32.mrf.mxu0
        %v6133 = vadd.f32 %v5940, %v6132
        %v6134 = vpop.f32.mrf.mxu0
        %v6135 = vadd.f32 %v5942, %v6134
        %v6136 = vpop.f32.mrf.mxu0
        %v6137 = vadd.f32 %v5944, %v6136
        %v6138 = vpop.f32.mrf.mxu0
        %v6139 = vadd.f32 %v5946, %v6138
        %6140 = vmatprep.mubr.bf16.mxu0 0
        %6141 = vmatmul.mubr.bf16.gmra.mxu0 %v5274
        %v6142 = vpop.f32.mrf.mxu0
        %v6143 = vadd.f32 %v5950, %v6142
        %v6144 = vpop.f32.mrf.mxu0
        %v6145 = vadd.f32 %v5952, %v6144
        %v6146 = vpop.f32.mrf.mxu0
        %v6147 = vadd.f32 %v5954, %v6146
        %v6148 = vpop.f32.mrf.mxu0
        %v6149 = vadd.f32 %v5956, %v6148
        %6150 = vmatprep.mubr.bf16.mxu0 0
        %6151 = vmatmul.mubr.bf16.gmra.mxu0 %v5277
        %v6152 = vpop.f32.mrf.mxu0
        %v6153 = vadd.f32 %v5960, %v6152
        %v6154 = vpop.f32.mrf.mxu0
        %v6155 = vadd.f32 %v5962, %v6154
        %v6156 = vpop.f32.mrf.mxu0
        %v6157 = vadd.f32 %v5964, %v6156
        %v6158 = vpop.f32.mrf.mxu0
        %v6159 = vadd.f32 %v5966, %v6158
        %6160 = vdwg.mxu0
        %6161 = vmatprep.subr.bf16.mxu0 0
        %6162 = vmatpush1.bf16.msra.mxu0 %v5654
        %6163 = vmatprep.subr.bf16.mxu0 0
        %6164 = vmatpush1.bf16.msra.mxu0 %v5651
        %6165 = vmatprep.subr.bf16.mxu0 0
        %6166 = vmatpush1.bf16.msra.mxu0 %v5648
        %6167 = vmatprep.subr.bf16.mxu0 0
        %6168 = vmatpush1.bf16.msra.mxu0 %v5645
        %6169 = vmatprep.subr.bf16.mxu0 0
        %6170 = vmatpush1.bf16.msra.mxu0 %v5642
        %6171 = vmatprep.subr.bf16.mxu0 0
        %6172 = vmatpush1.bf16.msra.mxu0 %v5639
        %6173 = vmatprep.subr.bf16.mxu0 0
        %6174 = vmatpush1.bf16.msra.mxu0 %v5636
        %6175 = vmatprep.subr.bf16.mxu0 0
        %6176 = vmatpush1.bf16.msra.mxu0 %v5633
        %6177 = vmatprep.subr.bf16.mxu0 0
        %6178 = vmatpush2.bf16.msra.mxu0 %v5678
        %6179 = vmatprep.subr.bf16.mxu0 0
        %6180 = vmatpush2.bf16.msra.mxu0 %v5675
        %6181 = vmatprep.subr.bf16.mxu0 0
        %6182 = vmatpush2.bf16.msra.mxu0 %v5672
        %6183 = vmatprep.subr.bf16.mxu0 0
        %6184 = vmatpush2.bf16.msra.mxu0 %v5669
        %6185 = vmatprep.subr.bf16.mxu0 0
        %6186 = vmatpush2.bf16.msra.mxu0 %v5666
        %6187 = vmatprep.subr.bf16.mxu0 0
        %6188 = vmatpush2.bf16.msra.mxu0 %v5663
        %6189 = vmatprep.subr.bf16.mxu0 0
        %6190 = vmatpush2.bf16.msra.mxu0 %v5660
        %6191 = vmatprep.subr.bf16.mxu0 0
        %6192 = vmatpush2.bf16.msra.mxu0 %v5657
        %6193 = vmatprep.mubr.bf16.mxu0 %v5231
        %6194 = vmatmul.mubr.bf16.gmra.mxu0 %v5230
        %v6195 = vpop.f32.mrf.mxu0
        %v6196 = vadd.f32 %v5387, %v6195
        %v6197 = vpop.f32.mrf.mxu0
        %v6198 = vpop.f32.mrf.mxu0
        %v6199 = vadd.f32 %v5387, %v6198
        %v6200 = vpop.f32.mrf.mxu0
        %6201 = vmatprep.mubr.bf16.mxu0 %v5234
        %6202 = vmatmul.mubr.bf16.gmra.mxu0 %v5233
        %v6203 = vpop.f32.mrf.mxu0
        %v6204 = vadd.f32 %v5387, %v6203
        %v6205 = vpop.f32.mrf.mxu0
        %v6206 = vpop.f32.mrf.mxu0
        %v6207 = vadd.f32 %v5387, %v6206
        %v6208 = vpop.f32.mrf.mxu0
        %6209 = vmatprep.mubr.bf16.mxu0 %v5237
        %6210 = vmatmul.mubr.bf16.gmra.mxu0 %v5236
        %v6211 = vpop.f32.mrf.mxu0
        %v6212 = vadd.f32 %v5387, %v6211
        %v6213 = vpop.f32.mrf.mxu0
        %v6214 = vpop.f32.mrf.mxu0
        %v6215 = vadd.f32 %v5387, %v6214
        %v6216 = vpop.f32.mrf.mxu0
        %6217 = vmatprep.mubr.bf16.mxu0 %v5240
        %6218 = vmatmul.mubr.bf16.gmra.mxu0 %v5239
        %v6219 = vpop.f32.mrf.mxu0
        %v6220 = vadd.f32 %v5387, %v6219
        %v6221 = vpop.f32.mrf.mxu0
        %v6222 = vpop.f32.mrf.mxu0
        %v6223 = vadd.f32 %v5387, %v6222
        %v6224 = vpop.f32.mrf.mxu0
        %6225 = vmatprep.mubr.bf16.mxu0 %v5243
        %6226 = vmatmul.mubr.bf16.gmra.mxu0 %v5242
        %v6227 = vpop.f32.mrf.mxu0
        %v6228 = vadd.f32 %v5387, %v6227
        %v6229 = vpop.f32.mrf.mxu0
        %v6230 = vpop.f32.mrf.mxu0
        %v6231 = vadd.f32 %v5387, %v6230
        %v6232 = vpop.f32.mrf.mxu0
        %6233 = vmatprep.mubr.bf16.mxu0 %v5246
        %6234 = vmatmul.mubr.bf16.gmra.mxu0 %v5245
        %v6235 = vpop.f32.mrf.mxu0
        %v6236 = vadd.f32 %v5387, %v6235
        %v6237 = vpop.f32.mrf.mxu0
        %v6238 = vpop.f32.mrf.mxu0
        %v6239 = vadd.f32 %v5387, %v6238
        %v6240 = vpop.f32.mrf.mxu0
        %6241 = vmatprep.mubr.bf16.mxu0 %v5249
        %6242 = vmatmul.mubr.bf16.gmra.mxu0 %v5248
        %v6243 = vpop.f32.mrf.mxu0
        %v6244 = vadd.f32 %v5387, %v6243
        %v6245 = vpop.f32.mrf.mxu0
        %v6246 = vpop.f32.mrf.mxu0
        %v6247 = vadd.f32 %v5387, %v6246
        %v6248 = vpop.f32.mrf.mxu0
        %6249 = vmatprep.mubr.bf16.mxu0 %v5252
        %6250 = vmatmul.mubr.bf16.gmra.mxu0 %v5251
        %v6251 = vpop.f32.mrf.mxu0
        %v6252 = vadd.f32 %v5387, %v6251
        %v6253 = vpop.f32.mrf.mxu0
        %v6254 = vpop.f32.mrf.mxu0
        %v6255 = vadd.f32 %v5387, %v6254
        %v6256 = vpop.f32.mrf.mxu0
        %6257 = vmatprep.mubr.bf16.mxu0 %v5255
        %6258 = vmatmul.mubr.bf16.gmra.mxu0 %v5254
        %v6259 = vpop.f32.mrf.mxu0
        %v6260 = vadd.f32 %v5387, %v6259
        %v6261 = vpop.f32.mrf.mxu0
        %v6262 = vpop.f32.mrf.mxu0
        %v6263 = vadd.f32 %v5387, %v6262
        %v6264 = vpop.f32.mrf.mxu0
        %6265 = vmatprep.mubr.bf16.mxu0 %v5258
        %6266 = vmatmul.mubr.bf16.gmra.mxu0 %v5257
        %v6267 = vpop.f32.mrf.mxu0
        %v6268 = vadd.f32 %v5387, %v6267
        %v6269 = vpop.f32.mrf.mxu0
        %v6270 = vpop.f32.mrf.mxu0
        %v6271 = vadd.f32 %v5387, %v6270
        %v6272 = vpop.f32.mrf.mxu0
        %6273 = vmatprep.mubr.bf16.mxu0 %v5261
        %6274 = vmatmul.mubr.bf16.gmra.mxu0 %v5260
        %v6275 = vpop.f32.mrf.mxu0
        %v6276 = vadd.f32 %v5387, %v6275
        %v6277 = vpop.f32.mrf.mxu0
        %v6278 = vpop.f32.mrf.mxu0
        %v6279 = vadd.f32 %v5387, %v6278
        %v6280 = vpop.f32.mrf.mxu0
        %6281 = vmatprep.mubr.bf16.mxu0 %v5264
        %6282 = vmatmul.mubr.bf16.gmra.mxu0 %v5263
        %v6283 = vpop.f32.mrf.mxu0
        %v6284 = vadd.f32 %v5387, %v6283
        %v6285 = vpop.f32.mrf.mxu0
        %v6286 = vpop.f32.mrf.mxu0
        %v6287 = vadd.f32 %v5387, %v6286
        %v6288 = vpop.f32.mrf.mxu0
        %6289 = vmatprep.mubr.bf16.mxu0 %v5267
        %6290 = vmatmul.mubr.bf16.gmra.mxu0 %v5266
        %v6291 = vpop.f32.mrf.mxu0
        %v6292 = vadd.f32 %v5387, %v6291
        %v6293 = vpop.f32.mrf.mxu0
        %v6294 = vpop.f32.mrf.mxu0
        %v6295 = vadd.f32 %v5387, %v6294
        %v6296 = vpop.f32.mrf.mxu0
        %6297 = vmatprep.mubr.bf16.mxu0 %v5270
        %6298 = vmatmul.mubr.bf16.gmra.mxu0 %v5269
        %v6299 = vpop.f32.mrf.mxu0
        %v6300 = vadd.f32 %v5387, %v6299
        %v6301 = vpop.f32.mrf.mxu0
        %v6302 = vpop.f32.mrf.mxu0
        %v6303 = vadd.f32 %v5387, %v6302
        %v6304 = vpop.f32.mrf.mxu0
        %6305 = vmatprep.mubr.bf16.mxu0 %v5273
        %6306 = vmatmul.mubr.bf16.gmra.mxu0 %v5272
        %v6307 = vpop.f32.mrf.mxu0
        %v6308 = vadd.f32 %v5387, %v6307
        %v6309 = vpop.f32.mrf.mxu0
        %v6310 = vpop.f32.mrf.mxu0
        %v6311 = vadd.f32 %v5387, %v6310
        %v6312 = vpop.f32.mrf.mxu0
        %6313 = vmatprep.mubr.bf16.mxu0 %v5276
        %6314 = vmatmul.mubr.bf16.gmra.mxu0 %v5275
        %v6315 = vpop.f32.mrf.mxu0
        %v6316 = vadd.f32 %v5387, %v6315
        %v6317 = vpop.f32.mrf.mxu0
        %v6318 = vpop.f32.mrf.mxu0
        %v6319 = vadd.f32 %v5387, %v6318
        %v6320 = vpop.f32.mrf.mxu0
        %6321 = vdwg.mxu0
        %6322 = vmatprep.subr.bf16.mxu0 0
        %6323 = vmatpush1.bf16.msra.mxu0 %v5702
        %6324 = vmatprep.subr.bf16.mxu0 0
        %6325 = vmatpush1.bf16.msra.mxu0 %v5699
        %6326 = vmatprep.subr.bf16.mxu0 0
        %6327 = vmatpush1.bf16.msra.mxu0 %v5696
        %6328 = vmatprep.subr.bf16.mxu0 0
        %6329 = vmatpush1.bf16.msra.mxu0 %v5693
        %6330 = vmatprep.subr.bf16.mxu0 0
        %6331 = vmatpush1.bf16.msra.mxu0 %v5690
        %6332 = vmatprep.subr.bf16.mxu0 0
        %6333 = vmatpush1.bf16.msra.mxu0 %v5687
        %6334 = vmatprep.subr.bf16.mxu0 0
        %6335 = vmatpush1.bf16.msra.mxu0 %v5684
        %6336 = vmatprep.subr.bf16.mxu0 0
        %6337 = vmatpush1.bf16.msra.mxu0 %v5681
        %6338 = vmatprep.subr.bf16.mxu0 0
        %6339 = vmatpush2.bf16.msra.mxu0 0
        %6340 = vmatprep.subr.bf16.mxu0 0
        %6341 = vmatpush2.bf16.msra.mxu0 0
        %6342 = vmatprep.subr.bf16.mxu0 0
        %6343 = vmatpush2.bf16.msra.mxu0 0
        %6344 = vmatprep.subr.bf16.mxu0 0
        %6345 = vmatpush2.bf16.msra.mxu0 0
        %6346 = vmatprep.subr.bf16.mxu0 0
        %6347 = vmatpush2.bf16.msra.mxu0 0
        %6348 = vmatprep.subr.bf16.mxu0 0
        %6349 = vmatpush2.bf16.msra.mxu0 0
        %6350 = vmatprep.subr.bf16.mxu0 0
        %6351 = vmatpush2.bf16.msra.mxu0 0
        %6352 = vmatprep.subr.bf16.mxu0 0
        %6353 = vmatpush2.bf16.msra.mxu0 0
        %6354 = vmatprep.mubr.bf16.mxu0 0
        %6355 = vmatmul.mubr.bf16.gmra.mxu0 %v5232
        %v6356 = vpop.f32.mrf.mxu0
        %v6357 = vadd.f32 %v6196, %v6356
        %v6358 = vpop.f32.mrf.mxu0
        %v6359 = vpop.f32.mrf.mxu0
        %v6360 = vadd.f32 %v6199, %v6359
        %v6361 = vpop.f32.mrf.mxu0
        %6362 = vmatprep.mubr.bf16.mxu0 0
        %6363 = vmatmul.mubr.bf16.gmra.mxu0 %v5235
        %v6364 = vpop.f32.mrf.mxu0
        %v6365 = vadd.f32 %v6204, %v6364
        %v6366 = vpop.f32.mrf.mxu0
        %v6367 = vpop.f32.mrf.mxu0
        %v6368 = vadd.f32 %v6207, %v6367
        %v6369 = vpop.f32.mrf.mxu0
        %6370 = vmatprep.mubr.bf16.mxu0 0
        %6371 = vmatmul.mubr.bf16.gmra.mxu0 %v5238
        %v6372 = vpop.f32.mrf.mxu0
        %v6373 = vadd.f32 %v6212, %v6372
        %v6374 = vpop.f32.mrf.mxu0
        %v6375 = vpop.f32.mrf.mxu0
        %v6376 = vadd.f32 %v6215, %v6375
        %v6377 = vpop.f32.mrf.mxu0
        %6378 = vmatprep.mubr.bf16.mxu0 0
        %6379 = vmatmul.mubr.bf16.gmra.mxu0 %v5241
        %v6380 = vpop.f32.mrf.mxu0
        %v6381 = vadd.f32 %v6220, %v6380
        %v6382 = vpop.f32.mrf.mxu0
        %v6383 = vpop.f32.mrf.mxu0
        %v6384 = vadd.f32 %v6223, %v6383
        %v6385 = vpop.f32.mrf.mxu0
        %6386 = vmatprep.mubr.bf16.mxu0 0
        %6387 = vmatmul.mubr.bf16.gmra.mxu0 %v5244
        %v6388 = vpop.f32.mrf.mxu0
        %v6389 = vadd.f32 %v6228, %v6388
        %v6390 = vpop.f32.mrf.mxu0
        %v6391 = vpop.f32.mrf.mxu0
        %v6392 = vadd.f32 %v6231, %v6391
        %v6393 = vpop.f32.mrf.mxu0
        %6394 = vmatprep.mubr.bf16.mxu0 0
        %6395 = vmatmul.mubr.bf16.gmra.mxu0 %v5247
        %v6396 = vpop.f32.mrf.mxu0
        %v6397 = vadd.f32 %v6236, %v6396
        %v6398 = vpop.f32.mrf.mxu0
        %v6399 = vpop.f32.mrf.mxu0
        %v6400 = vadd.f32 %v6239, %v6399
        %v6401 = vpop.f32.mrf.mxu0
        %6402 = vmatprep.mubr.bf16.mxu0 0
        %6403 = vmatmul.mubr.bf16.gmra.mxu0 %v5250
        %v6404 = vpop.f32.mrf.mxu0
        %v6405 = vadd.f32 %v6244, %v6404
        %v6406 = vpop.f32.mrf.mxu0
        %v6407 = vpop.f32.mrf.mxu0
        %v6408 = vadd.f32 %v6247, %v6407
        %v6409 = vpop.f32.mrf.mxu0
        %6410 = vmatprep.mubr.bf16.mxu0 0
        %6411 = vmatmul.mubr.bf16.gmra.mxu0 %v5253
        %v6412 = vpop.f32.mrf.mxu0
        %v6413 = vadd.f32 %v6252, %v6412
        %v6414 = vpop.f32.mrf.mxu0
        %v6415 = vpop.f32.mrf.mxu0
        %v6416 = vadd.f32 %v6255, %v6415
        %v6417 = vpop.f32.mrf.mxu0
        %6418 = vmatprep.mubr.bf16.mxu0 0
        %6419 = vmatmul.mubr.bf16.gmra.mxu0 %v5256
        %v6420 = vpop.f32.mrf.mxu0
        %v6421 = vadd.f32 %v6260, %v6420
        %v6422 = vpop.f32.mrf.mxu0
        %v6423 = vpop.f32.mrf.mxu0
        %v6424 = vadd.f32 %v6263, %v6423
        %v6425 = vpop.f32.mrf.mxu0
        %6426 = vmatprep.mubr.bf16.mxu0 0
        %6427 = vmatmul.mubr.bf16.gmra.mxu0 %v5259
        %v6428 = vpop.f32.mrf.mxu0
        %v6429 = vadd.f32 %v6268, %v6428
        %v6430 = vpop.f32.mrf.mxu0
        %v6431 = vpop.f32.mrf.mxu0
        %v6432 = vadd.f32 %v6271, %v6431
        %v6433 = vpop.f32.mrf.mxu0
        %6434 = vmatprep.mubr.bf16.mxu0 0
        %6435 = vmatmul.mubr.bf16.gmra.mxu0 %v5262
        %v6436 = vpop.f32.mrf.mxu0
        %v6437 = vadd.f32 %v6276, %v6436
        %v6438 = vpop.f32.mrf.mxu0
        %v6439 = vpop.f32.mrf.mxu0
        %v6440 = vadd.f32 %v6279, %v6439
        %v6441 = vpop.f32.mrf.mxu0
        %6442 = vmatprep.mubr.bf16.mxu0 0
        %6443 = vmatmul.mubr.bf16.gmra.mxu0 %v5265
        %v6444 = vpop.f32.mrf.mxu0
        %v6445 = vadd.f32 %v6284, %v6444
        %v6446 = vpop.f32.mrf.mxu0
        %v6447 = vpop.f32.mrf.mxu0
        %v6448 = vadd.f32 %v6287, %v6447
        %v6449 = vpop.f32.mrf.mxu0
        %6450 = vmatprep.mubr.bf16.mxu0 0
        %6451 = vmatmul.mubr.bf16.gmra.mxu0 %v5268
        %v6452 = vpop.f32.mrf.mxu0
        %v6453 = vadd.f32 %v6292, %v6452
        %v6454 = vpop.f32.mrf.mxu0
        %v6455 = vpop.f32.mrf.mxu0
        %v6456 = vadd.f32 %v6295, %v6455
        %v6457 = vpop.f32.mrf.mxu0
        %6458 = vmatprep.mubr.bf16.mxu0 0
        %6459 = vmatmul.mubr.bf16.gmra.mxu0 %v5271
        %v6460 = vpop.f32.mrf.mxu0
        %v6461 = vadd.f32 %v6300, %v6460
        %v6462 = vpop.f32.mrf.mxu0
        %v6463 = vpop.f32.mrf.mxu0
        %v6464 = vadd.f32 %v6303, %v6463
        %v6465 = vpop.f32.mrf.mxu0
        %6466 = vmatprep.mubr.bf16.mxu0 0
        %6467 = vmatmul.mubr.bf16.gmra.mxu0 %v5274
        %v6468 = vpop.f32.mrf.mxu0
        %v6469 = vadd.f32 %v6308, %v6468
        %v6470 = vpop.f32.mrf.mxu0
        %v6471 = vpop.f32.mrf.mxu0
        %v6472 = vadd.f32 %v6311, %v6471
        %v6473 = vpop.f32.mrf.mxu0
        %6474 = vmatprep.mubr.bf16.mxu0 0
        %6475 = vmatmul.mubr.bf16.gmra.mxu0 %v5277
        %v6476 = vpop.f32.mrf.mxu0
        %v6477 = vadd.f32 %v6316, %v6476
        %v6478 = vpop.f32.mrf.mxu0
        %v6479 = vpop.f32.mrf.mxu0
        %v6480 = vadd.f32 %v6319, %v6479
        %v6481 = vpop.f32.mrf.mxu0
        %6482 = vdwg.mxu0
        %v6483 = vmax.f32 %v6003, 0.0
        %v6484 = vmax.f32 %v6005, 0.0
        %v6485 = vmax.f32 %v6357, 0.0
        %v6486 = vmax.f32 %v6007, 0.0
        %v6487 = vmax.f32 %v6009, 0.0
        %v6488 = vmax.f32 %v6360, 0.0
        %v6489 = vmax.f32 %v6013, 0.0
        %v6490 = vmax.f32 %v6015, 0.0
        %v6491 = vmax.f32 %v6365, 0.0
        %v6492 = vmax.f32 %v6017, 0.0
        %v6493 = vmax.f32 %v6019, 0.0
        %v6494 = vmax.f32 %v6368, 0.0
        %v6495 = vmax.f32 %v6023, 0.0
        %v6496 = vmax.f32 %v6025, 0.0
        %v6497 = vmax.f32 %v6373, 0.0
        %v6498 = vmax.f32 %v6027, 0.0
        %v6499 = vmax.f32 %v6029, 0.0
        %v6500 = vmax.f32 %v6376, 0.0
        %v6501 = vmax.f32 %v6033, 0.0
        %v6502 = vmax.f32 %v6035, 0.0
        %v6503 = vmax.f32 %v6381, 0.0
        %v6504 = vmax.f32 %v6037, 0.0
        %v6505 = vmax.f32 %v6039, 0.0
        %v6506 = vmax.f32 %v6384, 0.0
        %v6507 = vmax.f32 %v6043, 0.0
        %v6508 = vmax.f32 %v6045, 0.0
        %v6509 = vmax.f32 %v6389, 0.0
        %v6510 = vmax.f32 %v6047, 0.0
        %v6511 = vmax.f32 %v6049, 0.0
        %v6512 = vmax.f32 %v6392, 0.0
        %v6513 = vmax.f32 %v6053, 0.0
        %v6514 = vmax.f32 %v6055, 0.0
        %v6515 = vmax.f32 %v6397, 0.0
        %v6516 = vmax.f32 %v6057, 0.0
        %v6517 = vmax.f32 %v6059, 0.0
        %v6518 = vmax.f32 %v6400, 0.0
        %v6519 = vmax.f32 %v6063, 0.0
        %v6520 = vmax.f32 %v6065, 0.0
        %v6521 = vmax.f32 %v6405, 0.0
        %v6522 = vmax.f32 %v6067, 0.0
        %v6523 = vmax.f32 %v6069, 0.0
        %v6524 = vmax.f32 %v6408, 0.0
        %v6525 = vmax.f32 %v6073, 0.0
        %v6526 = vmax.f32 %v6075, 0.0
        %v6527 = vmax.f32 %v6413, 0.0
        %v6528 = vmax.f32 %v6077, 0.0
        %v6529 = vmax.f32 %v6079, 0.0
        %v6530 = vmax.f32 %v6416, 0.0
        %v6531 = vmax.f32 %v6083, 0.0
        %v6532 = vmax.f32 %v6085, 0.0
        %v6533 = vmax.f32 %v6421, 0.0
        %v6534 = vmax.f32 %v6087, 0.0
        %v6535 = vmax.f32 %v6089, 0.0
        %v6536 = vmax.f32 %v6424, 0.0
        %v6537 = vmax.f32 %v6093, 0.0
        %v6538 = vmax.f32 %v6095, 0.0
        %v6539 = vmax.f32 %v6429, 0.0
        %v6540 = vmax.f32 %v6097, 0.0
        %v6541 = vmax.f32 %v6099, 0.0
        %v6542 = vmax.f32 %v6432, 0.0
        %v6543 = vmax.f32 %v6103, 0.0
        %v6544 = vmax.f32 %v6105, 0.0
        %v6545 = vmax.f32 %v6437, 0.0
        %v6546 = vmax.f32 %v6107, 0.0
        %v6547 = vmax.f32 %v6109, 0.0
        %v6548 = vmax.f32 %v6440, 0.0
        %v6549 = vmax.f32 %v6113, 0.0
        %v6550 = vmax.f32 %v6115, 0.0
        %v6551 = vmax.f32 %v6445, 0.0
        %v6552 = vmax.f32 %v6117, 0.0
        %v6553 = vmax.f32 %v6119, 0.0
        %v6554 = vmax.f32 %v6448, 0.0
        %v6555 = vmax.f32 %v6123, 0.0
        %v6556 = vmax.f32 %v6125, 0.0
        %v6557 = vmax.f32 %v6453, 0.0
        %v6558 = vmax.f32 %v6127, 0.0
        %v6559 = vmax.f32 %v6129, 0.0
        %v6560 = vmax.f32 %v6456, 0.0
        %v6561 = vmax.f32 %v6133, 0.0
        %v6562 = vmax.f32 %v6135, 0.0
        %v6563 = vmax.f32 %v6461, 0.0
        %v6564 = vmax.f32 %v6137, 0.0
        %v6565 = vmax.f32 %v6139, 0.0
        %v6566 = vmax.f32 %v6464, 0.0
        %v6567 = vmax.f32 %v6143, 0.0
        %v6568 = vmax.f32 %v6145, 0.0
        %v6569 = vmax.f32 %v6469, 0.0
        %v6570 = vmax.f32 %v6147, 0.0
        %v6571 = vmax.f32 %v6149, 0.0
        %v6572 = vmax.f32 %v6472, 0.0
        %v6573 = vmax.f32 %v6153, 0.0
        %v6574 = vmax.f32 %v6155, 0.0
        %v6575 = vmax.f32 %v6477, 0.0
        %v6576 = vmax.f32 %v6157, 0.0
        %v6577 = vmax.f32 %v6159, 0.0
        %v6578 = vmax.f32 %v6480, 0.0
        %v6579 = vpack.c.bf16 %v6486, %v6483
        %v6580 = vpack.c.bf16 %v6487, %v6484
        %v6581 = vpack.c.bf16 %v6488, %v6485
        %v6582 = vpack.c.bf16 %v6492, %v6489
        %v6583 = vpack.c.bf16 %v6493, %v6490
        %v6584 = vpack.c.bf16 %v6494, %v6491
        %v6585 = vpack.c.bf16 %v6498, %v6495
        %v6586 = vpack.c.bf16 %v6499, %v6496
        %v6587 = vpack.c.bf16 %v6500, %v6497
        %v6588 = vpack.c.bf16 %v6504, %v6501
        %v6589 = vpack.c.bf16 %v6505, %v6502
        %v6590 = vpack.c.bf16 %v6506, %v6503
        %v6591 = vpack.c.bf16 %v6510, %v6507
        %v6592 = vpack.c.bf16 %v6511, %v6508
        %v6593 = vpack.c.bf16 %v6512, %v6509
        %v6594 = vpack.c.bf16 %v6516, %v6513
        %v6595 = vpack.c.bf16 %v6517, %v6514
        %v6596 = vpack.c.bf16 %v6518, %v6515
        %v6597 = vpack.c.bf16 %v6522, %v6519
        %v6598 = vpack.c.bf16 %v6523, %v6520
        %v6599 = vpack.c.bf16 %v6524, %v6521
        %v6600 = vpack.c.bf16 %v6528, %v6525
        %v6601 = vpack.c.bf16 %v6529, %v6526
        %v6602 = vpack.c.bf16 %v6530, %v6527
        %v6603 = vpack.c.bf16 %v6534, %v6531
        %v6604 = vpack.c.bf16 %v6535, %v6532
        %v6605 = vpack.c.bf16 %v6536, %v6533
        %v6606 = vpack.c.bf16 %v6540, %v6537
        %v6607 = vpack.c.bf16 %v6541, %v6538
        %v6608 = vpack.c.bf16 %v6542, %v6539
        %v6609 = vpack.c.bf16 %v6546, %v6543
        %v6610 = vpack.c.bf16 %v6547, %v6544
        %v6611 = vpack.c.bf16 %v6548, %v6545
        %v6612 = vpack.c.bf16 %v6552, %v6549
        %v6613 = vpack.c.bf16 %v6553, %v6550
        %v6614 = vpack.c.bf16 %v6554, %v6551
        %v6615 = vpack.c.bf16 %v6558, %v6555
        %v6616 = vpack.c.bf16 %v6559, %v6556
        %v6617 = vpack.c.bf16 %v6560, %v6557
        %v6618 = vpack.c.bf16 %v6564, %v6561
        %v6619 = vpack.c.bf16 %v6565, %v6562
        %v6620 = vpack.c.bf16 %v6566, %v6563
        %v6621 = vpack.c.bf16 %v6570, %v6567
        %v6622 = vpack.c.bf16 %v6571, %v6568
        %v6623 = vpack.c.bf16 %v6572, %v6569
        %v6624 = vpack.c.bf16 %v6576, %v6573
        %v6625 = vpack.c.bf16 %v6577, %v6574
        %v6626 = vpack.c.bf16 %v6578, %v6575
        %v6627 = vld [vmem:[%s11] sm:$0xf]
        %v6628 = vld [vmem:[%s11 + $0x4] sm:$0xf]
        %v6629 = vld [vmem:[%s11 + $0x8] sm:$0xf]
        %v6630 = vld [vmem:[%s11 + $0xc] sm:$0xf]
        %v6631 = vld [vmem:[%s11 + $0x10] sm:$0xf]
        %v6632 = vld [vmem:[%s11 + $0x14] sm:$0xf]
        %v6633 = vld [vmem:[%s11 + $0x18] sm:$0xf]
        %v6634 = vld [vmem:[%s11 + $0x1c] sm:$0xf]
        %v6635 = vld [vmem:[%s11 + $0x20] sm:$0xf]
        %v6636 = vld [vmem:[%s11 + $0x24] sm:$0xf]
        %v6637 = vld [vmem:[%s11 + $0x28] sm:$0xf]
        %v6638 = vld [vmem:[%s11 + $0x2c] sm:$0xf]
        %v6639 = vld [vmem:[%s11 + $0x30] sm:$0xf]
        %v6640 = vld [vmem:[%s11 + $0x34] sm:$0xf]
        %v6641 = vld [vmem:[%s11 + $0x38] sm:$0xf]
        %v6642 = vld [vmem:[%s11 + $0x3c] sm:$0xf]
        %v6643 = vld [vmem:[%s11 + $0x40] sm:$0xf]
        %v6644 = vld [vmem:[%s11 + $0x44] sm:$0xf]
        %v6645 = vld [vmem:[%s11 + $0x48] sm:$0xf]
        %v6646 = vld [vmem:[%s11 + $0x4c] sm:$0xf]
        %v6647 = vld [vmem:[%s11 + $0x50] sm:$0xf]
        %v6648 = vld [vmem:[%s11 + $0x54] sm:$0xf]
        %v6649 = vld [vmem:[%s11 + $0x58] sm:$0xf]
        %v6650 = vld [vmem:[%s11 + $0x5c] sm:$0xf]
        %v6651 = vld [vmem:[%s11 + $0x60] sm:$0xf]
        %v6652 = vld [vmem:[%s11 + $0x64] sm:$0xf]
        %v6653 = vld [vmem:[%s11 + $0x68] sm:$0xf]
        %v6654 = vld [vmem:[%s11 + $0x6c] sm:$0xf]
        %v6655 = vld [vmem:[%s11 + $0x70] sm:$0xf]
        %v6656 = vld [vmem:[%s11 + $0x74] sm:$0xf]
        %v6657 = vld [vmem:[%s11 + $0x78] sm:$0xf]
        %v6658 = vld [vmem:[%s11 + $0x7c] sm:$0xf]
        %v6659 = vld [vmem:[%s11 + $0x80] sm:$0xf]
        %v6660 = vld [vmem:[%s11 + $0x84] sm:$0xf]
        %v6661 = vld [vmem:[%s11 + $0x88] sm:$0xf]
        %v6662 = vld [vmem:[%s11 + $0x8c] sm:$0xf]
        %v6663 = vld [vmem:[%s11 + $0x90] sm:$0xf]
        %v6664 = vld [vmem:[%s11 + $0x94] sm:$0xf]
        %v6665 = vld [vmem:[%s11 + $0x98] sm:$0xf]
        %v6666 = vld [vmem:[%s11 + $0x9c] sm:$0xf]
        %v6667 = vld [vmem:[%s11 + $0xa0] sm:$0xf]
        %v6668 = vld [vmem:[%s11 + $0xa4] sm:$0xf]
        %v6669 = vld [vmem:[%s11 + $0xa8] sm:$0xf]
        %v6670 = vld [vmem:[%s11 + $0xac] sm:$0xf]
        %v6671 = vld [vmem:[%s11 + $0xb0] sm:$0xf]
        %v6672 = vld [vmem:[%s11 + $0xb4] sm:$0xf]
        %v6673 = vld [vmem:[%s11 + $0xb8] sm:$0xf]
        %v6674 = vld [vmem:[%s11 + $0xbc] sm:$0xf]
        %v6675 = vld [vmem:[%s12] sm:$0x1]
        %v6677 = vlaneseq
        %v6678 = vshrl.u32 %v6677, 7
        %v6679 = vsub.s32 0, %v6678
        %v6680 = vrot.slane %v6675, %v6679
        %v6730 = vunpack.c.l.b16 %v6627
        %v6731 = vunpack.c.l.b16 %v6628
        %v6732 = vunpack.c.l.b16 %v6629
        %v6733 = vunpack.c.l.b16 %v6630
        %v6734 = vunpack.c.l.b16 %v6631
        %v6735 = vunpack.c.l.b16 %v6632
        %v6736 = vunpack.c.l.b16 %v6633
        %v6737 = vunpack.c.l.b16 %v6634
        %v6738 = vunpack.c.l.b16 %v6635
        %v6739 = vunpack.c.l.b16 %v6636
        %v6740 = vunpack.c.l.b16 %v6637
        %v6741 = vunpack.c.l.b16 %v6638
        %v6742 = vunpack.c.l.b16 %v6639
        %v6743 = vunpack.c.l.b16 %v6640
        %v6744 = vunpack.c.l.b16 %v6641
        %v6745 = vunpack.c.l.b16 %v6642
        %v6746 = vunpack.c.l.b16 %v6643
        %v6747 = vunpack.c.l.b16 %v6644
        %v6748 = vunpack.c.l.b16 %v6645
        %v6749 = vunpack.c.l.b16 %v6646
        %v6750 = vunpack.c.l.b16 %v6647
        %v6751 = vunpack.c.l.b16 %v6648
        %v6752 = vunpack.c.l.b16 %v6649
        %v6753 = vunpack.c.l.b16 %v6650
        %v6754 = vunpack.c.l.b16 %v6651
        %v6755 = vunpack.c.l.b16 %v6652
        %v6756 = vunpack.c.l.b16 %v6653
        %v6757 = vunpack.c.l.b16 %v6654
        %v6758 = vunpack.c.l.b16 %v6655
        %v6759 = vunpack.c.l.b16 %v6656
        %v6760 = vunpack.c.l.b16 %v6657
        %v6761 = vunpack.c.l.b16 %v6658
        %v6762 = vunpack.c.l.b16 %v6659
        %v6763 = vunpack.c.l.b16 %v6660
        %v6764 = vunpack.c.l.b16 %v6661
        %v6765 = vunpack.c.l.b16 %v6662
        %v6766 = vunpack.c.l.b16 %v6663
        %v6767 = vunpack.c.l.b16 %v6664
        %v6768 = vunpack.c.l.b16 %v6665
        %v6769 = vunpack.c.l.b16 %v6666
        %v6770 = vunpack.c.l.b16 %v6667
        %v6771 = vunpack.c.l.b16 %v6668
        %v6772 = vunpack.c.l.b16 %v6669
        %v6773 = vunpack.c.l.b16 %v6670
        %v6774 = vunpack.c.l.b16 %v6671
        %v6775 = vunpack.c.l.b16 %v6672
        %v6776 = vunpack.c.l.b16 %v6673
        %v6777 = vunpack.c.l.b16 %v6674
        %v6778 = vpack.c.b16 %v6731, %v6730
        %v6779 = vpack.c.b16 %v6733, %v6732
        %v6780 = vpack.c.b16 %v6735, %v6734
        %v6781 = vpack.c.b16 %v6737, %v6736
        %v6782 = vpack.c.b16 %v6739, %v6738
        %v6783 = vpack.c.b16 %v6741, %v6740
        %v6784 = vpack.c.b16 %v6743, %v6742
        %v6785 = vpack.c.b16 %v6745, %v6744
        %v6786 = vpack.c.b16 %v6747, %v6746
        %v6787 = vpack.c.b16 %v6749, %v6748
        %v6788 = vpack.c.b16 %v6751, %v6750
        %v6789 = vpack.c.b16 %v6753, %v6752
        %v6790 = vpack.c.b16 %v6755, %v6754
        %v6791 = vpack.c.b16 %v6757, %v6756
        %v6792 = vpack.c.b16 %v6759, %v6758
        %v6793 = vpack.c.b16 %v6761, %v6760
        %v6794 = vpack.c.b16 %v6763, %v6762
        %v6795 = vpack.c.b16 %v6765, %v6764
        %v6796 = vpack.c.b16 %v6767, %v6766
        %v6797 = vpack.c.b16 %v6769, %v6768
        %v6798 = vpack.c.b16 %v6771, %v6770
        %v6799 = vpack.c.b16 %v6773, %v6772
        %v6800 = vpack.c.b16 %v6775, %v6774
        %v6801 = vpack.c.b16 %v6777, %v6776
        %6826 = vmatprep.subr.bf16.mxu0 0
        %6827 = vmatpush1.bf16.msra.mxu0 %v6785
        %6828 = vmatprep.subr.bf16.mxu0 0
        %6829 = vmatpush1.bf16.msra.mxu0 %v6784
        %6830 = vmatprep.subr.bf16.mxu0 0
        %6831 = vmatpush1.bf16.msra.mxu0 %v6783
        %6832 = vmatprep.subr.bf16.mxu0 0
        %6833 = vmatpush1.bf16.msra.mxu0 %v6782
        %6834 = vmatprep.subr.bf16.mxu0 0
        %6835 = vmatpush1.bf16.msra.mxu0 %v6781
        %6836 = vmatprep.subr.bf16.mxu0 0
        %6837 = vmatpush1.bf16.msra.mxu0 %v6780
        %6838 = vmatprep.subr.bf16.mxu0 0
        %6839 = vmatpush1.bf16.msra.mxu0 %v6779
        %6840 = vmatprep.subr.bf16.mxu0 0
        %6841 = vmatpush1.bf16.msra.mxu0 %v6778
        %6842 = vmatprep.subr.bf16.mxu0 0
        %6843 = vmatpush2.bf16.msra.mxu0 %v6793
        %6844 = vmatprep.subr.bf16.mxu0 0
        %6845 = vmatpush2.bf16.msra.mxu0 %v6792
        %6846 = vmatprep.subr.bf16.mxu0 0
        %6847 = vmatpush2.bf16.msra.mxu0 %v6791
        %6848 = vmatprep.subr.bf16.mxu0 0
        %6849 = vmatpush2.bf16.msra.mxu0 %v6790
        %6850 = vmatprep.subr.bf16.mxu0 0
        %6851 = vmatpush2.bf16.msra.mxu0 %v6789
        %6852 = vmatprep.subr.bf16.mxu0 0
        %6853 = vmatpush2.bf16.msra.mxu0 %v6788
        %6854 = vmatprep.subr.bf16.mxu0 0
        %6855 = vmatpush2.bf16.msra.mxu0 %v6787
        %6856 = vmatprep.subr.bf16.mxu0 0
        %6857 = vmatpush2.bf16.msra.mxu0 %v6786
        %6858 = vmatprep.mubr.bf16.mxu0 %v6580
        %6859 = vmatmul.mubr.bf16.gmra.mxu0 %v6579
        %v6860 = vpop.f32.mrf.mxu0
        %v6861 = vadd.f32 %v6680, %v6860
        %v6862 = vpop.f32.mrf.mxu0
        %v6863 = vpop.f32.mrf.mxu0
        %v6864 = vadd.f32 %v6680, %v6863
        %v6865 = vpop.f32.mrf.mxu0
        %6866 = vmatprep.mubr.bf16.mxu0 %v6583
        %6867 = vmatmul.mubr.bf16.gmra.mxu0 %v6582
        %v6868 = vpop.f32.mrf.mxu0
        %v6869 = vadd.f32 %v6680, %v6868
        %v6870 = vpop.f32.mrf.mxu0
        %v6871 = vpop.f32.mrf.mxu0
        %v6872 = vadd.f32 %v6680, %v6871
        %v6873 = vpop.f32.mrf.mxu0
        %6874 = vmatprep.mubr.bf16.mxu0 %v6586
        %6875 = vmatmul.mubr.bf16.gmra.mxu0 %v6585
        %v6876 = vpop.f32.mrf.mxu0
        %v6877 = vadd.f32 %v6680, %v6876
        %v6878 = vpop.f32.mrf.mxu0
        %v6879 = vpop.f32.mrf.mxu0
        %v6880 = vadd.f32 %v6680, %v6879
        %v6881 = vpop.f32.mrf.mxu0
        %6882 = vmatprep.mubr.bf16.mxu0 %v6589
        %6883 = vmatmul.mubr.bf16.gmra.mxu0 %v6588
        %v6884 = vpop.f32.mrf.mxu0
        %v6885 = vadd.f32 %v6680, %v6884
        %v6886 = vpop.f32.mrf.mxu0
        %v6887 = vpop.f32.mrf.mxu0
        %v6888 = vadd.f32 %v6680, %v6887
        %v6889 = vpop.f32.mrf.mxu0
        %6890 = vmatprep.mubr.bf16.mxu0 %v6592
        %6891 = vmatmul.mubr.bf16.gmra.mxu0 %v6591
        %v6892 = vpop.f32.mrf.mxu0
        %v6893 = vadd.f32 %v6680, %v6892
        %v6894 = vpop.f32.mrf.mxu0
        %v6895 = vpop.f32.mrf.mxu0
        %v6896 = vadd.f32 %v6680, %v6895
        %v6897 = vpop.f32.mrf.mxu0
        %6898 = vmatprep.mubr.bf16.mxu0 %v6595
        %6899 = vmatmul.mubr.bf16.gmra.mxu0 %v6594
        %v6900 = vpop.f32.mrf.mxu0
        %v6901 = vadd.f32 %v6680, %v6900
        %v6902 = vpop.f32.mrf.mxu0
        %v6903 = vpop.f32.mrf.mxu0
        %v6904 = vadd.f32 %v6680, %v6903
        %v6905 = vpop.f32.mrf.mxu0
        %6906 = vmatprep.mubr.bf16.mxu0 %v6598
        %6907 = vmatmul.mubr.bf16.gmra.mxu0 %v6597
        %v6908 = vpop.f32.mrf.mxu0
        %v6909 = vadd.f32 %v6680, %v6908
        %v6910 = vpop.f32.mrf.mxu0
        %v6911 = vpop.f32.mrf.mxu0
        %v6912 = vadd.f32 %v6680, %v6911
        %v6913 = vpop.f32.mrf.mxu0
        %6914 = vmatprep.mubr.bf16.mxu0 %v6601
        %6915 = vmatmul.mubr.bf16.gmra.mxu0 %v6600
        %v6916 = vpop.f32.mrf.mxu0
        %v6917 = vadd.f32 %v6680, %v6916
        %v6918 = vpop.f32.mrf.mxu0
        %v6919 = vpop.f32.mrf.mxu0
        %v6920 = vadd.f32 %v6680, %v6919
        %v6921 = vpop.f32.mrf.mxu0
        %6922 = vmatprep.mubr.bf16.mxu0 %v6604
        %6923 = vmatmul.mubr.bf16.gmra.mxu0 %v6603
        %v6924 = vpop.f32.mrf.mxu0
        %v6925 = vadd.f32 %v6680, %v6924
        %v6926 = vpop.f32.mrf.mxu0
        %v6927 = vpop.f32.mrf.mxu0
        %v6928 = vadd.f32 %v6680, %v6927
        %v6929 = vpop.f32.mrf.mxu0
        %6930 = vmatprep.mubr.bf16.mxu0 %v6607
        %6931 = vmatmul.mubr.bf16.gmra.mxu0 %v6606
        %v6932 = vpop.f32.mrf.mxu0
        %v6933 = vadd.f32 %v6680, %v6932
        %v6934 = vpop.f32.mrf.mxu0
        %v6935 = vpop.f32.mrf.mxu0
        %v6936 = vadd.f32 %v6680, %v6935
        %v6937 = vpop.f32.mrf.mxu0
        %6938 = vmatprep.mubr.bf16.mxu0 %v6610
        %6939 = vmatmul.mubr.bf16.gmra.mxu0 %v6609
        %v6940 = vpop.f32.mrf.mxu0
        %v6941 = vadd.f32 %v6680, %v6940
        %v6942 = vpop.f32.mrf.mxu0
        %v6943 = vpop.f32.mrf.mxu0
        %v6944 = vadd.f32 %v6680, %v6943
        %v6945 = vpop.f32.mrf.mxu0
        %6946 = vmatprep.mubr.bf16.mxu0 %v6613
        %6947 = vmatmul.mubr.bf16.gmra.mxu0 %v6612
        %v6948 = vpop.f32.mrf.mxu0
        %v6949 = vadd.f32 %v6680, %v6948
        %v6950 = vpop.f32.mrf.mxu0
        %v6951 = vpop.f32.mrf.mxu0
        %v6952 = vadd.f32 %v6680, %v6951
        %v6953 = vpop.f32.mrf.mxu0
        %6954 = vmatprep.mubr.bf16.mxu0 %v6616
        %6955 = vmatmul.mubr.bf16.gmra.mxu0 %v6615
        %v6956 = vpop.f32.mrf.mxu0
        %v6957 = vadd.f32 %v6680, %v6956
        %v6958 = vpop.f32.mrf.mxu0
        %v6959 = vpop.f32.mrf.mxu0
        %v6960 = vadd.f32 %v6680, %v6959
        %v6961 = vpop.f32.mrf.mxu0
        %6962 = vmatprep.mubr.bf16.mxu0 %v6619
        %6963 = vmatmul.mubr.bf16.gmra.mxu0 %v6618
        %v6964 = vpop.f32.mrf.mxu0
        %v6965 = vadd.f32 %v6680, %v6964
        %v6966 = vpop.f32.mrf.mxu0
        %v6967 = vpop.f32.mrf.mxu0
        %v6968 = vadd.f32 %v6680, %v6967
        %v6969 = vpop.f32.mrf.mxu0
        %6970 = vmatprep.mubr.bf16.mxu0 %v6622
        %6971 = vmatmul.mubr.bf16.gmra.mxu0 %v6621
        %v6972 = vpop.f32.mrf.mxu0
        %v6973 = vadd.f32 %v6680, %v6972
        %v6974 = vpop.f32.mrf.mxu0
        %v6975 = vpop.f32.mrf.mxu0
        %v6976 = vadd.f32 %v6680, %v6975
        %v6977 = vpop.f32.mrf.mxu0
        %6978 = vmatprep.mubr.bf16.mxu0 %v6625
        %6979 = vmatmul.mubr.bf16.gmra.mxu0 %v6624
        %v6980 = vpop.f32.mrf.mxu0
        %v6981 = vadd.f32 %v6680, %v6980
        %v6982 = vpop.f32.mrf.mxu0
        %v6983 = vpop.f32.mrf.mxu0
        %v6984 = vadd.f32 %v6680, %v6983
        %v6985 = vpop.f32.mrf.mxu0
        %6986 = vdwg.mxu0
        %6987 = vmatprep.subr.bf16.mxu0 0
        %6988 = vmatpush1.bf16.msra.mxu0 %v6801
        %6989 = vmatprep.subr.bf16.mxu0 0
        %6990 = vmatpush1.bf16.msra.mxu0 %v6800
        %6991 = vmatprep.subr.bf16.mxu0 0
        %6992 = vmatpush1.bf16.msra.mxu0 %v6799
        %6993 = vmatprep.subr.bf16.mxu0 0
        %6994 = vmatpush1.bf16.msra.mxu0 %v6798
        %6995 = vmatprep.subr.bf16.mxu0 0
        %6996 = vmatpush1.bf16.msra.mxu0 %v6797
        %6997 = vmatprep.subr.bf16.mxu0 0
        %6998 = vmatpush1.bf16.msra.mxu0 %v6796
        %6999 = vmatprep.subr.bf16.mxu0 0
        %7000 = vmatpush1.bf16.msra.mxu0 %v6795
        %7001 = vmatprep.subr.bf16.mxu0 0
        %7002 = vmatpush1.bf16.msra.mxu0 %v6794
        %7003 = vmatprep.subr.bf16.mxu0 0
        %7004 = vmatpush2.bf16.msra.mxu0 0
        %7005 = vmatprep.subr.bf16.mxu0 0
        %7006 = vmatpush2.bf16.msra.mxu0 0
        %7007 = vmatprep.subr.bf16.mxu0 0
        %7008 = vmatpush2.bf16.msra.mxu0 0
        %7009 = vmatprep.subr.bf16.mxu0 0
        %7010 = vmatpush2.bf16.msra.mxu0 0
        %7011 = vmatprep.subr.bf16.mxu0 0
        %7012 = vmatpush2.bf16.msra.mxu0 0
        %7013 = vmatprep.subr.bf16.mxu0 0
        %7014 = vmatpush2.bf16.msra.mxu0 0
        %7015 = vmatprep.subr.bf16.mxu0 0
        %7016 = vmatpush2.bf16.msra.mxu0 0
        %7017 = vmatprep.subr.bf16.mxu0 0
        %7018 = vmatpush2.bf16.msra.mxu0 0
        %7019 = vmatprep.mubr.bf16.mxu0 0
        %7020 = vmatmul.mubr.bf16.gmra.mxu0 %v6581
        %v7021 = vpop.f32.mrf.mxu0
        %v7022 = vadd.f32 %v6861, %v7021
        %v7023 = vpop.f32.mrf.mxu0
        %v7024 = vpop.f32.mrf.mxu0
        %v7025 = vadd.f32 %v6864, %v7024
        %v7026 = vpop.f32.mrf.mxu0
        %7027 = vmatprep.mubr.bf16.mxu0 0
        %7028 = vmatmul.mubr.bf16.gmra.mxu0 %v6584
        %v7029 = vpop.f32.mrf.mxu0
        %v7030 = vadd.f32 %v6869, %v7029
        %v7031 = vpop.f32.mrf.mxu0
        %v7032 = vpop.f32.mrf.mxu0
        %v7033 = vadd.f32 %v6872, %v7032
        %v7034 = vpop.f32.mrf.mxu0
        %7035 = vmatprep.mubr.bf16.mxu0 0
        %7036 = vmatmul.mubr.bf16.gmra.mxu0 %v6587
        %v7037 = vpop.f32.mrf.mxu0
        %v7038 = vadd.f32 %v6877, %v7037
        %v7039 = vpop.f32.mrf.mxu0
        %v7040 = vpop.f32.mrf.mxu0
        %v7041 = vadd.f32 %v6880, %v7040
        %v7042 = vpop.f32.mrf.mxu0
        %7043 = vmatprep.mubr.bf16.mxu0 0
        %7044 = vmatmul.mubr.bf16.gmra.mxu0 %v6590
        %v7045 = vpop.f32.mrf.mxu0
        %v7046 = vadd.f32 %v6885, %v7045
        %v7047 = vpop.f32.mrf.mxu0
        %v7048 = vpop.f32.mrf.mxu0
        %v7049 = vadd.f32 %v6888, %v7048
        %v7050 = vpop.f32.mrf.mxu0
        %7051 = vmatprep.mubr.bf16.mxu0 0
        %7052 = vmatmul.mubr.bf16.gmra.mxu0 %v6593
        %v7053 = vpop.f32.mrf.mxu0
        %v7054 = vadd.f32 %v6893, %v7053
        %v7055 = vpop.f32.mrf.mxu0
        %v7056 = vpop.f32.mrf.mxu0
        %v7057 = vadd.f32 %v6896, %v7056
        %v7058 = vpop.f32.mrf.mxu0
        %7059 = vmatprep.mubr.bf16.mxu0 0
        %7060 = vmatmul.mubr.bf16.gmra.mxu0 %v6596
        %v7061 = vpop.f32.mrf.mxu0
        %v7062 = vadd.f32 %v6901, %v7061
        %v7063 = vpop.f32.mrf.mxu0
        %v7064 = vpop.f32.mrf.mxu0
        %v7065 = vadd.f32 %v6904, %v7064
        %v7066 = vpop.f32.mrf.mxu0
        %7067 = vmatprep.mubr.bf16.mxu0 0
        %7068 = vmatmul.mubr.bf16.gmra.mxu0 %v6599
        %v7069 = vpop.f32.mrf.mxu0
        %v7070 = vadd.f32 %v6909, %v7069
        %v7071 = vpop.f32.mrf.mxu0
        %v7072 = vpop.f32.mrf.mxu0
        %v7073 = vadd.f32 %v6912, %v7072
        %v7074 = vpop.f32.mrf.mxu0
        %7075 = vmatprep.mubr.bf16.mxu0 0
        %7076 = vmatmul.mubr.bf16.gmra.mxu0 %v6602
        %v7077 = vpop.f32.mrf.mxu0
        %v7078 = vadd.f32 %v6917, %v7077
        %v7079 = vpop.f32.mrf.mxu0
        %v7080 = vpop.f32.mrf.mxu0
        %v7081 = vadd.f32 %v6920, %v7080
        %v7082 = vpop.f32.mrf.mxu0
        %7083 = vmatprep.mubr.bf16.mxu0 0
        %7084 = vmatmul.mubr.bf16.gmra.mxu0 %v6605
        %v7085 = vpop.f32.mrf.mxu0
        %v7086 = vadd.f32 %v6925, %v7085
        %v7087 = vpop.f32.mrf.mxu0
        %v7088 = vpop.f32.mrf.mxu0
        %v7089 = vadd.f32 %v6928, %v7088
        %v7090 = vpop.f32.mrf.mxu0
        %7091 = vmatprep.mubr.bf16.mxu0 0
        %7092 = vmatmul.mubr.bf16.gmra.mxu0 %v6608
        %v7093 = vpop.f32.mrf.mxu0
        %v7094 = vadd.f32 %v6933, %v7093
        %v7095 = vpop.f32.mrf.mxu0
        %v7096 = vpop.f32.mrf.mxu0
        %v7097 = vadd.f32 %v6936, %v7096
        %v7098 = vpop.f32.mrf.mxu0
        %7099 = vmatprep.mubr.bf16.mxu0 0
        %7100 = vmatmul.mubr.bf16.gmra.mxu0 %v6611
        %v7101 = vpop.f32.mrf.mxu0
        %v7102 = vadd.f32 %v6941, %v7101
        %v7103 = vpop.f32.mrf.mxu0
        %v7104 = vpop.f32.mrf.mxu0
        %v7105 = vadd.f32 %v6944, %v7104
        %v7106 = vpop.f32.mrf.mxu0
        %7107 = vmatprep.mubr.bf16.mxu0 0
        %7108 = vmatmul.mubr.bf16.gmra.mxu0 %v6614
        %v7109 = vpop.f32.mrf.mxu0
        %v7110 = vadd.f32 %v6949, %v7109
        %v7111 = vpop.f32.mrf.mxu0
        %v7112 = vpop.f32.mrf.mxu0
        %v7113 = vadd.f32 %v6952, %v7112
        %v7114 = vpop.f32.mrf.mxu0
        %7115 = vmatprep.mubr.bf16.mxu0 0
        %7116 = vmatmul.mubr.bf16.gmra.mxu0 %v6617
        %v7117 = vpop.f32.mrf.mxu0
        %v7118 = vadd.f32 %v6957, %v7117
        %v7119 = vpop.f32.mrf.mxu0
        %v7120 = vpop.f32.mrf.mxu0
        %v7121 = vadd.f32 %v6960, %v7120
        %v7122 = vpop.f32.mrf.mxu0
        %7123 = vmatprep.mubr.bf16.mxu0 0
        %7124 = vmatmul.mubr.bf16.gmra.mxu0 %v6620
        %v7125 = vpop.f32.mrf.mxu0
        %v7126 = vadd.f32 %v6965, %v7125
        %v7127 = vpop.f32.mrf.mxu0
        %v7128 = vpop.f32.mrf.mxu0
        %v7129 = vadd.f32 %v6968, %v7128
        %v7130 = vpop.f32.mrf.mxu0
        %7131 = vmatprep.mubr.bf16.mxu0 0
        %7132 = vmatmul.mubr.bf16.gmra.mxu0 %v6623
        %v7133 = vpop.f32.mrf.mxu0
        %v7134 = vadd.f32 %v6973, %v7133
        %v7135 = vpop.f32.mrf.mxu0
        %v7136 = vpop.f32.mrf.mxu0
        %v7137 = vadd.f32 %v6976, %v7136
        %v7138 = vpop.f32.mrf.mxu0
        %7139 = vmatprep.mubr.bf16.mxu0 0
        %7140 = vmatmul.mubr.bf16.gmra.mxu0 %v6626
        %v7141 = vpop.f32.mrf.mxu0
        %v7142 = vadd.f32 %v6981, %v7141
        %v7143 = vpop.f32.mrf.mxu0
        %v7144 = vpop.f32.mrf.mxu0
        %v7145 = vadd.f32 %v6984, %v7144
        %v7146 = vpop.f32.mrf.mxu0
        %7147 = vdwg.mxu0
        %7148 = vst [vmem:[%s505] sm:$0xff] %v7022
        %7149 = vst [vmem:[%s505 + $0x8] sm:$0xff] %v7025
        %7150 = vst [vmem:[%s505 + $0x10] sm:$0xff] %v7030
        %7151 = vst [vmem:[%s505 + $0x18] sm:$0xff] %v7033
        %7152 = vst [vmem:[%s505 + $0x20] sm:$0xff] %v7038
        %7153 = vst [vmem:[%s505 + $0x28] sm:$0xff] %v7041
        %7154 = vst [vmem:[%s505 + $0x30] sm:$0xff] %v7046
        %7155 = vst [vmem:[%s505 + $0x38] sm:$0xff] %v7049
        %7156 = vst [vmem:[%s505 + $0x40] sm:$0xff] %v7054
        %7157 = vst [vmem:[%s505 + $0x48] sm:$0xff] %v7057
        %7158 = vst [vmem:[%s505 + $0x50] sm:$0xff] %v7062
        %7159 = vst [vmem:[%s505 + $0x58] sm:$0xff] %v7065
        %7160 = vst [vmem:[%s505 + $0x60] sm:$0xff] %v7070
        %7161 = vst [vmem:[%s505 + $0x68] sm:$0xff] %v7073
        %7162 = vst [vmem:[%s505 + $0x70] sm:$0xff] %v7078
        %7163 = vst [vmem:[%s505 + $0x78] sm:$0xff] %v7081
        %7164 = vst [vmem:[%s505 + $0x80] sm:$0xff] %v7086
        %7165 = vst [vmem:[%s505 + $0x88] sm:$0xff] %v7089
        %7166 = vst [vmem:[%s505 + $0x90] sm:$0xff] %v7094
        %7167 = vst [vmem:[%s505 + $0x98] sm:$0xff] %v7097
        %7168 = vst [vmem:[%s505 + $0xa0] sm:$0xff] %v7102
        %7169 = vst [vmem:[%s505 + $0xa8] sm:$0xff] %v7105
        %7170 = vst [vmem:[%s505 + $0xb0] sm:$0xff] %v7110
        %7171 = vst [vmem:[%s505 + $0xb8] sm:$0xff] %v7113
        %7172 = vst [vmem:[%s505 + $0xc0] sm:$0xff] %v7118
        %7173 = vst [vmem:[%s505 + $0xc8] sm:$0xff] %v7121
        %7174 = vst [vmem:[%s505 + $0xd0] sm:$0xff] %v7126
        %7175 = vst [vmem:[%s505 + $0xd8] sm:$0xff] %v7129
        %7176 = vst [vmem:[%s505 + $0xe0] sm:$0xff] %v7134
        %7177 = vst [vmem:[%s505 + $0xe8] sm:$0xff] %v7137
        %7178 = vst [vmem:[%s505 + $0xf0] sm:$0xff] %v7142
        %7179 = vst [vmem:[%s505 + $0xf8] sm:$0xff] %v7145
        %s7180 = smul.u32 32, %s27
        %p7181 = scmp.lt.s32.totalorder %s7180, 63
        %s7182 = scalar_select %p7181, %s7180, 63
        %s7183 = smul.addr %s7182, 8
        %s7184 = scalar_lea.vmem %s13, %s7183
        // Predicated region
        $region93: #{dn_forward.1} parent=71 // pred_check
          %p7185 = pneg %p323
        $region94: #{dn_forward.1} parent=71 // pred_check_branch
          %7187 = sbr.rel (%p7185) target = $region96
        $region95: #{dn_forward.1} parent=71 // pred_region
          %s7188 = smul.u32 32, %s27
        $region96: #{dn_forward.1} parent=71 // pred_fallthru
          _
      $region72: #{dn_forward.1} parent=5 // pred_fallthru
        _
      %p7189 = scmp.le.s32.totalorder 2, %s22
      // Predicated region
      $region97: #{dn_forward.1} parent=5 // pred_check
        %p7190 = pneg %p7189
      $region98: #{dn_forward.1} parent=5 // pred_check_branch
        %7192 = sbr.rel (%p7190) target = $region100
      $region99: #{dn_forward.1} parent=5 // pred_region
        %s7193 = ssub.s32 %s22, 2
        // Predicated region
        $region101: #{dn_forward.1} parent=99 // pred_check
          %p7194 = pneg %p329
        $region102: #{dn_forward.1} parent=99 // pred_check_branch
          %7196 = sbr.rel (%p7194) target = $region104
        $region103: #{dn_forward.1} parent=99 // pred_region
          %s7197 = smul.u32 32, %s28
          %p7198 = scmp.lt.s32.totalorder %s7197, 63
          %s7199 = scalar_select %p7198, %s7197, 63
          %s7200 = smul.addr %s7199, 8
          %s7201 = scalar_lea.vmem %s13, %s7200
        $region104: #{dn_forward.1} parent=99 // pred_fallthru
          _
      $region100: #{dn_forward.1} parent=5 // pred_fallthru
        _
    $region6: #{dn_forward.1} parent=1 // loop_footer
      %s26 = sadd.s32 1, %s22
    $region7: #{dn_forward.1} parent=1 // loop_footer_branch
      %21 = sbr.rel target = $region3
    $region8: #{dn_forward.1} parent=1 // loop_exit
      _
    %7202 = vsyncpa [#allocation3], 1
    %s7203 = scalar_lea.sflag [#allocation3], 1
    %7204 = vsyncpa %s7203, 1
    %7205 = vsyncpa [#allocation5], 1
    %7206 = vsyncpa [#allocation8], 1

</llo_original>
